<compile_context>
chip_gen: v7x
topology: tpu7x:2x2x1
jax: 0.10.0
libtpu: 0.0.40
codegen_flags: <defaults>
</compile_context>

<pallas_src>
import jax
import jax.numpy as jnp
from jax.experimental import pallas as pl
from jax.experimental.pallas import tpu as pltpu

MATMUL_DTYPE = jnp.bfloat16   # set to jnp.float32 for bit-exact f32 matmuls


def _im2col(pad_ref, h, w):
    """(h*w, 9*c) patch matrix from a padded (h+2, w+2, c) VMEM ref (tap k = dy*3+dx)."""
    c = pad_ref.shape[-1]
    cols = []
    for dy in range(3):
        for dx in range(3):
            win = pad_ref[dy:dy + h, dx:dx + w, :]      # static slices only
            cols.append(win.reshape(h * w, c))
    return jnp.concatenate(cols, axis=-1)


def _conv3x3_relu(pad_ref, w_ref, b_ref, h, w):
    """One conv layer: im2col + single MXU matmul + bias + ReLU -> (h*w, Cout) f32."""
    patches = _im2col(pad_ref, h, w).astype(MATMUL_DTYPE)
    acc = jnp.dot(patches, w_ref[...].astype(MATMUL_DTYPE),
                  preferred_element_type=jnp.float32)
    return jnp.maximum(acc + b_ref[...], 0.0)


def _maxpool2x2(x):
    """MaxPool2d(kernel_size=2, stride=2) on an (H, W, C) value (no strided slicing)."""
    H, W, C = x.shape
    x = x.reshape(H, W // 2, 2, C)
    x = jnp.maximum(x[:, :, 0, :], x[:, :, 1, :])        # pool along W
    x = x.reshape(H // 2, 2, W // 2, C)
    x = jnp.maximum(x[:, 0, :, :], x[:, 1, :, :])        # pool along H
    return x


def base_conv_kernel(x_ref, w1_ref, b1_ref, w2_ref, b2_ref, w3_ref, b3_ref,
                     w4_ref, b4_ref, o_ref, p_in, p1, p3, p4):
    """Fused BaseConv forward for one batch element (grid axis 0 = batch)."""
    _, H, W, _ = x_ref.shape
    Hp, Wp = H // 2, W // 2        # spatial size after first pool
    Ho, Wo = Hp // 2, Wp // 2      # spatial size after second pool

    # Zero the padded scratch every step (cheap, <200 KiB total) so the 1-pixel halo
    # is valid regardless of how the batch grid is split across TensorCores.
    p_in[...] = jnp.zeros_like(p_in)
    p1[...] = jnp.zeros_like(p1)
    p3[...] = jnp.zeros_like(p3)
    p4[...] = jnp.zeros_like(p4)

    # Layer 1: Conv(in_dim -> 32) + ReLU
    p_in[1:H + 1, 1:W + 1, :] = x_ref[0]
    h1 = _conv3x3_relu(p_in, w1_ref, b1_ref, H, W)                  # (H*W, 32)

    # Layer 2: Conv(32 -> 32) + ReLU, fused MaxPool(2, 2)
    p1[1:H + 1, 1:W + 1, :] = h1.reshape(H, W, 32)
    h2 = _conv3x3_relu(p1, w2_ref, b2_ref, H, W)                    # (H*W, 32)
    h2p = _maxpool2x2(h2.reshape(H, W, 32))                         # (Hp, Wp, 32)

    # Layer 3: Conv(32 -> 64) + ReLU
    p3[1:Hp + 1, 1:Wp + 1, :] = h2p
    h3 = _conv3x3_relu(p3, w3_ref, b3_ref, Hp, Wp)                  # (Hp*Wp, 64)

    # Layer 4: Conv(64 -> 64) + ReLU, fused MaxPool(2, 2)
    p4[1:Hp + 1, 1:Wp + 1, :] = h3.reshape(Hp, Wp, 64)
    h4 = _conv3x3_relu(p4, w4_ref, b4_ref, Hp, Wp)                  # (Hp*Wp, 64)
    h4p = _maxpool2x2(h4.reshape(Hp, Wp, 64))                       # (Ho, Wo, 64)

    # Lane-dense store: (Ho, Wo*64) is a multiple of 128 lanes wide (unmasked vst).
    o_ref[0] = h4p.reshape(Ho, Wo * 64)


def _fused_forward(x_nhwc, w1, b1, w2, b2, w3, b3, w4, b4):
    N, H, W, Cin = x_nhwc.shape
    assert H % 4 == 0 and W % 4 == 0, "two MaxPool(2,2) stages require H, W % 4 == 0"
    Ho, Wo = H // 4, W // 4
    const2 = lambda n: (0, 0)   # weights/biases: constant block index -> DMA'd once
    return pl.pallas_call(
        base_conv_kernel,
        out_shape=jax.ShapeDtypeStruct((N, Ho, Wo * 64), jnp.float32),
        grid=(N,),
        in_specs=[
            pl.BlockSpec((1, H, W, Cin), lambda n: (n, 0, 0, 0)),
            pl.BlockSpec(w1.shape, const2), pl.BlockSpec(b1.shape, const2),
            pl.BlockSpec(w2.shape, const2), pl.BlockSpec(b2.shape, const2),
            pl.BlockSpec(w3.shape, const2), pl.BlockSpec(b3.shape, const2),
            pl.BlockSpec(w4.shape, const2), pl.BlockSpec(b4.shape, const2),
        ],
        out_specs=pl.BlockSpec((1, Ho, Wo * 64), lambda n: (n, 0, 0)),
        scratch_shapes=[
            pltpu.VMEM((H + 2, W + 2, Cin), jnp.float32),             # padded input
            pltpu.VMEM((H + 2, W + 2, 32), jnp.float32),              # padded layer-1 out
            pltpu.VMEM((H // 2 + 2, W // 2 + 2, 32), jnp.float32),    # padded pooled layer-2 out
            pltpu.VMEM((H // 2 + 2, W // 2 + 2, 64), jnp.float32),    # padded layer-3 out
        ],
        compiler_params=pltpu.CompilerParams(dimension_semantics=("parallel",)),
    )(x_nhwc, w1, b1, w2, b2, w3, b3, w4, b4)


@jax.jit
def base_conv_forward(x_nchw, params):
    """BaseConv.forward: NCHW in, NCHW out (PyTorch-facing boundary)."""
    x = jnp.transpose(x_nchw, (0, 2, 3, 1)).astype(jnp.float32)     # -> NHWC
    N, H, W, _ = x.shape
    (w1, b1), (w2, b2), (w3, b3), (w4, b4) = params
    out = _fused_forward(x, w1, b1, w2, b2, w3, b3, w4, b4)         # (N, H//4, (W//4)*64)
    out = out.reshape(N, H // 4, W // 4, 64)
    return jnp.transpose(out, (0, 3, 1, 2))                         # -> NCHW


def init_params(key, in_dim):
    """Deterministic synthetic parameters matching BaseConv.__init__ shapes."""
    dims = [(in_dim, 32), (32, 32), (32, 64), (64, 64)]
    params = []
    for cin, cout in dims:
        kw, kb, key = jax.random.split(key, 3)
        # PyTorch conv layout (Cout, Cin, 3, 3) -> (3, 3, Cin, Cout) -> im2col (9*Cin, Cout)
        w_torch = jax.random.normal(kw, (cout, cin, 3, 3), jnp.float32) * (2.0 / (cin * 9)) ** 0.5
        w = jnp.transpose(w_torch, (2, 3, 1, 0)).reshape(9 * cin, cout).astype(MATMUL_DTYPE)
        b = (jax.random.normal(kb, (cout,), jnp.float32) * 0.01).reshape(1, cout)
        params.append((w, b))
    return params


def _reference_forward(x_nchw, params):
    """Pure-JAX/XLA reference (lax.conv + reduce_window) for verification."""
    x = jnp.transpose(x_nchw, (0, 2, 3, 1)).astype(jnp.float32)
    for idx, (w, b) in enumerate(params):
        cin, cout = w.shape[0] // 9, w.shape[1]
        w_hwio = w.astype(jnp.float32).reshape(3, 3, cin, cout)
        x = jax.lax.conv_general_dilated(
            x, w_hwio, window_strides=(1, 1), padding="SAME",
            dimension_numbers=("NHWC", "HWIO", "NHWC"))
        x = jnp.maximum(x + b.astype(jnp.float32).reshape(1, 1, 1, cout), 0.0)
        if idx in (1, 3):
            x = jax.lax.reduce_window(x, -jnp.inf, jax.lax.max,
                                      (1, 2, 2, 1), (1, 2, 2, 1), "VALID")
    return jnp.transpose(x, (0, 3, 1, 2))


if __name__ == "__main__":
    key = jax.random.PRNGKey(0)
    kx, kp = jax.random.split(key)
    in_dim = 4
    x = jax.random.normal(kx, (2, in_dim, 16, 16), jnp.float32)     # NCHW, like PyTorch
    params = init_params(kp, in_dim)

    out = jax.block_until_ready(base_conv_forward(x, params))
    assert out.shape == (2, 64, 4, 4), out.shape
    assert bool(jnp.all(jnp.isfinite(out)))

    ref = _reference_forward(x, params)
    max_err = float(jnp.max(jnp.abs(out - ref)))
    assert max_err < 1e-1, f"max abs error vs XLA reference: {max_err}"
    print("KERNEL_OK")
</pallas_src>

<mosaic_0001>
module attributes {stable_mosaic.version = 11 : i64} {
  func.func @base_conv_kernel(%arg0: i32, %arg1: memref<1x16x16x4xf32, #tpu.memory_space<vmem>>, %arg2: memref<36x32xbf16, #tpu.memory_space<vmem>>, %arg3: memref<1x32xf32, #tpu.memory_space<vmem>>, %arg4: memref<288x32xbf16, #tpu.memory_space<vmem>>, %arg5: memref<1x32xf32, #tpu.memory_space<vmem>>, %arg6: memref<288x64xbf16, #tpu.memory_space<vmem>>, %arg7: memref<1x64xf32, #tpu.memory_space<vmem>>, %arg8: memref<576x64xbf16, #tpu.memory_space<vmem>>, %arg9: memref<1x64xf32, #tpu.memory_space<vmem>>, %arg10: memref<1x4x256xf32, #tpu.memory_space<vmem>>, %arg11: memref<18x18x4xf32, #tpu.memory_space<vmem>>, %arg12: memref<18x18x32xf32, #tpu.memory_space<vmem>>, %arg13: memref<10x10x32xf32, #tpu.memory_space<vmem>>, %arg14: memref<10x10x64xf32, #tpu.memory_space<vmem>>) attributes {dimension_semantics = [#tpu.dimension_semantics<parallel>], iteration_bounds = array<i64: 2>, scalar_prefetch = 0 : i64, scratch_operands = 4 : i64, tpu.core_type = #tpu.core_type<tc>, window_params = [{transform_indices = @transform_0, window_bounds = array<i64: 1, 16, 16, 4>}, {pipeline_mode = #tpu.pipeline_mode<synchronous>, transform_indices = @transform_1, window_bounds = array<i64: 36, 32>}, {pipeline_mode = #tpu.pipeline_mode<synchronous>, transform_indices = @transform_2, window_bounds = array<i64: 1, 32>}, {pipeline_mode = #tpu.pipeline_mode<synchronous>, transform_indices = @transform_3, window_bounds = array<i64: 288, 32>}, {pipeline_mode = #tpu.pipeline_mode<synchronous>, transform_indices = @transform_4, window_bounds = array<i64: 1, 32>}, {pipeline_mode = #tpu.pipeline_mode<synchronous>, transform_indices = @transform_5, window_bounds = array<i64: 288, 64>}, {pipeline_mode = #tpu.pipeline_mode<synchronous>, transform_indices = @transform_6, window_bounds = array<i64: 1, 64>}, {pipeline_mode = #tpu.pipeline_mode<synchronous>, transform_indices = @transform_7, window_bounds = array<i64: 576, 64>}, {pipeline_mode = #tpu.pipeline_mode<synchronous>, transform_indices = @transform_8, window_bounds = array<i64: 1, 64>}, {transform_indices = @transform_9, window_bounds = array<i64: 1, 4, 256>}]} {
    %cst = arith.constant 0.000000e+00 : f32
    %0 = vector.broadcast %cst : f32 to vector<18x18x4xf32>
    %c0 = arith.constant 0 : index
    %c0_0 = arith.constant 0 : index
    %c0_1 = arith.constant 0 : index
    %1 = vector.load %arg11[%c0, %c0_0, %c0_1] : memref<18x18x4xf32, #tpu.memory_space<vmem>>, vector<18x18x4xf32>
    tpu.vector_store %arg11[%c0, %c0_0, %c0_1], %0 {strides = array<i32>} : memref<18x18x4xf32, #tpu.memory_space<vmem>>, vector<18x18x4xf32>,
    %cst_2 = arith.constant 0.000000e+00 : f32
    %2 = vector.broadcast %cst_2 : f32 to vector<18x18x32xf32>
    %c0_3 = arith.constant 0 : index
    %c0_4 = arith.constant 0 : index
    %c0_5 = arith.constant 0 : index
    %3 = vector.load %arg12[%c0_3, %c0_4, %c0_5] : memref<18x18x32xf32, #tpu.memory_space<vmem>>, vector<18x18x32xf32>
    tpu.vector_store %arg12[%c0_3, %c0_4, %c0_5], %2 {strides = array<i32>} : memref<18x18x32xf32, #tpu.memory_space<vmem>>, vector<18x18x32xf32>,
    %cst_6 = arith.constant 0.000000e+00 : f32
    %4 = vector.broadcast %cst_6 : f32 to vector<10x10x32xf32>
    %c0_7 = arith.constant 0 : index
    %c0_8 = arith.constant 0 : index
    %c0_9 = arith.constant 0 : index
    %5 = vector.load %arg13[%c0_7, %c0_8, %c0_9] : memref<10x10x32xf32, #tpu.memory_space<vmem>>, vector<10x10x32xf32>
    tpu.vector_store %arg13[%c0_7, %c0_8, %c0_9], %4 {strides = array<i32>} : memref<10x10x32xf32, #tpu.memory_space<vmem>>, vector<10x10x32xf32>,
    %cst_10 = arith.constant 0.000000e+00 : f32
    %6 = vector.broadcast %cst_10 : f32 to vector<10x10x64xf32>
    %c0_11 = arith.constant 0 : index
    %c0_12 = arith.constant 0 : index
    %c0_13 = arith.constant 0 : index
    %7 = vector.load %arg14[%c0_11, %c0_12, %c0_13] : memref<10x10x64xf32, #tpu.memory_space<vmem>>, vector<10x10x64xf32>
    tpu.vector_store %arg14[%c0_11, %c0_12, %c0_13], %6 {strides = array<i32>} : memref<10x10x64xf32, #tpu.memory_space<vmem>>, vector<10x10x64xf32>,
    %c0_14 = arith.constant 0 : index
    %c0_15 = arith.constant 0 : index
    %c0_16 = arith.constant 0 : index
    %c0_17 = arith.constant 0 : index
    %8 = vector.load %arg1[%c0_14, %c0_15, %c0_16, %c0_17] : memref<1x16x16x4xf32, #tpu.memory_space<vmem>>, vector<1x16x16x4xf32>
    %9 = vector.shape_cast %8 : vector<1x16x16x4xf32> to vector<16x16x4xf32>
    %c1 = arith.constant 1 : index
    %c1_18 = arith.constant 1 : index
    %c0_19 = arith.constant 0 : index
    %10 = vector.load %arg11[%c1, %c1_18, %c0_19] : memref<18x18x4xf32, #tpu.memory_space<vmem>>, vector<16x16x4xf32>
    tpu.vector_store %arg11[%c1, %c1_18, %c0_19], %9 {strides = array<i32>} : memref<18x18x4xf32, #tpu.memory_space<vmem>>, vector<16x16x4xf32>,
    %c0_20 = arith.constant 0 : index
    %c0_21 = arith.constant 0 : index
    %c0_22 = arith.constant 0 : index
    %11 = vector.load %arg11[%c0_20, %c0_21, %c0_22] : memref<18x18x4xf32, #tpu.memory_space<vmem>>, vector<16x16x4xf32>
    %12 = vector.shape_cast %11 : vector<16x16x4xf32> to vector<256x4xf32>
    %c0_23 = arith.constant 0 : index
    %c1_24 = arith.constant 1 : index
    %c0_25 = arith.constant 0 : index
    %13 = vector.load %arg11[%c0_23, %c1_24, %c0_25] : memref<18x18x4xf32, #tpu.memory_space<vmem>>, vector<16x16x4xf32>
    %14 = vector.shape_cast %13 : vector<16x16x4xf32> to vector<256x4xf32>
    %c0_26 = arith.constant 0 : index
    %c2 = arith.constant 2 : index
    %c0_27 = arith.constant 0 : index
    %15 = vector.load %arg11[%c0_26, %c2, %c0_27] : memref<18x18x4xf32, #tpu.memory_space<vmem>>, vector<16x16x4xf32>
    %16 = vector.shape_cast %15 : vector<16x16x4xf32> to vector<256x4xf32>
    %c1_28 = arith.constant 1 : index
    %c0_29 = arith.constant 0 : index
    %c0_30 = arith.constant 0 : index
    %17 = vector.load %arg11[%c1_28, %c0_29, %c0_30] : memref<18x18x4xf32, #tpu.memory_space<vmem>>, vector<16x16x4xf32>
    %18 = vector.shape_cast %17 : vector<16x16x4xf32> to vector<256x4xf32>
    %c1_31 = arith.constant 1 : index
    %c1_32 = arith.constant 1 : index
    %c0_33 = arith.constant 0 : index
    %19 = vector.load %arg11[%c1_31, %c1_32, %c0_33] : memref<18x18x4xf32, #tpu.memory_space<vmem>>, vector<16x16x4xf32>
    %20 = vector.shape_cast %19 : vector<16x16x4xf32> to vector<256x4xf32>
    %c1_34 = arith.constant 1 : index
    %c2_35 = arith.constant 2 : index
    %c0_36 = arith.constant 0 : index
    %21 = vector.load %arg11[%c1_34, %c2_35, %c0_36] : memref<18x18x4xf32, #tpu.memory_space<vmem>>, vector<16x16x4xf32>
    %22 = vector.shape_cast %21 : vector<16x16x4xf32> to vector<256x4xf32>
    %c2_37 = arith.constant 2 : index
    %c0_38 = arith.constant 0 : index
    %c0_39 = arith.constant 0 : index
    %23 = vector.load %arg11[%c2_37, %c0_38, %c0_39] : memref<18x18x4xf32, #tpu.memory_space<vmem>>, vector<16x16x4xf32>
    %24 = vector.shape_cast %23 : vector<16x16x4xf32> to vector<256x4xf32>
    %c2_40 = arith.constant 2 : index
    %c1_41 = arith.constant 1 : index
    %c0_42 = arith.constant 0 : index
    %25 = vector.load %arg11[%c2_40, %c1_41, %c0_42] : memref<18x18x4xf32, #tpu.memory_space<vmem>>, vector<16x16x4xf32>
    %26 = vector.shape_cast %25 : vector<16x16x4xf32> to vector<256x4xf32>
    %c2_43 = arith.constant 2 : index
    %c2_44 = arith.constant 2 : index
    %c0_45 = arith.constant 0 : index
    %27 = vector.load %arg11[%c2_43, %c2_44, %c0_45] : memref<18x18x4xf32, #tpu.memory_space<vmem>>, vector<16x16x4xf32>
    %28 = vector.shape_cast %27 : vector<16x16x4xf32> to vector<256x4xf32>
    %29 = tpu.concatenate %12, %14, %16, %18, %20, %22, %24, %26, %28 in 1 : vector<256x4xf32>, vector<256x4xf32>, vector<256x4xf32>, vector<256x4xf32>, vector<256x4xf32>, vector<256x4xf32>, vector<256x4xf32>, vector<256x4xf32>, vector<256x4xf32> -> vector<256x36xf32>
    %30 = arith.truncf %29 : vector<256x36xf32> to vector<256x36xbf16>
    %c0_46 = arith.constant 0 : index
    %c0_47 = arith.constant 0 : index
    %31 = vector.load %arg2[%c0_46, %c0_47] : memref<36x32xbf16, #tpu.memory_space<vmem>>, vector<36x32xbf16>
    %cst_48 = arith.constant dense<0.000000e+00> : vector<256x32xf32>
    %32 = tpu.matmul %30, %31, %cst_48 {dimension_numbers = #tpu.dot_dimension_numbers<[1], [0], [0], [1], [0, 0, 1, 1], [], []>} : vector<256x36xbf16>, vector<36x32xbf16>, vector<256x32xf32> -> vector<256x32xf32>
    %c0_49 = arith.constant 0 : index
    %c0_50 = arith.constant 0 : index
    %33 = vector.load %arg3[%c0_49, %c0_50] : memref<1x32xf32, #tpu.memory_space<vmem>>, vector<1x32xf32>
    %34 = vector.broadcast %33 : vector<1x32xf32> to vector<256x32xf32>
    %35 = arith.addf %32, %34 : vector<256x32xf32>
    %cst_51 = arith.constant 0.000000e+00 : f32
    %36 = vector.broadcast %cst_51 : f32 to vector<256x32xf32>
    %37 = arith.maximumf %35, %36 : vector<256x32xf32>
    %38 = vector.shape_cast %37 : vector<256x32xf32> to vector<16x16x32xf32>
    %c1_52 = arith.constant 1 : index
    %c1_53 = arith.constant 1 : index
    %c0_54 = arith.constant 0 : index
    %39 = vector.load %arg12[%c1_52, %c1_53, %c0_54] : memref<18x18x32xf32, #tpu.memory_space<vmem>>, vector<16x16x32xf32>
    tpu.vector_store %arg12[%c1_52, %c1_53, %c0_54], %38 {strides = array<i32>} : memref<18x18x32xf32, #tpu.memory_space<vmem>>, vector<16x16x32xf32>,
    %c0_55 = arith.constant 0 : index
    %c0_56 = arith.constant 0 : index
    %c0_57 = arith.constant 0 : index
    %40 = vector.load %arg12[%c0_55, %c0_56, %c0_57] : memref<18x18x32xf32, #tpu.memory_space<vmem>>, vector<16x16x32xf32>
    %41 = vector.shape_cast %40 : vector<16x16x32xf32> to vector<256x32xf32>
    %c0_58 = arith.constant 0 : index
    %c1_59 = arith.constant 1 : index
    %c0_60 = arith.constant 0 : index
    %42 = vector.load %arg12[%c0_58, %c1_59, %c0_60] : memref<18x18x32xf32, #tpu.memory_space<vmem>>, vector<16x16x32xf32>
    %43 = vector.shape_cast %42 : vector<16x16x32xf32> to vector<256x32xf32>
    %c0_61 = arith.constant 0 : index
    %c2_62 = arith.constant 2 : index
    %c0_63 = arith.constant 0 : index
    %44 = vector.load %arg12[%c0_61, %c2_62, %c0_63] : memref<18x18x32xf32, #tpu.memory_space<vmem>>, vector<16x16x32xf32>
    %45 = vector.shape_cast %44 : vector<16x16x32xf32> to vector<256x32xf32>
    %c1_64 = arith.constant 1 : index
    %c0_65 = arith.constant 0 : index
    %c0_66 = arith.constant 0 : index
    %46 = vector.load %arg12[%c1_64, %c0_65, %c0_66] : memref<18x18x32xf32, #tpu.memory_space<vmem>>, vector<16x16x32xf32>
    %47 = vector.shape_cast %46 : vector<16x16x32xf32> to vector<256x32xf32>
    %c1_67 = arith.constant 1 : index
    %c1_68 = arith.constant 1 : index
    %c0_69 = arith.constant 0 : index
    %48 = vector.load %arg12[%c1_67, %c1_68, %c0_69] : memref<18x18x32xf32, #tpu.memory_space<vmem>>, vector<16x16x32xf32>
    %49 = vector.shape_cast %48 : vector<16x16x32xf32> to vector<256x32xf32>
    %c1_70 = arith.constant 1 : index
    %c2_71 = arith.constant 2 : index
    %c0_72 = arith.constant 0 : index
    %50 = vector.load %arg12[%c1_70, %c2_71, %c0_72] : memref<18x18x32xf32, #tpu.memory_space<vmem>>, vector<16x16x32xf32>
    %51 = vector.shape_cast %50 : vector<16x16x32xf32> to vector<256x32xf32>
    %c2_73 = arith.constant 2 : index
    %c0_74 = arith.constant 0 : index
    %c0_75 = arith.constant 0 : index
    %52 = vector.load %arg12[%c2_73, %c0_74, %c0_75] : memref<18x18x32xf32, #tpu.memory_space<vmem>>, vector<16x16x32xf32>
    %53 = vector.shape_cast %52 : vector<16x16x32xf32> to vector<256x32xf32>
    %c2_76 = arith.constant 2 : index
    %c1_77 = arith.constant 1 : index
    %c0_78 = arith.constant 0 : index
    %54 = vector.load %arg12[%c2_76, %c1_77, %c0_78] : memref<18x18x32xf32, #tpu.memory_space<vmem>>, vector<16x16x32xf32>
    %55 = vector.shape_cast %54 : vector<16x16x32xf32> to vector<256x32xf32>
    %c2_79 = arith.constant 2 : index
    %c2_80 = arith.constant 2 : index
    %c0_81 = arith.constant 0 : index
    %56 = vector.load %arg12[%c2_79, %c2_80, %c0_81] : memref<18x18x32xf32, #tpu.memory_space<vmem>>, vector<16x16x32xf32>
    %57 = vector.shape_cast %56 : vector<16x16x32xf32> to vector<256x32xf32>
    %58 = tpu.concatenate %41, %43, %45, %47, %49, %51, %53, %55, %57 in 1 : vector<256x32xf32>, vector<256x32xf32>, vector<256x32xf32>, vector<256x32xf32>, vector<256x32xf32>, vector<256x32xf32>, vector<256x32xf32>, vector<256x32xf32>, vector<256x32xf32> -> vector<256x288xf32>
    %59 = arith.truncf %58 : vector<256x288xf32> to vector<256x288xbf16>
    %c0_82 = arith.constant 0 : index
    %c0_83 = arith.constant 0 : index
    %60 = vector.load %arg4[%c0_82, %c0_83] : memref<288x32xbf16, #tpu.memory_space<vmem>>, vector<288x32xbf16>
    %cst_84 = arith.constant dense<0.000000e+00> : vector<256x32xf32>
    %61 = tpu.matmul %59, %60, %cst_84 {dimension_numbers = #tpu.dot_dimension_numbers<[1], [0], [0], [1], [0, 0, 1, 1], [], []>} : vector<256x288xbf16>, vector<288x32xbf16>, vector<256x32xf32> -> vector<256x32xf32>
    %c0_85 = arith.constant 0 : index
    %c0_86 = arith.constant 0 : index
    %62 = vector.load %arg5[%c0_85, %c0_86] : memref<1x32xf32, #tpu.memory_space<vmem>>, vector<1x32xf32>
    %63 = vector.broadcast %62 : vector<1x32xf32> to vector<256x32xf32>
    %64 = arith.addf %61, %63 : vector<256x32xf32>
    %cst_87 = arith.constant 0.000000e+00 : f32
    %65 = vector.broadcast %cst_87 : f32 to vector<256x32xf32>
    %66 = arith.maximumf %64, %65 : vector<256x32xf32>
    %67 = vector.shape_cast %66 : vector<256x32xf32> to vector<16x16x32xf32>
    %68 = vector.shape_cast %67 : vector<16x16x32xf32> to vector<16x8x2x32xf32>
    %69 = vector.extract_strided_slice %68 {offsets = [0, 0, 0, 0], sizes = [16, 8, 1, 32], strides = [1, 1, 1, 1]} : vector<16x8x2x32xf32> to vector<16x8x1x32xf32>
    %70 = vector.shape_cast %69 : vector<16x8x1x32xf32> to vector<16x8x32xf32>
    %71 = vector.extract_strided_slice %68 {offsets = [0, 0, 1, 0], sizes = [16, 8, 1, 32], strides = [1, 1, 1, 1]} : vector<16x8x2x32xf32> to vector<16x8x1x32xf32>
    %72 = vector.shape_cast %71 : vector<16x8x1x32xf32> to vector<16x8x32xf32>
    %73 = arith.maximumf %70, %72 : vector<16x8x32xf32>
    %74 = vector.shape_cast %73 : vector<16x8x32xf32> to vector<8x2x8x32xf32>
    %75 = vector.extract_strided_slice %74 {offsets = [0, 0, 0, 0], sizes = [8, 1, 8, 32], strides = [1, 1, 1, 1]} : vector<8x2x8x32xf32> to vector<8x1x8x32xf32>
    %76 = vector.shape_cast %75 : vector<8x1x8x32xf32> to vector<8x8x32xf32>
    %77 = vector.extract_strided_slice %74 {offsets = [0, 1, 0, 0], sizes = [8, 1, 8, 32], strides = [1, 1, 1, 1]} : vector<8x2x8x32xf32> to vector<8x1x8x32xf32>
    %78 = vector.shape_cast %77 : vector<8x1x8x32xf32> to vector<8x8x32xf32>
    %79 = arith.maximumf %76, %78 : vector<8x8x32xf32>
    %c1_88 = arith.constant 1 : index
    %c1_89 = arith.constant 1 : index
    %c0_90 = arith.constant 0 : index
    %80 = vector.load %arg13[%c1_88, %c1_89, %c0_90] : memref<10x10x32xf32, #tpu.memory_space<vmem>>, vector<8x8x32xf32>
    tpu.vector_store %arg13[%c1_88, %c1_89, %c0_90], %79 {strides = array<i32>} : memref<10x10x32xf32, #tpu.memory_space<vmem>>, vector<8x8x32xf32>,
    %c0_91 = arith.constant 0 : index
    %c0_92 = arith.constant 0 : index
    %c0_93 = arith.constant 0 : index
    %81 = vector.load %arg13[%c0_91, %c0_92, %c0_93] : memref<10x10x32xf32, #tpu.memory_space<vmem>>, vector<8x8x32xf32>
    %82 = vector.shape_cast %81 : vector<8x8x32xf32> to vector<64x32xf32>
    %c0_94 = arith.constant 0 : index
    %c1_95 = arith.constant 1 : index
    %c0_96 = arith.constant 0 : index
    %83 = vector.load %arg13[%c0_94, %c1_95, %c0_96] : memref<10x10x32xf32, #tpu.memory_space<vmem>>, vector<8x8x32xf32>
    %84 = vector.shape_cast %83 : vector<8x8x32xf32> to vector<64x32xf32>
    %c0_97 = arith.constant 0 : index
    %c2_98 = arith.constant 2 : index
    %c0_99 = arith.constant 0 : index
    %85 = vector.load %arg13[%c0_97, %c2_98, %c0_99] : memref<10x10x32xf32, #tpu.memory_space<vmem>>, vector<8x8x32xf32>
    %86 = vector.shape_cast %85 : vector<8x8x32xf32> to vector<64x32xf32>
    %c1_100 = arith.constant 1 : index
    %c0_101 = arith.constant 0 : index
    %c0_102 = arith.constant 0 : index
    %87 = vector.load %arg13[%c1_100, %c0_101, %c0_102] : memref<10x10x32xf32, #tpu.memory_space<vmem>>, vector<8x8x32xf32>
    %88 = vector.shape_cast %87 : vector<8x8x32xf32> to vector<64x32xf32>
    %c1_103 = arith.constant 1 : index
    %c1_104 = arith.constant 1 : index
    %c0_105 = arith.constant 0 : index
    %89 = vector.load %arg13[%c1_103, %c1_104, %c0_105] : memref<10x10x32xf32, #tpu.memory_space<vmem>>, vector<8x8x32xf32>
    %90 = vector.shape_cast %89 : vector<8x8x32xf32> to vector<64x32xf32>
    %c1_106 = arith.constant 1 : index
    %c2_107 = arith.constant 2 : index
    %c0_108 = arith.constant 0 : index
    %91 = vector.load %arg13[%c1_106, %c2_107, %c0_108] : memref<10x10x32xf32, #tpu.memory_space<vmem>>, vector<8x8x32xf32>
    %92 = vector.shape_cast %91 : vector<8x8x32xf32> to vector<64x32xf32>
    %c2_109 = arith.constant 2 : index
    %c0_110 = arith.constant 0 : index
    %c0_111 = arith.constant 0 : index
    %93 = vector.load %arg13[%c2_109, %c0_110, %c0_111] : memref<10x10x32xf32, #tpu.memory_space<vmem>>, vector<8x8x32xf32>
    %94 = vector.shape_cast %93 : vector<8x8x32xf32> to vector<64x32xf32>
    %c2_112 = arith.constant 2 : index
    %c1_113 = arith.constant 1 : index
    %c0_114 = arith.constant 0 : index
    %95 = vector.load %arg13[%c2_112, %c1_113, %c0_114] : memref<10x10x32xf32, #tpu.memory_space<vmem>>, vector<8x8x32xf32>
    %96 = vector.shape_cast %95 : vector<8x8x32xf32> to vector<64x32xf32>
    %c2_115 = arith.constant 2 : index
    %c2_116 = arith.constant 2 : index
    %c0_117 = arith.constant 0 : index
    %97 = vector.load %arg13[%c2_115, %c2_116, %c0_117] : memref<10x10x32xf32, #tpu.memory_space<vmem>>, vector<8x8x32xf32>
    %98 = vector.shape_cast %97 : vector<8x8x32xf32> to vector<64x32xf32>
    %99 = tpu.concatenate %82, %84, %86, %88, %90, %92, %94, %96, %98 in 1 : vector<64x32xf32>, vector<64x32xf32>, vector<64x32xf32>, vector<64x32xf32>, vector<64x32xf32>, vector<64x32xf32>, vector<64x32xf32>, vector<64x32xf32>, vector<64x32xf32> -> vector<64x288xf32>
    %100 = arith.truncf %99 : vector<64x288xf32> to vector<64x288xbf16>
    %c0_118 = arith.constant 0 : index
    %c0_119 = arith.constant 0 : index
    %101 = vector.load %arg6[%c0_118, %c0_119] : memref<288x64xbf16, #tpu.memory_space<vmem>>, vector<288x64xbf16>
    %cst_120 = arith.constant dense<0.000000e+00> : vector<64x64xf32>
    %102 = tpu.matmul %100, %101, %cst_120 {dimension_numbers = #tpu.dot_dimension_numbers<[1], [0], [0], [1], [0, 0, 1, 1], [], []>} : vector<64x288xbf16>, vector<288x64xbf16>, vector<64x64xf32> -> vector<64x64xf32>
    %c0_121 = arith.constant 0 : index
    %c0_122 = arith.constant 0 : index
    %103 = vector.load %arg7[%c0_121, %c0_122] : memref<1x64xf32, #tpu.memory_space<vmem>>, vector<1x64xf32>
    %104 = vector.broadcast %103 : vector<1x64xf32> to vector<64x64xf32>
    %105 = arith.addf %102, %104 : vector<64x64xf32>
    %cst_123 = arith.constant 0.000000e+00 : f32
    %106 = vector.broadcast %cst_123 : f32 to vector<64x64xf32>
    %107 = arith.maximumf %105, %106 : vector<64x64xf32>
    %108 = vector.shape_cast %107 : vector<64x64xf32> to vector<8x8x64xf32>
    %c1_124 = arith.constant 1 : index
    %c1_125 = arith.constant 1 : index
    %c0_126 = arith.constant 0 : index
    %109 = vector.load %arg14[%c1_124, %c1_125, %c0_126] : memref<10x10x64xf32, #tpu.memory_space<vmem>>, vector<8x8x64xf32>
    tpu.vector_store %arg14[%c1_124, %c1_125, %c0_126], %108 {strides = array<i32>} : memref<10x10x64xf32, #tpu.memory_space<vmem>>, vector<8x8x64xf32>,
    %c0_127 = arith.constant 0 : index
    %c0_128 = arith.constant 0 : index
    %c0_129 = arith.constant 0 : index
    %110 = vector.load %arg14[%c0_127, %c0_128, %c0_129] : memref<10x10x64xf32, #tpu.memory_space<vmem>>, vector<8x8x64xf32>
    %111 = vector.shape_cast %110 : vector<8x8x64xf32> to vector<64x64xf32>
    %c0_130 = arith.constant 0 : index
    %c1_131 = arith.constant 1 : index
    %c0_132 = arith.constant 0 : index
    %112 = vector.load %arg14[%c0_130, %c1_131, %c0_132] : memref<10x10x64xf32, #tpu.memory_space<vmem>>, vector<8x8x64xf32>
    %113 = vector.shape_cast %112 : vector<8x8x64xf32> to vector<64x64xf32>
    %c0_133 = arith.constant 0 : index
    %c2_134 = arith.constant 2 : index
    %c0_135 = arith.constant 0 : index
    %114 = vector.load %arg14[%c0_133, %c2_134, %c0_135] : memref<10x10x64xf32, #tpu.memory_space<vmem>>, vector<8x8x64xf32>
    %115 = vector.shape_cast %114 : vector<8x8x64xf32> to vector<64x64xf32>
    %c1_136 = arith.constant 1 : index
    %c0_137 = arith.constant 0 : index
    %c0_138 = arith.constant 0 : index
    %116 = vector.load %arg14[%c1_136, %c0_137, %c0_138] : memref<10x10x64xf32, #tpu.memory_space<vmem>>, vector<8x8x64xf32>
    %117 = vector.shape_cast %116 : vector<8x8x64xf32> to vector<64x64xf32>
    %c1_139 = arith.constant 1 : index
    %c1_140 = arith.constant 1 : index
    %c0_141 = arith.constant 0 : index
    %118 = vector.load %arg14[%c1_139, %c1_140, %c0_141] : memref<10x10x64xf32, #tpu.memory_space<vmem>>, vector<8x8x64xf32>
    %119 = vector.shape_cast %118 : vector<8x8x64xf32> to vector<64x64xf32>
    %c1_142 = arith.constant 1 : index
    %c2_143 = arith.constant 2 : index
    %c0_144 = arith.constant 0 : index
    %120 = vector.load %arg14[%c1_142, %c2_143, %c0_144] : memref<10x10x64xf32, #tpu.memory_space<vmem>>, vector<8x8x64xf32>
    %121 = vector.shape_cast %120 : vector<8x8x64xf32> to vector<64x64xf32>
    %c2_145 = arith.constant 2 : index
    %c0_146 = arith.constant 0 : index
    %c0_147 = arith.constant 0 : index
    %122 = vector.load %arg14[%c2_145, %c0_146, %c0_147] : memref<10x10x64xf32, #tpu.memory_space<vmem>>, vector<8x8x64xf32>
    %123 = vector.shape_cast %122 : vector<8x8x64xf32> to vector<64x64xf32>
    %c2_148 = arith.constant 2 : index
    %c1_149 = arith.constant 1 : index
    %c0_150 = arith.constant 0 : index
    %124 = vector.load %arg14[%c2_148, %c1_149, %c0_150] : memref<10x10x64xf32, #tpu.memory_space<vmem>>, vector<8x8x64xf32>
    %125 = vector.shape_cast %124 : vector<8x8x64xf32> to vector<64x64xf32>
    %c2_151 = arith.constant 2 : index
    %c2_152 = arith.constant 2 : index
    %c0_153 = arith.constant 0 : index
    %126 = vector.load %arg14[%c2_151, %c2_152, %c0_153] : memref<10x10x64xf32, #tpu.memory_space<vmem>>, vector<8x8x64xf32>
    %127 = vector.shape_cast %126 : vector<8x8x64xf32> to vector<64x64xf32>
    %128 = tpu.concatenate %111, %113, %115, %117, %119, %121, %123, %125, %127 in 1 : vector<64x64xf32>, vector<64x64xf32>, vector<64x64xf32>, vector<64x64xf32>, vector<64x64xf32>, vector<64x64xf32>, vector<64x64xf32>, vector<64x64xf32>, vector<64x64xf32> -> vector<64x576xf32>
    %129 = arith.truncf %128 : vector<64x576xf32> to vector<64x576xbf16>
    %c0_154 = arith.constant 0 : index
    %c0_155 = arith.constant 0 : index
    %130 = vector.load %arg8[%c0_154, %c0_155] : memref<576x64xbf16, #tpu.memory_space<vmem>>, vector<576x64xbf16>
    %cst_156 = arith.constant dense<0.000000e+00> : vector<64x64xf32>
    %131 = tpu.matmul %129, %130, %cst_156 {dimension_numbers = #tpu.dot_dimension_numbers<[1], [0], [0], [1], [0, 0, 1, 1], [], []>} : vector<64x576xbf16>, vector<576x64xbf16>, vector<64x64xf32> -> vector<64x64xf32>
    %c0_157 = arith.constant 0 : index
    %c0_158 = arith.constant 0 : index
    %132 = vector.load %arg9[%c0_157, %c0_158] : memref<1x64xf32, #tpu.memory_space<vmem>>, vector<1x64xf32>
    %133 = vector.broadcast %132 : vector<1x64xf32> to vector<64x64xf32>
    %134 = arith.addf %131, %133 : vector<64x64xf32>
    %cst_159 = arith.constant 0.000000e+00 : f32
    %135 = vector.broadcast %cst_159 : f32 to vector<64x64xf32>
    %136 = arith.maximumf %134, %135 : vector<64x64xf32>
    %137 = vector.shape_cast %136 : vector<64x64xf32> to vector<8x8x64xf32>
    %138 = vector.shape_cast %137 : vector<8x8x64xf32> to vector<8x4x2x64xf32>
    %139 = vector.extract_strided_slice %138 {offsets = [0, 0, 0, 0], sizes = [8, 4, 1, 64], strides = [1, 1, 1, 1]} : vector<8x4x2x64xf32> to vector<8x4x1x64xf32>
    %140 = vector.shape_cast %139 : vector<8x4x1x64xf32> to vector<8x4x64xf32>
    %141 = vector.extract_strided_slice %138 {offsets = [0, 0, 1, 0], sizes = [8, 4, 1, 64], strides = [1, 1, 1, 1]} : vector<8x4x2x64xf32> to vector<8x4x1x64xf32>
    %142 = vector.shape_cast %141 : vector<8x4x1x64xf32> to vector<8x4x64xf32>
    %143 = arith.maximumf %140, %142 : vector<8x4x64xf32>
    %144 = vector.shape_cast %143 : vector<8x4x64xf32> to vector<4x2x4x64xf32>
    %145 = vector.extract_strided_slice %144 {offsets = [0, 0, 0, 0], sizes = [4, 1, 4, 64], strides = [1, 1, 1, 1]} : vector<4x2x4x64xf32> to vector<4x1x4x64xf32>
    %146 = vector.shape_cast %145 : vector<4x1x4x64xf32> to vector<4x4x64xf32>
    %147 = vector.extract_strided_slice %144 {offsets = [0, 1, 0, 0], sizes = [4, 1, 4, 64], strides = [1, 1, 1, 1]} : vector<4x2x4x64xf32> to vector<4x1x4x64xf32>
    %148 = vector.shape_cast %147 : vector<4x1x4x64xf32> to vector<4x4x64xf32>
    %149 = arith.maximumf %146, %148 : vector<4x4x64xf32>
    %150 = vector.shape_cast %149 : vector<4x4x64xf32> to vector<4x256xf32>
    %c0_160 = arith.constant 0 : index
    %c0_161 = arith.constant 0 : index
    %c0_162 = arith.constant 0 : index
    %151 = vector.load %arg10[%c0_160, %c0_161, %c0_162] : memref<1x4x256xf32, #tpu.memory_space<vmem>>, vector<1x4x256xf32>
    %152 = vector.shape_cast %151 : vector<1x4x256xf32> to vector<4x256xf32>
    %153 = vector.shape_cast %150 : vector<4x256xf32> to vector<1x4x256xf32>
    tpu.vector_store %arg10[%c0_160, %c0_161, %c0_162], %153 {strides = array<i32>} : memref<1x4x256xf32, #tpu.memory_space<vmem>>, vector<1x4x256xf32>,
    return
  }
  func.func @transform_0(%arg0: i32) -> (i32, i32, i32, i32) {
    %c0_i32 = arith.constant 0 : i32
    %c0_i32_0 = arith.constant 0 : i32
    %c0_i32_1 = arith.constant 0 : i32
    %c0_i32_2 = arith.constant 0 : i32
    return %arg0, %c0_i32, %c0_i32_0, %c0_i32_1 : i32, i32, i32, i32
  }
  func.func @transform_1(%arg0: i32) -> (i32, i32) {
    %c0_i32 = arith.constant 0 : i32
    %c0_i32_0 = arith.constant 0 : i32
    %c0_i32_1 = arith.constant 0 : i32
    return %c0_i32, %c0_i32_0 : i32, i32
  }
  func.func @transform_2(%arg0: i32) -> (i32, i32) {
    %c0_i32 = arith.constant 0 : i32
    %c0_i32_0 = arith.constant 0 : i32
    %c0_i32_1 = arith.constant 0 : i32
    return %c0_i32, %c0_i32_0 : i32, i32
  }
  func.func @transform_3(%arg0: i32) -> (i32, i32) {
    %c0_i32 = arith.constant 0 : i32
    %c0_i32_0 = arith.constant 0 : i32
    %c0_i32_1 = arith.constant 0 : i32
    return %c0_i32, %c0_i32_0 : i32, i32
  }
  func.func @transform_4(%arg0: i32) -> (i32, i32) {
    %c0_i32 = arith.constant 0 : i32
    %c0_i32_0 = arith.constant 0 : i32
    %c0_i32_1 = arith.constant 0 : i32
    return %c0_i32, %c0_i32_0 : i32, i32
  }
  func.func @transform_5(%arg0: i32) -> (i32, i32) {
    %c0_i32 = arith.constant 0 : i32
    %c0_i32_0 = arith.constant 0 : i32
    %c0_i32_1 = arith.constant 0 : i32
    return %c0_i32, %c0_i32_0 : i32, i32
  }
  func.func @transform_6(%arg0: i32) -> (i32, i32) {
    %c0_i32 = arith.constant 0 : i32
    %c0_i32_0 = arith.constant 0 : i32
    %c0_i32_1 = arith.constant 0 : i32
    return %c0_i32, %c0_i32_0 : i32, i32
  }
  func.func @transform_7(%arg0: i32) -> (i32, i32) {
    %c0_i32 = arith.constant 0 : i32
    %c0_i32_0 = arith.constant 0 : i32
    %c0_i32_1 = arith.constant 0 : i32
    return %c0_i32, %c0_i32_0 : i32, i32
  }
  func.func @transform_8(%arg0: i32) -> (i32, i32) {
    %c0_i32 = arith.constant 0 : i32
    %c0_i32_0 = arith.constant 0 : i32
    %c0_i32_1 = arith.constant 0 : i32
    return %c0_i32, %c0_i32_0 : i32, i32
  }
  func.func @transform_9(%arg0: i32) -> (i32, i32, i32) {
    %c0_i32 = arith.constant 0 : i32
    %c0_i32_0 = arith.constant 0 : i32
    %c0_i32_1 = arith.constant 0 : i32
    return %arg0, %c0_i32, %c0_i32_0 : i32, i32, i32
  }
}

</mosaic_0001>

<llo_original>
// kernel: base_conv_forward.1
$region0: #{base_conv_forward.1}
  #allocation0 [shape = 'u32[]', space=smem, size = 0x4, offset = 0x4, fixed_abs, tag = 'smem constant byte address 0x4 - core index']
  #allocation1 [shape = 'u32[144,128]{1,0:T(1,128)}', space=vmem, size = 0x12000, scoped, tag = 'internal scratch']
  #allocation2 [shape = 'f32[18,18,4]{2,1,0:T(8,128)}', space=vmem, size = 0x36000, scoped, tag = 'scratch operand']
  #allocation3 [shape = 'f32[18,18,32]{2,1,0:T(8,128)}', space=vmem, size = 0x36000, scoped, tag = 'scratch operand']
  #allocation4 [shape = 'f32[10,10,32]{2,1,0:T(8,128)}', space=vmem, size = 0x14000, scoped, tag = 'scratch operand']
  #allocation5 [shape = 'f32[10,10,64]{2,1,0:T(8,128)}', space=vmem, size = 0x14000, scoped, tag = 'scratch operand']
  %s0 = inlined_call_operand.vmem [shape: f32[2,16,16,4], index: 0, kind: input, shape index: {}]
  %s1 = inlined_call_operand.vmem [shape: bf16[36,32], index: 1, kind: input, shape index: {}]
  %s2 = inlined_call_operand.vmem [shape: f32[1,32], index: 2, kind: input, shape index: {}]
  %s3 = inlined_call_operand.vmem [shape: bf16[288,32], index: 3, kind: input, shape index: {}]
  %s4 = inlined_call_operand.vmem [shape: f32[1,32], index: 4, kind: input, shape index: {}]
  %s5 = inlined_call_operand.vmem [shape: bf16[288,64], index: 5, kind: input, shape index: {}]
  %s6 = inlined_call_operand.vmem [shape: f32[1,64], index: 6, kind: input, shape index: {}]
  %s7 = inlined_call_operand.vmem [shape: bf16[576,64], index: 7, kind: input, shape index: {}]
  %s8 = inlined_call_operand.vmem [shape: f32[1,64], index: 8, kind: input, shape index: {}]
  %s9 = inlined_call_operand.vmem [shape: f32[2,4,256], index: 9, kind: output, shape index: {}]
  %s10 = sld [smem:[#allocation0]]
  $region69: #{base_conv_forward.1} parent=0
    _
  %s12 = ssub.s32 1, %s10
  %s13 = scalar_select 0, %s12, %s10
  loop: start=0, step=1, limit=4
  $region2: #{base_conv_forward.1} parent=0 // loop_pre_header
    _
  $region3: #{base_conv_forward.1} parent=0 // loop_header
    %s15 = sphi 0, %s19
    %p16 = scmp.ge.s32.totalorder %s15, 4
    %s25 = sphi 0, %s27
    %s28 = sphi 0, %s25
    %s29 = sphi 0, %s28
    %s45 = sphi 0, %s29
    %s49 = sphi 0, %s49
    %s51 = sphi 0, %s49
    %s52 = sphi 0, %s51
    %s66 = sphi 0, %s52
    %s70 = sphi 0, %s70
    %s72 = sphi 0, %s70
    %s73 = sphi 0, %s72
    %s87 = sphi 0, %s73
    %s91 = sphi 0, %s91
    %s93 = sphi 0, %s91
    %s94 = sphi 0, %s93
    %s108 = sphi 0, %s94
    %s112 = sphi 0, %s112
    %s114 = sphi 0, %s112
    %s115 = sphi 0, %s114
    %s129 = sphi 0, %s115
    %s133 = sphi 0, %s133
    %s135 = sphi 0, %s133
    %s136 = sphi 0, %s135
    %s150 = sphi 0, %s136
    %s154 = sphi 0, %s154
    %s156 = sphi 0, %s154
    %s157 = sphi 0, %s156
    %s171 = sphi 0, %s157
    %s175 = sphi 0, %s175
    %s177 = sphi 0, %s175
    %s178 = sphi 0, %s177
    %s192 = sphi 0, %s178
    %s196 = sphi 0, %s196
    %s198 = sphi 0, %s196
    %s199 = sphi 0, %s198
    %s213 = sphi 0, %s199
    %s219 = sphi 0, %s221
    %s222 = sphi 0, %s219
    %s223 = sphi 0, %s222
    %s239 = sphi 0, %s223
  $region4: #{base_conv_forward.1} parent=0 // loop_header_branch
    %18 = sbr.rel (%p16) target = $region8
  $region5: #{base_conv_forward.1} parent=0 // loop_body
    %s20 = ssub.s32 %s15, 1
    %s21 = ssub.s32 %s15, 2
    %s22 = sadd.s32 %s15, 1
    %s23 = ssub.s32 %s15, %s22
    %p24 = scmp.eq.s32.totalorder %s23, 0
    %s26 = sadd.s32 %s25, 1
    %s27 = scalar_select %p24, %s25, %s26
    %p30 = pneg %p24
    %p31 = scmp.eq.s32.totalorder %s15, 1
    %p32 = por %p30, %p31
    %p33 = scmp.ne.s32.totalorder %s25, %s28
    %p34 = scmp.eq.s32.totalorder %s15, 0
    %p35 = por %p33, %p34
    %p36 = scmp.ne.s32.totalorder %s25, %s28
    %p37 = scmp.eq.s32.totalorder %s20, 1
    %p38 = por %p36, %p37
    %p39 = scmp.ne.s32.totalorder %s28, %s29
    %p40 = scmp.eq.s32.totalorder %s20, 0
    %p41 = por %p39, %p40
    %p42 = scmp.ne.s32.totalorder %s28, %s29
    %p43 = scmp.eq.s32.totalorder %s21, 1
    %p44 = por %p42, %p43
    %p46 = scmp.ne.s32.totalorder %s29, %s45
    %p47 = scmp.eq.s32.totalorder %s21, 0
    %p48 = por %p46, %p47
    %s50 = sadd.s32 %s49, 1
    %p53 = scmp.eq.s32.totalorder %s15, 1
    %p54 = scmp.ne.s32.totalorder %s49, %s51
    %p55 = scmp.eq.s32.totalorder %s15, 0
    %p56 = por %p54, %p55
    %p57 = scmp.ne.s32.totalorder %s49, %s51
    %p58 = scmp.eq.s32.totalorder %s20, 1
    %p59 = por %p57, %p58
    %p60 = scmp.ne.s32.totalorder %s51, %s52
    %p61 = scmp.eq.s32.totalorder %s20, 0
    %p62 = por %p60, %p61
    %p63 = scmp.ne.s32.totalorder %s51, %s52
    %p64 = scmp.eq.s32.totalorder %s21, 1
    %p65 = por %p63, %p64
    %p67 = scmp.ne.s32.totalorder %s52, %s66
    %p68 = scmp.eq.s32.totalorder %s21, 0
    %p69 = por %p67, %p68
    %s71 = sadd.s32 %s70, 1
    %p74 = scmp.eq.s32.totalorder %s15, 1
    %p75 = scmp.ne.s32.totalorder %s70, %s72
    %p76 = scmp.eq.s32.totalorder %s15, 0
    %p77 = por %p75, %p76
    %p78 = scmp.ne.s32.totalorder %s70, %s72
    %p79 = scmp.eq.s32.totalorder %s20, 1
    %p80 = por %p78, %p79
    %p81 = scmp.ne.s32.totalorder %s72, %s73
    %p82 = scmp.eq.s32.totalorder %s20, 0
    %p83 = por %p81, %p82
    %p84 = scmp.ne.s32.totalorder %s72, %s73
    %p85 = scmp.eq.s32.totalorder %s21, 1
    %p86 = por %p84, %p85
    %p88 = scmp.ne.s32.totalorder %s73, %s87
    %p89 = scmp.eq.s32.totalorder %s21, 0
    %p90 = por %p88, %p89
    %s92 = sadd.s32 %s91, 1
    %p95 = scmp.eq.s32.totalorder %s15, 1
    %p96 = scmp.ne.s32.totalorder %s91, %s93
    %p97 = scmp.eq.s32.totalorder %s15, 0
    %p98 = por %p96, %p97
    %p99 = scmp.ne.s32.totalorder %s91, %s93
    %p100 = scmp.eq.s32.totalorder %s20, 1
    %p101 = por %p99, %p100
    %p102 = scmp.ne.s32.totalorder %s93, %s94
    %p103 = scmp.eq.s32.totalorder %s20, 0
    %p104 = por %p102, %p103
    %p105 = scmp.ne.s32.totalorder %s93, %s94
    %p106 = scmp.eq.s32.totalorder %s21, 1
    %p107 = por %p105, %p106
    %p109 = scmp.ne.s32.totalorder %s94, %s108
    %p110 = scmp.eq.s32.totalorder %s21, 0
    %p111 = por %p109, %p110
    %s113 = sadd.s32 %s112, 1
    %p116 = scmp.eq.s32.totalorder %s15, 1
    %p117 = scmp.ne.s32.totalorder %s112, %s114
    %p118 = scmp.eq.s32.totalorder %s15, 0
    %p119 = por %p117, %p118
    %p120 = scmp.ne.s32.totalorder %s112, %s114
    %p121 = scmp.eq.s32.totalorder %s20, 1
    %p122 = por %p120, %p121
    %p123 = scmp.ne.s32.totalorder %s114, %s115
    %p124 = scmp.eq.s32.totalorder %s20, 0
    %p125 = por %p123, %p124
    %p126 = scmp.ne.s32.totalorder %s114, %s115
    %p127 = scmp.eq.s32.totalorder %s21, 1
    %p128 = por %p126, %p127
    %p130 = scmp.ne.s32.totalorder %s115, %s129
    %p131 = scmp.eq.s32.totalorder %s21, 0
    %p132 = por %p130, %p131
    %s134 = sadd.s32 %s133, 1
    %p137 = scmp.eq.s32.totalorder %s15, 1
    %p138 = scmp.ne.s32.totalorder %s133, %s135
    %p139 = scmp.eq.s32.totalorder %s15, 0
    %p140 = por %p138, %p139
    %p141 = scmp.ne.s32.totalorder %s133, %s135
    %p142 = scmp.eq.s32.totalorder %s20, 1
    %p143 = por %p141, %p142
    %p144 = scmp.ne.s32.totalorder %s135, %s136
    %p145 = scmp.eq.s32.totalorder %s20, 0
    %p146 = por %p144, %p145
    %p147 = scmp.ne.s32.totalorder %s135, %s136
    %p148 = scmp.eq.s32.totalorder %s21, 1
    %p149 = por %p147, %p148
    %p151 = scmp.ne.s32.totalorder %s136, %s150
    %p152 = scmp.eq.s32.totalorder %s21, 0
    %p153 = por %p151, %p152
    %s155 = sadd.s32 %s154, 1
    %p158 = scmp.eq.s32.totalorder %s15, 1
    %p159 = scmp.ne.s32.totalorder %s154, %s156
    %p160 = scmp.eq.s32.totalorder %s15, 0
    %p161 = por %p159, %p160
    %p162 = scmp.ne.s32.totalorder %s154, %s156
    %p163 = scmp.eq.s32.totalorder %s20, 1
    %p164 = por %p162, %p163
    %p165 = scmp.ne.s32.totalorder %s156, %s157
    %p166 = scmp.eq.s32.totalorder %s20, 0
    %p167 = por %p165, %p166
    %p168 = scmp.ne.s32.totalorder %s156, %s157
    %p169 = scmp.eq.s32.totalorder %s21, 1
    %p170 = por %p168, %p169
    %p172 = scmp.ne.s32.totalorder %s157, %s171
    %p173 = scmp.eq.s32.totalorder %s21, 0
    %p174 = por %p172, %p173
    %s176 = sadd.s32 %s175, 1
    %p179 = scmp.eq.s32.totalorder %s15, 1
    %p180 = scmp.ne.s32.totalorder %s175, %s177
    %p181 = scmp.eq.s32.totalorder %s15, 0
    %p182 = por %p180, %p181
    %p183 = scmp.ne.s32.totalorder %s175, %s177
    %p184 = scmp.eq.s32.totalorder %s20, 1
    %p185 = por %p183, %p184
    %p186 = scmp.ne.s32.totalorder %s177, %s178
    %p187 = scmp.eq.s32.totalorder %s20, 0
    %p188 = por %p186, %p187
    %p189 = scmp.ne.s32.totalorder %s177, %s178
    %p190 = scmp.eq.s32.totalorder %s21, 1
    %p191 = por %p189, %p190
    %p193 = scmp.ne.s32.totalorder %s178, %s192
    %p194 = scmp.eq.s32.totalorder %s21, 0
    %p195 = por %p193, %p194
    %s197 = sadd.s32 %s196, 1
    %p200 = scmp.eq.s32.totalorder %s15, 1
    %p201 = scmp.ne.s32.totalorder %s196, %s198
    %p202 = scmp.eq.s32.totalorder %s15, 0
    %p203 = por %p201, %p202
    %p204 = scmp.ne.s32.totalorder %s196, %s198
    %p205 = scmp.eq.s32.totalorder %s20, 1
    %p206 = por %p204, %p205
    %p207 = scmp.ne.s32.totalorder %s198, %s199
    %p208 = scmp.eq.s32.totalorder %s20, 0
    %p209 = por %p207, %p208
    %p210 = scmp.ne.s32.totalorder %s198, %s199
    %p211 = scmp.eq.s32.totalorder %s21, 1
    %p212 = por %p210, %p211
    %p214 = scmp.ne.s32.totalorder %s199, %s213
    %p215 = scmp.eq.s32.totalorder %s21, 0
    %p216 = por %p214, %p215
    %s217 = ssub.s32 %s15, %s22
    %p218 = scmp.eq.s32.totalorder %s217, 0
    %s220 = sadd.s32 %s219, 1
    %s221 = scalar_select %p218, %s219, %s220
    %p224 = pneg %p218
    %p225 = scmp.eq.s32.totalorder %s15, 1
    %p226 = por %p224, %p225
    %p227 = scmp.ne.s32.totalorder %s219, %s222
    %p228 = scmp.eq.s32.totalorder %s15, 0
    %p229 = por %p227, %p228
    %p230 = scmp.ne.s32.totalorder %s219, %s222
    %p231 = scmp.eq.s32.totalorder %s20, 1
    %p232 = por %p230, %p231
    %p233 = scmp.ne.s32.totalorder %s222, %s223
    %p234 = scmp.eq.s32.totalorder %s20, 0
    %p235 = por %p233, %p234
    %p236 = scmp.ne.s32.totalorder %s222, %s223
    %p237 = scmp.eq.s32.totalorder %s21, 1
    %p238 = por %p236, %p237
    %p240 = scmp.ne.s32.totalorder %s223, %s239
    %p241 = scmp.eq.s32.totalorder %s21, 0
    %p242 = por %p240, %p241
    %p243 = scmp.le.s32.totalorder 1, %s15
    %p244 = scmp.lt.s32.totalorder %s15, 3
    %p245 = pnand %p243, %p244
    %p246 = pneg %p245
    // Predicated region
    $region9: #{base_conv_forward.1} parent=5 // pred_check
      _
    $region10: #{base_conv_forward.1} parent=5 // pred_check_branch
      %248 = sbr.rel (%p245) target = $region12
    $region11: #{base_conv_forward.1} parent=5 // pred_region
      %s249 = ssub.s32 %s15, 1
      // Predicated region
      $region13: #{base_conv_forward.1} parent=11 // pred_check
        %p250 = pneg %p62
      $region14: #{base_conv_forward.1} parent=11 // pred_check_branch
        %252 = sbr.rel (%p250) target = $region16
      $region15: #{base_conv_forward.1} parent=11 // pred_region
        _
      $region16: #{base_conv_forward.1} parent=11 // pred_fallthru
        _
      // Predicated region
      $region17: #{base_conv_forward.1} parent=11 // pred_check
        %p253 = pneg %p83
      $region18: #{base_conv_forward.1} parent=11 // pred_check_branch
        %255 = sbr.rel (%p253) target = $region20
      $region19: #{base_conv_forward.1} parent=11 // pred_region
        _
      $region20: #{base_conv_forward.1} parent=11 // pred_fallthru
        _
      // Predicated region
      $region21: #{base_conv_forward.1} parent=11 // pred_check
        %p256 = pneg %p104
      $region22: #{base_conv_forward.1} parent=11 // pred_check_branch
        %258 = sbr.rel (%p256) target = $region24
      $region23: #{base_conv_forward.1} parent=11 // pred_region
        _
      $region24: #{base_conv_forward.1} parent=11 // pred_fallthru
        _
      // Predicated region
      $region25: #{base_conv_forward.1} parent=11 // pred_check
        %p259 = pneg %p125
      $region26: #{base_conv_forward.1} parent=11 // pred_check_branch
        %261 = sbr.rel (%p259) target = $region28
      $region27: #{base_conv_forward.1} parent=11 // pred_region
        _
      $region28: #{base_conv_forward.1} parent=11 // pred_fallthru
        _
      // Predicated region
      $region29: #{base_conv_forward.1} parent=11 // pred_check
        %p262 = pneg %p146
      $region30: #{base_conv_forward.1} parent=11 // pred_check_branch
        %264 = sbr.rel (%p262) target = $region32
      $region31: #{base_conv_forward.1} parent=11 // pred_region
        _
      $region32: #{base_conv_forward.1} parent=11 // pred_fallthru
        _
      // Predicated region
      $region33: #{base_conv_forward.1} parent=11 // pred_check
        %p265 = pneg %p167
      $region34: #{base_conv_forward.1} parent=11 // pred_check_branch
        %267 = sbr.rel (%p265) target = $region36
      $region35: #{base_conv_forward.1} parent=11 // pred_region
        _
      $region36: #{base_conv_forward.1} parent=11 // pred_fallthru
        _
      // Predicated region
      $region37: #{base_conv_forward.1} parent=11 // pred_check
        %p268 = pneg %p188
      $region38: #{base_conv_forward.1} parent=11 // pred_check_branch
        %270 = sbr.rel (%p268) target = $region40
      $region39: #{base_conv_forward.1} parent=11 // pred_region
        _
      $region40: #{base_conv_forward.1} parent=11 // pred_fallthru
        _
      // Predicated region
      $region41: #{base_conv_forward.1} parent=11 // pred_check
        %p271 = pneg %p209
      $region42: #{base_conv_forward.1} parent=11 // pred_check_branch
        %273 = sbr.rel (%p271) target = $region44
      $region43: #{base_conv_forward.1} parent=11 // pred_region
        _
      $region44: #{base_conv_forward.1} parent=11 // pred_fallthru
        _
    $region12: #{base_conv_forward.1} parent=5 // pred_fallthru
      _
    %p274 = scmp.lt.s32.totalorder %s15, 2
    // Predicated region
    $region45: #{base_conv_forward.1} parent=5 // pred_check
      %p275 = pneg %p274
    $region46: #{base_conv_forward.1} parent=5 // pred_check_branch
      %277 = sbr.rel (%p275) target = $region48
    $region47: #{base_conv_forward.1} parent=5 // pred_region
      // Predicated region
      $region49: #{base_conv_forward.1} parent=47 // pred_check
        %p278 = pneg %p35
      $region50: #{base_conv_forward.1} parent=47 // pred_check_branch
        %280 = sbr.rel (%p278) target = $region52
      $region51: #{base_conv_forward.1} parent=47 // pred_region
        %p281 = scmp.lt.s32.totalorder %s15, 1
        %s282 = scalar_select %p281, %s15, 1
        %s283 = smul.addr %s282, 32
        %s284 = smul.addr %s283, 8
        %s285 = scalar_lea.vmem %s0, %s284
      $region52: #{base_conv_forward.1} parent=47 // pred_fallthru
        _
    $region48: #{base_conv_forward.1} parent=5 // pred_fallthru
      _
    %p286 = scmp.le.s32.totalorder 1, %s15
    %p287 = scmp.lt.s32.totalorder %s15, 3
    %p288 = pnand %p286, %p287
    %p289 = pneg %p288
    // Predicated region
    $region53: #{base_conv_forward.1} parent=5 // pred_check
      _
    $region54: #{base_conv_forward.1} parent=5 // pred_check_branch
      %291 = sbr.rel (%p288) target = $region56
    $region55: #{base_conv_forward.1} parent=5 // pred_region
      %s292 = ssub.s32 %s15, 1
      %p293 = scmp.lt.s32.totalorder %s20, 1
      %s294 = scalar_select %p293, %s20, 1
      %s295 = smul.addr %s294, 32
      %s296 = smul.addr %s295, 8
      %s297 = scalar_lea.vmem %s0, %s296
      %p298 = pneg %p41
      %p299 = pneg %p38
      %p300 = pneg %p62
      %p301 = pneg %p59
      %p302 = pneg %p83
      %p303 = pneg %p80
      %p304 = pneg %p104
      %p305 = pneg %p101
      %p306 = pneg %p125
      %p307 = pneg %p122
      %p308 = pneg %p146
      %p309 = pneg %p143
      %p310 = pneg %p167
      %p311 = pneg %p164
      %p312 = pneg %p188
      %p313 = pneg %p185
      %p314 = pneg %p209
      %p315 = pneg %p206
      %p316 = pneg %p235
      %p317 = pneg %p232
      %p318 = scmp.lt.s32.totalorder %s20, 1
      %s319 = scalar_select %p318, %s20, 1
      %s320 = smul.addr %s319, 2
      %s321 = smul.addr %s320, 4
      %s322 = scalar_lea.vmem %s9, %s321
      %p323 = scmp.lt.s32.totalorder %s20, 1
      %s324 = scalar_select %p323, %s20, 1
      %s325 = smul.addr %s324, 32
      %s326 = smul.addr %s325, 8
      %s327 = scalar_lea.vmem %s0, %s326
      %p328 = scmp.lt.s32.totalorder %s20, 1
      %s329 = scalar_select %p328, %s20, 1
      %s330 = smul.addr %s329, 2
      %s331 = smul.addr %s330, 4
      %s332 = scalar_lea.vmem %s9, %s331
      %vm334 = vcmask 31744
      %335 = vst.msk [vmem:[#allocation2] sm:$0xff] %vm334, 0.0
      %336 = vst.msk [vmem:[#allocation2 + $0x8] sm:$0xff] %vm334, 0.0
      %vm337 = vcmask 25600
      %338 = vst.msk [vmem:[#allocation2 + $0x10] sm:$0x3] %vm337, 0.0
      %339 = vst.msk [vmem:[#allocation2 + $0x18] sm:$0xff] %vm334, 0.0
      %340 = vst.msk [vmem:[#allocation2 + $0x20] sm:$0xff] %vm334, 0.0
      %341 = vst.msk [vmem:[#allocation2 + $0x28] sm:$0x3] %vm337, 0.0
      %342 = vst.msk [vmem:[#allocation2 + $0x30] sm:$0xff] %vm334, 0.0
      %343 = vst.msk [vmem:[#allocation2 + $0x38] sm:$0xff] %vm334, 0.0
      %344 = vst.msk [vmem:[#allocation2 + $0x40] sm:$0x3] %vm337, 0.0
      %345 = vst.msk [vmem:[#allocation2 + $0x48] sm:$0xff] %vm334, 0.0
      %346 = vst.msk [vmem:[#allocation2 + $0x50] sm:$0xff] %vm334, 0.0
      %347 = vst.msk [vmem:[#allocation2 + $0x58] sm:$0x3] %vm337, 0.0
      %348 = vst.msk [vmem:[#allocation2 + $0x60] sm:$0xff] %vm334, 0.0
      %349 = vst.msk [vmem:[#allocation2 + $0x68] sm:$0xff] %vm334, 0.0
      %350 = vst.msk [vmem:[#allocation2 + $0x70] sm:$0x3] %vm337, 0.0
      %351 = vst.msk [vmem:[#allocation2 + $0x78] sm:$0xff] %vm334, 0.0
      %352 = vst.msk [vmem:[#allocation2 + $0x80] sm:$0xff] %vm334, 0.0
      %353 = vst.msk [vmem:[#allocation2 + $0x88] sm:$0x3] %vm337, 0.0
      %354 = vst.msk [vmem:[#allocation2 + $0x90] sm:$0xff] %vm334, 0.0
      %355 = vst.msk [vmem:[#allocation2 + $0x98] sm:$0xff] %vm334, 0.0
      %356 = vst.msk [vmem:[#allocation2 + $0xa0] sm:$0x3] %vm337, 0.0
      %357 = vst.msk [vmem:[#allocation2 + $0xa8] sm:$0xff] %vm334, 0.0
      %358 = vst.msk [vmem:[#allocation2 + $0xb0] sm:$0xff] %vm334, 0.0
      %359 = vst.msk [vmem:[#allocation2 + $0xb8] sm:$0x3] %vm337, 0.0
      %360 = vst.msk [vmem:[#allocation2 + $0xc0] sm:$0xff] %vm334, 0.0
      %361 = vst.msk [vmem:[#allocation2 + $0xc8] sm:$0xff] %vm334, 0.0
      %362 = vst.msk [vmem:[#allocation2 + $0xd0] sm:$0x3] %vm337, 0.0
      %363 = vst.msk [vmem:[#allocation2 + $0xd8] sm:$0xff] %vm334, 0.0
      %364 = vst.msk [vmem:[#allocation2 + $0xe0] sm:$0xff] %vm334, 0.0
      %365 = vst.msk [vmem:[#allocation2 + $0xe8] sm:$0x3] %vm337, 0.0
      %366 = vst.msk [vmem:[#allocation2 + $0xf0] sm:$0xff] %vm334, 0.0
      %367 = vst.msk [vmem:[#allocation2 + $0xf8] sm:$0xff] %vm334, 0.0
      %368 = vst.msk [vmem:[#allocation2 + $0x100] sm:$0x3] %vm337, 0.0
      %369 = vst.msk [vmem:[#allocation2 + $0x108] sm:$0xff] %vm334, 0.0
      %370 = vst.msk [vmem:[#allocation2 + $0x110] sm:$0xff] %vm334, 0.0
      %371 = vst.msk [vmem:[#allocation2 + $0x118] sm:$0x3] %vm337, 0.0
      %372 = vst.msk [vmem:[#allocation2 + $0x120] sm:$0xff] %vm334, 0.0
      %373 = vst.msk [vmem:[#allocation2 + $0x128] sm:$0xff] %vm334, 0.0
      %374 = vst.msk [vmem:[#allocation2 + $0x130] sm:$0x3] %vm337, 0.0
      %375 = vst.msk [vmem:[#allocation2 + $0x138] sm:$0xff] %vm334, 0.0
      %376 = vst.msk [vmem:[#allocation2 + $0x140] sm:$0xff] %vm334, 0.0
      %377 = vst.msk [vmem:[#allocation2 + $0x148] sm:$0x3] %vm337, 0.0
      %378 = vst.msk [vmem:[#allocation2 + $0x150] sm:$0xff] %vm334, 0.0
      %379 = vst.msk [vmem:[#allocation2 + $0x158] sm:$0xff] %vm334, 0.0
      %380 = vst.msk [vmem:[#allocation2 + $0x160] sm:$0x3] %vm337, 0.0
      %381 = vst.msk [vmem:[#allocation2 + $0x168] sm:$0xff] %vm334, 0.0
      %382 = vst.msk [vmem:[#allocation2 + $0x170] sm:$0xff] %vm334, 0.0
      %383 = vst.msk [vmem:[#allocation2 + $0x178] sm:$0x3] %vm337, 0.0
      %384 = vst.msk [vmem:[#allocation2 + $0x180] sm:$0xff] %vm334, 0.0
      %385 = vst.msk [vmem:[#allocation2 + $0x188] sm:$0xff] %vm334, 0.0
      %386 = vst.msk [vmem:[#allocation2 + $0x190] sm:$0x3] %vm337, 0.0
      %387 = vst.msk [vmem:[#allocation2 + $0x198] sm:$0xff] %vm334, 0.0
      %388 = vst.msk [vmem:[#allocation2 + $0x1a0] sm:$0xff] %vm334, 0.0
      %389 = vst.msk [vmem:[#allocation2 + $0x1a8] sm:$0x3] %vm337, 0.0
      %vm390 = vcmask 261120
      %391 = vst.msk [vmem:[#allocation3] sm:$0xff] %vm390, 0.0
      %392 = vst.msk [vmem:[#allocation3 + $0x8] sm:$0xff] %vm390, 0.0
      %vm393 = vcmask 254976
      %394 = vst.msk [vmem:[#allocation3 + $0x10] sm:$0x3] %vm393, 0.0
      %395 = vst.msk [vmem:[#allocation3 + $0x18] sm:$0xff] %vm390, 0.0
      %396 = vst.msk [vmem:[#allocation3 + $0x20] sm:$0xff] %vm390, 0.0
      %397 = vst.msk [vmem:[#allocation3 + $0x28] sm:$0x3] %vm393, 0.0
      %398 = vst.msk [vmem:[#allocation3 + $0x30] sm:$0xff] %vm390, 0.0
      %399 = vst.msk [vmem:[#allocation3 + $0x38] sm:$0xff] %vm390, 0.0
      %400 = vst.msk [vmem:[#allocation3 + $0x40] sm:$0x3] %vm393, 0.0
      %401 = vst.msk [vmem:[#allocation3 + $0x48] sm:$0xff] %vm390, 0.0
      %402 = vst.msk [vmem:[#allocation3 + $0x50] sm:$0xff] %vm390, 0.0
      %403 = vst.msk [vmem:[#allocation3 + $0x58] sm:$0x3] %vm393, 0.0
      %404 = vst.msk [vmem:[#allocation3 + $0x60] sm:$0xff] %vm390, 0.0
      %405 = vst.msk [vmem:[#allocation3 + $0x68] sm:$0xff] %vm390, 0.0
      %406 = vst.msk [vmem:[#allocation3 + $0x70] sm:$0x3] %vm393, 0.0
      %407 = vst.msk [vmem:[#allocation3 + $0x78] sm:$0xff] %vm390, 0.0
      %408 = vst.msk [vmem:[#allocation3 + $0x80] sm:$0xff] %vm390, 0.0
      %409 = vst.msk [vmem:[#allocation3 + $0x88] sm:$0x3] %vm393, 0.0
      %410 = vst.msk [vmem:[#allocation3 + $0x90] sm:$0xff] %vm390, 0.0
      %411 = vst.msk [vmem:[#allocation3 + $0x98] sm:$0xff] %vm390, 0.0
      %412 = vst.msk [vmem:[#allocation3 + $0xa0] sm:$0x3] %vm393, 0.0
      %413 = vst.msk [vmem:[#allocation3 + $0xa8] sm:$0xff] %vm390, 0.0
      %414 = vst.msk [vmem:[#allocation3 + $0xb0] sm:$0xff] %vm390, 0.0
      %415 = vst.msk [vmem:[#allocation3 + $0xb8] sm:$0x3] %vm393, 0.0
      %416 = vst.msk [vmem:[#allocation3 + $0xc0] sm:$0xff] %vm390, 0.0
      %417 = vst.msk [vmem:[#allocation3 + $0xc8] sm:$0xff] %vm390, 0.0
      %418 = vst.msk [vmem:[#allocation3 + $0xd0] sm:$0x3] %vm393, 0.0
      %419 = vst.msk [vmem:[#allocation3 + $0xd8] sm:$0xff] %vm390, 0.0
      %420 = vst.msk [vmem:[#allocation3 + $0xe0] sm:$0xff] %vm390, 0.0
      %421 = vst.msk [vmem:[#allocation3 + $0xe8] sm:$0x3] %vm393, 0.0
      %422 = vst.msk [vmem:[#allocation3 + $0xf0] sm:$0xff] %vm390, 0.0
      %423 = vst.msk [vmem:[#allocation3 + $0xf8] sm:$0xff] %vm390, 0.0
      %424 = vst.msk [vmem:[#allocation3 + $0x100] sm:$0x3] %vm393, 0.0
      %425 = vst.msk [vmem:[#allocation3 + $0x108] sm:$0xff] %vm390, 0.0
      %426 = vst.msk [vmem:[#allocation3 + $0x110] sm:$0xff] %vm390, 0.0
      %427 = vst.msk [vmem:[#allocation3 + $0x118] sm:$0x3] %vm393, 0.0
      %428 = vst.msk [vmem:[#allocation3 + $0x120] sm:$0xff] %vm390, 0.0
      %429 = vst.msk [vmem:[#allocation3 + $0x128] sm:$0xff] %vm390, 0.0
      %430 = vst.msk [vmem:[#allocation3 + $0x130] sm:$0x3] %vm393, 0.0
      %431 = vst.msk [vmem:[#allocation3 + $0x138] sm:$0xff] %vm390, 0.0
      %432 = vst.msk [vmem:[#allocation3 + $0x140] sm:$0xff] %vm390, 0.0
      %433 = vst.msk [vmem:[#allocation3 + $0x148] sm:$0x3] %vm393, 0.0
      %434 = vst.msk [vmem:[#allocation3 + $0x150] sm:$0xff] %vm390, 0.0
      %435 = vst.msk [vmem:[#allocation3 + $0x158] sm:$0xff] %vm390, 0.0
      %436 = vst.msk [vmem:[#allocation3 + $0x160] sm:$0x3] %vm393, 0.0
      %437 = vst.msk [vmem:[#allocation3 + $0x168] sm:$0xff] %vm390, 0.0
      %438 = vst.msk [vmem:[#allocation3 + $0x170] sm:$0xff] %vm390, 0.0
      %439 = vst.msk [vmem:[#allocation3 + $0x178] sm:$0x3] %vm393, 0.0
      %440 = vst.msk [vmem:[#allocation3 + $0x180] sm:$0xff] %vm390, 0.0
      %441 = vst.msk [vmem:[#allocation3 + $0x188] sm:$0xff] %vm390, 0.0
      %442 = vst.msk [vmem:[#allocation3 + $0x190] sm:$0x3] %vm393, 0.0
      %443 = vst.msk [vmem:[#allocation3 + $0x198] sm:$0xff] %vm390, 0.0
      %444 = vst.msk [vmem:[#allocation3 + $0x1a0] sm:$0xff] %vm390, 0.0
      %445 = vst.msk [vmem:[#allocation3 + $0x1a8] sm:$0x3] %vm393, 0.0
      %446 = vst.msk [vmem:[#allocation4] sm:$0xff] %vm390, 0.0
      %447 = vst.msk [vmem:[#allocation4 + $0x8] sm:$0x3] %vm393, 0.0
      %448 = vst.msk [vmem:[#allocation4 + $0x10] sm:$0xff] %vm390, 0.0
      %449 = vst.msk [vmem:[#allocation4 + $0x18] sm:$0x3] %vm393, 0.0
      %450 = vst.msk [vmem:[#allocation4 + $0x20] sm:$0xff] %vm390, 0.0
      %451 = vst.msk [vmem:[#allocation4 + $0x28] sm:$0x3] %vm393, 0.0
      %452 = vst.msk [vmem:[#allocation4 + $0x30] sm:$0xff] %vm390, 0.0
      %453 = vst.msk [vmem:[#allocation4 + $0x38] sm:$0x3] %vm393, 0.0
      %454 = vst.msk [vmem:[#allocation4 + $0x40] sm:$0xff] %vm390, 0.0
      %455 = vst.msk [vmem:[#allocation4 + $0x48] sm:$0x3] %vm393, 0.0
      %456 = vst.msk [vmem:[#allocation4 + $0x50] sm:$0xff] %vm390, 0.0
      %457 = vst.msk [vmem:[#allocation4 + $0x58] sm:$0x3] %vm393, 0.0
      %458 = vst.msk [vmem:[#allocation4 + $0x60] sm:$0xff] %vm390, 0.0
      %459 = vst.msk [vmem:[#allocation4 + $0x68] sm:$0x3] %vm393, 0.0
      %460 = vst.msk [vmem:[#allocation4 + $0x70] sm:$0xff] %vm390, 0.0
      %461 = vst.msk [vmem:[#allocation4 + $0x78] sm:$0x3] %vm393, 0.0
      %462 = vst.msk [vmem:[#allocation4 + $0x80] sm:$0xff] %vm390, 0.0
      %463 = vst.msk [vmem:[#allocation4 + $0x88] sm:$0x3] %vm393, 0.0
      %464 = vst.msk [vmem:[#allocation4 + $0x90] sm:$0xff] %vm390, 0.0
      %465 = vst.msk [vmem:[#allocation4 + $0x98] sm:$0x3] %vm393, 0.0
      %vm466 = vcmask 523264
      %467 = vst.msk [vmem:[#allocation5] sm:$0xff] %vm466, 0.0
      %vm468 = vcmask 517120
      %469 = vst.msk [vmem:[#allocation5 + $0x8] sm:$0x3] %vm468, 0.0
      %470 = vst.msk [vmem:[#allocation5 + $0x10] sm:$0xff] %vm466, 0.0
      %471 = vst.msk [vmem:[#allocation5 + $0x18] sm:$0x3] %vm468, 0.0
      %472 = vst.msk [vmem:[#allocation5 + $0x20] sm:$0xff] %vm466, 0.0
      %473 = vst.msk [vmem:[#allocation5 + $0x28] sm:$0x3] %vm468, 0.0
      %474 = vst.msk [vmem:[#allocation5 + $0x30] sm:$0xff] %vm466, 0.0
      %475 = vst.msk [vmem:[#allocation5 + $0x38] sm:$0x3] %vm468, 0.0
      %476 = vst.msk [vmem:[#allocation5 + $0x40] sm:$0xff] %vm466, 0.0
      %477 = vst.msk [vmem:[#allocation5 + $0x48] sm:$0x3] %vm468, 0.0
      %478 = vst.msk [vmem:[#allocation5 + $0x50] sm:$0xff] %vm466, 0.0
      %479 = vst.msk [vmem:[#allocation5 + $0x58] sm:$0x3] %vm468, 0.0
      %480 = vst.msk [vmem:[#allocation5 + $0x60] sm:$0xff] %vm466, 0.0
      %481 = vst.msk [vmem:[#allocation5 + $0x68] sm:$0x3] %vm468, 0.0
      %482 = vst.msk [vmem:[#allocation5 + $0x70] sm:$0xff] %vm466, 0.0
      %483 = vst.msk [vmem:[#allocation5 + $0x78] sm:$0x3] %vm468, 0.0
      %484 = vst.msk [vmem:[#allocation5 + $0x80] sm:$0xff] %vm466, 0.0
      %485 = vst.msk [vmem:[#allocation5 + $0x88] sm:$0x3] %vm468, 0.0
      %486 = vst.msk [vmem:[#allocation5 + $0x90] sm:$0xff] %vm466, 0.0
      %487 = vst.msk [vmem:[#allocation5 + $0x98] sm:$0x3] %vm468, 0.0
      %v488 = vld [vmem:[%s327] sm:$0xff]
      %v489 = vld [vmem:[%s327 + $0x8] sm:$0xff]
      %v490 = vld [vmem:[%s327 + $0x10] sm:$0xff]
      %v491 = vld [vmem:[%s327 + $0x18] sm:$0xff]
      %v492 = vld [vmem:[%s327 + $0x20] sm:$0xff]
      %v493 = vld [vmem:[%s327 + $0x28] sm:$0xff]
      %v494 = vld [vmem:[%s327 + $0x30] sm:$0xff]
      %v495 = vld [vmem:[%s327 + $0x38] sm:$0xff]
      %v496 = vld [vmem:[%s327 + $0x40] sm:$0xff]
      %v497 = vld [vmem:[%s327 + $0x48] sm:$0xff]
      %v498 = vld [vmem:[%s327 + $0x50] sm:$0xff]
      %v499 = vld [vmem:[%s327 + $0x58] sm:$0xff]
      %v500 = vld [vmem:[%s327 + $0x60] sm:$0xff]
      %v501 = vld [vmem:[%s327 + $0x68] sm:$0xff]
      %v502 = vld [vmem:[%s327 + $0x70] sm:$0xff]
      %v503 = vld [vmem:[%s327 + $0x78] sm:$0xff]
      %v504 = vld [vmem:[%s327 + $0x80] sm:$0xff]
      %v505 = vld [vmem:[%s327 + $0x88] sm:$0xff]
      %v506 = vld [vmem:[%s327 + $0x90] sm:$0xff]
      %v507 = vld [vmem:[%s327 + $0x98] sm:$0xff]
      %v508 = vld [vmem:[%s327 + $0xa0] sm:$0xff]
      %v509 = vld [vmem:[%s327 + $0xa8] sm:$0xff]
      %v510 = vld [vmem:[%s327 + $0xb0] sm:$0xff]
      %v511 = vld [vmem:[%s327 + $0xb8] sm:$0xff]
      %v512 = vld [vmem:[%s327 + $0xc0] sm:$0xff]
      %v513 = vld [vmem:[%s327 + $0xc8] sm:$0xff]
      %v514 = vld [vmem:[%s327 + $0xd0] sm:$0xff]
      %v515 = vld [vmem:[%s327 + $0xd8] sm:$0xff]
      %v516 = vld [vmem:[%s327 + $0xe0] sm:$0xff]
      %v517 = vld [vmem:[%s327 + $0xe8] sm:$0xff]
      %v518 = vld [vmem:[%s327 + $0xf0] sm:$0xff]
      %v519 = vld [vmem:[%s327 + $0xf8] sm:$0xff]
      %s520 = scalar_lea.vmem [#allocation2], 24
      %521 = vst.msk [vmem:[%s520 + $0x1] sm:$0xff] %vm334, %v488
      %522 = vst.msk [vmem:[%s520 + $0x9] sm:$0xff] %vm334, %v489
      %523 = vst.msk [vmem:[%s520 + $0x19] sm:$0xff] %vm334, %v490
      %524 = vst.msk [vmem:[%s520 + $0x21] sm:$0xff] %vm334, %v491
      %525 = vst.msk [vmem:[%s520 + $0x31] sm:$0xff] %vm334, %v492
      %526 = vst.msk [vmem:[%s520 + $0x39] sm:$0xff] %vm334, %v493
      %527 = vst.msk [vmem:[%s520 + $0x49] sm:$0xff] %vm334, %v494
      %528 = vst.msk [vmem:[%s520 + $0x51] sm:$0xff] %vm334, %v495
      %529 = vst.msk [vmem:[%s520 + $0x61] sm:$0xff] %vm334, %v496
      %530 = vst.msk [vmem:[%s520 + $0x69] sm:$0xff] %vm334, %v497
      %531 = vst.msk [vmem:[%s520 + $0x79] sm:$0xff] %vm334, %v498
      %532 = vst.msk [vmem:[%s520 + $0x81] sm:$0xff] %vm334, %v499
      %533 = vst.msk [vmem:[%s520 + $0x91] sm:$0xff] %vm334, %v500
      %534 = vst.msk [vmem:[%s520 + $0x99] sm:$0xff] %vm334, %v501
      %535 = vst.msk [vmem:[%s520 + $0xa9] sm:$0xff] %vm334, %v502
      %536 = vst.msk [vmem:[%s520 + $0xb1] sm:$0xff] %vm334, %v503
      %537 = vst.msk [vmem:[%s520 + $0xc1] sm:$0xff] %vm334, %v504
      %538 = vst.msk [vmem:[%s520 + $0xc9] sm:$0xff] %vm334, %v505
      %539 = vst.msk [vmem:[%s520 + $0xd9] sm:$0xff] %vm334, %v506
      %540 = vst.msk [vmem:[%s520 + $0xe1] sm:$0xff] %vm334, %v507
      %541 = vst.msk [vmem:[%s520 + $0xf1] sm:$0xff] %vm334, %v508
      %542 = vst.msk [vmem:[%s520 + $0xf9] sm:$0xff] %vm334, %v509
      %543 = vst.msk [vmem:[%s520 + $0x109] sm:$0xff] %vm334, %v510
      %544 = vst.msk [vmem:[%s520 + $0x111] sm:$0xff] %vm334, %v511
      %545 = vst.msk [vmem:[%s520 + $0x121] sm:$0xff] %vm334, %v512
      %546 = vst.msk [vmem:[%s520 + $0x129] sm:$0xff] %vm334, %v513
      %547 = vst.msk [vmem:[%s520 + $0x139] sm:$0xff] %vm334, %v514
      %548 = vst.msk [vmem:[%s520 + $0x141] sm:$0xff] %vm334, %v515
      %549 = vst.msk [vmem:[%s520 + $0x151] sm:$0xff] %vm334, %v516
      %550 = vst.msk [vmem:[%s520 + $0x159] sm:$0xff] %vm334, %v517
      %551 = vst.msk [vmem:[%s520 + $0x169] sm:$0xff] %vm334, %v518
      %552 = vst.msk [vmem:[%s520 + $0x171] sm:$0xff] %vm334, %v519
      %v553 = vld [vmem:[#allocation2] sm:$0xff]
      %v554 = vld [vmem:[#allocation2 + $0x8] sm:$0xff]
      %v555 = vld [vmem:[#allocation2 + $0x18] sm:$0xff]
      %v556 = vld [vmem:[#allocation2 + $0x20] sm:$0xff]
      %v557 = vld [vmem:[#allocation2 + $0x30] sm:$0xff]
      %v558 = vld [vmem:[#allocation2 + $0x38] sm:$0xff]
      %v559 = vld [vmem:[#allocation2 + $0x48] sm:$0xff]
      %v560 = vld [vmem:[#allocation2 + $0x50] sm:$0xff]
      %v561 = vld [vmem:[#allocation2 + $0x60] sm:$0xff]
      %v562 = vld [vmem:[#allocation2 + $0x68] sm:$0xff]
      %v563 = vld [vmem:[#allocation2 + $0x78] sm:$0xff]
      %v564 = vld [vmem:[#allocation2 + $0x80] sm:$0xff]
      %v565 = vld [vmem:[#allocation2 + $0x90] sm:$0xff]
      %v566 = vld [vmem:[#allocation2 + $0x98] sm:$0xff]
      %v567 = vld [vmem:[#allocation2 + $0xa8] sm:$0xff]
      %v568 = vld [vmem:[#allocation2 + $0xb0] sm:$0xff]
      %v569 = vld [vmem:[#allocation2 + $0xc0] sm:$0xff]
      %v570 = vld [vmem:[#allocation2 + $0xc8] sm:$0xff]
      %v571 = vld [vmem:[#allocation2 + $0xd8] sm:$0xff]
      %v572 = vld [vmem:[#allocation2 + $0xe0] sm:$0xff]
      %v573 = vld [vmem:[#allocation2 + $0xf0] sm:$0xff]
      %v574 = vld [vmem:[#allocation2 + $0xf8] sm:$0xff]
      %v575 = vld [vmem:[#allocation2 + $0x108] sm:$0xff]
      %v576 = vld [vmem:[#allocation2 + $0x110] sm:$0xff]
      %v577 = vld [vmem:[#allocation2 + $0x120] sm:$0xff]
      %v578 = vld [vmem:[#allocation2 + $0x128] sm:$0xff]
      %v579 = vld [vmem:[#allocation2 + $0x138] sm:$0xff]
      %v580 = vld [vmem:[#allocation2 + $0x140] sm:$0xff]
      %v581 = vld [vmem:[#allocation2 + $0x150] sm:$0xff]
      %v582 = vld [vmem:[#allocation2 + $0x158] sm:$0xff]
      %v583 = vld [vmem:[#allocation2 + $0x168] sm:$0xff]
      %v584 = vld [vmem:[#allocation2 + $0x170] sm:$0xff]
      %v585 = vld [vmem:[#allocation2 + $0x1] sm:$0xff]
      %v586 = vld [vmem:[#allocation2 + $0x9] sm:$0xff]
      %v587 = vld [vmem:[#allocation2 + $0x19] sm:$0xff]
      %v588 = vld [vmem:[#allocation2 + $0x21] sm:$0xff]
      %v589 = vld [vmem:[#allocation2 + $0x31] sm:$0xff]
      %v590 = vld [vmem:[#allocation2 + $0x39] sm:$0xff]
      %v591 = vld [vmem:[#allocation2 + $0x49] sm:$0xff]
      %v592 = vld [vmem:[#allocation2 + $0x51] sm:$0xff]
      %v593 = vld [vmem:[#allocation2 + $0x61] sm:$0xff]
      %v594 = vld [vmem:[#allocation2 + $0x69] sm:$0xff]
      %v595 = vld [vmem:[#allocation2 + $0x79] sm:$0xff]
      %v596 = vld [vmem:[#allocation2 + $0x81] sm:$0xff]
      %v597 = vld [vmem:[#allocation2 + $0x91] sm:$0xff]
      %v598 = vld [vmem:[#allocation2 + $0x99] sm:$0xff]
      %v599 = vld [vmem:[#allocation2 + $0xa9] sm:$0xff]
      %v600 = vld [vmem:[#allocation2 + $0xb1] sm:$0xff]
      %v601 = vld [vmem:[#allocation2 + $0xc1] sm:$0xff]
      %v602 = vld [vmem:[#allocation2 + $0xc9] sm:$0xff]
      %v603 = vld [vmem:[#allocation2 + $0xd9] sm:$0xff]
      %v604 = vld [vmem:[#allocation2 + $0xe1] sm:$0xff]
      %v605 = vld [vmem:[#allocation2 + $0xf1] sm:$0xff]
      %v606 = vld [vmem:[#allocation2 + $0xf9] sm:$0xff]
      %v607 = vld [vmem:[#allocation2 + $0x109] sm:$0xff]
      %v608 = vld [vmem:[#allocation2 + $0x111] sm:$0xff]
      %v609 = vld [vmem:[#allocation2 + $0x121] sm:$0xff]
      %v610 = vld [vmem:[#allocation2 + $0x129] sm:$0xff]
      %v611 = vld [vmem:[#allocation2 + $0x139] sm:$0xff]
      %v612 = vld [vmem:[#allocation2 + $0x141] sm:$0xff]
      %v613 = vld [vmem:[#allocation2 + $0x151] sm:$0xff]
      %v614 = vld [vmem:[#allocation2 + $0x159] sm:$0xff]
      %v615 = vld [vmem:[#allocation2 + $0x169] sm:$0xff]
      %v616 = vld [vmem:[#allocation2 + $0x171] sm:$0xff]
      %v617 = vld [vmem:[#allocation2 + $0x2] sm:$0xff]
      %v618 = vld [vmem:[#allocation2 + $0xa] sm:$0xff]
      %v619 = vld [vmem:[#allocation2 + $0x1a] sm:$0xff]
      %v620 = vld [vmem:[#allocation2 + $0x22] sm:$0xff]
      %v621 = vld [vmem:[#allocation2 + $0x32] sm:$0xff]
      %v622 = vld [vmem:[#allocation2 + $0x3a] sm:$0xff]
      %v623 = vld [vmem:[#allocation2 + $0x4a] sm:$0xff]
      %v624 = vld [vmem:[#allocation2 + $0x52] sm:$0xff]
      %v625 = vld [vmem:[#allocation2 + $0x62] sm:$0xff]
      %v626 = vld [vmem:[#allocation2 + $0x6a] sm:$0xff]
      %v627 = vld [vmem:[#allocation2 + $0x7a] sm:$0xff]
      %v628 = vld [vmem:[#allocation2 + $0x82] sm:$0xff]
      %v629 = vld [vmem:[#allocation2 + $0x92] sm:$0xff]
      %v630 = vld [vmem:[#allocation2 + $0x9a] sm:$0xff]
      %v631 = vld [vmem:[#allocation2 + $0xaa] sm:$0xff]
      %v632 = vld [vmem:[#allocation2 + $0xb2] sm:$0xff]
      %v633 = vld [vmem:[#allocation2 + $0xc2] sm:$0xff]
      %v634 = vld [vmem:[#allocation2 + $0xca] sm:$0xff]
      %v635 = vld [vmem:[#allocation2 + $0xda] sm:$0xff]
      %v636 = vld [vmem:[#allocation2 + $0xe2] sm:$0xff]
      %v637 = vld [vmem:[#allocation2 + $0xf2] sm:$0xff]
      %v638 = vld [vmem:[#allocation2 + $0xfa] sm:$0xff]
      %v639 = vld [vmem:[#allocation2 + $0x10a] sm:$0xff]
      %v640 = vld [vmem:[#allocation2 + $0x112] sm:$0xff]
      %v641 = vld [vmem:[#allocation2 + $0x122] sm:$0xff]
      %v642 = vld [vmem:[#allocation2 + $0x12a] sm:$0xff]
      %v643 = vld [vmem:[#allocation2 + $0x13a] sm:$0xff]
      %v644 = vld [vmem:[#allocation2 + $0x142] sm:$0xff]
      %v645 = vld [vmem:[#allocation2 + $0x152] sm:$0xff]
      %v646 = vld [vmem:[#allocation2 + $0x15a] sm:$0xff]
      %v647 = vld [vmem:[#allocation2 + $0x16a] sm:$0xff]
      %v648 = vld [vmem:[#allocation2 + $0x172] sm:$0xff]
      %v649 = vld [vmem:[%s520] sm:$0xff]
      %v650 = vld [vmem:[%s520 + $0x8] sm:$0xff]
      %v651 = vld [vmem:[%s520 + $0x18] sm:$0xff]
      %v652 = vld [vmem:[%s520 + $0x20] sm:$0xff]
      %v653 = vld [vmem:[%s520 + $0x30] sm:$0xff]
      %v654 = vld [vmem:[%s520 + $0x38] sm:$0xff]
      %v655 = vld [vmem:[%s520 + $0x48] sm:$0xff]
      %v656 = vld [vmem:[%s520 + $0x50] sm:$0xff]
      %v657 = vld [vmem:[%s520 + $0x60] sm:$0xff]
      %v658 = vld [vmem:[%s520 + $0x68] sm:$0xff]
      %v659 = vld [vmem:[%s520 + $0x78] sm:$0xff]
      %v660 = vld [vmem:[%s520 + $0x80] sm:$0xff]
      %v661 = vld [vmem:[%s520 + $0x90] sm:$0xff]
      %v662 = vld [vmem:[%s520 + $0x98] sm:$0xff]
      %v663 = vld [vmem:[%s520 + $0xa8] sm:$0xff]
      %v664 = vld [vmem:[%s520 + $0xb0] sm:$0xff]
      %v665 = vld [vmem:[%s520 + $0xc0] sm:$0xff]
      %v666 = vld [vmem:[%s520 + $0xc8] sm:$0xff]
      %v667 = vld [vmem:[%s520 + $0xd8] sm:$0xff]
      %v668 = vld [vmem:[%s520 + $0xe0] sm:$0xff]
      %v669 = vld [vmem:[%s520 + $0xf0] sm:$0xff]
      %v670 = vld [vmem:[%s520 + $0xf8] sm:$0xff]
      %v671 = vld [vmem:[%s520 + $0x108] sm:$0xff]
      %v672 = vld [vmem:[%s520 + $0x110] sm:$0xff]
      %v673 = vld [vmem:[%s520 + $0x120] sm:$0xff]
      %v674 = vld [vmem:[%s520 + $0x128] sm:$0xff]
      %v675 = vld [vmem:[%s520 + $0x138] sm:$0xff]
      %v676 = vld [vmem:[%s520 + $0x140] sm:$0xff]
      %v677 = vld [vmem:[%s520 + $0x150] sm:$0xff]
      %v678 = vld [vmem:[%s520 + $0x158] sm:$0xff]
      %v679 = vld [vmem:[%s520 + $0x168] sm:$0xff]
      %v680 = vld [vmem:[%s520 + $0x170] sm:$0xff]
      %v681 = vld [vmem:[%s520 + $0x1] sm:$0xff]
      %v682 = vld [vmem:[%s520 + $0x9] sm:$0xff]
      %v683 = vld [vmem:[%s520 + $0x19] sm:$0xff]
      %v684 = vld [vmem:[%s520 + $0x21] sm:$0xff]
      %v685 = vld [vmem:[%s520 + $0x31] sm:$0xff]
      %v686 = vld [vmem:[%s520 + $0x39] sm:$0xff]
      %v687 = vld [vmem:[%s520 + $0x49] sm:$0xff]
      %v688 = vld [vmem:[%s520 + $0x51] sm:$0xff]
      %v689 = vld [vmem:[%s520 + $0x61] sm:$0xff]
      %v690 = vld [vmem:[%s520 + $0x69] sm:$0xff]
      %v691 = vld [vmem:[%s520 + $0x79] sm:$0xff]
      %v692 = vld [vmem:[%s520 + $0x81] sm:$0xff]
      %v693 = vld [vmem:[%s520 + $0x91] sm:$0xff]
      %v694 = vld [vmem:[%s520 + $0x99] sm:$0xff]
      %v695 = vld [vmem:[%s520 + $0xa9] sm:$0xff]
      %v696 = vld [vmem:[%s520 + $0xb1] sm:$0xff]
      %v697 = vld [vmem:[%s520 + $0xc1] sm:$0xff]
      %v698 = vld [vmem:[%s520 + $0xc9] sm:$0xff]
      %v699 = vld [vmem:[%s520 + $0xd9] sm:$0xff]
      %v700 = vld [vmem:[%s520 + $0xe1] sm:$0xff]
      %v701 = vld [vmem:[%s520 + $0xf1] sm:$0xff]
      %v702 = vld [vmem:[%s520 + $0xf9] sm:$0xff]
      %v703 = vld [vmem:[%s520 + $0x109] sm:$0xff]
      %v704 = vld [vmem:[%s520 + $0x111] sm:$0xff]
      %v705 = vld [vmem:[%s520 + $0x121] sm:$0xff]
      %v706 = vld [vmem:[%s520 + $0x129] sm:$0xff]
      %v707 = vld [vmem:[%s520 + $0x139] sm:$0xff]
      %v708 = vld [vmem:[%s520 + $0x141] sm:$0xff]
      %v709 = vld [vmem:[%s520 + $0x151] sm:$0xff]
      %v710 = vld [vmem:[%s520 + $0x159] sm:$0xff]
      %v711 = vld [vmem:[%s520 + $0x169] sm:$0xff]
      %v712 = vld [vmem:[%s520 + $0x171] sm:$0xff]
      %v713 = vld [vmem:[%s520 + $0x2] sm:$0xff]
      %v714 = vld [vmem:[%s520 + $0xa] sm:$0xff]
      %v715 = vld [vmem:[%s520 + $0x1a] sm:$0xff]
      %v716 = vld [vmem:[%s520 + $0x22] sm:$0xff]
      %v717 = vld [vmem:[%s520 + $0x32] sm:$0xff]
      %v718 = vld [vmem:[%s520 + $0x3a] sm:$0xff]
      %v719 = vld [vmem:[%s520 + $0x4a] sm:$0xff]
      %v720 = vld [vmem:[%s520 + $0x52] sm:$0xff]
      %v721 = vld [vmem:[%s520 + $0x62] sm:$0xff]
      %v722 = vld [vmem:[%s520 + $0x6a] sm:$0xff]
      %v723 = vld [vmem:[%s520 + $0x7a] sm:$0xff]
      %v724 = vld [vmem:[%s520 + $0x82] sm:$0xff]
      %v725 = vld [vmem:[%s520 + $0x92] sm:$0xff]
      %v726 = vld [vmem:[%s520 + $0x9a] sm:$0xff]
      %v727 = vld [vmem:[%s520 + $0xaa] sm:$0xff]
      %v728 = vld [vmem:[%s520 + $0xb2] sm:$0xff]
      %v729 = vld [vmem:[%s520 + $0xc2] sm:$0xff]
      %v730 = vld [vmem:[%s520 + $0xca] sm:$0xff]
      %v731 = vld [vmem:[%s520 + $0xda] sm:$0xff]
      %v732 = vld [vmem:[%s520 + $0xe2] sm:$0xff]
      %v733 = vld [vmem:[%s520 + $0xf2] sm:$0xff]
      %v734 = vld [vmem:[%s520 + $0xfa] sm:$0xff]
      %v735 = vld [vmem:[%s520 + $0x10a] sm:$0xff]
      %v736 = vld [vmem:[%s520 + $0x112] sm:$0xff]
      %v737 = vld [vmem:[%s520 + $0x122] sm:$0xff]
      %v738 = vld [vmem:[%s520 + $0x12a] sm:$0xff]
      %v739 = vld [vmem:[%s520 + $0x13a] sm:$0xff]
      %v740 = vld [vmem:[%s520 + $0x142] sm:$0xff]
      %v741 = vld [vmem:[%s520 + $0x152] sm:$0xff]
      %v742 = vld [vmem:[%s520 + $0x15a] sm:$0xff]
      %v743 = vld [vmem:[%s520 + $0x16a] sm:$0xff]
      %v744 = vld [vmem:[%s520 + $0x172] sm:$0xff]
      %s745 = scalar_lea.vmem [#allocation2], 48
      %v746 = vld [vmem:[%s745] sm:$0xff]
      %v747 = vld [vmem:[%s745 + $0x8] sm:$0xff]
      %v748 = vld [vmem:[%s745 + $0x18] sm:$0xff]
      %v749 = vld [vmem:[%s745 + $0x20] sm:$0xff]
      %v750 = vld [vmem:[%s745 + $0x30] sm:$0xff]
      %v751 = vld [vmem:[%s745 + $0x38] sm:$0xff]
      %v752 = vld [vmem:[%s745 + $0x48] sm:$0xff]
      %v753 = vld [vmem:[%s745 + $0x50] sm:$0xff]
      %v754 = vld [vmem:[%s745 + $0x60] sm:$0xff]
      %v755 = vld [vmem:[%s745 + $0x68] sm:$0xff]
      %v756 = vld [vmem:[%s745 + $0x78] sm:$0xff]
      %v757 = vld [vmem:[%s745 + $0x80] sm:$0xff]
      %v758 = vld [vmem:[%s745 + $0x90] sm:$0xff]
      %v759 = vld [vmem:[%s745 + $0x98] sm:$0xff]
      %v760 = vld [vmem:[%s745 + $0xa8] sm:$0xff]
      %v761 = vld [vmem:[%s745 + $0xb0] sm:$0xff]
      %v762 = vld [vmem:[%s745 + $0xc0] sm:$0xff]
      %v763 = vld [vmem:[%s745 + $0xc8] sm:$0xff]
      %v764 = vld [vmem:[%s745 + $0xd8] sm:$0xff]
      %v765 = vld [vmem:[%s745 + $0xe0] sm:$0xff]
      %v766 = vld [vmem:[%s745 + $0xf0] sm:$0xff]
      %v767 = vld [vmem:[%s745 + $0xf8] sm:$0xff]
      %v768 = vld [vmem:[%s745 + $0x108] sm:$0xff]
      %v769 = vld [vmem:[%s745 + $0x110] sm:$0xff]
      %v770 = vld [vmem:[%s745 + $0x120] sm:$0xff]
      %v771 = vld [vmem:[%s745 + $0x128] sm:$0xff]
      %v772 = vld [vmem:[%s745 + $0x138] sm:$0xff]
      %v773 = vld [vmem:[%s745 + $0x140] sm:$0xff]
      %v774 = vld [vmem:[%s745 + $0x150] sm:$0xff]
      %v775 = vld [vmem:[%s745 + $0x158] sm:$0xff]
      %v776 = vld [vmem:[%s745 + $0x168] sm:$0xff]
      %v777 = vld [vmem:[%s745 + $0x170] sm:$0xff]
      %v778 = vld [vmem:[%s745 + $0x1] sm:$0xff]
      %v779 = vld [vmem:[%s745 + $0x9] sm:$0xff]
      %v780 = vld [vmem:[%s745 + $0x19] sm:$0xff]
      %v781 = vld [vmem:[%s745 + $0x21] sm:$0xff]
      %v782 = vld [vmem:[%s745 + $0x31] sm:$0xff]
      %v783 = vld [vmem:[%s745 + $0x39] sm:$0xff]
      %v784 = vld [vmem:[%s745 + $0x49] sm:$0xff]
      %v785 = vld [vmem:[%s745 + $0x51] sm:$0xff]
      %v786 = vld [vmem:[%s745 + $0x61] sm:$0xff]
      %v787 = vld [vmem:[%s745 + $0x69] sm:$0xff]
      %v788 = vld [vmem:[%s745 + $0x79] sm:$0xff]
      %v789 = vld [vmem:[%s745 + $0x81] sm:$0xff]
      %v790 = vld [vmem:[%s745 + $0x91] sm:$0xff]
      %v791 = vld [vmem:[%s745 + $0x99] sm:$0xff]
      %v792 = vld [vmem:[%s745 + $0xa9] sm:$0xff]
      %v793 = vld [vmem:[%s745 + $0xb1] sm:$0xff]
      %v794 = vld [vmem:[%s745 + $0xc1] sm:$0xff]
      %v795 = vld [vmem:[%s745 + $0xc9] sm:$0xff]
      %v796 = vld [vmem:[%s745 + $0xd9] sm:$0xff]
      %v797 = vld [vmem:[%s745 + $0xe1] sm:$0xff]
      %v798 = vld [vmem:[%s745 + $0xf1] sm:$0xff]
      %v799 = vld [vmem:[%s745 + $0xf9] sm:$0xff]
      %v800 = vld [vmem:[%s745 + $0x109] sm:$0xff]
      %v801 = vld [vmem:[%s745 + $0x111] sm:$0xff]
      %v802 = vld [vmem:[%s745 + $0x121] sm:$0xff]
      %v803 = vld [vmem:[%s745 + $0x129] sm:$0xff]
      %v804 = vld [vmem:[%s745 + $0x139] sm:$0xff]
      %v805 = vld [vmem:[%s745 + $0x141] sm:$0xff]
      %v806 = vld [vmem:[%s745 + $0x151] sm:$0xff]
      %v807 = vld [vmem:[%s745 + $0x159] sm:$0xff]
      %v808 = vld [vmem:[%s745 + $0x169] sm:$0xff]
      %v809 = vld [vmem:[%s745 + $0x171] sm:$0xff]
      %v810 = vld [vmem:[%s745 + $0x2] sm:$0xff]
      %v811 = vld [vmem:[%s745 + $0xa] sm:$0xff]
      %v812 = vld [vmem:[%s745 + $0x1a] sm:$0xff]
      %v813 = vld [vmem:[%s745 + $0x22] sm:$0xff]
      %v814 = vld [vmem:[%s745 + $0x32] sm:$0xff]
      %v815 = vld [vmem:[%s745 + $0x3a] sm:$0xff]
      %v816 = vld [vmem:[%s745 + $0x4a] sm:$0xff]
      %v817 = vld [vmem:[%s745 + $0x52] sm:$0xff]
      %v818 = vld [vmem:[%s745 + $0x62] sm:$0xff]
      %v819 = vld [vmem:[%s745 + $0x6a] sm:$0xff]
      %v820 = vld [vmem:[%s745 + $0x7a] sm:$0xff]
      %v821 = vld [vmem:[%s745 + $0x82] sm:$0xff]
      %v822 = vld [vmem:[%s745 + $0x92] sm:$0xff]
      %v823 = vld [vmem:[%s745 + $0x9a] sm:$0xff]
      %v824 = vld [vmem:[%s745 + $0xaa] sm:$0xff]
      %v825 = vld [vmem:[%s745 + $0xb2] sm:$0xff]
      %v826 = vld [vmem:[%s745 + $0xc2] sm:$0xff]
      %v827 = vld [vmem:[%s745 + $0xca] sm:$0xff]
      %v828 = vld [vmem:[%s745 + $0xda] sm:$0xff]
      %v829 = vld [vmem:[%s745 + $0xe2] sm:$0xff]
      %v830 = vld [vmem:[%s745 + $0xf2] sm:$0xff]
      %v831 = vld [vmem:[%s745 + $0xfa] sm:$0xff]
      %v832 = vld [vmem:[%s745 + $0x10a] sm:$0xff]
      %v833 = vld [vmem:[%s745 + $0x112] sm:$0xff]
      %v834 = vld [vmem:[%s745 + $0x122] sm:$0xff]
      %v835 = vld [vmem:[%s745 + $0x12a] sm:$0xff]
      %v836 = vld [vmem:[%s745 + $0x13a] sm:$0xff]
      %v837 = vld [vmem:[%s745 + $0x142] sm:$0xff]
      %v838 = vld [vmem:[%s745 + $0x152] sm:$0xff]
      %v839 = vld [vmem:[%s745 + $0x15a] sm:$0xff]
      %v840 = vld [vmem:[%s745 + $0x16a] sm:$0xff]
      %v841 = vld [vmem:[%s745 + $0x172] sm:$0xff]
      %874 = vrot.lane.b32.xlu0 %v585, 4
      %v875 = vpop.permute.xlu0 %874
      %876 = vrot.lane.b32.xlu0 %v586, 4
      %v877 = vpop.permute.xlu0 %876
      %878 = vrot.lane.b32.xlu0 %v587, 4
      %v879 = vpop.permute.xlu0 %878
      %880 = vrot.lane.b32.xlu0 %v588, 4
      %v881 = vpop.permute.xlu0 %880
      %882 = vrot.lane.b32.xlu0 %v589, 4
      %v883 = vpop.permute.xlu0 %882
      %884 = vrot.lane.b32.xlu0 %v590, 4
      %v885 = vpop.permute.xlu0 %884
      %886 = vrot.lane.b32.xlu0 %v591, 4
      %v887 = vpop.permute.xlu0 %886
      %888 = vrot.lane.b32.xlu0 %v592, 4
      %v889 = vpop.permute.xlu0 %888
      %890 = vrot.lane.b32.xlu0 %v593, 4
      %v891 = vpop.permute.xlu0 %890
      %892 = vrot.lane.b32.xlu0 %v594, 4
      %v893 = vpop.permute.xlu0 %892
      %894 = vrot.lane.b32.xlu0 %v595, 4
      %v895 = vpop.permute.xlu0 %894
      %896 = vrot.lane.b32.xlu0 %v596, 4
      %v897 = vpop.permute.xlu0 %896
      %898 = vrot.lane.b32.xlu0 %v597, 4
      %v899 = vpop.permute.xlu0 %898
      %900 = vrot.lane.b32.xlu0 %v598, 4
      %v901 = vpop.permute.xlu0 %900
      %902 = vrot.lane.b32.xlu0 %v599, 4
      %v903 = vpop.permute.xlu0 %902
      %904 = vrot.lane.b32.xlu0 %v600, 4
      %v905 = vpop.permute.xlu0 %904
      %906 = vrot.lane.b32.xlu0 %v601, 4
      %v907 = vpop.permute.xlu0 %906
      %908 = vrot.lane.b32.xlu0 %v602, 4
      %v909 = vpop.permute.xlu0 %908
      %910 = vrot.lane.b32.xlu0 %v603, 4
      %v911 = vpop.permute.xlu0 %910
      %912 = vrot.lane.b32.xlu0 %v604, 4
      %v913 = vpop.permute.xlu0 %912
      %914 = vrot.lane.b32.xlu0 %v605, 4
      %v915 = vpop.permute.xlu0 %914
      %916 = vrot.lane.b32.xlu0 %v606, 4
      %v917 = vpop.permute.xlu0 %916
      %918 = vrot.lane.b32.xlu0 %v607, 4
      %v919 = vpop.permute.xlu0 %918
      %920 = vrot.lane.b32.xlu0 %v608, 4
      %v921 = vpop.permute.xlu0 %920
      %922 = vrot.lane.b32.xlu0 %v609, 4
      %v923 = vpop.permute.xlu0 %922
      %924 = vrot.lane.b32.xlu0 %v610, 4
      %v925 = vpop.permute.xlu0 %924
      %926 = vrot.lane.b32.xlu0 %v611, 4
      %v927 = vpop.permute.xlu0 %926
      %928 = vrot.lane.b32.xlu0 %v612, 4
      %v929 = vpop.permute.xlu0 %928
      %930 = vrot.lane.b32.xlu0 %v613, 4
      %v931 = vpop.permute.xlu0 %930
      %932 = vrot.lane.b32.xlu0 %v614, 4
      %v933 = vpop.permute.xlu0 %932
      %934 = vrot.lane.b32.xlu0 %v615, 4
      %v935 = vpop.permute.xlu0 %934
      %936 = vrot.lane.b32.xlu0 %v616, 4
      %v937 = vpop.permute.xlu0 %936
      %1002 = vrot.lane.b32.xlu0 %v617, 8
      %v1003 = vpop.permute.xlu0 %1002
      %1004 = vrot.lane.b32.xlu0 %v618, 8
      %v1005 = vpop.permute.xlu0 %1004
      %1006 = vrot.lane.b32.xlu0 %v619, 8
      %v1007 = vpop.permute.xlu0 %1006
      %1008 = vrot.lane.b32.xlu0 %v620, 8
      %v1009 = vpop.permute.xlu0 %1008
      %1010 = vrot.lane.b32.xlu0 %v621, 8
      %v1011 = vpop.permute.xlu0 %1010
      %1012 = vrot.lane.b32.xlu0 %v622, 8
      %v1013 = vpop.permute.xlu0 %1012
      %1014 = vrot.lane.b32.xlu0 %v623, 8
      %v1015 = vpop.permute.xlu0 %1014
      %1016 = vrot.lane.b32.xlu0 %v624, 8
      %v1017 = vpop.permute.xlu0 %1016
      %1018 = vrot.lane.b32.xlu0 %v625, 8
      %v1019 = vpop.permute.xlu0 %1018
      %1020 = vrot.lane.b32.xlu0 %v626, 8
      %v1021 = vpop.permute.xlu0 %1020
      %1022 = vrot.lane.b32.xlu0 %v627, 8
      %v1023 = vpop.permute.xlu0 %1022
      %1024 = vrot.lane.b32.xlu0 %v628, 8
      %v1025 = vpop.permute.xlu0 %1024
      %1026 = vrot.lane.b32.xlu0 %v629, 8
      %v1027 = vpop.permute.xlu0 %1026
      %1028 = vrot.lane.b32.xlu0 %v630, 8
      %v1029 = vpop.permute.xlu0 %1028
      %1030 = vrot.lane.b32.xlu0 %v631, 8
      %v1031 = vpop.permute.xlu0 %1030
      %1032 = vrot.lane.b32.xlu0 %v632, 8
      %v1033 = vpop.permute.xlu0 %1032
      %1034 = vrot.lane.b32.xlu0 %v633, 8
      %v1035 = vpop.permute.xlu0 %1034
      %1036 = vrot.lane.b32.xlu0 %v634, 8
      %v1037 = vpop.permute.xlu0 %1036
      %1038 = vrot.lane.b32.xlu0 %v635, 8
      %v1039 = vpop.permute.xlu0 %1038
      %1040 = vrot.lane.b32.xlu0 %v636, 8
      %v1041 = vpop.permute.xlu0 %1040
      %1042 = vrot.lane.b32.xlu0 %v637, 8
      %v1043 = vpop.permute.xlu0 %1042
      %1044 = vrot.lane.b32.xlu0 %v638, 8
      %v1045 = vpop.permute.xlu0 %1044
      %1046 = vrot.lane.b32.xlu0 %v639, 8
      %v1047 = vpop.permute.xlu0 %1046
      %1048 = vrot.lane.b32.xlu0 %v640, 8
      %v1049 = vpop.permute.xlu0 %1048
      %1050 = vrot.lane.b32.xlu0 %v641, 8
      %v1051 = vpop.permute.xlu0 %1050
      %1052 = vrot.lane.b32.xlu0 %v642, 8
      %v1053 = vpop.permute.xlu0 %1052
      %1054 = vrot.lane.b32.xlu0 %v643, 8
      %v1055 = vpop.permute.xlu0 %1054
      %1056 = vrot.lane.b32.xlu0 %v644, 8
      %v1057 = vpop.permute.xlu0 %1056
      %1058 = vrot.lane.b32.xlu0 %v645, 8
      %v1059 = vpop.permute.xlu0 %1058
      %1060 = vrot.lane.b32.xlu0 %v646, 8
      %v1061 = vpop.permute.xlu0 %1060
      %1062 = vrot.lane.b32.xlu0 %v647, 8
      %v1063 = vpop.permute.xlu0 %1062
      %1064 = vrot.lane.b32.xlu0 %v648, 8
      %v1065 = vpop.permute.xlu0 %1064
      %1130 = vrot.lane.b32.xlu0 %v649, 12
      %v1131 = vpop.permute.xlu0 %1130
      %1132 = vrot.lane.b32.xlu0 %v650, 12
      %v1133 = vpop.permute.xlu0 %1132
      %1134 = vrot.lane.b32.xlu0 %v651, 12
      %v1135 = vpop.permute.xlu0 %1134
      %1136 = vrot.lane.b32.xlu0 %v652, 12
      %v1137 = vpop.permute.xlu0 %1136
      %1138 = vrot.lane.b32.xlu0 %v653, 12
      %v1139 = vpop.permute.xlu0 %1138
      %1140 = vrot.lane.b32.xlu0 %v654, 12
      %v1141 = vpop.permute.xlu0 %1140
      %1142 = vrot.lane.b32.xlu0 %v655, 12
      %v1143 = vpop.permute.xlu0 %1142
      %1144 = vrot.lane.b32.xlu0 %v656, 12
      %v1145 = vpop.permute.xlu0 %1144
      %1146 = vrot.lane.b32.xlu0 %v657, 12
      %v1147 = vpop.permute.xlu0 %1146
      %1148 = vrot.lane.b32.xlu0 %v658, 12
      %v1149 = vpop.permute.xlu0 %1148
      %1150 = vrot.lane.b32.xlu0 %v659, 12
      %v1151 = vpop.permute.xlu0 %1150
      %1152 = vrot.lane.b32.xlu0 %v660, 12
      %v1153 = vpop.permute.xlu0 %1152
      %1154 = vrot.lane.b32.xlu0 %v661, 12
      %v1155 = vpop.permute.xlu0 %1154
      %1156 = vrot.lane.b32.xlu0 %v662, 12
      %v1157 = vpop.permute.xlu0 %1156
      %1158 = vrot.lane.b32.xlu0 %v663, 12
      %v1159 = vpop.permute.xlu0 %1158
      %1160 = vrot.lane.b32.xlu0 %v664, 12
      %v1161 = vpop.permute.xlu0 %1160
      %1162 = vrot.lane.b32.xlu0 %v665, 12
      %v1163 = vpop.permute.xlu0 %1162
      %1164 = vrot.lane.b32.xlu0 %v666, 12
      %v1165 = vpop.permute.xlu0 %1164
      %1166 = vrot.lane.b32.xlu0 %v667, 12
      %v1167 = vpop.permute.xlu0 %1166
      %1168 = vrot.lane.b32.xlu0 %v668, 12
      %v1169 = vpop.permute.xlu0 %1168
      %1170 = vrot.lane.b32.xlu0 %v669, 12
      %v1171 = vpop.permute.xlu0 %1170
      %1172 = vrot.lane.b32.xlu0 %v670, 12
      %v1173 = vpop.permute.xlu0 %1172
      %1174 = vrot.lane.b32.xlu0 %v671, 12
      %v1175 = vpop.permute.xlu0 %1174
      %1176 = vrot.lane.b32.xlu0 %v672, 12
      %v1177 = vpop.permute.xlu0 %1176
      %1178 = vrot.lane.b32.xlu0 %v673, 12
      %v1179 = vpop.permute.xlu0 %1178
      %1180 = vrot.lane.b32.xlu0 %v674, 12
      %v1181 = vpop.permute.xlu0 %1180
      %1182 = vrot.lane.b32.xlu0 %v675, 12
      %v1183 = vpop.permute.xlu0 %1182
      %1184 = vrot.lane.b32.xlu0 %v676, 12
      %v1185 = vpop.permute.xlu0 %1184
      %1186 = vrot.lane.b32.xlu0 %v677, 12
      %v1187 = vpop.permute.xlu0 %1186
      %1188 = vrot.lane.b32.xlu0 %v678, 12
      %v1189 = vpop.permute.xlu0 %1188
      %1190 = vrot.lane.b32.xlu0 %v679, 12
      %v1191 = vpop.permute.xlu0 %1190
      %1192 = vrot.lane.b32.xlu0 %v680, 12
      %v1193 = vpop.permute.xlu0 %1192
      %1258 = vrot.lane.b32.xlu0 %v681, 16
      %v1259 = vpop.permute.xlu0 %1258
      %1260 = vrot.lane.b32.xlu0 %v682, 16
      %v1261 = vpop.permute.xlu0 %1260
      %1262 = vrot.lane.b32.xlu0 %v683, 16
      %v1263 = vpop.permute.xlu0 %1262
      %1264 = vrot.lane.b32.xlu0 %v684, 16
      %v1265 = vpop.permute.xlu0 %1264
      %1266 = vrot.lane.b32.xlu0 %v685, 16
      %v1267 = vpop.permute.xlu0 %1266
      %1268 = vrot.lane.b32.xlu0 %v686, 16
      %v1269 = vpop.permute.xlu0 %1268
      %1270 = vrot.lane.b32.xlu0 %v687, 16
      %v1271 = vpop.permute.xlu0 %1270
      %1272 = vrot.lane.b32.xlu0 %v688, 16
      %v1273 = vpop.permute.xlu0 %1272
      %1274 = vrot.lane.b32.xlu0 %v689, 16
      %v1275 = vpop.permute.xlu0 %1274
      %1276 = vrot.lane.b32.xlu0 %v690, 16
      %v1277 = vpop.permute.xlu0 %1276
      %1278 = vrot.lane.b32.xlu0 %v691, 16
      %v1279 = vpop.permute.xlu0 %1278
      %1280 = vrot.lane.b32.xlu0 %v692, 16
      %v1281 = vpop.permute.xlu0 %1280
      %1282 = vrot.lane.b32.xlu0 %v693, 16
      %v1283 = vpop.permute.xlu0 %1282
      %1284 = vrot.lane.b32.xlu0 %v694, 16
      %v1285 = vpop.permute.xlu0 %1284
      %1286 = vrot.lane.b32.xlu0 %v695, 16
      %v1287 = vpop.permute.xlu0 %1286
      %1288 = vrot.lane.b32.xlu0 %v696, 16
      %v1289 = vpop.permute.xlu0 %1288
      %1290 = vrot.lane.b32.xlu0 %v697, 16
      %v1291 = vpop.permute.xlu0 %1290
      %1292 = vrot.lane.b32.xlu0 %v698, 16
      %v1293 = vpop.permute.xlu0 %1292
      %1294 = vrot.lane.b32.xlu0 %v699, 16
      %v1295 = vpop.permute.xlu0 %1294
      %1296 = vrot.lane.b32.xlu0 %v700, 16
      %v1297 = vpop.permute.xlu0 %1296
      %1298 = vrot.lane.b32.xlu0 %v701, 16
      %v1299 = vpop.permute.xlu0 %1298
      %1300 = vrot.lane.b32.xlu0 %v702, 16
      %v1301 = vpop.permute.xlu0 %1300
      %1302 = vrot.lane.b32.xlu0 %v703, 16
      %v1303 = vpop.permute.xlu0 %1302
      %1304 = vrot.lane.b32.xlu0 %v704, 16
      %v1305 = vpop.permute.xlu0 %1304
      %1306 = vrot.lane.b32.xlu0 %v705, 16
      %v1307 = vpop.permute.xlu0 %1306
      %1308 = vrot.lane.b32.xlu0 %v706, 16
      %v1309 = vpop.permute.xlu0 %1308
      %1310 = vrot.lane.b32.xlu0 %v707, 16
      %v1311 = vpop.permute.xlu0 %1310
      %1312 = vrot.lane.b32.xlu0 %v708, 16
      %v1313 = vpop.permute.xlu0 %1312
      %1314 = vrot.lane.b32.xlu0 %v709, 16
      %v1315 = vpop.permute.xlu0 %1314
      %1316 = vrot.lane.b32.xlu0 %v710, 16
      %v1317 = vpop.permute.xlu0 %1316
      %1318 = vrot.lane.b32.xlu0 %v711, 16
      %v1319 = vpop.permute.xlu0 %1318
      %1320 = vrot.lane.b32.xlu0 %v712, 16
      %v1321 = vpop.permute.xlu0 %1320
      %1386 = vrot.lane.b32.xlu0 %v713, 20
      %v1387 = vpop.permute.xlu0 %1386
      %1388 = vrot.lane.b32.xlu0 %v714, 20
      %v1389 = vpop.permute.xlu0 %1388
      %1390 = vrot.lane.b32.xlu0 %v715, 20
      %v1391 = vpop.permute.xlu0 %1390
      %1392 = vrot.lane.b32.xlu0 %v716, 20
      %v1393 = vpop.permute.xlu0 %1392
      %1394 = vrot.lane.b32.xlu0 %v717, 20
      %v1395 = vpop.permute.xlu0 %1394
      %1396 = vrot.lane.b32.xlu0 %v718, 20
      %v1397 = vpop.permute.xlu0 %1396
      %1398 = vrot.lane.b32.xlu0 %v719, 20
      %v1399 = vpop.permute.xlu0 %1398
      %1400 = vrot.lane.b32.xlu0 %v720, 20
      %v1401 = vpop.permute.xlu0 %1400
      %1402 = vrot.lane.b32.xlu0 %v721, 20
      %v1403 = vpop.permute.xlu0 %1402
      %1404 = vrot.lane.b32.xlu0 %v722, 20
      %v1405 = vpop.permute.xlu0 %1404
      %1406 = vrot.lane.b32.xlu0 %v723, 20
      %v1407 = vpop.permute.xlu0 %1406
      %1408 = vrot.lane.b32.xlu0 %v724, 20
      %v1409 = vpop.permute.xlu0 %1408
      %1410 = vrot.lane.b32.xlu0 %v725, 20
      %v1411 = vpop.permute.xlu0 %1410
      %1412 = vrot.lane.b32.xlu0 %v726, 20
      %v1413 = vpop.permute.xlu0 %1412
      %1414 = vrot.lane.b32.xlu0 %v727, 20
      %v1415 = vpop.permute.xlu0 %1414
      %1416 = vrot.lane.b32.xlu0 %v728, 20
      %v1417 = vpop.permute.xlu0 %1416
      %1418 = vrot.lane.b32.xlu0 %v729, 20
      %v1419 = vpop.permute.xlu0 %1418
      %1420 = vrot.lane.b32.xlu0 %v730, 20
      %v1421 = vpop.permute.xlu0 %1420
      %1422 = vrot.lane.b32.xlu0 %v731, 20
      %v1423 = vpop.permute.xlu0 %1422
      %1424 = vrot.lane.b32.xlu0 %v732, 20
      %v1425 = vpop.permute.xlu0 %1424
      %1426 = vrot.lane.b32.xlu0 %v733, 20
      %v1427 = vpop.permute.xlu0 %1426
      %1428 = vrot.lane.b32.xlu0 %v734, 20
      %v1429 = vpop.permute.xlu0 %1428
      %1430 = vrot.lane.b32.xlu0 %v735, 20
      %v1431 = vpop.permute.xlu0 %1430
      %1432 = vrot.lane.b32.xlu0 %v736, 20
      %v1433 = vpop.permute.xlu0 %1432
      %1434 = vrot.lane.b32.xlu0 %v737, 20
      %v1435 = vpop.permute.xlu0 %1434
      %1436 = vrot.lane.b32.xlu0 %v738, 20
      %v1437 = vpop.permute.xlu0 %1436
      %1438 = vrot.lane.b32.xlu0 %v739, 20
      %v1439 = vpop.permute.xlu0 %1438
      %1440 = vrot.lane.b32.xlu0 %v740, 20
      %v1441 = vpop.permute.xlu0 %1440
      %1442 = vrot.lane.b32.xlu0 %v741, 20
      %v1443 = vpop.permute.xlu0 %1442
      %1444 = vrot.lane.b32.xlu0 %v742, 20
      %v1445 = vpop.permute.xlu0 %1444
      %1446 = vrot.lane.b32.xlu0 %v743, 20
      %v1447 = vpop.permute.xlu0 %1446
      %1448 = vrot.lane.b32.xlu0 %v744, 20
      %v1449 = vpop.permute.xlu0 %1448
      %1514 = vrot.lane.b32.xlu0 %v746, 24
      %v1515 = vpop.permute.xlu0 %1514
      %1516 = vrot.lane.b32.xlu0 %v747, 24
      %v1517 = vpop.permute.xlu0 %1516
      %1518 = vrot.lane.b32.xlu0 %v748, 24
      %v1519 = vpop.permute.xlu0 %1518
      %1520 = vrot.lane.b32.xlu0 %v749, 24
      %v1521 = vpop.permute.xlu0 %1520
      %1522 = vrot.lane.b32.xlu0 %v750, 24
      %v1523 = vpop.permute.xlu0 %1522
      %1524 = vrot.lane.b32.xlu0 %v751, 24
      %v1525 = vpop.permute.xlu0 %1524
      %1526 = vrot.lane.b32.xlu0 %v752, 24
      %v1527 = vpop.permute.xlu0 %1526
      %1528 = vrot.lane.b32.xlu0 %v753, 24
      %v1529 = vpop.permute.xlu0 %1528
      %1530 = vrot.lane.b32.xlu0 %v754, 24
      %v1531 = vpop.permute.xlu0 %1530
      %1532 = vrot.lane.b32.xlu0 %v755, 24
      %v1533 = vpop.permute.xlu0 %1532
      %1534 = vrot.lane.b32.xlu0 %v756, 24
      %v1535 = vpop.permute.xlu0 %1534
      %1536 = vrot.lane.b32.xlu0 %v757, 24
      %v1537 = vpop.permute.xlu0 %1536
      %1538 = vrot.lane.b32.xlu0 %v758, 24
      %v1539 = vpop.permute.xlu0 %1538
      %1540 = vrot.lane.b32.xlu0 %v759, 24
      %v1541 = vpop.permute.xlu0 %1540
      %1542 = vrot.lane.b32.xlu0 %v760, 24
      %v1543 = vpop.permute.xlu0 %1542
      %1544 = vrot.lane.b32.xlu0 %v761, 24
      %v1545 = vpop.permute.xlu0 %1544
      %1546 = vrot.lane.b32.xlu0 %v762, 24
      %v1547 = vpop.permute.xlu0 %1546
      %1548 = vrot.lane.b32.xlu0 %v763, 24
      %v1549 = vpop.permute.xlu0 %1548
      %1550 = vrot.lane.b32.xlu0 %v764, 24
      %v1551 = vpop.permute.xlu0 %1550
      %1552 = vrot.lane.b32.xlu0 %v765, 24
      %v1553 = vpop.permute.xlu0 %1552
      %1554 = vrot.lane.b32.xlu0 %v766, 24
      %v1555 = vpop.permute.xlu0 %1554
      %1556 = vrot.lane.b32.xlu0 %v767, 24
      %v1557 = vpop.permute.xlu0 %1556
      %1558 = vrot.lane.b32.xlu0 %v768, 24
      %v1559 = vpop.permute.xlu0 %1558
      %1560 = vrot.lane.b32.xlu0 %v769, 24
      %v1561 = vpop.permute.xlu0 %1560
      %1562 = vrot.lane.b32.xlu0 %v770, 24
      %v1563 = vpop.permute.xlu0 %1562
      %1564 = vrot.lane.b32.xlu0 %v771, 24
      %v1565 = vpop.permute.xlu0 %1564
      %1566 = vrot.lane.b32.xlu0 %v772, 24
      %v1567 = vpop.permute.xlu0 %1566
      %1568 = vrot.lane.b32.xlu0 %v773, 24
      %v1569 = vpop.permute.xlu0 %1568
      %1570 = vrot.lane.b32.xlu0 %v774, 24
      %v1571 = vpop.permute.xlu0 %1570
      %1572 = vrot.lane.b32.xlu0 %v775, 24
      %v1573 = vpop.permute.xlu0 %1572
      %1574 = vrot.lane.b32.xlu0 %v776, 24
      %v1575 = vpop.permute.xlu0 %1574
      %1576 = vrot.lane.b32.xlu0 %v777, 24
      %v1577 = vpop.permute.xlu0 %1576
      %1642 = vrot.lane.b32.xlu0 %v778, 28
      %v1643 = vpop.permute.xlu0 %1642
      %1644 = vrot.lane.b32.xlu0 %v779, 28
      %v1645 = vpop.permute.xlu0 %1644
      %1646 = vrot.lane.b32.xlu0 %v780, 28
      %v1647 = vpop.permute.xlu0 %1646
      %1648 = vrot.lane.b32.xlu0 %v781, 28
      %v1649 = vpop.permute.xlu0 %1648
      %1650 = vrot.lane.b32.xlu0 %v782, 28
      %v1651 = vpop.permute.xlu0 %1650
      %1652 = vrot.lane.b32.xlu0 %v783, 28
      %v1653 = vpop.permute.xlu0 %1652
      %1654 = vrot.lane.b32.xlu0 %v784, 28
      %v1655 = vpop.permute.xlu0 %1654
      %1656 = vrot.lane.b32.xlu0 %v785, 28
      %v1657 = vpop.permute.xlu0 %1656
      %1658 = vrot.lane.b32.xlu0 %v786, 28
      %v1659 = vpop.permute.xlu0 %1658
      %1660 = vrot.lane.b32.xlu0 %v787, 28
      %v1661 = vpop.permute.xlu0 %1660
      %1662 = vrot.lane.b32.xlu0 %v788, 28
      %v1663 = vpop.permute.xlu0 %1662
      %1664 = vrot.lane.b32.xlu0 %v789, 28
      %v1665 = vpop.permute.xlu0 %1664
      %1666 = vrot.lane.b32.xlu0 %v790, 28
      %v1667 = vpop.permute.xlu0 %1666
      %1668 = vrot.lane.b32.xlu0 %v791, 28
      %v1669 = vpop.permute.xlu0 %1668
      %1670 = vrot.lane.b32.xlu0 %v792, 28
      %v1671 = vpop.permute.xlu0 %1670
      %1672 = vrot.lane.b32.xlu0 %v793, 28
      %v1673 = vpop.permute.xlu0 %1672
      %1674 = vrot.lane.b32.xlu0 %v794, 28
      %v1675 = vpop.permute.xlu0 %1674
      %1676 = vrot.lane.b32.xlu0 %v795, 28
      %v1677 = vpop.permute.xlu0 %1676
      %1678 = vrot.lane.b32.xlu0 %v796, 28
      %v1679 = vpop.permute.xlu0 %1678
      %1680 = vrot.lane.b32.xlu0 %v797, 28
      %v1681 = vpop.permute.xlu0 %1680
      %1682 = vrot.lane.b32.xlu0 %v798, 28
      %v1683 = vpop.permute.xlu0 %1682
      %1684 = vrot.lane.b32.xlu0 %v799, 28
      %v1685 = vpop.permute.xlu0 %1684
      %1686 = vrot.lane.b32.xlu0 %v800, 28
      %v1687 = vpop.permute.xlu0 %1686
      %1688 = vrot.lane.b32.xlu0 %v801, 28
      %v1689 = vpop.permute.xlu0 %1688
      %1690 = vrot.lane.b32.xlu0 %v802, 28
      %v1691 = vpop.permute.xlu0 %1690
      %1692 = vrot.lane.b32.xlu0 %v803, 28
      %v1693 = vpop.permute.xlu0 %1692
      %1694 = vrot.lane.b32.xlu0 %v804, 28
      %v1695 = vpop.permute.xlu0 %1694
      %1696 = vrot.lane.b32.xlu0 %v805, 28
      %v1697 = vpop.permute.xlu0 %1696
      %1698 = vrot.lane.b32.xlu0 %v806, 28
      %v1699 = vpop.permute.xlu0 %1698
      %1700 = vrot.lane.b32.xlu0 %v807, 28
      %v1701 = vpop.permute.xlu0 %1700
      %1702 = vrot.lane.b32.xlu0 %v808, 28
      %v1703 = vpop.permute.xlu0 %1702
      %1704 = vrot.lane.b32.xlu0 %v809, 28
      %v1705 = vpop.permute.xlu0 %1704
      %1770 = vrot.lane.b32.xlu0 %v810, 32
      %v1771 = vpop.permute.xlu0 %1770
      %1772 = vrot.lane.b32.xlu0 %v811, 32
      %v1773 = vpop.permute.xlu0 %1772
      %1774 = vrot.lane.b32.xlu0 %v812, 32
      %v1775 = vpop.permute.xlu0 %1774
      %1776 = vrot.lane.b32.xlu0 %v813, 32
      %v1777 = vpop.permute.xlu0 %1776
      %1778 = vrot.lane.b32.xlu0 %v814, 32
      %v1779 = vpop.permute.xlu0 %1778
      %1780 = vrot.lane.b32.xlu0 %v815, 32
      %v1781 = vpop.permute.xlu0 %1780
      %1782 = vrot.lane.b32.xlu0 %v816, 32
      %v1783 = vpop.permute.xlu0 %1782
      %1784 = vrot.lane.b32.xlu0 %v817, 32
      %v1785 = vpop.permute.xlu0 %1784
      %1786 = vrot.lane.b32.xlu0 %v818, 32
      %v1787 = vpop.permute.xlu0 %1786
      %1788 = vrot.lane.b32.xlu0 %v819, 32
      %v1789 = vpop.permute.xlu0 %1788
      %1790 = vrot.lane.b32.xlu0 %v820, 32
      %v1791 = vpop.permute.xlu0 %1790
      %1792 = vrot.lane.b32.xlu0 %v821, 32
      %v1793 = vpop.permute.xlu0 %1792
      %1794 = vrot.lane.b32.xlu0 %v822, 32
      %v1795 = vpop.permute.xlu0 %1794
      %1796 = vrot.lane.b32.xlu0 %v823, 32
      %v1797 = vpop.permute.xlu0 %1796
      %1798 = vrot.lane.b32.xlu0 %v824, 32
      %v1799 = vpop.permute.xlu0 %1798
      %1800 = vrot.lane.b32.xlu0 %v825, 32
      %v1801 = vpop.permute.xlu0 %1800
      %1802 = vrot.lane.b32.xlu0 %v826, 32
      %v1803 = vpop.permute.xlu0 %1802
      %1804 = vrot.lane.b32.xlu0 %v827, 32
      %v1805 = vpop.permute.xlu0 %1804
      %1806 = vrot.lane.b32.xlu0 %v828, 32
      %v1807 = vpop.permute.xlu0 %1806
      %1808 = vrot.lane.b32.xlu0 %v829, 32
      %v1809 = vpop.permute.xlu0 %1808
      %1810 = vrot.lane.b32.xlu0 %v830, 32
      %v1811 = vpop.permute.xlu0 %1810
      %1812 = vrot.lane.b32.xlu0 %v831, 32
      %v1813 = vpop.permute.xlu0 %1812
      %1814 = vrot.lane.b32.xlu0 %v832, 32
      %v1815 = vpop.permute.xlu0 %1814
      %1816 = vrot.lane.b32.xlu0 %v833, 32
      %v1817 = vpop.permute.xlu0 %1816
      %1818 = vrot.lane.b32.xlu0 %v834, 32
      %v1819 = vpop.permute.xlu0 %1818
      %1820 = vrot.lane.b32.xlu0 %v835, 32
      %v1821 = vpop.permute.xlu0 %1820
      %1822 = vrot.lane.b32.xlu0 %v836, 32
      %v1823 = vpop.permute.xlu0 %1822
      %1824 = vrot.lane.b32.xlu0 %v837, 32
      %v1825 = vpop.permute.xlu0 %1824
      %1826 = vrot.lane.b32.xlu0 %v838, 32
      %v1827 = vpop.permute.xlu0 %1826
      %1828 = vrot.lane.b32.xlu0 %v839, 32
      %v1829 = vpop.permute.xlu0 %1828
      %1830 = vrot.lane.b32.xlu0 %v840, 32
      %v1831 = vpop.permute.xlu0 %1830
      %1832 = vrot.lane.b32.xlu0 %v841, 32
      %v1833 = vpop.permute.xlu0 %1832
      %v1866 = vsel %vm334, %v553, %v875
      %v1867 = vsel %vm334, %v554, %v877
      %v1868 = vsel %vm334, %v555, %v879
      %v1869 = vsel %vm334, %v556, %v881
      %v1870 = vsel %vm334, %v557, %v883
      %v1871 = vsel %vm334, %v558, %v885
      %v1872 = vsel %vm334, %v559, %v887
      %v1873 = vsel %vm334, %v560, %v889
      %v1874 = vsel %vm334, %v561, %v891
      %v1875 = vsel %vm334, %v562, %v893
      %v1876 = vsel %vm334, %v563, %v895
      %v1877 = vsel %vm334, %v564, %v897
      %v1878 = vsel %vm334, %v565, %v899
      %v1879 = vsel %vm334, %v566, %v901
      %v1880 = vsel %vm334, %v567, %v903
      %v1881 = vsel %vm334, %v568, %v905
      %v1882 = vsel %vm334, %v569, %v907
      %v1883 = vsel %vm334, %v570, %v909
      %v1884 = vsel %vm334, %v571, %v911
      %v1885 = vsel %vm334, %v572, %v913
      %v1886 = vsel %vm334, %v573, %v915
      %v1887 = vsel %vm334, %v574, %v917
      %v1888 = vsel %vm334, %v575, %v919
      %v1889 = vsel %vm334, %v576, %v921
      %v1890 = vsel %vm334, %v577, %v923
      %v1891 = vsel %vm334, %v578, %v925
      %v1892 = vsel %vm334, %v579, %v927
      %v1893 = vsel %vm334, %v580, %v929
      %v1894 = vsel %vm334, %v581, %v931
      %v1895 = vsel %vm334, %v582, %v933
      %v1896 = vsel %vm334, %v583, %v935
      %v1897 = vsel %vm334, %v584, %v937
      %vm1898 = vcmask 64512
      %v1899 = vsel %vm1898, %v1866, %v1003
      %v1900 = vsel %vm1898, %v1867, %v1005
      %v1901 = vsel %vm1898, %v1868, %v1007
      %v1902 = vsel %vm1898, %v1869, %v1009
      %v1903 = vsel %vm1898, %v1870, %v1011
      %v1904 = vsel %vm1898, %v1871, %v1013
      %v1905 = vsel %vm1898, %v1872, %v1015
      %v1906 = vsel %vm1898, %v1873, %v1017
      %v1907 = vsel %vm1898, %v1874, %v1019
      %v1908 = vsel %vm1898, %v1875, %v1021
      %v1909 = vsel %vm1898, %v1876, %v1023
      %v1910 = vsel %vm1898, %v1877, %v1025
      %v1911 = vsel %vm1898, %v1878, %v1027
      %v1912 = vsel %vm1898, %v1879, %v1029
      %v1913 = vsel %vm1898, %v1880, %v1031
      %v1914 = vsel %vm1898, %v1881, %v1033
      %v1915 = vsel %vm1898, %v1882, %v1035
      %v1916 = vsel %vm1898, %v1883, %v1037
      %v1917 = vsel %vm1898, %v1884, %v1039
      %v1918 = vsel %vm1898, %v1885, %v1041
      %v1919 = vsel %vm1898, %v1886, %v1043
      %v1920 = vsel %vm1898, %v1887, %v1045
      %v1921 = vsel %vm1898, %v1888, %v1047
      %v1922 = vsel %vm1898, %v1889, %v1049
      %v1923 = vsel %vm1898, %v1890, %v1051
      %v1924 = vsel %vm1898, %v1891, %v1053
      %v1925 = vsel %vm1898, %v1892, %v1055
      %v1926 = vsel %vm1898, %v1893, %v1057
      %v1927 = vsel %vm1898, %v1894, %v1059
      %v1928 = vsel %vm1898, %v1895, %v1061
      %v1929 = vsel %vm1898, %v1896, %v1063
      %v1930 = vsel %vm1898, %v1897, %v1065
      %vm1931 = vcmask 97280
      %v1932 = vsel %vm1931, %v1899, %v1131
      %v1933 = vsel %vm1931, %v1900, %v1133
      %v1934 = vsel %vm1931, %v1901, %v1135
      %v1935 = vsel %vm1931, %v1902, %v1137
      %v1936 = vsel %vm1931, %v1903, %v1139
      %v1937 = vsel %vm1931, %v1904, %v1141
      %v1938 = vsel %vm1931, %v1905, %v1143
      %v1939 = vsel %vm1931, %v1906, %v1145
      %v1940 = vsel %vm1931, %v1907, %v1147
      %v1941 = vsel %vm1931, %v1908, %v1149
      %v1942 = vsel %vm1931, %v1909, %v1151
      %v1943 = vsel %vm1931, %v1910, %v1153
      %v1944 = vsel %vm1931, %v1911, %v1155
      %v1945 = vsel %vm1931, %v1912, %v1157
      %v1946 = vsel %vm1931, %v1913, %v1159
      %v1947 = vsel %vm1931, %v1914, %v1161
      %v1948 = vsel %vm1931, %v1915, %v1163
      %v1949 = vsel %vm1931, %v1916, %v1165
      %v1950 = vsel %vm1931, %v1917, %v1167
      %v1951 = vsel %vm1931, %v1918, %v1169
      %v1952 = vsel %vm1931, %v1919, %v1171
      %v1953 = vsel %vm1931, %v1920, %v1173
      %v1954 = vsel %vm1931, %v1921, %v1175
      %v1955 = vsel %vm1931, %v1922, %v1177
      %v1956 = vsel %vm1931, %v1923, %v1179
      %v1957 = vsel %vm1931, %v1924, %v1181
      %v1958 = vsel %vm1931, %v1925, %v1183
      %v1959 = vsel %vm1931, %v1926, %v1185
      %v1960 = vsel %vm1931, %v1927, %v1187
      %v1961 = vsel %vm1931, %v1928, %v1189
      %v1962 = vsel %vm1931, %v1929, %v1191
      %v1963 = vsel %vm1931, %v1930, %v1193
      %vm1964 = vcmask 130048
      %v1965 = vsel %vm1964, %v1932, %v1259
      %v1966 = vsel %vm1964, %v1933, %v1261
      %v1967 = vsel %vm1964, %v1934, %v1263
      %v1968 = vsel %vm1964, %v1935, %v1265
      %v1969 = vsel %vm1964, %v1936, %v1267
      %v1970 = vsel %vm1964, %v1937, %v1269
      %v1971 = vsel %vm1964, %v1938, %v1271
      %v1972 = vsel %vm1964, %v1939, %v1273
      %v1973 = vsel %vm1964, %v1940, %v1275
      %v1974 = vsel %vm1964, %v1941, %v1277
      %v1975 = vsel %vm1964, %v1942, %v1279
      %v1976 = vsel %vm1964, %v1943, %v1281
      %v1977 = vsel %vm1964, %v1944, %v1283
      %v1978 = vsel %vm1964, %v1945, %v1285
      %v1979 = vsel %vm1964, %v1946, %v1287
      %v1980 = vsel %vm1964, %v1947, %v1289
      %v1981 = vsel %vm1964, %v1948, %v1291
      %v1982 = vsel %vm1964, %v1949, %v1293
      %v1983 = vsel %vm1964, %v1950, %v1295
      %v1984 = vsel %vm1964, %v1951, %v1297
      %v1985 = vsel %vm1964, %v1952, %v1299
      %v1986 = vsel %vm1964, %v1953, %v1301
      %v1987 = vsel %vm1964, %v1954, %v1303
      %v1988 = vsel %vm1964, %v1955, %v1305
      %v1989 = vsel %vm1964, %v1956, %v1307
      %v1990 = vsel %vm1964, %v1957, %v1309
      %v1991 = vsel %vm1964, %v1958, %v1311
      %v1992 = vsel %vm1964, %v1959, %v1313
      %v1993 = vsel %vm1964, %v1960, %v1315
      %v1994 = vsel %vm1964, %v1961, %v1317
      %v1995 = vsel %vm1964, %v1962, %v1319
      %v1996 = vsel %vm1964, %v1963, %v1321
      %vm1997 = vcmask 162816
      %v1998 = vsel %vm1997, %v1965, %v1387
      %v1999 = vsel %vm1997, %v1966, %v1389
      %v2000 = vsel %vm1997, %v1967, %v1391
      %v2001 = vsel %vm1997, %v1968, %v1393
      %v2002 = vsel %vm1997, %v1969, %v1395
      %v2003 = vsel %vm1997, %v1970, %v1397
      %v2004 = vsel %vm1997, %v1971, %v1399
      %v2005 = vsel %vm1997, %v1972, %v1401
      %v2006 = vsel %vm1997, %v1973, %v1403
      %v2007 = vsel %vm1997, %v1974, %v1405
      %v2008 = vsel %vm1997, %v1975, %v1407
      %v2009 = vsel %vm1997, %v1976, %v1409
      %v2010 = vsel %vm1997, %v1977, %v1411
      %v2011 = vsel %vm1997, %v1978, %v1413
      %v2012 = vsel %vm1997, %v1979, %v1415
      %v2013 = vsel %vm1997, %v1980, %v1417
      %v2014 = vsel %vm1997, %v1981, %v1419
      %v2015 = vsel %vm1997, %v1982, %v1421
      %v2016 = vsel %vm1997, %v1983, %v1423
      %v2017 = vsel %vm1997, %v1984, %v1425
      %v2018 = vsel %vm1997, %v1985, %v1427
      %v2019 = vsel %vm1997, %v1986, %v1429
      %v2020 = vsel %vm1997, %v1987, %v1431
      %v2021 = vsel %vm1997, %v1988, %v1433
      %v2022 = vsel %vm1997, %v1989, %v1435
      %v2023 = vsel %vm1997, %v1990, %v1437
      %v2024 = vsel %vm1997, %v1991, %v1439
      %v2025 = vsel %vm1997, %v1992, %v1441
      %v2026 = vsel %vm1997, %v1993, %v1443
      %v2027 = vsel %vm1997, %v1994, %v1445
      %v2028 = vsel %vm1997, %v1995, %v1447
      %v2029 = vsel %vm1997, %v1996, %v1449
      %vm2030 = vcmask 195584
      %v2031 = vsel %vm2030, %v1998, %v1515
      %v2032 = vsel %vm2030, %v1999, %v1517
      %v2033 = vsel %vm2030, %v2000, %v1519
      %v2034 = vsel %vm2030, %v2001, %v1521
      %v2035 = vsel %vm2030, %v2002, %v1523
      %v2036 = vsel %vm2030, %v2003, %v1525
      %v2037 = vsel %vm2030, %v2004, %v1527
      %v2038 = vsel %vm2030, %v2005, %v1529
      %v2039 = vsel %vm2030, %v2006, %v1531
      %v2040 = vsel %vm2030, %v2007, %v1533
      %v2041 = vsel %vm2030, %v2008, %v1535
      %v2042 = vsel %vm2030, %v2009, %v1537
      %v2043 = vsel %vm2030, %v2010, %v1539
      %v2044 = vsel %vm2030, %v2011, %v1541
      %v2045 = vsel %vm2030, %v2012, %v1543
      %v2046 = vsel %vm2030, %v2013, %v1545
      %v2047 = vsel %vm2030, %v2014, %v1547
      %v2048 = vsel %vm2030, %v2015, %v1549
      %v2049 = vsel %vm2030, %v2016, %v1551
      %v2050 = vsel %vm2030, %v2017, %v1553
      %v2051 = vsel %vm2030, %v2018, %v1555
      %v2052 = vsel %vm2030, %v2019, %v1557
      %v2053 = vsel %vm2030, %v2020, %v1559
      %v2054 = vsel %vm2030, %v2021, %v1561
      %v2055 = vsel %vm2030, %v2022, %v1563
      %v2056 = vsel %vm2030, %v2023, %v1565
      %v2057 = vsel %vm2030, %v2024, %v1567
      %v2058 = vsel %vm2030, %v2025, %v1569
      %v2059 = vsel %vm2030, %v2026, %v1571
      %v2060 = vsel %vm2030, %v2027, %v1573
      %v2061 = vsel %vm2030, %v2028, %v1575
      %v2062 = vsel %vm2030, %v2029, %v1577
      %vm2063 = vcmask 228352
      %v2064 = vsel %vm2063, %v2031, %v1643
      %v2065 = vsel %vm2063, %v2032, %v1645
      %v2066 = vsel %vm2063, %v2033, %v1647
      %v2067 = vsel %vm2063, %v2034, %v1649
      %v2068 = vsel %vm2063, %v2035, %v1651
      %v2069 = vsel %vm2063, %v2036, %v1653
      %v2070 = vsel %vm2063, %v2037, %v1655
      %v2071 = vsel %vm2063, %v2038, %v1657
      %v2072 = vsel %vm2063, %v2039, %v1659
      %v2073 = vsel %vm2063, %v2040, %v1661
      %v2074 = vsel %vm2063, %v2041, %v1663
      %v2075 = vsel %vm2063, %v2042, %v1665
      %v2076 = vsel %vm2063, %v2043, %v1667
      %v2077 = vsel %vm2063, %v2044, %v1669
      %v2078 = vsel %vm2063, %v2045, %v1671
      %v2079 = vsel %vm2063, %v2046, %v1673
      %v2080 = vsel %vm2063, %v2047, %v1675
      %v2081 = vsel %vm2063, %v2048, %v1677
      %v2082 = vsel %vm2063, %v2049, %v1679
      %v2083 = vsel %vm2063, %v2050, %v1681
      %v2084 = vsel %vm2063, %v2051, %v1683
      %v2085 = vsel %vm2063, %v2052, %v1685
      %v2086 = vsel %vm2063, %v2053, %v1687
      %v2087 = vsel %vm2063, %v2054, %v1689
      %v2088 = vsel %vm2063, %v2055, %v1691
      %v2089 = vsel %vm2063, %v2056, %v1693
      %v2090 = vsel %vm2063, %v2057, %v1695
      %v2091 = vsel %vm2063, %v2058, %v1697
      %v2092 = vsel %vm2063, %v2059, %v1699
      %v2093 = vsel %vm2063, %v2060, %v1701
      %v2094 = vsel %vm2063, %v2061, %v1703
      %v2095 = vsel %vm2063, %v2062, %v1705
      %v2096 = vsel %vm390, %v2064, %v1771
      %v2097 = vsel %vm390, %v2065, %v1773
      %v2098 = vsel %vm390, %v2066, %v1775
      %v2099 = vsel %vm390, %v2067, %v1777
      %v2100 = vsel %vm390, %v2068, %v1779
      %v2101 = vsel %vm390, %v2069, %v1781
      %v2102 = vsel %vm390, %v2070, %v1783
      %v2103 = vsel %vm390, %v2071, %v1785
      %v2104 = vsel %vm390, %v2072, %v1787
      %v2105 = vsel %vm390, %v2073, %v1789
      %v2106 = vsel %vm390, %v2074, %v1791
      %v2107 = vsel %vm390, %v2075, %v1793
      %v2108 = vsel %vm390, %v2076, %v1795
      %v2109 = vsel %vm390, %v2077, %v1797
      %v2110 = vsel %vm390, %v2078, %v1799
      %v2111 = vsel %vm390, %v2079, %v1801
      %v2112 = vsel %vm390, %v2080, %v1803
      %v2113 = vsel %vm390, %v2081, %v1805
      %v2114 = vsel %vm390, %v2082, %v1807
      %v2115 = vsel %vm390, %v2083, %v1809
      %v2116 = vsel %vm390, %v2084, %v1811
      %v2117 = vsel %vm390, %v2085, %v1813
      %v2118 = vsel %vm390, %v2086, %v1815
      %v2119 = vsel %vm390, %v2087, %v1817
      %v2120 = vsel %vm390, %v2088, %v1819
      %v2121 = vsel %vm390, %v2089, %v1821
      %v2122 = vsel %vm390, %v2090, %v1823
      %v2123 = vsel %vm390, %v2091, %v1825
      %v2124 = vsel %vm390, %v2092, %v1827
      %v2125 = vsel %vm390, %v2093, %v1829
      %v2126 = vsel %vm390, %v2094, %v1831
      %v2127 = vsel %vm390, %v2095, %v1833
      %v2128 = vpack.c.bf16 %v2097, %v2096
      %v2129 = vpack.c.bf16 %v2099, %v2098
      %v2130 = vpack.c.bf16 %v2101, %v2100
      %v2131 = vpack.c.bf16 %v2103, %v2102
      %v2132 = vpack.c.bf16 %v2105, %v2104
      %v2133 = vpack.c.bf16 %v2107, %v2106
      %v2134 = vpack.c.bf16 %v2109, %v2108
      %v2135 = vpack.c.bf16 %v2111, %v2110
      %v2136 = vpack.c.bf16 %v2113, %v2112
      %v2137 = vpack.c.bf16 %v2115, %v2114
      %v2138 = vpack.c.bf16 %v2117, %v2116
      %v2139 = vpack.c.bf16 %v2119, %v2118
      %v2140 = vpack.c.bf16 %v2121, %v2120
      %v2141 = vpack.c.bf16 %v2123, %v2122
      %v2142 = vpack.c.bf16 %v2125, %v2124
      %v2143 = vpack.c.bf16 %v2127, %v2126
      %v2144 = vld [vmem:[%s1] sm:$0xf]
      %v2145 = vld [vmem:[%s1 + $0x4] sm:$0xf]
      %v2146 = vld [vmem:[%s1 + $0x8] sm:$0xf]
      %v2147 = vld [vmem:[%s1 + $0xc] sm:$0xf]
      %v2148 = vld [vmem:[%s1 + $0x10] sm:$0x3]
      %v2149 = vld [vmem:[%s2] sm:$0x1]
      %v2151 = vlaneseq
      %v2152 = vshrl.u32 %v2151, 7
      %v2153 = vsub.s32 0, %v2152
      %v2154 = vrot.slane %v2149, %v2153
      %v2161 = vunpack.c.l.b16 %v2144
      %v2162 = vunpack.c.l.b16 %v2145
      %v2163 = vunpack.c.l.b16 %v2146
      %v2164 = vunpack.c.l.b16 %v2147
      %v2165 = vunpack.c.l.b16 %v2148
      %v2166 = vpack.c.b16 %v2162, %v2161
      %v2167 = vpack.c.b16 %v2164, %v2163
      %v2168 = vpack.c.b16 %v2165, %v2165
      %vm2171 = vcmask 293888
      %v2173 = vsel %vm2171, %v2128, 0
      %v2176 = vsel %vm2171, %v2129, 0
      %v2179 = vsel %vm2171, %v2130, 0
      %v2182 = vsel %vm2171, %v2131, 0
      %v2185 = vsel %vm2171, %v2132, 0
      %v2188 = vsel %vm2171, %v2133, 0
      %v2191 = vsel %vm2171, %v2134, 0
      %v2194 = vsel %vm2171, %v2135, 0
      %v2197 = vsel %vm2171, %v2136, 0
      %v2200 = vsel %vm2171, %v2137, 0
      %v2203 = vsel %vm2171, %v2138, 0
      %v2206 = vsel %vm2171, %v2139, 0
      %v2209 = vsel %vm2171, %v2140, 0
      %v2212 = vsel %vm2171, %v2141, 0
      %v2215 = vsel %vm2171, %v2142, 0
      %v2218 = vsel %vm2171, %v2143, 0
      %vm2220 = vcmask 1041408
      %v2222 = vsel %vm2220, %v2168, 0
      %2224 = vmatprep.subr.bf16.mxu0 0
      %2225 = vmatpush1.bf16.msra.mxu0 %v2166
      %2226 = vmatprep.subr.bf16.mxu0 0
      %2227 = vmatpush1.bf16.msra.mxu0 %v2167
      %2228 = vmatprep.subr.bf16.mxu0 0
      %2229 = vmatpush1.bf16.msra.mxu0 %v2222
      %2230 = vmatprep.subr.bf16.mxu0 0
      %2231 = vmatpush1.bf16.msra.mxu0 0
      %2232 = vmatprep.subr.bf16.mxu0 0
      %2233 = vmatpush1.bf16.msra.mxu0 0
      %2234 = vmatprep.subr.bf16.mxu0 0
      %2235 = vmatpush1.bf16.msra.mxu0 0
      %2236 = vmatprep.subr.bf16.mxu0 0
      %2237 = vmatpush1.bf16.msra.mxu0 0
      %2238 = vmatprep.subr.bf16.mxu0 0
      %2239 = vmatpush1.bf16.msra.mxu0 0
      %2240 = vmatprep.subr.bf16.mxu0 0
      %2241 = vmatpush1.bf16.msra.mxu0 0
      %2242 = vmatprep.subr.bf16.mxu0 0
      %2243 = vmatpush1.bf16.msra.mxu0 0
      %2244 = vmatprep.subr.bf16.mxu0 0
      %2245 = vmatpush1.bf16.msra.mxu0 0
      %2246 = vmatprep.subr.bf16.mxu0 0
      %2247 = vmatpush1.bf16.msra.mxu0 0
      %2248 = vmatprep.subr.bf16.mxu0 0
      %2249 = vmatpush1.bf16.msra.mxu0 0
      %2250 = vmatprep.subr.bf16.mxu0 0
      %2251 = vmatpush1.bf16.msra.mxu0 0
      %2252 = vmatprep.subr.bf16.mxu0 0
      %2253 = vmatpush1.bf16.msra.mxu0 0
      %2254 = vmatprep.subr.bf16.mxu0 0
      %2255 = vmatpush1.bf16.msra.mxu0 0
      %2256 = vmatprep.mubr.bf16.mxu0 0
      %2257 = vmatmul.mubr.bf16.gmra.mrb[0].mxu0 %v2173
      %v2258 = vpop.f32.mrb[0].mxu0
      %v2259 = vadd.f32 %v2154, %v2258
      %v2260 = vpop.f32.mrb[0].mxu0
      %v2261 = vpop.f32.mrb[0].mxu0
      %v2262 = vadd.f32 %v2154, %v2261
      %v2263 = vpop.f32.mrb[0].mxu0
      %2264 = vmatprep.mubr.bf16.mxu0 0
      %2265 = vmatmul.mubr.bf16.gmra.mrb[0].mxu0 %v2176
      %v2266 = vpop.f32.mrb[0].mxu0
      %v2267 = vadd.f32 %v2154, %v2266
      %v2268 = vpop.f32.mrb[0].mxu0
      %v2269 = vpop.f32.mrb[0].mxu0
      %v2270 = vadd.f32 %v2154, %v2269
      %v2271 = vpop.f32.mrb[0].mxu0
      %2272 = vmatprep.mubr.bf16.mxu0 0
      %2273 = vmatmul.mubr.bf16.gmra.mrb[0].mxu0 %v2179
      %v2274 = vpop.f32.mrb[0].mxu0
      %v2275 = vadd.f32 %v2154, %v2274
      %v2276 = vpop.f32.mrb[0].mxu0
      %v2277 = vpop.f32.mrb[0].mxu0
      %v2278 = vadd.f32 %v2154, %v2277
      %v2279 = vpop.f32.mrb[0].mxu0
      %2280 = vmatprep.mubr.bf16.mxu0 0
      %2281 = vmatmul.mubr.bf16.gmra.mrb[0].mxu0 %v2182
      %v2282 = vpop.f32.mrb[0].mxu0
      %v2283 = vadd.f32 %v2154, %v2282
      %v2284 = vpop.f32.mrb[0].mxu0
      %v2285 = vpop.f32.mrb[0].mxu0
      %v2286 = vadd.f32 %v2154, %v2285
      %v2287 = vpop.f32.mrb[0].mxu0
      %2288 = vmatprep.mubr.bf16.mxu0 0
      %2289 = vmatmul.mubr.bf16.gmra.mrb[0].mxu0 %v2185
      %v2290 = vpop.f32.mrb[0].mxu0
      %v2291 = vadd.f32 %v2154, %v2290
      %v2292 = vpop.f32.mrb[0].mxu0
      %v2293 = vpop.f32.mrb[0].mxu0
      %v2294 = vadd.f32 %v2154, %v2293
      %v2295 = vpop.f32.mrb[0].mxu0
      %2296 = vmatprep.mubr.bf16.mxu0 0
      %2297 = vmatmul.mubr.bf16.gmra.mrb[0].mxu0 %v2188
      %v2298 = vpop.f32.mrb[0].mxu0
      %v2299 = vadd.f32 %v2154, %v2298
      %v2300 = vpop.f32.mrb[0].mxu0
      %v2301 = vpop.f32.mrb[0].mxu0
      %v2302 = vadd.f32 %v2154, %v2301
      %v2303 = vpop.f32.mrb[0].mxu0
      %2304 = vmatprep.mubr.bf16.mxu0 0
      %2305 = vmatmul.mubr.bf16.gmra.mrb[0].mxu0 %v2191
      %v2306 = vpop.f32.mrb[0].mxu0
      %v2307 = vadd.f32 %v2154, %v2306
      %v2308 = vpop.f32.mrb[0].mxu0
      %v2309 = vpop.f32.mrb[0].mxu0
      %v2310 = vadd.f32 %v2154, %v2309
      %v2311 = vpop.f32.mrb[0].mxu0
      %2312 = vmatprep.mubr.bf16.mxu0 0
      %2313 = vmatmul.mubr.bf16.gmra.mrb[0].mxu0 %v2194
      %v2314 = vpop.f32.mrb[0].mxu0
      %v2315 = vadd.f32 %v2154, %v2314
      %v2316 = vpop.f32.mrb[0].mxu0
      %v2317 = vpop.f32.mrb[0].mxu0
      %v2318 = vadd.f32 %v2154, %v2317
      %v2319 = vpop.f32.mrb[0].mxu0
      %2320 = vmatprep.mubr.bf16.mxu0 0
      %2321 = vmatmul.mubr.bf16.gmra.mrb[0].mxu0 %v2197
      %v2322 = vpop.f32.mrb[0].mxu0
      %v2323 = vadd.f32 %v2154, %v2322
      %v2324 = vpop.f32.mrb[0].mxu0
      %v2325 = vpop.f32.mrb[0].mxu0
      %v2326 = vadd.f32 %v2154, %v2325
      %v2327 = vpop.f32.mrb[0].mxu0
      %2328 = vmatprep.mubr.bf16.mxu0 0
      %2329 = vmatmul.mubr.bf16.gmra.mrb[0].mxu0 %v2200
      %v2330 = vpop.f32.mrb[0].mxu0
      %v2331 = vadd.f32 %v2154, %v2330
      %v2332 = vpop.f32.mrb[0].mxu0
      %v2333 = vpop.f32.mrb[0].mxu0
      %v2334 = vadd.f32 %v2154, %v2333
      %v2335 = vpop.f32.mrb[0].mxu0
      %2336 = vmatprep.mubr.bf16.mxu0 0
      %2337 = vmatmul.mubr.bf16.gmra.mrb[0].mxu0 %v2203
      %v2338 = vpop.f32.mrb[0].mxu0
      %v2339 = vadd.f32 %v2154, %v2338
      %v2340 = vpop.f32.mrb[0].mxu0
      %v2341 = vpop.f32.mrb[0].mxu0
      %v2342 = vadd.f32 %v2154, %v2341
      %v2343 = vpop.f32.mrb[0].mxu0
      %2344 = vmatprep.mubr.bf16.mxu0 0
      %2345 = vmatmul.mubr.bf16.gmra.mrb[0].mxu0 %v2206
      %v2346 = vpop.f32.mrb[0].mxu0
      %v2347 = vadd.f32 %v2154, %v2346
      %v2348 = vpop.f32.mrb[0].mxu0
      %v2349 = vpop.f32.mrb[0].mxu0
      %v2350 = vadd.f32 %v2154, %v2349
      %v2351 = vpop.f32.mrb[0].mxu0
      %2352 = vmatprep.mubr.bf16.mxu0 0
      %2353 = vmatmul.mubr.bf16.gmra.mrb[0].mxu0 %v2209
      %v2354 = vpop.f32.mrb[0].mxu0
      %v2355 = vadd.f32 %v2154, %v2354
      %v2356 = vpop.f32.mrb[0].mxu0
      %v2357 = vpop.f32.mrb[0].mxu0
      %v2358 = vadd.f32 %v2154, %v2357
      %v2359 = vpop.f32.mrb[0].mxu0
      %2360 = vmatprep.mubr.bf16.mxu0 0
      %2361 = vmatmul.mubr.bf16.gmra.mrb[0].mxu0 %v2212
      %v2362 = vpop.f32.mrb[0].mxu0
      %v2363 = vadd.f32 %v2154, %v2362
      %v2364 = vpop.f32.mrb[0].mxu0
      %v2365 = vpop.f32.mrb[0].mxu0
      %v2366 = vadd.f32 %v2154, %v2365
      %v2367 = vpop.f32.mrb[0].mxu0
      %2368 = vmatprep.mubr.bf16.mxu0 0
      %2369 = vmatmul.mubr.bf16.gmra.mrb[0].mxu0 %v2215
      %v2370 = vpop.f32.mrb[0].mxu0
      %v2371 = vadd.f32 %v2154, %v2370
      %v2372 = vpop.f32.mrb[0].mxu0
      %v2373 = vpop.f32.mrb[0].mxu0
      %v2374 = vadd.f32 %v2154, %v2373
      %v2375 = vpop.f32.mrb[0].mxu0
      %2376 = vmatprep.mubr.bf16.mxu0 0
      %2377 = vmatmul.mubr.bf16.gmra.mrb[0].mxu0 %v2218
      %v2378 = vpop.f32.mrb[0].mxu0
      %v2379 = vadd.f32 %v2154, %v2378
      %v2380 = vpop.f32.mrb[0].mxu0
      %v2381 = vpop.f32.mrb[0].mxu0
      %v2382 = vadd.f32 %v2154, %v2381
      %v2383 = vpop.f32.mrb[0].mxu0
      %2384 = vdwg.mxu0
      %v2385 = vmax.f32 %v2259, 0.0
      %v2386 = vmax.f32 %v2262, 0.0
      %v2387 = vmax.f32 %v2267, 0.0
      %v2388 = vmax.f32 %v2270, 0.0
      %v2389 = vmax.f32 %v2275, 0.0
      %v2390 = vmax.f32 %v2278, 0.0
      %v2391 = vmax.f32 %v2283, 0.0
      %v2392 = vmax.f32 %v2286, 0.0
      %v2393 = vmax.f32 %v2291, 0.0
      %v2394 = vmax.f32 %v2294, 0.0
      %v2395 = vmax.f32 %v2299, 0.0
      %v2396 = vmax.f32 %v2302, 0.0
      %v2397 = vmax.f32 %v2307, 0.0
      %v2398 = vmax.f32 %v2310, 0.0
      %v2399 = vmax.f32 %v2315, 0.0
      %v2400 = vmax.f32 %v2318, 0.0
      %v2401 = vmax.f32 %v2323, 0.0
      %v2402 = vmax.f32 %v2326, 0.0
      %v2403 = vmax.f32 %v2331, 0.0
      %v2404 = vmax.f32 %v2334, 0.0
      %v2405 = vmax.f32 %v2339, 0.0
      %v2406 = vmax.f32 %v2342, 0.0
      %v2407 = vmax.f32 %v2347, 0.0
      %v2408 = vmax.f32 %v2350, 0.0
      %v2409 = vmax.f32 %v2355, 0.0
      %v2410 = vmax.f32 %v2358, 0.0
      %v2411 = vmax.f32 %v2363, 0.0
      %v2412 = vmax.f32 %v2366, 0.0
      %v2413 = vmax.f32 %v2371, 0.0
      %v2414 = vmax.f32 %v2374, 0.0
      %v2415 = vmax.f32 %v2379, 0.0
      %v2416 = vmax.f32 %v2382, 0.0
      %s2417 = scalar_lea.vmem [#allocation3], 24
      %2418 = vst.msk [vmem:[%s2417 + $0x1] sm:$0xff] %vm390, %v2385
      %2419 = vst.msk [vmem:[%s2417 + $0x9] sm:$0xff] %vm390, %v2386
      %2420 = vst.msk [vmem:[%s2417 + $0x19] sm:$0xff] %vm390, %v2387
      %2421 = vst.msk [vmem:[%s2417 + $0x21] sm:$0xff] %vm390, %v2388
      %2422 = vst.msk [vmem:[%s2417 + $0x31] sm:$0xff] %vm390, %v2389
      %2423 = vst.msk [vmem:[%s2417 + $0x39] sm:$0xff] %vm390, %v2390
      %2424 = vst.msk [vmem:[%s2417 + $0x49] sm:$0xff] %vm390, %v2391
      %2425 = vst.msk [vmem:[%s2417 + $0x51] sm:$0xff] %vm390, %v2392
      %2426 = vst.msk [vmem:[%s2417 + $0x61] sm:$0xff] %vm390, %v2393
      %2427 = vst.msk [vmem:[%s2417 + $0x69] sm:$0xff] %vm390, %v2394
      %2428 = vst.msk [vmem:[%s2417 + $0x79] sm:$0xff] %vm390, %v2395
      %2429 = vst.msk [vmem:[%s2417 + $0x81] sm:$0xff] %vm390, %v2396
      %2430 = vst.msk [vmem:[%s2417 + $0x91] sm:$0xff] %vm390, %v2397
      %2431 = vst.msk [vmem:[%s2417 + $0x99] sm:$0xff] %vm390, %v2398
      %2432 = vst.msk [vmem:[%s2417 + $0xa9] sm:$0xff] %vm390, %v2399
      %2433 = vst.msk [vmem:[%s2417 + $0xb1] sm:$0xff] %vm390, %v2400
      %2434 = vst.msk [vmem:[%s2417 + $0xc1] sm:$0xff] %vm390, %v2401
      %2435 = vst.msk [vmem:[%s2417 + $0xc9] sm:$0xff] %vm390, %v2402
      %2436 = vst.msk [vmem:[%s2417 + $0xd9] sm:$0xff] %vm390, %v2403
      %2437 = vst.msk [vmem:[%s2417 + $0xe1] sm:$0xff] %vm390, %v2404
      %2438 = vst.msk [vmem:[%s2417 + $0xf1] sm:$0xff] %vm390, %v2405
      %2439 = vst.msk [vmem:[%s2417 + $0xf9] sm:$0xff] %vm390, %v2406
      %2440 = vst.msk [vmem:[%s2417 + $0x109] sm:$0xff] %vm390, %v2407
      %2441 = vst.msk [vmem:[%s2417 + $0x111] sm:$0xff] %vm390, %v2408
      %2442 = vst.msk [vmem:[%s2417 + $0x121] sm:$0xff] %vm390, %v2409
      %2443 = vst.msk [vmem:[%s2417 + $0x129] sm:$0xff] %vm390, %v2410
      %2444 = vst.msk [vmem:[%s2417 + $0x139] sm:$0xff] %vm390, %v2411
      %2445 = vst.msk [vmem:[%s2417 + $0x141] sm:$0xff] %vm390, %v2412
      %2446 = vst.msk [vmem:[%s2417 + $0x151] sm:$0xff] %vm390, %v2413
      %2447 = vst.msk [vmem:[%s2417 + $0x159] sm:$0xff] %vm390, %v2414
      %2448 = vst.msk [vmem:[%s2417 + $0x169] sm:$0xff] %vm390, %v2415
      %2449 = vst.msk [vmem:[%s2417 + $0x171] sm:$0xff] %vm390, %v2416
      %v2450 = vld [vmem:[#allocation3] sm:$0xff]
      %v2451 = vld [vmem:[#allocation3 + $0x8] sm:$0xff]
      %v2452 = vld [vmem:[#allocation3 + $0x18] sm:$0xff]
      %v2453 = vld [vmem:[#allocation3 + $0x20] sm:$0xff]
      %v2454 = vld [vmem:[#allocation3 + $0x30] sm:$0xff]
      %v2455 = vld [vmem:[#allocation3 + $0x38] sm:$0xff]
      %v2456 = vld [vmem:[#allocation3 + $0x48] sm:$0xff]
      %v2457 = vld [vmem:[#allocation3 + $0x50] sm:$0xff]
      %v2458 = vld [vmem:[#allocation3 + $0x60] sm:$0xff]
      %v2459 = vld [vmem:[#allocation3 + $0x68] sm:$0xff]
      %v2460 = vld [vmem:[#allocation3 + $0x78] sm:$0xff]
      %v2461 = vld [vmem:[#allocation3 + $0x80] sm:$0xff]
      %v2462 = vld [vmem:[#allocation3 + $0x90] sm:$0xff]
      %v2463 = vld [vmem:[#allocation3 + $0x98] sm:$0xff]
      %v2464 = vld [vmem:[#allocation3 + $0xa8] sm:$0xff]
      %v2465 = vld [vmem:[#allocation3 + $0xb0] sm:$0xff]
      %v2466 = vld [vmem:[#allocation3 + $0xc0] sm:$0xff]
      %v2467 = vld [vmem:[#allocation3 + $0xc8] sm:$0xff]
      %v2468 = vld [vmem:[#allocation3 + $0xd8] sm:$0xff]
      %v2469 = vld [vmem:[#allocation3 + $0xe0] sm:$0xff]
      %v2470 = vld [vmem:[#allocation3 + $0xf0] sm:$0xff]
      %v2471 = vld [vmem:[#allocation3 + $0xf8] sm:$0xff]
      %v2472 = vld [vmem:[#allocation3 + $0x108] sm:$0xff]
      %v2473 = vld [vmem:[#allocation3 + $0x110] sm:$0xff]
      %v2474 = vld [vmem:[#allocation3 + $0x120] sm:$0xff]
      %v2475 = vld [vmem:[#allocation3 + $0x128] sm:$0xff]
      %v2476 = vld [vmem:[#allocation3 + $0x138] sm:$0xff]
      %v2477 = vld [vmem:[#allocation3 + $0x140] sm:$0xff]
      %v2478 = vld [vmem:[#allocation3 + $0x150] sm:$0xff]
      %v2479 = vld [vmem:[#allocation3 + $0x158] sm:$0xff]
      %v2480 = vld [vmem:[#allocation3 + $0x168] sm:$0xff]
      %v2481 = vld [vmem:[#allocation3 + $0x170] sm:$0xff]
      %v2482 = vld [vmem:[#allocation3 + $0x1] sm:$0xff]
      %v2483 = vld [vmem:[#allocation3 + $0x9] sm:$0xff]
      %v2484 = vld [vmem:[#allocation3 + $0x19] sm:$0xff]
      %v2485 = vld [vmem:[#allocation3 + $0x21] sm:$0xff]
      %v2486 = vld [vmem:[#allocation3 + $0x31] sm:$0xff]
      %v2487 = vld [vmem:[#allocation3 + $0x39] sm:$0xff]
      %v2488 = vld [vmem:[#allocation3 + $0x49] sm:$0xff]
      %v2489 = vld [vmem:[#allocation3 + $0x51] sm:$0xff]
      %v2490 = vld [vmem:[#allocation3 + $0x61] sm:$0xff]
      %v2491 = vld [vmem:[#allocation3 + $0x69] sm:$0xff]
      %v2492 = vld [vmem:[#allocation3 + $0x79] sm:$0xff]
      %v2493 = vld [vmem:[#allocation3 + $0x81] sm:$0xff]
      %v2494 = vld [vmem:[#allocation3 + $0x91] sm:$0xff]
      %v2495 = vld [vmem:[#allocation3 + $0x99] sm:$0xff]
      %v2496 = vld [vmem:[#allocation3 + $0xa9] sm:$0xff]
      %v2497 = vld [vmem:[#allocation3 + $0xb1] sm:$0xff]
      %v2498 = vld [vmem:[#allocation3 + $0xc1] sm:$0xff]
      %v2499 = vld [vmem:[#allocation3 + $0xc9] sm:$0xff]
      %v2500 = vld [vmem:[#allocation3 + $0xd9] sm:$0xff]
      %v2501 = vld [vmem:[#allocation3 + $0xe1] sm:$0xff]
      %v2502 = vld [vmem:[#allocation3 + $0xf1] sm:$0xff]
      %v2503 = vld [vmem:[#allocation3 + $0xf9] sm:$0xff]
      %v2504 = vld [vmem:[#allocation3 + $0x109] sm:$0xff]
      %v2505 = vld [vmem:[#allocation3 + $0x111] sm:$0xff]
      %v2506 = vld [vmem:[#allocation3 + $0x121] sm:$0xff]
      %v2507 = vld [vmem:[#allocation3 + $0x129] sm:$0xff]
      %v2508 = vld [vmem:[#allocation3 + $0x139] sm:$0xff]
      %v2509 = vld [vmem:[#allocation3 + $0x141] sm:$0xff]
      %v2510 = vld [vmem:[#allocation3 + $0x151] sm:$0xff]
      %v2511 = vld [vmem:[#allocation3 + $0x159] sm:$0xff]
      %v2512 = vld [vmem:[#allocation3 + $0x169] sm:$0xff]
      %v2513 = vld [vmem:[#allocation3 + $0x171] sm:$0xff]
      %v2514 = vld [vmem:[#allocation3 + $0x2] sm:$0xff]
      %v2515 = vld [vmem:[#allocation3 + $0xa] sm:$0xff]
      %v2516 = vld [vmem:[#allocation3 + $0x1a] sm:$0xff]
      %v2517 = vld [vmem:[#allocation3 + $0x22] sm:$0xff]
      %v2518 = vld [vmem:[#allocation3 + $0x32] sm:$0xff]
      %v2519 = vld [vmem:[#allocation3 + $0x3a] sm:$0xff]
      %v2520 = vld [vmem:[#allocation3 + $0x4a] sm:$0xff]
      %v2521 = vld [vmem:[#allocation3 + $0x52] sm:$0xff]
      %v2522 = vld [vmem:[#allocation3 + $0x62] sm:$0xff]
      %v2523 = vld [vmem:[#allocation3 + $0x6a] sm:$0xff]
      %v2524 = vld [vmem:[#allocation3 + $0x7a] sm:$0xff]
      %v2525 = vld [vmem:[#allocation3 + $0x82] sm:$0xff]
      %v2526 = vld [vmem:[#allocation3 + $0x92] sm:$0xff]
      %v2527 = vld [vmem:[#allocation3 + $0x9a] sm:$0xff]
      %v2528 = vld [vmem:[#allocation3 + $0xaa] sm:$0xff]
      %v2529 = vld [vmem:[#allocation3 + $0xb2] sm:$0xff]
      %v2530 = vld [vmem:[#allocation3 + $0xc2] sm:$0xff]
      %v2531 = vld [vmem:[#allocation3 + $0xca] sm:$0xff]
      %v2532 = vld [vmem:[#allocation3 + $0xda] sm:$0xff]
      %v2533 = vld [vmem:[#allocation3 + $0xe2] sm:$0xff]
      %v2534 = vld [vmem:[#allocation3 + $0xf2] sm:$0xff]
      %v2535 = vld [vmem:[#allocation3 + $0xfa] sm:$0xff]
      %v2536 = vld [vmem:[#allocation3 + $0x10a] sm:$0xff]
      %v2537 = vld [vmem:[#allocation3 + $0x112] sm:$0xff]
      %v2538 = vld [vmem:[#allocation3 + $0x122] sm:$0xff]
      %v2539 = vld [vmem:[#allocation3 + $0x12a] sm:$0xff]
      %v2540 = vld [vmem:[#allocation3 + $0x13a] sm:$0xff]
      %v2541 = vld [vmem:[#allocation3 + $0x142] sm:$0xff]
      %v2542 = vld [vmem:[#allocation3 + $0x152] sm:$0xff]
      %v2543 = vld [vmem:[#allocation3 + $0x15a] sm:$0xff]
      %v2544 = vld [vmem:[#allocation3 + $0x16a] sm:$0xff]
      %v2545 = vld [vmem:[#allocation3 + $0x172] sm:$0xff]
      %v2546 = vld [vmem:[%s2417] sm:$0xff]
      %v2547 = vld [vmem:[%s2417 + $0x8] sm:$0xff]
      %v2548 = vld [vmem:[%s2417 + $0x18] sm:$0xff]
      %v2549 = vld [vmem:[%s2417 + $0x20] sm:$0xff]
      %v2550 = vld [vmem:[%s2417 + $0x30] sm:$0xff]
      %v2551 = vld [vmem:[%s2417 + $0x38] sm:$0xff]
      %v2552 = vld [vmem:[%s2417 + $0x48] sm:$0xff]
      %v2553 = vld [vmem:[%s2417 + $0x50] sm:$0xff]
      %v2554 = vld [vmem:[%s2417 + $0x60] sm:$0xff]
      %v2555 = vld [vmem:[%s2417 + $0x68] sm:$0xff]
      %v2556 = vld [vmem:[%s2417 + $0x78] sm:$0xff]
      %v2557 = vld [vmem:[%s2417 + $0x80] sm:$0xff]
      %v2558 = vld [vmem:[%s2417 + $0x90] sm:$0xff]
      %v2559 = vld [vmem:[%s2417 + $0x98] sm:$0xff]
      %v2560 = vld [vmem:[%s2417 + $0xa8] sm:$0xff]
      %v2561 = vld [vmem:[%s2417 + $0xb0] sm:$0xff]
      %v2562 = vld [vmem:[%s2417 + $0xc0] sm:$0xff]
      %v2563 = vld [vmem:[%s2417 + $0xc8] sm:$0xff]
      %v2564 = vld [vmem:[%s2417 + $0xd8] sm:$0xff]
      %v2565 = vld [vmem:[%s2417 + $0xe0] sm:$0xff]
      %v2566 = vld [vmem:[%s2417 + $0xf0] sm:$0xff]
      %v2567 = vld [vmem:[%s2417 + $0xf8] sm:$0xff]
      %v2568 = vld [vmem:[%s2417 + $0x108] sm:$0xff]
      %v2569 = vld [vmem:[%s2417 + $0x110] sm:$0xff]
      %v2570 = vld [vmem:[%s2417 + $0x120] sm:$0xff]
      %v2571 = vld [vmem:[%s2417 + $0x128] sm:$0xff]
      %v2572 = vld [vmem:[%s2417 + $0x138] sm:$0xff]
      %v2573 = vld [vmem:[%s2417 + $0x140] sm:$0xff]
      %v2574 = vld [vmem:[%s2417 + $0x150] sm:$0xff]
      %v2575 = vld [vmem:[%s2417 + $0x158] sm:$0xff]
      %v2576 = vld [vmem:[%s2417 + $0x168] sm:$0xff]
      %v2577 = vld [vmem:[%s2417 + $0x170] sm:$0xff]
      %v2578 = vld [vmem:[%s2417 + $0x1] sm:$0xff]
      %v2579 = vld [vmem:[%s2417 + $0x9] sm:$0xff]
      %v2580 = vld [vmem:[%s2417 + $0x19] sm:$0xff]
      %v2581 = vld [vmem:[%s2417 + $0x21] sm:$0xff]
      %v2582 = vld [vmem:[%s2417 + $0x31] sm:$0xff]
      %v2583 = vld [vmem:[%s2417 + $0x39] sm:$0xff]
      %v2584 = vld [vmem:[%s2417 + $0x49] sm:$0xff]
      %v2585 = vld [vmem:[%s2417 + $0x51] sm:$0xff]
      %v2586 = vld [vmem:[%s2417 + $0x61] sm:$0xff]
      %v2587 = vld [vmem:[%s2417 + $0x69] sm:$0xff]
      %v2588 = vld [vmem:[%s2417 + $0x79] sm:$0xff]
      %v2589 = vld [vmem:[%s2417 + $0x81] sm:$0xff]
      %v2590 = vld [vmem:[%s2417 + $0x91] sm:$0xff]
      %v2591 = vld [vmem:[%s2417 + $0x99] sm:$0xff]
      %v2592 = vld [vmem:[%s2417 + $0xa9] sm:$0xff]
      %v2593 = vld [vmem:[%s2417 + $0xb1] sm:$0xff]
      %v2594 = vld [vmem:[%s2417 + $0xc1] sm:$0xff]
      %v2595 = vld [vmem:[%s2417 + $0xc9] sm:$0xff]
      %v2596 = vld [vmem:[%s2417 + $0xd9] sm:$0xff]
      %v2597 = vld [vmem:[%s2417 + $0xe1] sm:$0xff]
      %v2598 = vld [vmem:[%s2417 + $0xf1] sm:$0xff]
      %v2599 = vld [vmem:[%s2417 + $0xf9] sm:$0xff]
      %v2600 = vld [vmem:[%s2417 + $0x109] sm:$0xff]
      %v2601 = vld [vmem:[%s2417 + $0x111] sm:$0xff]
      %v2602 = vld [vmem:[%s2417 + $0x121] sm:$0xff]
      %v2603 = vld [vmem:[%s2417 + $0x129] sm:$0xff]
      %v2604 = vld [vmem:[%s2417 + $0x139] sm:$0xff]
      %v2605 = vld [vmem:[%s2417 + $0x141] sm:$0xff]
      %v2606 = vld [vmem:[%s2417 + $0x151] sm:$0xff]
      %v2607 = vld [vmem:[%s2417 + $0x159] sm:$0xff]
      %v2608 = vld [vmem:[%s2417 + $0x169] sm:$0xff]
      %v2609 = vld [vmem:[%s2417 + $0x171] sm:$0xff]
      %v2610 = vld [vmem:[%s2417 + $0x2] sm:$0xff]
      %v2611 = vld [vmem:[%s2417 + $0xa] sm:$0xff]
      %v2612 = vld [vmem:[%s2417 + $0x1a] sm:$0xff]
      %v2613 = vld [vmem:[%s2417 + $0x22] sm:$0xff]
      %v2614 = vld [vmem:[%s2417 + $0x32] sm:$0xff]
      %v2615 = vld [vmem:[%s2417 + $0x3a] sm:$0xff]
      %v2616 = vld [vmem:[%s2417 + $0x4a] sm:$0xff]
      %v2617 = vld [vmem:[%s2417 + $0x52] sm:$0xff]
      %v2618 = vld [vmem:[%s2417 + $0x62] sm:$0xff]
      %v2619 = vld [vmem:[%s2417 + $0x6a] sm:$0xff]
      %v2620 = vld [vmem:[%s2417 + $0x7a] sm:$0xff]
      %v2621 = vld [vmem:[%s2417 + $0x82] sm:$0xff]
      %v2622 = vld [vmem:[%s2417 + $0x92] sm:$0xff]
      %v2623 = vld [vmem:[%s2417 + $0x9a] sm:$0xff]
      %v2624 = vld [vmem:[%s2417 + $0xaa] sm:$0xff]
      %v2625 = vld [vmem:[%s2417 + $0xb2] sm:$0xff]
      %v2626 = vld [vmem:[%s2417 + $0xc2] sm:$0xff]
      %v2627 = vld [vmem:[%s2417 + $0xca] sm:$0xff]
      %v2628 = vld [vmem:[%s2417 + $0xda] sm:$0xff]
      %v2629 = vld [vmem:[%s2417 + $0xe2] sm:$0xff]
      %v2630 = vld [vmem:[%s2417 + $0xf2] sm:$0xff]
      %v2631 = vld [vmem:[%s2417 + $0xfa] sm:$0xff]
      %v2632 = vld [vmem:[%s2417 + $0x10a] sm:$0xff]
      %v2633 = vld [vmem:[%s2417 + $0x112] sm:$0xff]
      %v2634 = vld [vmem:[%s2417 + $0x122] sm:$0xff]
      %v2635 = vld [vmem:[%s2417 + $0x12a] sm:$0xff]
      %v2636 = vld [vmem:[%s2417 + $0x13a] sm:$0xff]
      %v2637 = vld [vmem:[%s2417 + $0x142] sm:$0xff]
      %v2638 = vld [vmem:[%s2417 + $0x152] sm:$0xff]
      %v2639 = vld [vmem:[%s2417 + $0x15a] sm:$0xff]
      %v2640 = vld [vmem:[%s2417 + $0x16a] sm:$0xff]
      %v2641 = vld [vmem:[%s2417 + $0x172] sm:$0xff]
      %s2642 = scalar_lea.vmem [#allocation3], 48
      %v2643 = vld [vmem:[%s2642] sm:$0xff]
      %v2644 = vld [vmem:[%s2642 + $0x8] sm:$0xff]
      %v2645 = vld [vmem:[%s2642 + $0x18] sm:$0xff]
      %v2646 = vld [vmem:[%s2642 + $0x20] sm:$0xff]
      %v2647 = vld [vmem:[%s2642 + $0x30] sm:$0xff]
      %v2648 = vld [vmem:[%s2642 + $0x38] sm:$0xff]
      %v2649 = vld [vmem:[%s2642 + $0x48] sm:$0xff]
      %v2650 = vld [vmem:[%s2642 + $0x50] sm:$0xff]
      %v2651 = vld [vmem:[%s2642 + $0x60] sm:$0xff]
      %v2652 = vld [vmem:[%s2642 + $0x68] sm:$0xff]
      %v2653 = vld [vmem:[%s2642 + $0x78] sm:$0xff]
      %v2654 = vld [vmem:[%s2642 + $0x80] sm:$0xff]
      %v2655 = vld [vmem:[%s2642 + $0x90] sm:$0xff]
      %v2656 = vld [vmem:[%s2642 + $0x98] sm:$0xff]
      %v2657 = vld [vmem:[%s2642 + $0xa8] sm:$0xff]
      %v2658 = vld [vmem:[%s2642 + $0xb0] sm:$0xff]
      %v2659 = vld [vmem:[%s2642 + $0xc0] sm:$0xff]
      %v2660 = vld [vmem:[%s2642 + $0xc8] sm:$0xff]
      %v2661 = vld [vmem:[%s2642 + $0xd8] sm:$0xff]
      %v2662 = vld [vmem:[%s2642 + $0xe0] sm:$0xff]
      %v2663 = vld [vmem:[%s2642 + $0xf0] sm:$0xff]
      %v2664 = vld [vmem:[%s2642 + $0xf8] sm:$0xff]
      %v2665 = vld [vmem:[%s2642 + $0x108] sm:$0xff]
      %v2666 = vld [vmem:[%s2642 + $0x110] sm:$0xff]
      %v2667 = vld [vmem:[%s2642 + $0x120] sm:$0xff]
      %v2668 = vld [vmem:[%s2642 + $0x128] sm:$0xff]
      %v2669 = vld [vmem:[%s2642 + $0x138] sm:$0xff]
      %v2670 = vld [vmem:[%s2642 + $0x140] sm:$0xff]
      %v2671 = vld [vmem:[%s2642 + $0x150] sm:$0xff]
      %v2672 = vld [vmem:[%s2642 + $0x158] sm:$0xff]
      %v2673 = vld [vmem:[%s2642 + $0x168] sm:$0xff]
      %v2674 = vld [vmem:[%s2642 + $0x170] sm:$0xff]
      %v2675 = vld [vmem:[%s2642 + $0x1] sm:$0xff]
      %v2676 = vld [vmem:[%s2642 + $0x9] sm:$0xff]
      %v2677 = vld [vmem:[%s2642 + $0x19] sm:$0xff]
      %v2678 = vld [vmem:[%s2642 + $0x21] sm:$0xff]
      %v2679 = vld [vmem:[%s2642 + $0x31] sm:$0xff]
      %v2680 = vld [vmem:[%s2642 + $0x39] sm:$0xff]
      %v2681 = vld [vmem:[%s2642 + $0x49] sm:$0xff]
      %v2682 = vld [vmem:[%s2642 + $0x51] sm:$0xff]
      %v2683 = vld [vmem:[%s2642 + $0x61] sm:$0xff]
      %v2684 = vld [vmem:[%s2642 + $0x69] sm:$0xff]
      %v2685 = vld [vmem:[%s2642 + $0x79] sm:$0xff]
      %v2686 = vld [vmem:[%s2642 + $0x81] sm:$0xff]
      %v2687 = vld [vmem:[%s2642 + $0x91] sm:$0xff]
      %v2688 = vld [vmem:[%s2642 + $0x99] sm:$0xff]
      %v2689 = vld [vmem:[%s2642 + $0xa9] sm:$0xff]
      %v2690 = vld [vmem:[%s2642 + $0xb1] sm:$0xff]
      %v2691 = vld [vmem:[%s2642 + $0xc1] sm:$0xff]
      %v2692 = vld [vmem:[%s2642 + $0xc9] sm:$0xff]
      %v2693 = vld [vmem:[%s2642 + $0xd9] sm:$0xff]
      %v2694 = vld [vmem:[%s2642 + $0xe1] sm:$0xff]
      %v2695 = vld [vmem:[%s2642 + $0xf1] sm:$0xff]
      %v2696 = vld [vmem:[%s2642 + $0xf9] sm:$0xff]
      %v2697 = vld [vmem:[%s2642 + $0x109] sm:$0xff]
      %v2698 = vld [vmem:[%s2642 + $0x111] sm:$0xff]
      %v2699 = vld [vmem:[%s2642 + $0x121] sm:$0xff]
      %v2700 = vld [vmem:[%s2642 + $0x129] sm:$0xff]
      %v2701 = vld [vmem:[%s2642 + $0x139] sm:$0xff]
      %v2702 = vld [vmem:[%s2642 + $0x141] sm:$0xff]
      %v2703 = vld [vmem:[%s2642 + $0x151] sm:$0xff]
      %v2704 = vld [vmem:[%s2642 + $0x159] sm:$0xff]
      %v2705 = vld [vmem:[%s2642 + $0x169] sm:$0xff]
      %v2706 = vld [vmem:[%s2642 + $0x171] sm:$0xff]
      %v2707 = vld [vmem:[%s2642 + $0x2] sm:$0xff]
      %v2708 = vld [vmem:[%s2642 + $0xa] sm:$0xff]
      %v2709 = vld [vmem:[%s2642 + $0x1a] sm:$0xff]
      %v2710 = vld [vmem:[%s2642 + $0x22] sm:$0xff]
      %v2711 = vld [vmem:[%s2642 + $0x32] sm:$0xff]
      %v2712 = vld [vmem:[%s2642 + $0x3a] sm:$0xff]
      %v2713 = vld [vmem:[%s2642 + $0x4a] sm:$0xff]
      %v2714 = vld [vmem:[%s2642 + $0x52] sm:$0xff]
      %v2715 = vld [vmem:[%s2642 + $0x62] sm:$0xff]
      %v2716 = vld [vmem:[%s2642 + $0x6a] sm:$0xff]
      %v2717 = vld [vmem:[%s2642 + $0x7a] sm:$0xff]
      %v2718 = vld [vmem:[%s2642 + $0x82] sm:$0xff]
      %v2719 = vld [vmem:[%s2642 + $0x92] sm:$0xff]
      %v2720 = vld [vmem:[%s2642 + $0x9a] sm:$0xff]
      %v2721 = vld [vmem:[%s2642 + $0xaa] sm:$0xff]
      %v2722 = vld [vmem:[%s2642 + $0xb2] sm:$0xff]
      %v2723 = vld [vmem:[%s2642 + $0xc2] sm:$0xff]
      %v2724 = vld [vmem:[%s2642 + $0xca] sm:$0xff]
      %v2725 = vld [vmem:[%s2642 + $0xda] sm:$0xff]
      %v2726 = vld [vmem:[%s2642 + $0xe2] sm:$0xff]
      %v2727 = vld [vmem:[%s2642 + $0xf2] sm:$0xff]
      %v2728 = vld [vmem:[%s2642 + $0xfa] sm:$0xff]
      %v2729 = vld [vmem:[%s2642 + $0x10a] sm:$0xff]
      %v2730 = vld [vmem:[%s2642 + $0x112] sm:$0xff]
      %v2731 = vld [vmem:[%s2642 + $0x122] sm:$0xff]
      %v2732 = vld [vmem:[%s2642 + $0x12a] sm:$0xff]
      %v2733 = vld [vmem:[%s2642 + $0x13a] sm:$0xff]
      %v2734 = vld [vmem:[%s2642 + $0x142] sm:$0xff]
      %v2735 = vld [vmem:[%s2642 + $0x152] sm:$0xff]
      %v2736 = vld [vmem:[%s2642 + $0x15a] sm:$0xff]
      %v2737 = vld [vmem:[%s2642 + $0x16a] sm:$0xff]
      %v2738 = vld [vmem:[%s2642 + $0x172] sm:$0xff]
      %2771 = vrot.lane.b32.xlu0 %v2482, 32
      %v2772 = vpop.permute.xlu0 %2771
      %2773 = vrot.lane.b32.xlu0 %v2483, 32
      %v2774 = vpop.permute.xlu0 %2773
      %2775 = vrot.lane.b32.xlu0 %v2484, 32
      %v2776 = vpop.permute.xlu0 %2775
      %2777 = vrot.lane.b32.xlu0 %v2485, 32
      %v2778 = vpop.permute.xlu0 %2777
      %2779 = vrot.lane.b32.xlu0 %v2486, 32
      %v2780 = vpop.permute.xlu0 %2779
      %2781 = vrot.lane.b32.xlu0 %v2487, 32
      %v2782 = vpop.permute.xlu0 %2781
      %2783 = vrot.lane.b32.xlu0 %v2488, 32
      %v2784 = vpop.permute.xlu0 %2783
      %2785 = vrot.lane.b32.xlu0 %v2489, 32
      %v2786 = vpop.permute.xlu0 %2785
      %2787 = vrot.lane.b32.xlu0 %v2490, 32
      %v2788 = vpop.permute.xlu0 %2787
      %2789 = vrot.lane.b32.xlu0 %v2491, 32
      %v2790 = vpop.permute.xlu0 %2789
      %2791 = vrot.lane.b32.xlu0 %v2492, 32
      %v2792 = vpop.permute.xlu0 %2791
      %2793 = vrot.lane.b32.xlu0 %v2493, 32
      %v2794 = vpop.permute.xlu0 %2793
      %2795 = vrot.lane.b32.xlu0 %v2494, 32
      %v2796 = vpop.permute.xlu0 %2795
      %2797 = vrot.lane.b32.xlu0 %v2495, 32
      %v2798 = vpop.permute.xlu0 %2797
      %2799 = vrot.lane.b32.xlu0 %v2496, 32
      %v2800 = vpop.permute.xlu0 %2799
      %2801 = vrot.lane.b32.xlu0 %v2497, 32
      %v2802 = vpop.permute.xlu0 %2801
      %2803 = vrot.lane.b32.xlu0 %v2498, 32
      %v2804 = vpop.permute.xlu0 %2803
      %2805 = vrot.lane.b32.xlu0 %v2499, 32
      %v2806 = vpop.permute.xlu0 %2805
      %2807 = vrot.lane.b32.xlu0 %v2500, 32
      %v2808 = vpop.permute.xlu0 %2807
      %2809 = vrot.lane.b32.xlu0 %v2501, 32
      %v2810 = vpop.permute.xlu0 %2809
      %2811 = vrot.lane.b32.xlu0 %v2502, 32
      %v2812 = vpop.permute.xlu0 %2811
      %2813 = vrot.lane.b32.xlu0 %v2503, 32
      %v2814 = vpop.permute.xlu0 %2813
      %2815 = vrot.lane.b32.xlu0 %v2504, 32
      %v2816 = vpop.permute.xlu0 %2815
      %2817 = vrot.lane.b32.xlu0 %v2505, 32
      %v2818 = vpop.permute.xlu0 %2817
      %2819 = vrot.lane.b32.xlu0 %v2506, 32
      %v2820 = vpop.permute.xlu0 %2819
      %2821 = vrot.lane.b32.xlu0 %v2507, 32
      %v2822 = vpop.permute.xlu0 %2821
      %2823 = vrot.lane.b32.xlu0 %v2508, 32
      %v2824 = vpop.permute.xlu0 %2823
      %2825 = vrot.lane.b32.xlu0 %v2509, 32
      %v2826 = vpop.permute.xlu0 %2825
      %2827 = vrot.lane.b32.xlu0 %v2510, 32
      %v2828 = vpop.permute.xlu0 %2827
      %2829 = vrot.lane.b32.xlu0 %v2511, 32
      %v2830 = vpop.permute.xlu0 %2829
      %2831 = vrot.lane.b32.xlu0 %v2512, 32
      %v2832 = vpop.permute.xlu0 %2831
      %2833 = vrot.lane.b32.xlu0 %v2513, 32
      %v2834 = vpop.permute.xlu0 %2833
      %2899 = vrot.lane.b32.xlu0 %v2514, 64
      %v2900 = vpop.permute.xlu0 %2899
      %2901 = vrot.lane.b32.xlu0 %v2515, 64
      %v2902 = vpop.permute.xlu0 %2901
      %2903 = vrot.lane.b32.xlu0 %v2516, 64
      %v2904 = vpop.permute.xlu0 %2903
      %2905 = vrot.lane.b32.xlu0 %v2517, 64
      %v2906 = vpop.permute.xlu0 %2905
      %2907 = vrot.lane.b32.xlu0 %v2518, 64
      %v2908 = vpop.permute.xlu0 %2907
      %2909 = vrot.lane.b32.xlu0 %v2519, 64
      %v2910 = vpop.permute.xlu0 %2909
      %2911 = vrot.lane.b32.xlu0 %v2520, 64
      %v2912 = vpop.permute.xlu0 %2911
      %2913 = vrot.lane.b32.xlu0 %v2521, 64
      %v2914 = vpop.permute.xlu0 %2913
      %2915 = vrot.lane.b32.xlu0 %v2522, 64
      %v2916 = vpop.permute.xlu0 %2915
      %2917 = vrot.lane.b32.xlu0 %v2523, 64
      %v2918 = vpop.permute.xlu0 %2917
      %2919 = vrot.lane.b32.xlu0 %v2524, 64
      %v2920 = vpop.permute.xlu0 %2919
      %2921 = vrot.lane.b32.xlu0 %v2525, 64
      %v2922 = vpop.permute.xlu0 %2921
      %2923 = vrot.lane.b32.xlu0 %v2526, 64
      %v2924 = vpop.permute.xlu0 %2923
      %2925 = vrot.lane.b32.xlu0 %v2527, 64
      %v2926 = vpop.permute.xlu0 %2925
      %2927 = vrot.lane.b32.xlu0 %v2528, 64
      %v2928 = vpop.permute.xlu0 %2927
      %2929 = vrot.lane.b32.xlu0 %v2529, 64
      %v2930 = vpop.permute.xlu0 %2929
      %2931 = vrot.lane.b32.xlu0 %v2530, 64
      %v2932 = vpop.permute.xlu0 %2931
      %2933 = vrot.lane.b32.xlu0 %v2531, 64
      %v2934 = vpop.permute.xlu0 %2933
      %2935 = vrot.lane.b32.xlu0 %v2532, 64
      %v2936 = vpop.permute.xlu0 %2935
      %2937 = vrot.lane.b32.xlu0 %v2533, 64
      %v2938 = vpop.permute.xlu0 %2937
      %2939 = vrot.lane.b32.xlu0 %v2534, 64
      %v2940 = vpop.permute.xlu0 %2939
      %2941 = vrot.lane.b32.xlu0 %v2535, 64
      %v2942 = vpop.permute.xlu0 %2941
      %2943 = vrot.lane.b32.xlu0 %v2536, 64
      %v2944 = vpop.permute.xlu0 %2943
      %2945 = vrot.lane.b32.xlu0 %v2537, 64
      %v2946 = vpop.permute.xlu0 %2945
      %2947 = vrot.lane.b32.xlu0 %v2538, 64
      %v2948 = vpop.permute.xlu0 %2947
      %2949 = vrot.lane.b32.xlu0 %v2539, 64
      %v2950 = vpop.permute.xlu0 %2949
      %2951 = vrot.lane.b32.xlu0 %v2540, 64
      %v2952 = vpop.permute.xlu0 %2951
      %2953 = vrot.lane.b32.xlu0 %v2541, 64
      %v2954 = vpop.permute.xlu0 %2953
      %2955 = vrot.lane.b32.xlu0 %v2542, 64
      %v2956 = vpop.permute.xlu0 %2955
      %2957 = vrot.lane.b32.xlu0 %v2543, 64
      %v2958 = vpop.permute.xlu0 %2957
      %2959 = vrot.lane.b32.xlu0 %v2544, 64
      %v2960 = vpop.permute.xlu0 %2959
      %2961 = vrot.lane.b32.xlu0 %v2545, 64
      %v2962 = vpop.permute.xlu0 %2961
      %3027 = vrot.lane.b32.xlu0 %v2546, 96
      %v3028 = vpop.permute.xlu0 %3027
      %3029 = vrot.lane.b32.xlu0 %v2547, 96
      %v3030 = vpop.permute.xlu0 %3029
      %3031 = vrot.lane.b32.xlu0 %v2548, 96
      %v3032 = vpop.permute.xlu0 %3031
      %3033 = vrot.lane.b32.xlu0 %v2549, 96
      %v3034 = vpop.permute.xlu0 %3033
      %3035 = vrot.lane.b32.xlu0 %v2550, 96
      %v3036 = vpop.permute.xlu0 %3035
      %3037 = vrot.lane.b32.xlu0 %v2551, 96
      %v3038 = vpop.permute.xlu0 %3037
      %3039 = vrot.lane.b32.xlu0 %v2552, 96
      %v3040 = vpop.permute.xlu0 %3039
      %3041 = vrot.lane.b32.xlu0 %v2553, 96
      %v3042 = vpop.permute.xlu0 %3041
      %3043 = vrot.lane.b32.xlu0 %v2554, 96
      %v3044 = vpop.permute.xlu0 %3043
      %3045 = vrot.lane.b32.xlu0 %v2555, 96
      %v3046 = vpop.permute.xlu0 %3045
      %3047 = vrot.lane.b32.xlu0 %v2556, 96
      %v3048 = vpop.permute.xlu0 %3047
      %3049 = vrot.lane.b32.xlu0 %v2557, 96
      %v3050 = vpop.permute.xlu0 %3049
      %3051 = vrot.lane.b32.xlu0 %v2558, 96
      %v3052 = vpop.permute.xlu0 %3051
      %3053 = vrot.lane.b32.xlu0 %v2559, 96
      %v3054 = vpop.permute.xlu0 %3053
      %3055 = vrot.lane.b32.xlu0 %v2560, 96
      %v3056 = vpop.permute.xlu0 %3055
      %3057 = vrot.lane.b32.xlu0 %v2561, 96
      %v3058 = vpop.permute.xlu0 %3057
      %3059 = vrot.lane.b32.xlu0 %v2562, 96
      %v3060 = vpop.permute.xlu0 %3059
      %3061 = vrot.lane.b32.xlu0 %v2563, 96
      %v3062 = vpop.permute.xlu0 %3061
      %3063 = vrot.lane.b32.xlu0 %v2564, 96
      %v3064 = vpop.permute.xlu0 %3063
      %3065 = vrot.lane.b32.xlu0 %v2565, 96
      %v3066 = vpop.permute.xlu0 %3065
      %3067 = vrot.lane.b32.xlu0 %v2566, 96
      %v3068 = vpop.permute.xlu0 %3067
      %3069 = vrot.lane.b32.xlu0 %v2567, 96
      %v3070 = vpop.permute.xlu0 %3069
      %3071 = vrot.lane.b32.xlu0 %v2568, 96
      %v3072 = vpop.permute.xlu0 %3071
      %3073 = vrot.lane.b32.xlu0 %v2569, 96
      %v3074 = vpop.permute.xlu0 %3073
      %3075 = vrot.lane.b32.xlu0 %v2570, 96
      %v3076 = vpop.permute.xlu0 %3075
      %3077 = vrot.lane.b32.xlu0 %v2571, 96
      %v3078 = vpop.permute.xlu0 %3077
      %3079 = vrot.lane.b32.xlu0 %v2572, 96
      %v3080 = vpop.permute.xlu0 %3079
      %3081 = vrot.lane.b32.xlu0 %v2573, 96
      %v3082 = vpop.permute.xlu0 %3081
      %3083 = vrot.lane.b32.xlu0 %v2574, 96
      %v3084 = vpop.permute.xlu0 %3083
      %3085 = vrot.lane.b32.xlu0 %v2575, 96
      %v3086 = vpop.permute.xlu0 %3085
      %3087 = vrot.lane.b32.xlu0 %v2576, 96
      %v3088 = vpop.permute.xlu0 %3087
      %3089 = vrot.lane.b32.xlu0 %v2577, 96
      %v3090 = vpop.permute.xlu0 %3089
      %3155 = vrot.lane.b32.xlu0 %v2610, 32
      %v3156 = vpop.permute.xlu0 %3155
      %3157 = vrot.lane.b32.xlu0 %v2611, 32
      %v3158 = vpop.permute.xlu0 %3157
      %3159 = vrot.lane.b32.xlu0 %v2612, 32
      %v3160 = vpop.permute.xlu0 %3159
      %3161 = vrot.lane.b32.xlu0 %v2613, 32
      %v3162 = vpop.permute.xlu0 %3161
      %3163 = vrot.lane.b32.xlu0 %v2614, 32
      %v3164 = vpop.permute.xlu0 %3163
      %3165 = vrot.lane.b32.xlu0 %v2615, 32
      %v3166 = vpop.permute.xlu0 %3165
      %3167 = vrot.lane.b32.xlu0 %v2616, 32
      %v3168 = vpop.permute.xlu0 %3167
      %3169 = vrot.lane.b32.xlu0 %v2617, 32
      %v3170 = vpop.permute.xlu0 %3169
      %3171 = vrot.lane.b32.xlu0 %v2618, 32
      %v3172 = vpop.permute.xlu0 %3171
      %3173 = vrot.lane.b32.xlu0 %v2619, 32
      %v3174 = vpop.permute.xlu0 %3173
      %3175 = vrot.lane.b32.xlu0 %v2620, 32
      %v3176 = vpop.permute.xlu0 %3175
      %3177 = vrot.lane.b32.xlu0 %v2621, 32
      %v3178 = vpop.permute.xlu0 %3177
      %3179 = vrot.lane.b32.xlu0 %v2622, 32
      %v3180 = vpop.permute.xlu0 %3179
      %3181 = vrot.lane.b32.xlu0 %v2623, 32
      %v3182 = vpop.permute.xlu0 %3181
      %3183 = vrot.lane.b32.xlu0 %v2624, 32
      %v3184 = vpop.permute.xlu0 %3183
      %3185 = vrot.lane.b32.xlu0 %v2625, 32
      %v3186 = vpop.permute.xlu0 %3185
      %3187 = vrot.lane.b32.xlu0 %v2626, 32
      %v3188 = vpop.permute.xlu0 %3187
      %3189 = vrot.lane.b32.xlu0 %v2627, 32
      %v3190 = vpop.permute.xlu0 %3189
      %3191 = vrot.lane.b32.xlu0 %v2628, 32
      %v3192 = vpop.permute.xlu0 %3191
      %3193 = vrot.lane.b32.xlu0 %v2629, 32
      %v3194 = vpop.permute.xlu0 %3193
      %3195 = vrot.lane.b32.xlu0 %v2630, 32
      %v3196 = vpop.permute.xlu0 %3195
      %3197 = vrot.lane.b32.xlu0 %v2631, 32
      %v3198 = vpop.permute.xlu0 %3197
      %3199 = vrot.lane.b32.xlu0 %v2632, 32
      %v3200 = vpop.permute.xlu0 %3199
      %3201 = vrot.lane.b32.xlu0 %v2633, 32
      %v3202 = vpop.permute.xlu0 %3201
      %3203 = vrot.lane.b32.xlu0 %v2634, 32
      %v3204 = vpop.permute.xlu0 %3203
      %3205 = vrot.lane.b32.xlu0 %v2635, 32
      %v3206 = vpop.permute.xlu0 %3205
      %3207 = vrot.lane.b32.xlu0 %v2636, 32
      %v3208 = vpop.permute.xlu0 %3207
      %3209 = vrot.lane.b32.xlu0 %v2637, 32
      %v3210 = vpop.permute.xlu0 %3209
      %3211 = vrot.lane.b32.xlu0 %v2638, 32
      %v3212 = vpop.permute.xlu0 %3211
      %3213 = vrot.lane.b32.xlu0 %v2639, 32
      %v3214 = vpop.permute.xlu0 %3213
      %3215 = vrot.lane.b32.xlu0 %v2640, 32
      %v3216 = vpop.permute.xlu0 %3215
      %3217 = vrot.lane.b32.xlu0 %v2641, 32
      %v3218 = vpop.permute.xlu0 %3217
      %3283 = vrot.lane.b32.xlu0 %v2643, 64
      %v3284 = vpop.permute.xlu0 %3283
      %3285 = vrot.lane.b32.xlu0 %v2644, 64
      %v3286 = vpop.permute.xlu0 %3285
      %3287 = vrot.lane.b32.xlu0 %v2645, 64
      %v3288 = vpop.permute.xlu0 %3287
      %3289 = vrot.lane.b32.xlu0 %v2646, 64
      %v3290 = vpop.permute.xlu0 %3289
      %3291 = vrot.lane.b32.xlu0 %v2647, 64
      %v3292 = vpop.permute.xlu0 %3291
      %3293 = vrot.lane.b32.xlu0 %v2648, 64
      %v3294 = vpop.permute.xlu0 %3293
      %3295 = vrot.lane.b32.xlu0 %v2649, 64
      %v3296 = vpop.permute.xlu0 %3295
      %3297 = vrot.lane.b32.xlu0 %v2650, 64
      %v3298 = vpop.permute.xlu0 %3297
      %3299 = vrot.lane.b32.xlu0 %v2651, 64
      %v3300 = vpop.permute.xlu0 %3299
      %3301 = vrot.lane.b32.xlu0 %v2652, 64
      %v3302 = vpop.permute.xlu0 %3301
      %3303 = vrot.lane.b32.xlu0 %v2653, 64
      %v3304 = vpop.permute.xlu0 %3303
      %3305 = vrot.lane.b32.xlu0 %v2654, 64
      %v3306 = vpop.permute.xlu0 %3305
      %3307 = vrot.lane.b32.xlu0 %v2655, 64
      %v3308 = vpop.permute.xlu0 %3307
      %3309 = vrot.lane.b32.xlu0 %v2656, 64
      %v3310 = vpop.permute.xlu0 %3309
      %3311 = vrot.lane.b32.xlu0 %v2657, 64
      %v3312 = vpop.permute.xlu0 %3311
      %3313 = vrot.lane.b32.xlu0 %v2658, 64
      %v3314 = vpop.permute.xlu0 %3313
      %3315 = vrot.lane.b32.xlu0 %v2659, 64
      %v3316 = vpop.permute.xlu0 %3315
      %3317 = vrot.lane.b32.xlu0 %v2660, 64
      %v3318 = vpop.permute.xlu0 %3317
      %3319 = vrot.lane.b32.xlu0 %v2661, 64
      %v3320 = vpop.permute.xlu0 %3319
      %3321 = vrot.lane.b32.xlu0 %v2662, 64
      %v3322 = vpop.permute.xlu0 %3321
      %3323 = vrot.lane.b32.xlu0 %v2663, 64
      %v3324 = vpop.permute.xlu0 %3323
      %3325 = vrot.lane.b32.xlu0 %v2664, 64
      %v3326 = vpop.permute.xlu0 %3325
      %3327 = vrot.lane.b32.xlu0 %v2665, 64
      %v3328 = vpop.permute.xlu0 %3327
      %3329 = vrot.lane.b32.xlu0 %v2666, 64
      %v3330 = vpop.permute.xlu0 %3329
      %3331 = vrot.lane.b32.xlu0 %v2667, 64
      %v3332 = vpop.permute.xlu0 %3331
      %3333 = vrot.lane.b32.xlu0 %v2668, 64
      %v3334 = vpop.permute.xlu0 %3333
      %3335 = vrot.lane.b32.xlu0 %v2669, 64
      %v3336 = vpop.permute.xlu0 %3335
      %3337 = vrot.lane.b32.xlu0 %v2670, 64
      %v3338 = vpop.permute.xlu0 %3337
      %3339 = vrot.lane.b32.xlu0 %v2671, 64
      %v3340 = vpop.permute.xlu0 %3339
      %3341 = vrot.lane.b32.xlu0 %v2672, 64
      %v3342 = vpop.permute.xlu0 %3341
      %3343 = vrot.lane.b32.xlu0 %v2673, 64
      %v3344 = vpop.permute.xlu0 %3343
      %3345 = vrot.lane.b32.xlu0 %v2674, 64
      %v3346 = vpop.permute.xlu0 %3345
      %3411 = vrot.lane.b32.xlu0 %v2675, 96
      %v3412 = vpop.permute.xlu0 %3411
      %3413 = vrot.lane.b32.xlu0 %v2676, 96
      %v3414 = vpop.permute.xlu0 %3413
      %3415 = vrot.lane.b32.xlu0 %v2677, 96
      %v3416 = vpop.permute.xlu0 %3415
      %3417 = vrot.lane.b32.xlu0 %v2678, 96
      %v3418 = vpop.permute.xlu0 %3417
      %3419 = vrot.lane.b32.xlu0 %v2679, 96
      %v3420 = vpop.permute.xlu0 %3419
      %3421 = vrot.lane.b32.xlu0 %v2680, 96
      %v3422 = vpop.permute.xlu0 %3421
      %3423 = vrot.lane.b32.xlu0 %v2681, 96
      %v3424 = vpop.permute.xlu0 %3423
      %3425 = vrot.lane.b32.xlu0 %v2682, 96
      %v3426 = vpop.permute.xlu0 %3425
      %3427 = vrot.lane.b32.xlu0 %v2683, 96
      %v3428 = vpop.permute.xlu0 %3427
      %3429 = vrot.lane.b32.xlu0 %v2684, 96
      %v3430 = vpop.permute.xlu0 %3429
      %3431 = vrot.lane.b32.xlu0 %v2685, 96
      %v3432 = vpop.permute.xlu0 %3431
      %3433 = vrot.lane.b32.xlu0 %v2686, 96
      %v3434 = vpop.permute.xlu0 %3433
      %3435 = vrot.lane.b32.xlu0 %v2687, 96
      %v3436 = vpop.permute.xlu0 %3435
      %3437 = vrot.lane.b32.xlu0 %v2688, 96
      %v3438 = vpop.permute.xlu0 %3437
      %3439 = vrot.lane.b32.xlu0 %v2689, 96
      %v3440 = vpop.permute.xlu0 %3439
      %3441 = vrot.lane.b32.xlu0 %v2690, 96
      %v3442 = vpop.permute.xlu0 %3441
      %3443 = vrot.lane.b32.xlu0 %v2691, 96
      %v3444 = vpop.permute.xlu0 %3443
      %3445 = vrot.lane.b32.xlu0 %v2692, 96
      %v3446 = vpop.permute.xlu0 %3445
      %3447 = vrot.lane.b32.xlu0 %v2693, 96
      %v3448 = vpop.permute.xlu0 %3447
      %3449 = vrot.lane.b32.xlu0 %v2694, 96
      %v3450 = vpop.permute.xlu0 %3449
      %3451 = vrot.lane.b32.xlu0 %v2695, 96
      %v3452 = vpop.permute.xlu0 %3451
      %3453 = vrot.lane.b32.xlu0 %v2696, 96
      %v3454 = vpop.permute.xlu0 %3453
      %3455 = vrot.lane.b32.xlu0 %v2697, 96
      %v3456 = vpop.permute.xlu0 %3455
      %3457 = vrot.lane.b32.xlu0 %v2698, 96
      %v3458 = vpop.permute.xlu0 %3457
      %3459 = vrot.lane.b32.xlu0 %v2699, 96
      %v3460 = vpop.permute.xlu0 %3459
      %3461 = vrot.lane.b32.xlu0 %v2700, 96
      %v3462 = vpop.permute.xlu0 %3461
      %3463 = vrot.lane.b32.xlu0 %v2701, 96
      %v3464 = vpop.permute.xlu0 %3463
      %3465 = vrot.lane.b32.xlu0 %v2702, 96
      %v3466 = vpop.permute.xlu0 %3465
      %3467 = vrot.lane.b32.xlu0 %v2703, 96
      %v3468 = vpop.permute.xlu0 %3467
      %3469 = vrot.lane.b32.xlu0 %v2704, 96
      %v3470 = vpop.permute.xlu0 %3469
      %3471 = vrot.lane.b32.xlu0 %v2705, 96
      %v3472 = vpop.permute.xlu0 %3471
      %3473 = vrot.lane.b32.xlu0 %v2706, 96
      %v3474 = vpop.permute.xlu0 %3473
      %v3507 = vsel %vm390, %v2450, %v2772
      %v3508 = vsel %vm390, %v2451, %v2774
      %v3509 = vsel %vm390, %v2452, %v2776
      %v3510 = vsel %vm390, %v2453, %v2778
      %v3511 = vsel %vm390, %v2454, %v2780
      %v3512 = vsel %vm390, %v2455, %v2782
      %v3513 = vsel %vm390, %v2456, %v2784
      %v3514 = vsel %vm390, %v2457, %v2786
      %v3515 = vsel %vm390, %v2458, %v2788
      %v3516 = vsel %vm390, %v2459, %v2790
      %v3517 = vsel %vm390, %v2460, %v2792
      %v3518 = vsel %vm390, %v2461, %v2794
      %v3519 = vsel %vm390, %v2462, %v2796
      %v3520 = vsel %vm390, %v2463, %v2798
      %v3521 = vsel %vm390, %v2464, %v2800
      %v3522 = vsel %vm390, %v2465, %v2802
      %v3523 = vsel %vm390, %v2466, %v2804
      %v3524 = vsel %vm390, %v2467, %v2806
      %v3525 = vsel %vm390, %v2468, %v2808
      %v3526 = vsel %vm390, %v2469, %v2810
      %v3527 = vsel %vm390, %v2470, %v2812
      %v3528 = vsel %vm390, %v2471, %v2814
      %v3529 = vsel %vm390, %v2472, %v2816
      %v3530 = vsel %vm390, %v2473, %v2818
      %v3531 = vsel %vm390, %v2474, %v2820
      %v3532 = vsel %vm390, %v2475, %v2822
      %v3533 = vsel %vm390, %v2476, %v2824
      %v3534 = vsel %vm390, %v2477, %v2826
      %v3535 = vsel %vm390, %v2478, %v2828
      %v3536 = vsel %vm390, %v2479, %v2830
      %v3537 = vsel %vm390, %v2480, %v2832
      %v3538 = vsel %vm390, %v2481, %v2834
      %v3539 = vsel %vm466, %v3507, %v2900
      %v3540 = vsel %vm466, %v3508, %v2902
      %v3541 = vsel %vm466, %v3509, %v2904
      %v3542 = vsel %vm466, %v3510, %v2906
      %v3543 = vsel %vm466, %v3511, %v2908
      %v3544 = vsel %vm466, %v3512, %v2910
      %v3545 = vsel %vm466, %v3513, %v2912
      %v3546 = vsel %vm466, %v3514, %v2914
      %v3547 = vsel %vm466, %v3515, %v2916
      %v3548 = vsel %vm466, %v3516, %v2918
      %v3549 = vsel %vm466, %v3517, %v2920
      %v3550 = vsel %vm466, %v3518, %v2922
      %v3551 = vsel %vm466, %v3519, %v2924
      %v3552 = vsel %vm466, %v3520, %v2926
      %v3553 = vsel %vm466, %v3521, %v2928
      %v3554 = vsel %vm466, %v3522, %v2930
      %v3555 = vsel %vm466, %v3523, %v2932
      %v3556 = vsel %vm466, %v3524, %v2934
      %v3557 = vsel %vm466, %v3525, %v2936
      %v3558 = vsel %vm466, %v3526, %v2938
      %v3559 = vsel %vm466, %v3527, %v2940
      %v3560 = vsel %vm466, %v3528, %v2942
      %v3561 = vsel %vm466, %v3529, %v2944
      %v3562 = vsel %vm466, %v3530, %v2946
      %v3563 = vsel %vm466, %v3531, %v2948
      %v3564 = vsel %vm466, %v3532, %v2950
      %v3565 = vsel %vm466, %v3533, %v2952
      %v3566 = vsel %vm466, %v3534, %v2954
      %v3567 = vsel %vm466, %v3535, %v2956
      %v3568 = vsel %vm466, %v3536, %v2958
      %v3569 = vsel %vm466, %v3537, %v2960
      %v3570 = vsel %vm466, %v3538, %v2962
      %vm3571 = vcmask 785408
      %v3572 = vsel %vm3571, %v3539, %v3028
      %v3573 = vsel %vm3571, %v3540, %v3030
      %v3574 = vsel %vm3571, %v3541, %v3032
      %v3575 = vsel %vm3571, %v3542, %v3034
      %v3576 = vsel %vm3571, %v3543, %v3036
      %v3577 = vsel %vm3571, %v3544, %v3038
      %v3578 = vsel %vm3571, %v3545, %v3040
      %v3579 = vsel %vm3571, %v3546, %v3042
      %v3580 = vsel %vm3571, %v3547, %v3044
      %v3581 = vsel %vm3571, %v3548, %v3046
      %v3582 = vsel %vm3571, %v3549, %v3048
      %v3583 = vsel %vm3571, %v3550, %v3050
      %v3584 = vsel %vm3571, %v3551, %v3052
      %v3585 = vsel %vm3571, %v3552, %v3054
      %v3586 = vsel %vm3571, %v3553, %v3056
      %v3587 = vsel %vm3571, %v3554, %v3058
      %v3588 = vsel %vm3571, %v3555, %v3060
      %v3589 = vsel %vm3571, %v3556, %v3062
      %v3590 = vsel %vm3571, %v3557, %v3064
      %v3591 = vsel %vm3571, %v3558, %v3066
      %v3592 = vsel %vm3571, %v3559, %v3068
      %v3593 = vsel %vm3571, %v3560, %v3070
      %v3594 = vsel %vm3571, %v3561, %v3072
      %v3595 = vsel %vm3571, %v3562, %v3074
      %v3596 = vsel %vm3571, %v3563, %v3076
      %v3597 = vsel %vm3571, %v3564, %v3078
      %v3598 = vsel %vm3571, %v3565, %v3080
      %v3599 = vsel %vm3571, %v3566, %v3082
      %v3600 = vsel %vm3571, %v3567, %v3084
      %v3601 = vsel %vm3571, %v3568, %v3086
      %v3602 = vsel %vm3571, %v3569, %v3088
      %v3603 = vsel %vm3571, %v3570, %v3090
      %v3604 = vsel %vm390, %v2578, %v3156
      %v3605 = vsel %vm390, %v2579, %v3158
      %v3606 = vsel %vm390, %v2580, %v3160
      %v3607 = vsel %vm390, %v2581, %v3162
      %v3608 = vsel %vm390, %v2582, %v3164
      %v3609 = vsel %vm390, %v2583, %v3166
      %v3610 = vsel %vm390, %v2584, %v3168
      %v3611 = vsel %vm390, %v2585, %v3170
      %v3612 = vsel %vm390, %v2586, %v3172
      %v3613 = vsel %vm390, %v2587, %v3174
      %v3614 = vsel %vm390, %v2588, %v3176
      %v3615 = vsel %vm390, %v2589, %v3178
      %v3616 = vsel %vm390, %v2590, %v3180
      %v3617 = vsel %vm390, %v2591, %v3182
      %v3618 = vsel %vm390, %v2592, %v3184
      %v3619 = vsel %vm390, %v2593, %v3186
      %v3620 = vsel %vm390, %v2594, %v3188
      %v3621 = vsel %vm390, %v2595, %v3190
      %v3622 = vsel %vm390, %v2596, %v3192
      %v3623 = vsel %vm390, %v2597, %v3194
      %v3624 = vsel %vm390, %v2598, %v3196
      %v3625 = vsel %vm390, %v2599, %v3198
      %v3626 = vsel %vm390, %v2600, %v3200
      %v3627 = vsel %vm390, %v2601, %v3202
      %v3628 = vsel %vm390, %v2602, %v3204
      %v3629 = vsel %vm390, %v2603, %v3206
      %v3630 = vsel %vm390, %v2604, %v3208
      %v3631 = vsel %vm390, %v2605, %v3210
      %v3632 = vsel %vm390, %v2606, %v3212
      %v3633 = vsel %vm390, %v2607, %v3214
      %v3634 = vsel %vm390, %v2608, %v3216
      %v3635 = vsel %vm390, %v2609, %v3218
      %v3636 = vsel %vm466, %v3604, %v3284
      %v3637 = vsel %vm466, %v3605, %v3286
      %v3638 = vsel %vm466, %v3606, %v3288
      %v3639 = vsel %vm466, %v3607, %v3290
      %v3640 = vsel %vm466, %v3608, %v3292
      %v3641 = vsel %vm466, %v3609, %v3294
      %v3642 = vsel %vm466, %v3610, %v3296
      %v3643 = vsel %vm466, %v3611, %v3298
      %v3644 = vsel %vm466, %v3612, %v3300
      %v3645 = vsel %vm466, %v3613, %v3302
      %v3646 = vsel %vm466, %v3614, %v3304
      %v3647 = vsel %vm466, %v3615, %v3306
      %v3648 = vsel %vm466, %v3616, %v3308
      %v3649 = vsel %vm466, %v3617, %v3310
      %v3650 = vsel %vm466, %v3618, %v3312
      %v3651 = vsel %vm466, %v3619, %v3314
      %v3652 = vsel %vm466, %v3620, %v3316
      %v3653 = vsel %vm466, %v3621, %v3318
      %v3654 = vsel %vm466, %v3622, %v3320
      %v3655 = vsel %vm466, %v3623, %v3322
      %v3656 = vsel %vm466, %v3624, %v3324
      %v3657 = vsel %vm466, %v3625, %v3326
      %v3658 = vsel %vm466, %v3626, %v3328
      %v3659 = vsel %vm466, %v3627, %v3330
      %v3660 = vsel %vm466, %v3628, %v3332
      %v3661 = vsel %vm466, %v3629, %v3334
      %v3662 = vsel %vm466, %v3630, %v3336
      %v3663 = vsel %vm466, %v3631, %v3338
      %v3664 = vsel %vm466, %v3632, %v3340
      %v3665 = vsel %vm466, %v3633, %v3342
      %v3666 = vsel %vm466, %v3634, %v3344
      %v3667 = vsel %vm466, %v3635, %v3346
      %v3668 = vsel %vm3571, %v3636, %v3412
      %v3669 = vsel %vm3571, %v3637, %v3414
      %v3670 = vsel %vm3571, %v3638, %v3416
      %v3671 = vsel %vm3571, %v3639, %v3418
      %v3672 = vsel %vm3571, %v3640, %v3420
      %v3673 = vsel %vm3571, %v3641, %v3422
      %v3674 = vsel %vm3571, %v3642, %v3424
      %v3675 = vsel %vm3571, %v3643, %v3426
      %v3676 = vsel %vm3571, %v3644, %v3428
      %v3677 = vsel %vm3571, %v3645, %v3430
      %v3678 = vsel %vm3571, %v3646, %v3432
      %v3679 = vsel %vm3571, %v3647, %v3434
      %v3680 = vsel %vm3571, %v3648, %v3436
      %v3681 = vsel %vm3571, %v3649, %v3438
      %v3682 = vsel %vm3571, %v3650, %v3440
      %v3683 = vsel %vm3571, %v3651, %v3442
      %v3684 = vsel %vm3571, %v3652, %v3444
      %v3685 = vsel %vm3571, %v3653, %v3446
      %v3686 = vsel %vm3571, %v3654, %v3448
      %v3687 = vsel %vm3571, %v3655, %v3450
      %v3688 = vsel %vm3571, %v3656, %v3452
      %v3689 = vsel %vm3571, %v3657, %v3454
      %v3690 = vsel %vm3571, %v3658, %v3456
      %v3691 = vsel %vm3571, %v3659, %v3458
      %v3692 = vsel %vm3571, %v3660, %v3460
      %v3693 = vsel %vm3571, %v3661, %v3462
      %v3694 = vsel %vm3571, %v3662, %v3464
      %v3695 = vsel %vm3571, %v3663, %v3466
      %v3696 = vsel %vm3571, %v3664, %v3468
      %v3697 = vsel %vm3571, %v3665, %v3470
      %v3698 = vsel %vm3571, %v3666, %v3472
      %v3699 = vsel %vm3571, %v3667, %v3474
      %v3700 = vpack.c.bf16 %v3573, %v3572
      %v3701 = vpack.c.bf16 %v3669, %v3668
      %v3702 = vpack.c.bf16 %v2708, %v2707
      %v3703 = vpack.c.bf16 %v3575, %v3574
      %v3704 = vpack.c.bf16 %v3671, %v3670
      %v3705 = vpack.c.bf16 %v2710, %v2709
      %v3706 = vpack.c.bf16 %v3577, %v3576
      %v3707 = vpack.c.bf16 %v3673, %v3672
      %v3708 = vpack.c.bf16 %v2712, %v2711
      %v3709 = vpack.c.bf16 %v3579, %v3578
      %v3710 = vpack.c.bf16 %v3675, %v3674
      %v3711 = vpack.c.bf16 %v2714, %v2713
      %v3712 = vpack.c.bf16 %v3581, %v3580
      %v3713 = vpack.c.bf16 %v3677, %v3676
      %v3714 = vpack.c.bf16 %v2716, %v2715
      %v3715 = vpack.c.bf16 %v3583, %v3582
      %v3716 = vpack.c.bf16 %v3679, %v3678
      %v3717 = vpack.c.bf16 %v2718, %v2717
      %v3718 = vpack.c.bf16 %v3585, %v3584
      %v3719 = vpack.c.bf16 %v3681, %v3680
      %v3720 = vpack.c.bf16 %v2720, %v2719
      %v3721 = vpack.c.bf16 %v3587, %v3586
      %v3722 = vpack.c.bf16 %v3683, %v3682
      %v3723 = vpack.c.bf16 %v2722, %v2721
      %v3724 = vpack.c.bf16 %v3589, %v3588
      %v3725 = vpack.c.bf16 %v3685, %v3684
      %v3726 = vpack.c.bf16 %v2724, %v2723
      %v3727 = vpack.c.bf16 %v3591, %v3590
      %v3728 = vpack.c.bf16 %v3687, %v3686
      %v3729 = vpack.c.bf16 %v2726, %v2725
      %v3730 = vpack.c.bf16 %v3593, %v3592
      %v3731 = vpack.c.bf16 %v3689, %v3688
      %v3732 = vpack.c.bf16 %v2728, %v2727
      %v3733 = vpack.c.bf16 %v3595, %v3594
      %v3734 = vpack.c.bf16 %v3691, %v3690
      %v3735 = vpack.c.bf16 %v2730, %v2729
      %v3736 = vpack.c.bf16 %v3597, %v3596
      %v3737 = vpack.c.bf16 %v3693, %v3692
      %v3738 = vpack.c.bf16 %v2732, %v2731
      %v3739 = vpack.c.bf16 %v3599, %v3598
      %v3740 = vpack.c.bf16 %v3695, %v3694
      %v3741 = vpack.c.bf16 %v2734, %v2733
      %v3742 = vpack.c.bf16 %v3601, %v3600
      %v3743 = vpack.c.bf16 %v3697, %v3696
      %v3744 = vpack.c.bf16 %v2736, %v2735
      %v3745 = vpack.c.bf16 %v3603, %v3602
      %v3746 = vpack.c.bf16 %v3699, %v3698
      %v3747 = vpack.c.bf16 %v2738, %v2737
      %v3748 = vld [vmem:[%s3] sm:$0xf]
      %v3749 = vld [vmem:[%s3 + $0x4] sm:$0xf]
      %v3750 = vld [vmem:[%s3 + $0x8] sm:$0xf]
      %v3751 = vld [vmem:[%s3 + $0xc] sm:$0xf]
      %v3752 = vld [vmem:[%s3 + $0x10] sm:$0xf]
      %v3753 = vld [vmem:[%s3 + $0x14] sm:$0xf]
      %v3754 = vld [vmem:[%s3 + $0x18] sm:$0xf]
      %v3755 = vld [vmem:[%s3 + $0x1c] sm:$0xf]
      %v3756 = vld [vmem:[%s3 + $0x20] sm:$0xf]
      %v3757 = vld [vmem:[%s3 + $0x24] sm:$0xf]
      %v3758 = vld [vmem:[%s3 + $0x28] sm:$0xf]
      %v3759 = vld [vmem:[%s3 + $0x2c] sm:$0xf]
      %v3760 = vld [vmem:[%s3 + $0x30] sm:$0xf]
      %v3761 = vld [vmem:[%s3 + $0x34] sm:$0xf]
      %v3762 = vld [vmem:[%s3 + $0x38] sm:$0xf]
      %v3763 = vld [vmem:[%s3 + $0x3c] sm:$0xf]
      %v3764 = vld [vmem:[%s3 + $0x40] sm:$0xf]
      %v3765 = vld [vmem:[%s3 + $0x44] sm:$0xf]
      %v3766 = vld [vmem:[%s3 + $0x48] sm:$0xf]
      %v3767 = vld [vmem:[%s3 + $0x4c] sm:$0xf]
      %v3768 = vld [vmem:[%s3 + $0x50] sm:$0xf]
      %v3769 = vld [vmem:[%s3 + $0x54] sm:$0xf]
      %v3770 = vld [vmem:[%s3 + $0x58] sm:$0xf]
      %v3771 = vld [vmem:[%s3 + $0x5c] sm:$0xf]
      %v3772 = vld [vmem:[%s3 + $0x60] sm:$0xf]
      %v3773 = vld [vmem:[%s3 + $0x64] sm:$0xf]
      %v3774 = vld [vmem:[%s3 + $0x68] sm:$0xf]
      %v3775 = vld [vmem:[%s3 + $0x6c] sm:$0xf]
      %v3776 = vld [vmem:[%s3 + $0x70] sm:$0xf]
      %v3777 = vld [vmem:[%s3 + $0x74] sm:$0xf]
      %v3778 = vld [vmem:[%s3 + $0x78] sm:$0xf]
      %v3779 = vld [vmem:[%s3 + $0x7c] sm:$0xf]
      %v3780 = vld [vmem:[%s3 + $0x80] sm:$0xf]
      %v3781 = vld [vmem:[%s3 + $0x84] sm:$0xf]
      %v3782 = vld [vmem:[%s3 + $0x88] sm:$0xf]
      %v3783 = vld [vmem:[%s3 + $0x8c] sm:$0xf]
      %v3784 = vld [vmem:[%s4] sm:$0x1]
      %v3786 = vlaneseq
      %v3787 = vshrl.u32 %v3786, 7
      %v3788 = vsub.s32 0, %v3787
      %v3789 = vrot.slane %v3784, %v3788
      %v3827 = vunpack.c.l.b16 %v3748
      %v3828 = vunpack.c.l.b16 %v3749
      %v3829 = vunpack.c.l.b16 %v3750
      %v3830 = vunpack.c.l.b16 %v3751
      %v3831 = vunpack.c.l.b16 %v3752
      %v3832 = vunpack.c.l.b16 %v3753
      %v3833 = vunpack.c.l.b16 %v3754
      %v3834 = vunpack.c.l.b16 %v3755
      %v3835 = vunpack.c.l.b16 %v3756
      %v3836 = vunpack.c.l.b16 %v3757
      %v3837 = vunpack.c.l.b16 %v3758
      %v3838 = vunpack.c.l.b16 %v3759
      %v3839 = vunpack.c.l.b16 %v3760
      %v3840 = vunpack.c.l.b16 %v3761
      %v3841 = vunpack.c.l.b16 %v3762
      %v3842 = vunpack.c.l.b16 %v3763
      %v3843 = vunpack.c.l.b16 %v3764
      %v3844 = vunpack.c.l.b16 %v3765
      %v3845 = vunpack.c.l.b16 %v3766
      %v3846 = vunpack.c.l.b16 %v3767
      %v3847 = vunpack.c.l.b16 %v3768
      %v3848 = vunpack.c.l.b16 %v3769
      %v3849 = vunpack.c.l.b16 %v3770
      %v3850 = vunpack.c.l.b16 %v3771
      %v3851 = vunpack.c.l.b16 %v3772
      %v3852 = vunpack.c.l.b16 %v3773
      %v3853 = vunpack.c.l.b16 %v3774
      %v3854 = vunpack.c.l.b16 %v3775
      %v3855 = vunpack.c.l.b16 %v3776
      %v3856 = vunpack.c.l.b16 %v3777
      %v3857 = vunpack.c.l.b16 %v3778
      %v3858 = vunpack.c.l.b16 %v3779
      %v3859 = vunpack.c.l.b16 %v3780
      %v3860 = vunpack.c.l.b16 %v3781
      %v3861 = vunpack.c.l.b16 %v3782
      %v3862 = vunpack.c.l.b16 %v3783
      %v3863 = vpack.c.b16 %v3828, %v3827
      %v3864 = vpack.c.b16 %v3830, %v3829
      %v3865 = vpack.c.b16 %v3832, %v3831
      %v3866 = vpack.c.b16 %v3834, %v3833
      %v3867 = vpack.c.b16 %v3836, %v3835
      %v3868 = vpack.c.b16 %v3838, %v3837
      %v3869 = vpack.c.b16 %v3840, %v3839
      %v3870 = vpack.c.b16 %v3842, %v3841
      %v3871 = vpack.c.b16 %v3844, %v3843
      %v3872 = vpack.c.b16 %v3846, %v3845
      %v3873 = vpack.c.b16 %v3848, %v3847
      %v3874 = vpack.c.b16 %v3850, %v3849
      %v3875 = vpack.c.b16 %v3852, %v3851
      %v3876 = vpack.c.b16 %v3854, %v3853
      %v3877 = vpack.c.b16 %v3856, %v3855
      %v3878 = vpack.c.b16 %v3858, %v3857
      %v3879 = vpack.c.b16 %v3860, %v3859
      %v3880 = vpack.c.b16 %v3862, %v3861
      %v3900 = vsel %vm390, %v3702, 0
      %v3903 = vsel %vm390, %v3705, 0
      %v3906 = vsel %vm390, %v3708, 0
      %v3909 = vsel %vm390, %v3711, 0
      %v3912 = vsel %vm390, %v3714, 0
      %v3915 = vsel %vm390, %v3717, 0
      %v3918 = vsel %vm390, %v3720, 0
      %v3921 = vsel %vm390, %v3723, 0
      %v3924 = vsel %vm390, %v3726, 0
      %v3927 = vsel %vm390, %v3729, 0
      %v3930 = vsel %vm390, %v3732, 0
      %v3933 = vsel %vm390, %v3735, 0
      %v3936 = vsel %vm390, %v3738, 0
      %v3939 = vsel %vm390, %v3741, 0
      %v3942 = vsel %vm390, %v3744, 0
      %v3945 = vsel %vm390, %v3747, 0
      %3947 = vmatprep.subr.bf16.mxu0 0
      %3948 = vmatpush1.bf16.msra.mxu0 %v3863
      %3949 = vmatprep.subr.bf16.mxu0 0
      %3950 = vmatpush1.bf16.msra.mxu0 %v3864
      %3951 = vmatprep.subr.bf16.mxu0 0
      %3952 = vmatpush1.bf16.msra.mxu0 %v3865
      %3953 = vmatprep.subr.bf16.mxu0 0
      %3954 = vmatpush1.bf16.msra.mxu0 %v3866
      %3955 = vmatprep.subr.bf16.mxu0 0
      %3956 = vmatpush1.bf16.msra.mxu0 %v3867
      %3957 = vmatprep.subr.bf16.mxu0 0
      %3958 = vmatpush1.bf16.msra.mxu0 %v3868
      %3959 = vmatprep.subr.bf16.mxu0 0
      %3960 = vmatpush1.bf16.msra.mxu0 %v3869
      %3961 = vmatprep.subr.bf16.mxu0 0
      %3962 = vmatpush1.bf16.msra.mxu0 %v3870
      %3963 = vmatprep.subr.bf16.mxu0 0
      %3964 = vmatpush1.bf16.msra.mxu0 %v3871
      %3965 = vmatprep.subr.bf16.mxu0 0
      %3966 = vmatpush1.bf16.msra.mxu0 %v3872
      %3967 = vmatprep.subr.bf16.mxu0 0
      %3968 = vmatpush1.bf16.msra.mxu0 %v3873
      %3969 = vmatprep.subr.bf16.mxu0 0
      %3970 = vmatpush1.bf16.msra.mxu0 %v3874
      %3971 = vmatprep.subr.bf16.mxu0 0
      %3972 = vmatpush1.bf16.msra.mxu0 %v3875
      %3973 = vmatprep.subr.bf16.mxu0 0
      %3974 = vmatpush1.bf16.msra.mxu0 %v3876
      %3975 = vmatprep.subr.bf16.mxu0 0
      %3976 = vmatpush1.bf16.msra.mxu0 %v3877
      %3977 = vmatprep.subr.bf16.mxu0 0
      %3978 = vmatpush1.bf16.msra.mxu0 %v3878
      %3979 = vmatprep.mubr.bf16.mxu0 %v3701
      %3980 = vmatmul.mubr.bf16.gmra.mrb[0].mxu0 %v3700
      %v3981 = vpop.f32.mrb[0].mxu0
      %v3982 = vadd.f32 %v3789, %v3981
      %v3983 = vpop.f32.mrb[0].mxu0
      %v3984 = vpop.f32.mrb[0].mxu0
      %v3985 = vadd.f32 %v3789, %v3984
      %v3986 = vpop.f32.mrb[0].mxu0
      %3987 = vmatprep.mubr.bf16.mxu0 %v3704
      %3988 = vmatmul.mubr.bf16.gmra.mrb[0].mxu0 %v3703
      %v3989 = vpop.f32.mrb[0].mxu0
      %v3990 = vadd.f32 %v3789, %v3989
      %v3991 = vpop.f32.mrb[0].mxu0
      %v3992 = vpop.f32.mrb[0].mxu0
      %v3993 = vadd.f32 %v3789, %v3992
      %v3994 = vpop.f32.mrb[0].mxu0
      %3995 = vmatprep.mubr.bf16.mxu0 %v3707
      %3996 = vmatmul.mubr.bf16.gmra.mrb[0].mxu0 %v3706
      %v3997 = vpop.f32.mrb[0].mxu0
      %v3998 = vadd.f32 %v3789, %v3997
      %v3999 = vpop.f32.mrb[0].mxu0
      %v4000 = vpop.f32.mrb[0].mxu0
      %v4001 = vadd.f32 %v3789, %v4000
      %v4002 = vpop.f32.mrb[0].mxu0
      %4003 = vmatprep.mubr.bf16.mxu0 %v3710
      %4004 = vmatmul.mubr.bf16.gmra.mrb[0].mxu0 %v3709
      %v4005 = vpop.f32.mrb[0].mxu0
      %v4006 = vadd.f32 %v3789, %v4005
      %v4007 = vpop.f32.mrb[0].mxu0
      %v4008 = vpop.f32.mrb[0].mxu0
      %v4009 = vadd.f32 %v3789, %v4008
      %v4010 = vpop.f32.mrb[0].mxu0
      %4011 = vmatprep.mubr.bf16.mxu0 %v3713
      %4012 = vmatmul.mubr.bf16.gmra.mrb[0].mxu0 %v3712
      %v4013 = vpop.f32.mrb[0].mxu0
      %v4014 = vadd.f32 %v3789, %v4013
      %v4015 = vpop.f32.mrb[0].mxu0
      %v4016 = vpop.f32.mrb[0].mxu0
      %v4017 = vadd.f32 %v3789, %v4016
      %v4018 = vpop.f32.mrb[0].mxu0
      %4019 = vmatprep.mubr.bf16.mxu0 %v3716
      %4020 = vmatmul.mubr.bf16.gmra.mrb[0].mxu0 %v3715
      %v4021 = vpop.f32.mrb[0].mxu0
      %v4022 = vadd.f32 %v3789, %v4021
      %v4023 = vpop.f32.mrb[0].mxu0
      %v4024 = vpop.f32.mrb[0].mxu0
      %v4025 = vadd.f32 %v3789, %v4024
      %v4026 = vpop.f32.mrb[0].mxu0
      %4027 = vmatprep.mubr.bf16.mxu0 %v3719
      %4028 = vmatmul.mubr.bf16.gmra.mrb[0].mxu0 %v3718
      %v4029 = vpop.f32.mrb[0].mxu0
      %v4030 = vadd.f32 %v3789, %v4029
      %v4031 = vpop.f32.mrb[0].mxu0
      %v4032 = vpop.f32.mrb[0].mxu0
      %v4033 = vadd.f32 %v3789, %v4032
      %v4034 = vpop.f32.mrb[0].mxu0
      %4035 = vmatprep.mubr.bf16.mxu0 %v3722
      %4036 = vmatmul.mubr.bf16.gmra.mrb[0].mxu0 %v3721
      %v4037 = vpop.f32.mrb[0].mxu0
      %v4038 = vadd.f32 %v3789, %v4037
      %v4039 = vpop.f32.mrb[0].mxu0
      %v4040 = vpop.f32.mrb[0].mxu0
      %v4041 = vadd.f32 %v3789, %v4040
      %v4042 = vpop.f32.mrb[0].mxu0
      %4043 = vmatprep.mubr.bf16.mxu0 %v3725
      %4044 = vmatmul.mubr.bf16.gmra.mrb[0].mxu0 %v3724
      %v4045 = vpop.f32.mrb[0].mxu0
      %v4046 = vadd.f32 %v3789, %v4045
      %v4047 = vpop.f32.mrb[0].mxu0
      %v4048 = vpop.f32.mrb[0].mxu0
      %v4049 = vadd.f32 %v3789, %v4048
      %v4050 = vpop.f32.mrb[0].mxu0
      %4051 = vmatprep.mubr.bf16.mxu0 %v3728
      %4052 = vmatmul.mubr.bf16.gmra.mrb[0].mxu0 %v3727
      %v4053 = vpop.f32.mrb[0].mxu0
      %v4054 = vadd.f32 %v3789, %v4053
      %v4055 = vpop.f32.mrb[0].mxu0
      %v4056 = vpop.f32.mrb[0].mxu0
      %v4057 = vadd.f32 %v3789, %v4056
      %v4058 = vpop.f32.mrb[0].mxu0
      %4059 = vmatprep.mubr.bf16.mxu0 %v3731
      %4060 = vmatmul.mubr.bf16.gmra.mrb[0].mxu0 %v3730
      %v4061 = vpop.f32.mrb[0].mxu0
      %v4062 = vadd.f32 %v3789, %v4061
      %v4063 = vpop.f32.mrb[0].mxu0
      %v4064 = vpop.f32.mrb[0].mxu0
      %v4065 = vadd.f32 %v3789, %v4064
      %v4066 = vpop.f32.mrb[0].mxu0
      %4067 = vmatprep.mubr.bf16.mxu0 %v3734
      %4068 = vmatmul.mubr.bf16.gmra.mrb[0].mxu0 %v3733
      %v4069 = vpop.f32.mrb[0].mxu0
      %v4070 = vadd.f32 %v3789, %v4069
      %v4071 = vpop.f32.mrb[0].mxu0
      %v4072 = vpop.f32.mrb[0].mxu0
      %v4073 = vadd.f32 %v3789, %v4072
      %v4074 = vpop.f32.mrb[0].mxu0
      %4075 = vmatprep.mubr.bf16.mxu0 %v3737
      %4076 = vmatmul.mubr.bf16.gmra.mrb[0].mxu0 %v3736
      %v4077 = vpop.f32.mrb[0].mxu0
      %v4078 = vadd.f32 %v3789, %v4077
      %v4079 = vpop.f32.mrb[0].mxu0
      %v4080 = vpop.f32.mrb[0].mxu0
      %v4081 = vadd.f32 %v3789, %v4080
      %v4082 = vpop.f32.mrb[0].mxu0
      %4083 = vmatprep.mubr.bf16.mxu0 %v3740
      %4084 = vmatmul.mubr.bf16.gmra.mrb[0].mxu0 %v3739
      %v4085 = vpop.f32.mrb[0].mxu0
      %v4086 = vadd.f32 %v3789, %v4085
      %v4087 = vpop.f32.mrb[0].mxu0
      %v4088 = vpop.f32.mrb[0].mxu0
      %v4089 = vadd.f32 %v3789, %v4088
      %v4090 = vpop.f32.mrb[0].mxu0
      %4091 = vmatprep.mubr.bf16.mxu0 %v3743
      %4092 = vmatmul.mubr.bf16.gmra.mrb[0].mxu0 %v3742
      %v4093 = vpop.f32.mrb[0].mxu0
      %v4094 = vadd.f32 %v3789, %v4093
      %v4095 = vpop.f32.mrb[0].mxu0
      %v4096 = vpop.f32.mrb[0].mxu0
      %v4097 = vadd.f32 %v3789, %v4096
      %v4098 = vpop.f32.mrb[0].mxu0
      %4099 = vmatprep.mubr.bf16.mxu0 %v3746
      %4100 = vmatmul.mubr.bf16.gmra.mrb[0].mxu0 %v3745
      %v4101 = vpop.f32.mrb[0].mxu0
      %v4102 = vadd.f32 %v3789, %v4101
      %v4103 = vpop.f32.mrb[0].mxu0
      %v4104 = vpop.f32.mrb[0].mxu0
      %v4105 = vadd.f32 %v3789, %v4104
      %v4106 = vpop.f32.mrb[0].mxu0
      %4107 = vdwg.mxu0
      %4108 = vmatprep.subr.bf16.mxu0 0
      %4109 = vmatpush1.bf16.msra.mxu0 %v3879
      %4110 = vmatprep.subr.bf16.mxu0 0
      %4111 = vmatpush1.bf16.msra.mxu0 %v3880
      %4112 = vmatprep.subr.bf16.mxu0 0
      %4113 = vmatpush1.bf16.msra.mxu0 0
      %4114 = vmatprep.subr.bf16.mxu0 0
      %4115 = vmatpush1.bf16.msra.mxu0 0
      %4116 = vmatprep.subr.bf16.mxu0 0
      %4117 = vmatpush1.bf16.msra.mxu0 0
      %4118 = vmatprep.subr.bf16.mxu0 0
      %4119 = vmatpush1.bf16.msra.mxu0 0
      %4120 = vmatprep.subr.bf16.mxu0 0
      %4121 = vmatpush1.bf16.msra.mxu0 0
      %4122 = vmatprep.subr.bf16.mxu0 0
      %4123 = vmatpush1.bf16.msra.mxu0 0
      %4124 = vmatprep.subr.bf16.mxu0 0
      %4125 = vmatpush1.bf16.msra.mxu0 0
      %4126 = vmatprep.subr.bf16.mxu0 0
      %4127 = vmatpush1.bf16.msra.mxu0 0
      %4128 = vmatprep.subr.bf16.mxu0 0
      %4129 = vmatpush1.bf16.msra.mxu0 0
      %4130 = vmatprep.subr.bf16.mxu0 0
      %4131 = vmatpush1.bf16.msra.mxu0 0
      %4132 = vmatprep.subr.bf16.mxu0 0
      %4133 = vmatpush1.bf16.msra.mxu0 0
      %4134 = vmatprep.subr.bf16.mxu0 0
      %4135 = vmatpush1.bf16.msra.mxu0 0
      %4136 = vmatprep.subr.bf16.mxu0 0
      %4137 = vmatpush1.bf16.msra.mxu0 0
      %4138 = vmatprep.subr.bf16.mxu0 0
      %4139 = vmatpush1.bf16.msra.mxu0 0
      %4140 = vmatprep.mubr.bf16.mxu0 0
      %4141 = vmatmul.mubr.bf16.gmra.mrb[0].mxu0 %v3900
      %v4142 = vpop.f32.mrb[0].mxu0
      %v4143 = vadd.f32 %v3982, %v4142
      %v4144 = vpop.f32.mrb[0].mxu0
      %v4145 = vpop.f32.mrb[0].mxu0
      %v4146 = vadd.f32 %v3985, %v4145
      %v4147 = vpop.f32.mrb[0].mxu0
      %4148 = vmatprep.mubr.bf16.mxu0 0
      %4149 = vmatmul.mubr.bf16.gmra.mrb[0].mxu0 %v3903
      %v4150 = vpop.f32.mrb[0].mxu0
      %v4151 = vadd.f32 %v3990, %v4150
      %v4152 = vpop.f32.mrb[0].mxu0
      %v4153 = vpop.f32.mrb[0].mxu0
      %v4154 = vadd.f32 %v3993, %v4153
      %v4155 = vpop.f32.mrb[0].mxu0
      %4156 = vmatprep.mubr.bf16.mxu0 0
      %4157 = vmatmul.mubr.bf16.gmra.mrb[0].mxu0 %v3906
      %v4158 = vpop.f32.mrb[0].mxu0
      %v4159 = vadd.f32 %v3998, %v4158
      %v4160 = vpop.f32.mrb[0].mxu0
      %v4161 = vpop.f32.mrb[0].mxu0
      %v4162 = vadd.f32 %v4001, %v4161
      %v4163 = vpop.f32.mrb[0].mxu0
      %4164 = vmatprep.mubr.bf16.mxu0 0
      %4165 = vmatmul.mubr.bf16.gmra.mrb[0].mxu0 %v3909
      %v4166 = vpop.f32.mrb[0].mxu0
      %v4167 = vadd.f32 %v4006, %v4166
      %v4168 = vpop.f32.mrb[0].mxu0
      %v4169 = vpop.f32.mrb[0].mxu0
      %v4170 = vadd.f32 %v4009, %v4169
      %v4171 = vpop.f32.mrb[0].mxu0
      %4172 = vmatprep.mubr.bf16.mxu0 0
      %4173 = vmatmul.mubr.bf16.gmra.mrb[0].mxu0 %v3912
      %v4174 = vpop.f32.mrb[0].mxu0
      %v4175 = vadd.f32 %v4014, %v4174
      %v4176 = vpop.f32.mrb[0].mxu0
      %v4177 = vpop.f32.mrb[0].mxu0
      %v4178 = vadd.f32 %v4017, %v4177
      %v4179 = vpop.f32.mrb[0].mxu0
      %4180 = vmatprep.mubr.bf16.mxu0 0
      %4181 = vmatmul.mubr.bf16.gmra.mrb[0].mxu0 %v3915
      %v4182 = vpop.f32.mrb[0].mxu0
      %v4183 = vadd.f32 %v4022, %v4182
      %v4184 = vpop.f32.mrb[0].mxu0
      %v4185 = vpop.f32.mrb[0].mxu0
      %v4186 = vadd.f32 %v4025, %v4185
      %v4187 = vpop.f32.mrb[0].mxu0
      %4188 = vmatprep.mubr.bf16.mxu0 0
      %4189 = vmatmul.mubr.bf16.gmra.mrb[0].mxu0 %v3918
      %v4190 = vpop.f32.mrb[0].mxu0
      %v4191 = vadd.f32 %v4030, %v4190
      %v4192 = vpop.f32.mrb[0].mxu0
      %v4193 = vpop.f32.mrb[0].mxu0
      %v4194 = vadd.f32 %v4033, %v4193
      %v4195 = vpop.f32.mrb[0].mxu0
      %4196 = vmatprep.mubr.bf16.mxu0 0
      %4197 = vmatmul.mubr.bf16.gmra.mrb[0].mxu0 %v3921
      %v4198 = vpop.f32.mrb[0].mxu0
      %v4199 = vadd.f32 %v4038, %v4198
      %v4200 = vpop.f32.mrb[0].mxu0
      %v4201 = vpop.f32.mrb[0].mxu0
      %v4202 = vadd.f32 %v4041, %v4201
      %v4203 = vpop.f32.mrb[0].mxu0
      %4204 = vmatprep.mubr.bf16.mxu0 0
      %4205 = vmatmul.mubr.bf16.gmra.mrb[0].mxu0 %v3924
      %v4206 = vpop.f32.mrb[0].mxu0
      %v4207 = vadd.f32 %v4046, %v4206
      %v4208 = vpop.f32.mrb[0].mxu0
      %v4209 = vpop.f32.mrb[0].mxu0
      %v4210 = vadd.f32 %v4049, %v4209
      %v4211 = vpop.f32.mrb[0].mxu0
      %4212 = vmatprep.mubr.bf16.mxu0 0
      %4213 = vmatmul.mubr.bf16.gmra.mrb[0].mxu0 %v3927
      %v4214 = vpop.f32.mrb[0].mxu0
      %v4215 = vadd.f32 %v4054, %v4214
      %v4216 = vpop.f32.mrb[0].mxu0
      %v4217 = vpop.f32.mrb[0].mxu0
      %v4218 = vadd.f32 %v4057, %v4217
      %v4219 = vpop.f32.mrb[0].mxu0
      %4220 = vmatprep.mubr.bf16.mxu0 0
      %4221 = vmatmul.mubr.bf16.gmra.mrb[0].mxu0 %v3930
      %v4222 = vpop.f32.mrb[0].mxu0
      %v4223 = vadd.f32 %v4062, %v4222
      %v4224 = vpop.f32.mrb[0].mxu0
      %v4225 = vpop.f32.mrb[0].mxu0
      %v4226 = vadd.f32 %v4065, %v4225
      %v4227 = vpop.f32.mrb[0].mxu0
      %4228 = vmatprep.mubr.bf16.mxu0 0
      %4229 = vmatmul.mubr.bf16.gmra.mrb[0].mxu0 %v3933
      %v4230 = vpop.f32.mrb[0].mxu0
      %v4231 = vadd.f32 %v4070, %v4230
      %v4232 = vpop.f32.mrb[0].mxu0
      %v4233 = vpop.f32.mrb[0].mxu0
      %v4234 = vadd.f32 %v4073, %v4233
      %v4235 = vpop.f32.mrb[0].mxu0
      %4236 = vmatprep.mubr.bf16.mxu0 0
      %4237 = vmatmul.mubr.bf16.gmra.mrb[0].mxu0 %v3936
      %v4238 = vpop.f32.mrb[0].mxu0
      %v4239 = vadd.f32 %v4078, %v4238
      %v4240 = vpop.f32.mrb[0].mxu0
      %v4241 = vpop.f32.mrb[0].mxu0
      %v4242 = vadd.f32 %v4081, %v4241
      %v4243 = vpop.f32.mrb[0].mxu0
      %4244 = vmatprep.mubr.bf16.mxu0 0
      %4245 = vmatmul.mubr.bf16.gmra.mrb[0].mxu0 %v3939
      %v4246 = vpop.f32.mrb[0].mxu0
      %v4247 = vadd.f32 %v4086, %v4246
      %v4248 = vpop.f32.mrb[0].mxu0
      %v4249 = vpop.f32.mrb[0].mxu0
      %v4250 = vadd.f32 %v4089, %v4249
      %v4251 = vpop.f32.mrb[0].mxu0
      %4252 = vmatprep.mubr.bf16.mxu0 0
      %4253 = vmatmul.mubr.bf16.gmra.mrb[0].mxu0 %v3942
      %v4254 = vpop.f32.mrb[0].mxu0
      %v4255 = vadd.f32 %v4094, %v4254
      %v4256 = vpop.f32.mrb[0].mxu0
      %v4257 = vpop.f32.mrb[0].mxu0
      %v4258 = vadd.f32 %v4097, %v4257
      %v4259 = vpop.f32.mrb[0].mxu0
      %4260 = vmatprep.mubr.bf16.mxu0 0
      %4261 = vmatmul.mubr.bf16.gmra.mrb[0].mxu0 %v3945
      %v4262 = vpop.f32.mrb[0].mxu0
      %v4263 = vadd.f32 %v4102, %v4262
      %v4264 = vpop.f32.mrb[0].mxu0
      %v4265 = vpop.f32.mrb[0].mxu0
      %v4266 = vadd.f32 %v4105, %v4265
      %v4267 = vpop.f32.mrb[0].mxu0
      %4268 = vdwg.mxu0
      %v4269 = vmax.f32 %v4143, 0.0
      %v4270 = vmax.f32 %v4146, 0.0
      %v4271 = vmax.f32 %v4151, 0.0
      %v4272 = vmax.f32 %v4154, 0.0
      %v4273 = vmax.f32 %v4159, 0.0
      %v4274 = vmax.f32 %v4162, 0.0
      %v4275 = vmax.f32 %v4167, 0.0
      %v4276 = vmax.f32 %v4170, 0.0
      %v4277 = vmax.f32 %v4175, 0.0
      %v4278 = vmax.f32 %v4178, 0.0
      %v4279 = vmax.f32 %v4183, 0.0
      %v4280 = vmax.f32 %v4186, 0.0
      %v4281 = vmax.f32 %v4191, 0.0
      %v4282 = vmax.f32 %v4194, 0.0
      %v4283 = vmax.f32 %v4199, 0.0
      %v4284 = vmax.f32 %v4202, 0.0
      %v4285 = vmax.f32 %v4207, 0.0
      %v4286 = vmax.f32 %v4210, 0.0
      %v4287 = vmax.f32 %v4215, 0.0
      %v4288 = vmax.f32 %v4218, 0.0
      %v4289 = vmax.f32 %v4223, 0.0
      %v4290 = vmax.f32 %v4226, 0.0
      %v4291 = vmax.f32 %v4231, 0.0
      %v4292 = vmax.f32 %v4234, 0.0
      %v4293 = vmax.f32 %v4239, 0.0
      %v4294 = vmax.f32 %v4242, 0.0
      %v4295 = vmax.f32 %v4247, 0.0
      %v4296 = vmax.f32 %v4250, 0.0
      %v4297 = vmax.f32 %v4255, 0.0
      %v4298 = vmax.f32 %v4258, 0.0
      %v4299 = vmax.f32 %v4263, 0.0
      %v4300 = vmax.f32 %v4266, 0.0
      %v4333 = vcombine.high %v4269, %v4269
      %v4335 = vunpack.c.l.s4 1983009808
      %v4336 = vunpack.c.0.s8 %v4335
      %v4337 = vlaneseq
      %v4338 = vshrl.u32 %v4337, 7
      %v4339 = vsub.s32 %v4336, %v4338
      %v4340 = vrot.slane %v4269, %v4339
      %v4342 = vunpack.c.l.s4 1983009808
      %v4343 = vunpack.c.0.s8 %v4342
      %v4344 = vlaneseq
      %v4345 = vshrl.u32 %v4344, 7
      %v4346 = vsub.s32 %v4343, %v4345
      %v4347 = vrot.slane %v4333, %v4346
      %v4348 = vcombine.high %v4340, %v4340
      %v4349 = vcombine.high %v4347, %v4347
      %v4350 = vcombine.high %v4270, %v4270
      %v4352 = vunpack.c.l.s4 1983009808
      %v4353 = vunpack.c.0.s8 %v4352
      %v4354 = vlaneseq
      %v4355 = vshrl.u32 %v4354, 7
      %v4356 = vsub.s32 %v4353, %v4355
      %v4357 = vrot.slane %v4270, %v4356
      %v4359 = vunpack.c.l.s4 1983009808
      %v4360 = vunpack.c.0.s8 %v4359
      %v4361 = vlaneseq
      %v4362 = vshrl.u32 %v4361, 7
      %v4363 = vsub.s32 %v4360, %v4362
      %v4364 = vrot.slane %v4350, %v4363
      %v4365 = vcombine.high %v4357, %v4357
      %v4366 = vcombine.high %v4364, %v4364
      %v4367 = vcombine.high %v4271, %v4271
      %v4369 = vunpack.c.l.s4 1983009808
      %v4370 = vunpack.c.0.s8 %v4369
      %v4371 = vlaneseq
      %v4372 = vshrl.u32 %v4371, 7
      %v4373 = vsub.s32 %v4370, %v4372
      %v4374 = vrot.slane %v4271, %v4373
      %v4376 = vunpack.c.l.s4 1983009808
      %v4377 = vunpack.c.0.s8 %v4376
      %v4378 = vlaneseq
      %v4379 = vshrl.u32 %v4378, 7
      %v4380 = vsub.s32 %v4377, %v4379
      %v4381 = vrot.slane %v4367, %v4380
      %v4382 = vcombine.high %v4374, %v4374
      %v4383 = vcombine.high %v4381, %v4381
      %v4384 = vcombine.high %v4272, %v4272
      %v4386 = vunpack.c.l.s4 1983009808
      %v4387 = vunpack.c.0.s8 %v4386
      %v4388 = vlaneseq
      %v4389 = vshrl.u32 %v4388, 7
      %v4390 = vsub.s32 %v4387, %v4389
      %v4391 = vrot.slane %v4272, %v4390
      %v4393 = vunpack.c.l.s4 1983009808
      %v4394 = vunpack.c.0.s8 %v4393
      %v4395 = vlaneseq
      %v4396 = vshrl.u32 %v4395, 7
      %v4397 = vsub.s32 %v4394, %v4396
      %v4398 = vrot.slane %v4384, %v4397
      %v4399 = vcombine.high %v4391, %v4391
      %v4400 = vcombine.high %v4398, %v4398
      %v4401 = vcombine.high %v4273, %v4273
      %v4403 = vunpack.c.l.s4 1983009808
      %v4404 = vunpack.c.0.s8 %v4403
      %v4405 = vlaneseq
      %v4406 = vshrl.u32 %v4405, 7
      %v4407 = vsub.s32 %v4404, %v4406
      %v4408 = vrot.slane %v4273, %v4407
      %v4410 = vunpack.c.l.s4 1983009808
      %v4411 = vunpack.c.0.s8 %v4410
      %v4412 = vlaneseq
      %v4413 = vshrl.u32 %v4412, 7
      %v4414 = vsub.s32 %v4411, %v4413
      %v4415 = vrot.slane %v4401, %v4414
      %v4416 = vcombine.high %v4408, %v4408
      %v4417 = vcombine.high %v4415, %v4415
      %v4418 = vcombine.high %v4274, %v4274
      %v4420 = vunpack.c.l.s4 1983009808
      %v4421 = vunpack.c.0.s8 %v4420
      %v4422 = vlaneseq
      %v4423 = vshrl.u32 %v4422, 7
      %v4424 = vsub.s32 %v4421, %v4423
      %v4425 = vrot.slane %v4274, %v4424
      %v4427 = vunpack.c.l.s4 1983009808
      %v4428 = vunpack.c.0.s8 %v4427
      %v4429 = vlaneseq
      %v4430 = vshrl.u32 %v4429, 7
      %v4431 = vsub.s32 %v4428, %v4430
      %v4432 = vrot.slane %v4418, %v4431
      %v4433 = vcombine.high %v4425, %v4425
      %v4434 = vcombine.high %v4432, %v4432
      %v4435 = vcombine.high %v4275, %v4275
      %v4437 = vunpack.c.l.s4 1983009808
      %v4438 = vunpack.c.0.s8 %v4437
      %v4439 = vlaneseq
      %v4440 = vshrl.u32 %v4439, 7
      %v4441 = vsub.s32 %v4438, %v4440
      %v4442 = vrot.slane %v4275, %v4441
      %v4444 = vunpack.c.l.s4 1983009808
      %v4445 = vunpack.c.0.s8 %v4444
      %v4446 = vlaneseq
      %v4447 = vshrl.u32 %v4446, 7
      %v4448 = vsub.s32 %v4445, %v4447
      %v4449 = vrot.slane %v4435, %v4448
      %v4450 = vcombine.high %v4442, %v4442
      %v4451 = vcombine.high %v4449, %v4449
      %v4452 = vcombine.high %v4276, %v4276
      %v4454 = vunpack.c.l.s4 1983009808
      %v4455 = vunpack.c.0.s8 %v4454
      %v4456 = vlaneseq
      %v4457 = vshrl.u32 %v4456, 7
      %v4458 = vsub.s32 %v4455, %v4457
      %v4459 = vrot.slane %v4276, %v4458
      %v4461 = vunpack.c.l.s4 1983009808
      %v4462 = vunpack.c.0.s8 %v4461
      %v4463 = vlaneseq
      %v4464 = vshrl.u32 %v4463, 7
      %v4465 = vsub.s32 %v4462, %v4464
      %v4466 = vrot.slane %v4452, %v4465
      %v4467 = vcombine.high %v4459, %v4459
      %v4468 = vcombine.high %v4466, %v4466
      %v4469 = vcombine.high %v4277, %v4277
      %v4471 = vunpack.c.l.s4 1983009808
      %v4472 = vunpack.c.0.s8 %v4471
      %v4473 = vlaneseq
      %v4474 = vshrl.u32 %v4473, 7
      %v4475 = vsub.s32 %v4472, %v4474
      %v4476 = vrot.slane %v4277, %v4475
      %v4478 = vunpack.c.l.s4 1983009808
      %v4479 = vunpack.c.0.s8 %v4478
      %v4480 = vlaneseq
      %v4481 = vshrl.u32 %v4480, 7
      %v4482 = vsub.s32 %v4479, %v4481
      %v4483 = vrot.slane %v4469, %v4482
      %v4484 = vcombine.high %v4476, %v4476
      %v4485 = vcombine.high %v4483, %v4483
      %v4486 = vcombine.high %v4278, %v4278
      %v4488 = vunpack.c.l.s4 1983009808
      %v4489 = vunpack.c.0.s8 %v4488
      %v4490 = vlaneseq
      %v4491 = vshrl.u32 %v4490, 7
      %v4492 = vsub.s32 %v4489, %v4491
      %v4493 = vrot.slane %v4278, %v4492
      %v4495 = vunpack.c.l.s4 1983009808
      %v4496 = vunpack.c.0.s8 %v4495
      %v4497 = vlaneseq
      %v4498 = vshrl.u32 %v4497, 7
      %v4499 = vsub.s32 %v4496, %v4498
      %v4500 = vrot.slane %v4486, %v4499
      %v4501 = vcombine.high %v4493, %v4493
      %v4502 = vcombine.high %v4500, %v4500
      %v4503 = vcombine.high %v4279, %v4279
      %v4505 = vunpack.c.l.s4 1983009808
      %v4506 = vunpack.c.0.s8 %v4505
      %v4507 = vlaneseq
      %v4508 = vshrl.u32 %v4507, 7
      %v4509 = vsub.s32 %v4506, %v4508
      %v4510 = vrot.slane %v4279, %v4509
      %v4512 = vunpack.c.l.s4 1983009808
      %v4513 = vunpack.c.0.s8 %v4512
      %v4514 = vlaneseq
      %v4515 = vshrl.u32 %v4514, 7
      %v4516 = vsub.s32 %v4513, %v4515
      %v4517 = vrot.slane %v4503, %v4516
      %v4518 = vcombine.high %v4510, %v4510
      %v4519 = vcombine.high %v4517, %v4517
      %v4520 = vcombine.high %v4280, %v4280
      %v4522 = vunpack.c.l.s4 1983009808
      %v4523 = vunpack.c.0.s8 %v4522
      %v4524 = vlaneseq
      %v4525 = vshrl.u32 %v4524, 7
      %v4526 = vsub.s32 %v4523, %v4525
      %v4527 = vrot.slane %v4280, %v4526
      %v4529 = vunpack.c.l.s4 1983009808
      %v4530 = vunpack.c.0.s8 %v4529
      %v4531 = vlaneseq
      %v4532 = vshrl.u32 %v4531, 7
      %v4533 = vsub.s32 %v4530, %v4532
      %v4534 = vrot.slane %v4520, %v4533
      %v4535 = vcombine.high %v4527, %v4527
      %v4536 = vcombine.high %v4534, %v4534
      %v4537 = vcombine.high %v4281, %v4281
      %v4539 = vunpack.c.l.s4 1983009808
      %v4540 = vunpack.c.0.s8 %v4539
      %v4541 = vlaneseq
      %v4542 = vshrl.u32 %v4541, 7
      %v4543 = vsub.s32 %v4540, %v4542
      %v4544 = vrot.slane %v4281, %v4543
      %v4546 = vunpack.c.l.s4 1983009808
      %v4547 = vunpack.c.0.s8 %v4546
      %v4548 = vlaneseq
      %v4549 = vshrl.u32 %v4548, 7
      %v4550 = vsub.s32 %v4547, %v4549
      %v4551 = vrot.slane %v4537, %v4550
      %v4552 = vcombine.high %v4544, %v4544
      %v4553 = vcombine.high %v4551, %v4551
      %v4554 = vcombine.high %v4282, %v4282
      %v4556 = vunpack.c.l.s4 1983009808
      %v4557 = vunpack.c.0.s8 %v4556
      %v4558 = vlaneseq
      %v4559 = vshrl.u32 %v4558, 7
      %v4560 = vsub.s32 %v4557, %v4559
      %v4561 = vrot.slane %v4282, %v4560
      %v4563 = vunpack.c.l.s4 1983009808
      %v4564 = vunpack.c.0.s8 %v4563
      %v4565 = vlaneseq
      %v4566 = vshrl.u32 %v4565, 7
      %v4567 = vsub.s32 %v4564, %v4566
      %v4568 = vrot.slane %v4554, %v4567
      %v4569 = vcombine.high %v4561, %v4561
      %v4570 = vcombine.high %v4568, %v4568
      %v4571 = vcombine.high %v4283, %v4283
      %v4573 = vunpack.c.l.s4 1983009808
      %v4574 = vunpack.c.0.s8 %v4573
      %v4575 = vlaneseq
      %v4576 = vshrl.u32 %v4575, 7
      %v4577 = vsub.s32 %v4574, %v4576
      %v4578 = vrot.slane %v4283, %v4577
      %v4580 = vunpack.c.l.s4 1983009808
      %v4581 = vunpack.c.0.s8 %v4580
      %v4582 = vlaneseq
      %v4583 = vshrl.u32 %v4582, 7
      %v4584 = vsub.s32 %v4581, %v4583
      %v4585 = vrot.slane %v4571, %v4584
      %v4586 = vcombine.high %v4578, %v4578
      %v4587 = vcombine.high %v4585, %v4585
      %v4588 = vcombine.high %v4284, %v4284
      %v4590 = vunpack.c.l.s4 1983009808
      %v4591 = vunpack.c.0.s8 %v4590
      %v4592 = vlaneseq
      %v4593 = vshrl.u32 %v4592, 7
      %v4594 = vsub.s32 %v4591, %v4593
      %v4595 = vrot.slane %v4284, %v4594
      %v4597 = vunpack.c.l.s4 1983009808
      %v4598 = vunpack.c.0.s8 %v4597
      %v4599 = vlaneseq
      %v4600 = vshrl.u32 %v4599, 7
      %v4601 = vsub.s32 %v4598, %v4600
      %v4602 = vrot.slane %v4588, %v4601
      %v4603 = vcombine.high %v4595, %v4595
      %v4604 = vcombine.high %v4602, %v4602
      %v4605 = vcombine.high %v4285, %v4285
      %v4607 = vunpack.c.l.s4 1983009808
      %v4608 = vunpack.c.0.s8 %v4607
      %v4609 = vlaneseq
      %v4610 = vshrl.u32 %v4609, 7
      %v4611 = vsub.s32 %v4608, %v4610
      %v4612 = vrot.slane %v4285, %v4611
      %v4614 = vunpack.c.l.s4 1983009808
      %v4615 = vunpack.c.0.s8 %v4614
      %v4616 = vlaneseq
      %v4617 = vshrl.u32 %v4616, 7
      %v4618 = vsub.s32 %v4615, %v4617
      %v4619 = vrot.slane %v4605, %v4618
      %v4620 = vcombine.high %v4612, %v4612
      %v4621 = vcombine.high %v4619, %v4619
      %v4622 = vcombine.high %v4286, %v4286
      %v4624 = vunpack.c.l.s4 1983009808
      %v4625 = vunpack.c.0.s8 %v4624
      %v4626 = vlaneseq
      %v4627 = vshrl.u32 %v4626, 7
      %v4628 = vsub.s32 %v4625, %v4627
      %v4629 = vrot.slane %v4286, %v4628
      %v4631 = vunpack.c.l.s4 1983009808
      %v4632 = vunpack.c.0.s8 %v4631
      %v4633 = vlaneseq
      %v4634 = vshrl.u32 %v4633, 7
      %v4635 = vsub.s32 %v4632, %v4634
      %v4636 = vrot.slane %v4622, %v4635
      %v4637 = vcombine.high %v4629, %v4629
      %v4638 = vcombine.high %v4636, %v4636
      %v4639 = vcombine.high %v4287, %v4287
      %v4641 = vunpack.c.l.s4 1983009808
      %v4642 = vunpack.c.0.s8 %v4641
      %v4643 = vlaneseq
      %v4644 = vshrl.u32 %v4643, 7
      %v4645 = vsub.s32 %v4642, %v4644
      %v4646 = vrot.slane %v4287, %v4645
      %v4648 = vunpack.c.l.s4 1983009808
      %v4649 = vunpack.c.0.s8 %v4648
      %v4650 = vlaneseq
      %v4651 = vshrl.u32 %v4650, 7
      %v4652 = vsub.s32 %v4649, %v4651
      %v4653 = vrot.slane %v4639, %v4652
      %v4654 = vcombine.high %v4646, %v4646
      %v4655 = vcombine.high %v4653, %v4653
      %v4656 = vcombine.high %v4288, %v4288
      %v4658 = vunpack.c.l.s4 1983009808
      %v4659 = vunpack.c.0.s8 %v4658
      %v4660 = vlaneseq
      %v4661 = vshrl.u32 %v4660, 7
      %v4662 = vsub.s32 %v4659, %v4661
      %v4663 = vrot.slane %v4288, %v4662
      %v4665 = vunpack.c.l.s4 1983009808
      %v4666 = vunpack.c.0.s8 %v4665
      %v4667 = vlaneseq
      %v4668 = vshrl.u32 %v4667, 7
      %v4669 = vsub.s32 %v4666, %v4668
      %v4670 = vrot.slane %v4656, %v4669
      %v4671 = vcombine.high %v4663, %v4663
      %v4672 = vcombine.high %v4670, %v4670
      %v4673 = vcombine.high %v4289, %v4289
      %v4675 = vunpack.c.l.s4 1983009808
      %v4676 = vunpack.c.0.s8 %v4675
      %v4677 = vlaneseq
      %v4678 = vshrl.u32 %v4677, 7
      %v4679 = vsub.s32 %v4676, %v4678
      %v4680 = vrot.slane %v4289, %v4679
      %v4682 = vunpack.c.l.s4 1983009808
      %v4683 = vunpack.c.0.s8 %v4682
      %v4684 = vlaneseq
      %v4685 = vshrl.u32 %v4684, 7
      %v4686 = vsub.s32 %v4683, %v4685
      %v4687 = vrot.slane %v4673, %v4686
      %v4688 = vcombine.high %v4680, %v4680
      %v4689 = vcombine.high %v4687, %v4687
      %v4690 = vcombine.high %v4290, %v4290
      %v4692 = vunpack.c.l.s4 1983009808
      %v4693 = vunpack.c.0.s8 %v4692
      %v4694 = vlaneseq
      %v4695 = vshrl.u32 %v4694, 7
      %v4696 = vsub.s32 %v4693, %v4695
      %v4697 = vrot.slane %v4290, %v4696
      %v4699 = vunpack.c.l.s4 1983009808
      %v4700 = vunpack.c.0.s8 %v4699
      %v4701 = vlaneseq
      %v4702 = vshrl.u32 %v4701, 7
      %v4703 = vsub.s32 %v4700, %v4702
      %v4704 = vrot.slane %v4690, %v4703
      %v4705 = vcombine.high %v4697, %v4697
      %v4706 = vcombine.high %v4704, %v4704
      %v4707 = vcombine.high %v4291, %v4291
      %v4709 = vunpack.c.l.s4 1983009808
      %v4710 = vunpack.c.0.s8 %v4709
      %v4711 = vlaneseq
      %v4712 = vshrl.u32 %v4711, 7
      %v4713 = vsub.s32 %v4710, %v4712
      %v4714 = vrot.slane %v4291, %v4713
      %v4716 = vunpack.c.l.s4 1983009808
      %v4717 = vunpack.c.0.s8 %v4716
      %v4718 = vlaneseq
      %v4719 = vshrl.u32 %v4718, 7
      %v4720 = vsub.s32 %v4717, %v4719
      %v4721 = vrot.slane %v4707, %v4720
      %v4722 = vcombine.high %v4714, %v4714
      %v4723 = vcombine.high %v4721, %v4721
      %v4724 = vcombine.high %v4292, %v4292
      %v4726 = vunpack.c.l.s4 1983009808
      %v4727 = vunpack.c.0.s8 %v4726
      %v4728 = vlaneseq
      %v4729 = vshrl.u32 %v4728, 7
      %v4730 = vsub.s32 %v4727, %v4729
      %v4731 = vrot.slane %v4292, %v4730
      %v4733 = vunpack.c.l.s4 1983009808
      %v4734 = vunpack.c.0.s8 %v4733
      %v4735 = vlaneseq
      %v4736 = vshrl.u32 %v4735, 7
      %v4737 = vsub.s32 %v4734, %v4736
      %v4738 = vrot.slane %v4724, %v4737
      %v4739 = vcombine.high %v4731, %v4731
      %v4740 = vcombine.high %v4738, %v4738
      %v4741 = vcombine.high %v4293, %v4293
      %v4743 = vunpack.c.l.s4 1983009808
      %v4744 = vunpack.c.0.s8 %v4743
      %v4745 = vlaneseq
      %v4746 = vshrl.u32 %v4745, 7
      %v4747 = vsub.s32 %v4744, %v4746
      %v4748 = vrot.slane %v4293, %v4747
      %v4750 = vunpack.c.l.s4 1983009808
      %v4751 = vunpack.c.0.s8 %v4750
      %v4752 = vlaneseq
      %v4753 = vshrl.u32 %v4752, 7
      %v4754 = vsub.s32 %v4751, %v4753
      %v4755 = vrot.slane %v4741, %v4754
      %v4756 = vcombine.high %v4748, %v4748
      %v4757 = vcombine.high %v4755, %v4755
      %v4758 = vcombine.high %v4294, %v4294
      %v4760 = vunpack.c.l.s4 1983009808
      %v4761 = vunpack.c.0.s8 %v4760
      %v4762 = vlaneseq
      %v4763 = vshrl.u32 %v4762, 7
      %v4764 = vsub.s32 %v4761, %v4763
      %v4765 = vrot.slane %v4294, %v4764
      %v4767 = vunpack.c.l.s4 1983009808
      %v4768 = vunpack.c.0.s8 %v4767
      %v4769 = vlaneseq
      %v4770 = vshrl.u32 %v4769, 7
      %v4771 = vsub.s32 %v4768, %v4770
      %v4772 = vrot.slane %v4758, %v4771
      %v4773 = vcombine.high %v4765, %v4765
      %v4774 = vcombine.high %v4772, %v4772
      %v4775 = vcombine.high %v4295, %v4295
      %v4777 = vunpack.c.l.s4 1983009808
      %v4778 = vunpack.c.0.s8 %v4777
      %v4779 = vlaneseq
      %v4780 = vshrl.u32 %v4779, 7
      %v4781 = vsub.s32 %v4778, %v4780
      %v4782 = vrot.slane %v4295, %v4781
      %v4784 = vunpack.c.l.s4 1983009808
      %v4785 = vunpack.c.0.s8 %v4784
      %v4786 = vlaneseq
      %v4787 = vshrl.u32 %v4786, 7
      %v4788 = vsub.s32 %v4785, %v4787
      %v4789 = vrot.slane %v4775, %v4788
      %v4790 = vcombine.high %v4782, %v4782
      %v4791 = vcombine.high %v4789, %v4789
      %v4792 = vcombine.high %v4296, %v4296
      %v4794 = vunpack.c.l.s4 1983009808
      %v4795 = vunpack.c.0.s8 %v4794
      %v4796 = vlaneseq
      %v4797 = vshrl.u32 %v4796, 7
      %v4798 = vsub.s32 %v4795, %v4797
      %v4799 = vrot.slane %v4296, %v4798
      %v4801 = vunpack.c.l.s4 1983009808
      %v4802 = vunpack.c.0.s8 %v4801
      %v4803 = vlaneseq
      %v4804 = vshrl.u32 %v4803, 7
      %v4805 = vsub.s32 %v4802, %v4804
      %v4806 = vrot.slane %v4792, %v4805
      %v4807 = vcombine.high %v4799, %v4799
      %v4808 = vcombine.high %v4806, %v4806
      %v4809 = vcombine.high %v4297, %v4297
      %v4811 = vunpack.c.l.s4 1983009808
      %v4812 = vunpack.c.0.s8 %v4811
      %v4813 = vlaneseq
      %v4814 = vshrl.u32 %v4813, 7
      %v4815 = vsub.s32 %v4812, %v4814
      %v4816 = vrot.slane %v4297, %v4815
      %v4818 = vunpack.c.l.s4 1983009808
      %v4819 = vunpack.c.0.s8 %v4818
      %v4820 = vlaneseq
      %v4821 = vshrl.u32 %v4820, 7
      %v4822 = vsub.s32 %v4819, %v4821
      %v4823 = vrot.slane %v4809, %v4822
      %v4824 = vcombine.high %v4816, %v4816
      %v4825 = vcombine.high %v4823, %v4823
      %v4826 = vcombine.high %v4298, %v4298
      %v4828 = vunpack.c.l.s4 1983009808
      %v4829 = vunpack.c.0.s8 %v4828
      %v4830 = vlaneseq
      %v4831 = vshrl.u32 %v4830, 7
      %v4832 = vsub.s32 %v4829, %v4831
      %v4833 = vrot.slane %v4298, %v4832
      %v4835 = vunpack.c.l.s4 1983009808
      %v4836 = vunpack.c.0.s8 %v4835
      %v4837 = vlaneseq
      %v4838 = vshrl.u32 %v4837, 7
      %v4839 = vsub.s32 %v4836, %v4838
      %v4840 = vrot.slane %v4826, %v4839
      %v4841 = vcombine.high %v4833, %v4833
      %v4842 = vcombine.high %v4840, %v4840
      %v4843 = vcombine.high %v4299, %v4299
      %v4845 = vunpack.c.l.s4 1983009808
      %v4846 = vunpack.c.0.s8 %v4845
      %v4847 = vlaneseq
      %v4848 = vshrl.u32 %v4847, 7
      %v4849 = vsub.s32 %v4846, %v4848
      %v4850 = vrot.slane %v4299, %v4849
      %v4852 = vunpack.c.l.s4 1983009808
      %v4853 = vunpack.c.0.s8 %v4852
      %v4854 = vlaneseq
      %v4855 = vshrl.u32 %v4854, 7
      %v4856 = vsub.s32 %v4853, %v4855
      %v4857 = vrot.slane %v4843, %v4856
      %v4858 = vcombine.high %v4850, %v4850
      %v4859 = vcombine.high %v4857, %v4857
      %v4860 = vcombine.high %v4300, %v4300
      %v4862 = vunpack.c.l.s4 1983009808
      %v4863 = vunpack.c.0.s8 %v4862
      %v4864 = vlaneseq
      %v4865 = vshrl.u32 %v4864, 7
      %v4866 = vsub.s32 %v4863, %v4865
      %v4867 = vrot.slane %v4300, %v4866
      %v4869 = vunpack.c.l.s4 1983009808
      %v4870 = vunpack.c.0.s8 %v4869
      %v4871 = vlaneseq
      %v4872 = vshrl.u32 %v4871, 7
      %v4873 = vsub.s32 %v4870, %v4872
      %v4874 = vrot.slane %v4860, %v4873
      %v4875 = vcombine.high %v4867, %v4867
      %v4876 = vcombine.high %v4874, %v4874
      %v5005 = vrot.slane %v4340, 7
      %v5006 = vrot.slane %v5005, 2
      %v5007 = vrot.slane %v4348, 7
      %v5008 = vrot.slane %v5007, 2
      %v5009 = vrot.slane %v4347, 7
      %v5010 = vrot.slane %v5009, 2
      %v5011 = vrot.slane %v4349, 7
      %v5012 = vrot.slane %v5011, 2
      %v5013 = vrot.slane %v4357, 7
      %v5014 = vrot.slane %v5013, 2
      %v5015 = vrot.slane %v4365, 7
      %v5016 = vrot.slane %v5015, 2
      %v5017 = vrot.slane %v4364, 7
      %v5018 = vrot.slane %v5017, 2
      %v5019 = vrot.slane %v4366, 7
      %v5020 = vrot.slane %v5019, 2
      %v5021 = vrot.slane %v4374, 7
      %v5022 = vrot.slane %v5021, 2
      %v5023 = vrot.slane %v4382, 7
      %v5024 = vrot.slane %v5023, 2
      %v5025 = vrot.slane %v4381, 7
      %v5026 = vrot.slane %v5025, 2
      %v5027 = vrot.slane %v4383, 7
      %v5028 = vrot.slane %v5027, 2
      %v5029 = vrot.slane %v4391, 7
      %v5030 = vrot.slane %v5029, 2
      %v5031 = vrot.slane %v4399, 7
      %v5032 = vrot.slane %v5031, 2
      %v5033 = vrot.slane %v4398, 7
      %v5034 = vrot.slane %v5033, 2
      %v5035 = vrot.slane %v4400, 7
      %v5036 = vrot.slane %v5035, 2
      %v5037 = vrot.slane %v4408, 7
      %v5038 = vrot.slane %v5037, 2
      %v5039 = vrot.slane %v4416, 7
      %v5040 = vrot.slane %v5039, 2
      %v5041 = vrot.slane %v4415, 7
      %v5042 = vrot.slane %v5041, 2
      %v5043 = vrot.slane %v4417, 7
      %v5044 = vrot.slane %v5043, 2
      %v5045 = vrot.slane %v4425, 7
      %v5046 = vrot.slane %v5045, 2
      %v5047 = vrot.slane %v4433, 7
      %v5048 = vrot.slane %v5047, 2
      %v5049 = vrot.slane %v4432, 7
      %v5050 = vrot.slane %v5049, 2
      %v5051 = vrot.slane %v4434, 7
      %v5052 = vrot.slane %v5051, 2
      %v5053 = vrot.slane %v4442, 7
      %v5054 = vrot.slane %v5053, 2
      %v5055 = vrot.slane %v4450, 7
      %v5056 = vrot.slane %v5055, 2
      %v5057 = vrot.slane %v4449, 7
      %v5058 = vrot.slane %v5057, 2
      %v5059 = vrot.slane %v4451, 7
      %v5060 = vrot.slane %v5059, 2
      %v5061 = vrot.slane %v4459, 7
      %v5062 = vrot.slane %v5061, 2
      %v5063 = vrot.slane %v4467, 7
      %v5064 = vrot.slane %v5063, 2
      %v5065 = vrot.slane %v4466, 7
      %v5066 = vrot.slane %v5065, 2
      %v5067 = vrot.slane %v4468, 7
      %v5068 = vrot.slane %v5067, 2
      %v5069 = vrot.slane %v4476, 7
      %v5070 = vrot.slane %v5069, 2
      %v5071 = vrot.slane %v4484, 7
      %v5072 = vrot.slane %v5071, 2
      %v5073 = vrot.slane %v4483, 7
      %v5074 = vrot.slane %v5073, 2
      %v5075 = vrot.slane %v4485, 7
      %v5076 = vrot.slane %v5075, 2
      %v5077 = vrot.slane %v4493, 7
      %v5078 = vrot.slane %v5077, 2
      %v5079 = vrot.slane %v4501, 7
      %v5080 = vrot.slane %v5079, 2
      %v5081 = vrot.slane %v4500, 7
      %v5082 = vrot.slane %v5081, 2
      %v5083 = vrot.slane %v4502, 7
      %v5084 = vrot.slane %v5083, 2
      %v5085 = vrot.slane %v4510, 7
      %v5086 = vrot.slane %v5085, 2
      %v5087 = vrot.slane %v4518, 7
      %v5088 = vrot.slane %v5087, 2
      %v5089 = vrot.slane %v4517, 7
      %v5090 = vrot.slane %v5089, 2
      %v5091 = vrot.slane %v4519, 7
      %v5092 = vrot.slane %v5091, 2
      %v5093 = vrot.slane %v4527, 7
      %v5094 = vrot.slane %v5093, 2
      %v5095 = vrot.slane %v4535, 7
      %v5096 = vrot.slane %v5095, 2
      %v5097 = vrot.slane %v4534, 7
      %v5098 = vrot.slane %v5097, 2
      %v5099 = vrot.slane %v4536, 7
      %v5100 = vrot.slane %v5099, 2
      %v5101 = vrot.slane %v4544, 7
      %v5102 = vrot.slane %v5101, 2
      %v5103 = vrot.slane %v4552, 7
      %v5104 = vrot.slane %v5103, 2
      %v5105 = vrot.slane %v4551, 7
      %v5106 = vrot.slane %v5105, 2
      %v5107 = vrot.slane %v4553, 7
      %v5108 = vrot.slane %v5107, 2
      %v5109 = vrot.slane %v4561, 7
      %v5110 = vrot.slane %v5109, 2
      %v5111 = vrot.slane %v4569, 7
      %v5112 = vrot.slane %v5111, 2
      %v5113 = vrot.slane %v4568, 7
      %v5114 = vrot.slane %v5113, 2
      %v5115 = vrot.slane %v4570, 7
      %v5116 = vrot.slane %v5115, 2
      %v5117 = vrot.slane %v4578, 7
      %v5118 = vrot.slane %v5117, 2
      %v5119 = vrot.slane %v4586, 7
      %v5120 = vrot.slane %v5119, 2
      %v5121 = vrot.slane %v4585, 7
      %v5122 = vrot.slane %v5121, 2
      %v5123 = vrot.slane %v4587, 7
      %v5124 = vrot.slane %v5123, 2
      %v5125 = vrot.slane %v4595, 7
      %v5126 = vrot.slane %v5125, 2
      %v5127 = vrot.slane %v4603, 7
      %v5128 = vrot.slane %v5127, 2
      %v5129 = vrot.slane %v4602, 7
      %v5130 = vrot.slane %v5129, 2
      %v5131 = vrot.slane %v4604, 7
      %v5132 = vrot.slane %v5131, 2
      %v5133 = vrot.slane %v4612, 7
      %v5134 = vrot.slane %v5133, 2
      %v5135 = vrot.slane %v4620, 7
      %v5136 = vrot.slane %v5135, 2
      %v5137 = vrot.slane %v4619, 7
      %v5138 = vrot.slane %v5137, 2
      %v5139 = vrot.slane %v4621, 7
      %v5140 = vrot.slane %v5139, 2
      %v5141 = vrot.slane %v4629, 7
      %v5142 = vrot.slane %v5141, 2
      %v5143 = vrot.slane %v4637, 7
      %v5144 = vrot.slane %v5143, 2
      %v5145 = vrot.slane %v4636, 7
      %v5146 = vrot.slane %v5145, 2
      %v5147 = vrot.slane %v4638, 7
      %v5148 = vrot.slane %v5147, 2
      %v5149 = vrot.slane %v4646, 7
      %v5150 = vrot.slane %v5149, 2
      %v5151 = vrot.slane %v4654, 7
      %v5152 = vrot.slane %v5151, 2
      %v5153 = vrot.slane %v4653, 7
      %v5154 = vrot.slane %v5153, 2
      %v5155 = vrot.slane %v4655, 7
      %v5156 = vrot.slane %v5155, 2
      %v5157 = vrot.slane %v4663, 7
      %v5158 = vrot.slane %v5157, 2
      %v5159 = vrot.slane %v4671, 7
      %v5160 = vrot.slane %v5159, 2
      %v5161 = vrot.slane %v4670, 7
      %v5162 = vrot.slane %v5161, 2
      %v5163 = vrot.slane %v4672, 7
      %v5164 = vrot.slane %v5163, 2
      %v5165 = vrot.slane %v4680, 7
      %v5166 = vrot.slane %v5165, 2
      %v5167 = vrot.slane %v4688, 7
      %v5168 = vrot.slane %v5167, 2
      %v5169 = vrot.slane %v4687, 7
      %v5170 = vrot.slane %v5169, 2
      %v5171 = vrot.slane %v4689, 7
      %v5172 = vrot.slane %v5171, 2
      %v5173 = vrot.slane %v4697, 7
      %v5174 = vrot.slane %v5173, 2
      %v5175 = vrot.slane %v4705, 7
      %v5176 = vrot.slane %v5175, 2
      %v5177 = vrot.slane %v4704, 7
      %v5178 = vrot.slane %v5177, 2
      %v5179 = vrot.slane %v4706, 7
      %v5180 = vrot.slane %v5179, 2
      %v5181 = vrot.slane %v4714, 7
      %v5182 = vrot.slane %v5181, 2
      %v5183 = vrot.slane %v4722, 7
      %v5184 = vrot.slane %v5183, 2
      %v5185 = vrot.slane %v4721, 7
      %v5186 = vrot.slane %v5185, 2
      %v5187 = vrot.slane %v4723, 7
      %v5188 = vrot.slane %v5187, 2
      %v5189 = vrot.slane %v4731, 7
      %v5190 = vrot.slane %v5189, 2
      %v5191 = vrot.slane %v4739, 7
      %v5192 = vrot.slane %v5191, 2
      %v5193 = vrot.slane %v4738, 7
      %v5194 = vrot.slane %v5193, 2
      %v5195 = vrot.slane %v4740, 7
      %v5196 = vrot.slane %v5195, 2
      %v5197 = vrot.slane %v4748, 7
      %v5198 = vrot.slane %v5197, 2
      %v5199 = vrot.slane %v4756, 7
      %v5200 = vrot.slane %v5199, 2
      %v5201 = vrot.slane %v4755, 7
      %v5202 = vrot.slane %v5201, 2
      %v5203 = vrot.slane %v4757, 7
      %v5204 = vrot.slane %v5203, 2
      %v5205 = vrot.slane %v4765, 7
      %v5206 = vrot.slane %v5205, 2
      %v5207 = vrot.slane %v4773, 7
      %v5208 = vrot.slane %v5207, 2
      %v5209 = vrot.slane %v4772, 7
      %v5210 = vrot.slane %v5209, 2
      %v5211 = vrot.slane %v4774, 7
      %v5212 = vrot.slane %v5211, 2
      %v5213 = vrot.slane %v4782, 7
      %v5214 = vrot.slane %v5213, 2
      %v5215 = vrot.slane %v4790, 7
      %v5216 = vrot.slane %v5215, 2
      %v5217 = vrot.slane %v4789, 7
      %v5218 = vrot.slane %v5217, 2
      %v5219 = vrot.slane %v4791, 7
      %v5220 = vrot.slane %v5219, 2
      %v5221 = vrot.slane %v4799, 7
      %v5222 = vrot.slane %v5221, 2
      %v5223 = vrot.slane %v4807, 7
      %v5224 = vrot.slane %v5223, 2
      %v5225 = vrot.slane %v4806, 7
      %v5226 = vrot.slane %v5225, 2
      %v5227 = vrot.slane %v4808, 7
      %v5228 = vrot.slane %v5227, 2
      %v5229 = vrot.slane %v4816, 7
      %v5230 = vrot.slane %v5229, 2
      %v5231 = vrot.slane %v4824, 7
      %v5232 = vrot.slane %v5231, 2
      %v5233 = vrot.slane %v4823, 7
      %v5234 = vrot.slane %v5233, 2
      %v5235 = vrot.slane %v4825, 7
      %v5236 = vrot.slane %v5235, 2
      %v5237 = vrot.slane %v4833, 7
      %v5238 = vrot.slane %v5237, 2
      %v5239 = vrot.slane %v4841, 7
      %v5240 = vrot.slane %v5239, 2
      %v5241 = vrot.slane %v4840, 7
      %v5242 = vrot.slane %v5241, 2
      %v5243 = vrot.slane %v4842, 7
      %v5244 = vrot.slane %v5243, 2
      %v5245 = vrot.slane %v4850, 7
      %v5246 = vrot.slane %v5245, 2
      %v5247 = vrot.slane %v4858, 7
      %v5248 = vrot.slane %v5247, 2
      %v5249 = vrot.slane %v4857, 7
      %v5250 = vrot.slane %v5249, 2
      %v5251 = vrot.slane %v4859, 7
      %v5252 = vrot.slane %v5251, 2
      %v5253 = vrot.slane %v4867, 7
      %v5254 = vrot.slane %v5253, 2
      %v5255 = vrot.slane %v4875, 7
      %v5256 = vrot.slane %v5255, 2
      %v5257 = vrot.slane %v4874, 7
      %v5258 = vrot.slane %v5257, 2
      %v5259 = vrot.slane %v4876, 7
      %v5260 = vrot.slane %v5259, 2
      %v5389 = vmax.f32 %v4340, %v5006
      %v5390 = vmax.f32 %v4348, %v5008
      %v5391 = vmax.f32 %v4347, %v5010
      %v5392 = vmax.f32 %v4349, %v5012
      %v5393 = vmax.f32 %v4357, %v5014
      %v5394 = vmax.f32 %v4365, %v5016
      %v5395 = vmax.f32 %v4364, %v5018
      %v5396 = vmax.f32 %v4366, %v5020
      %v5397 = vmax.f32 %v4374, %v5022
      %v5398 = vmax.f32 %v4382, %v5024
      %v5399 = vmax.f32 %v4381, %v5026
      %v5400 = vmax.f32 %v4383, %v5028
      %v5401 = vmax.f32 %v4391, %v5030
      %v5402 = vmax.f32 %v4399, %v5032
      %v5403 = vmax.f32 %v4398, %v5034
      %v5404 = vmax.f32 %v4400, %v5036
      %v5405 = vmax.f32 %v4408, %v5038
      %v5406 = vmax.f32 %v4416, %v5040
      %v5407 = vmax.f32 %v4415, %v5042
      %v5408 = vmax.f32 %v4417, %v5044
      %v5409 = vmax.f32 %v4425, %v5046
      %v5410 = vmax.f32 %v4433, %v5048
      %v5411 = vmax.f32 %v4432, %v5050
      %v5412 = vmax.f32 %v4434, %v5052
      %v5413 = vmax.f32 %v4442, %v5054
      %v5414 = vmax.f32 %v4450, %v5056
      %v5415 = vmax.f32 %v4449, %v5058
      %v5416 = vmax.f32 %v4451, %v5060
      %v5417 = vmax.f32 %v4459, %v5062
      %v5418 = vmax.f32 %v4467, %v5064
      %v5419 = vmax.f32 %v4466, %v5066
      %v5420 = vmax.f32 %v4468, %v5068
      %v5421 = vmax.f32 %v4476, %v5070
      %v5422 = vmax.f32 %v4484, %v5072
      %v5423 = vmax.f32 %v4483, %v5074
      %v5424 = vmax.f32 %v4485, %v5076
      %v5425 = vmax.f32 %v4493, %v5078
      %v5426 = vmax.f32 %v4501, %v5080
      %v5427 = vmax.f32 %v4500, %v5082
      %v5428 = vmax.f32 %v4502, %v5084
      %v5429 = vmax.f32 %v4510, %v5086
      %v5430 = vmax.f32 %v4518, %v5088
      %v5431 = vmax.f32 %v4517, %v5090
      %v5432 = vmax.f32 %v4519, %v5092
      %v5433 = vmax.f32 %v4527, %v5094
      %v5434 = vmax.f32 %v4535, %v5096
      %v5435 = vmax.f32 %v4534, %v5098
      %v5436 = vmax.f32 %v4536, %v5100
      %v5437 = vmax.f32 %v4544, %v5102
      %v5438 = vmax.f32 %v4552, %v5104
      %v5439 = vmax.f32 %v4551, %v5106
      %v5440 = vmax.f32 %v4553, %v5108
      %v5441 = vmax.f32 %v4561, %v5110
      %v5442 = vmax.f32 %v4569, %v5112
      %v5443 = vmax.f32 %v4568, %v5114
      %v5444 = vmax.f32 %v4570, %v5116
      %v5445 = vmax.f32 %v4578, %v5118
      %v5446 = vmax.f32 %v4586, %v5120
      %v5447 = vmax.f32 %v4585, %v5122
      %v5448 = vmax.f32 %v4587, %v5124
      %v5449 = vmax.f32 %v4595, %v5126
      %v5450 = vmax.f32 %v4603, %v5128
      %v5451 = vmax.f32 %v4602, %v5130
      %v5452 = vmax.f32 %v4604, %v5132
      %v5453 = vmax.f32 %v4612, %v5134
      %v5454 = vmax.f32 %v4620, %v5136
      %v5455 = vmax.f32 %v4619, %v5138
      %v5456 = vmax.f32 %v4621, %v5140
      %v5457 = vmax.f32 %v4629, %v5142
      %v5458 = vmax.f32 %v4637, %v5144
      %v5459 = vmax.f32 %v4636, %v5146
      %v5460 = vmax.f32 %v4638, %v5148
      %v5461 = vmax.f32 %v4646, %v5150
      %v5462 = vmax.f32 %v4654, %v5152
      %v5463 = vmax.f32 %v4653, %v5154
      %v5464 = vmax.f32 %v4655, %v5156
      %v5465 = vmax.f32 %v4663, %v5158
      %v5466 = vmax.f32 %v4671, %v5160
      %v5467 = vmax.f32 %v4670, %v5162
      %v5468 = vmax.f32 %v4672, %v5164
      %v5469 = vmax.f32 %v4680, %v5166
      %v5470 = vmax.f32 %v4688, %v5168
      %v5471 = vmax.f32 %v4687, %v5170
      %v5472 = vmax.f32 %v4689, %v5172
      %v5473 = vmax.f32 %v4697, %v5174
      %v5474 = vmax.f32 %v4705, %v5176
      %v5475 = vmax.f32 %v4704, %v5178
      %v5476 = vmax.f32 %v4706, %v5180
      %v5477 = vmax.f32 %v4714, %v5182
      %v5478 = vmax.f32 %v4722, %v5184
      %v5479 = vmax.f32 %v4721, %v5186
      %v5480 = vmax.f32 %v4723, %v5188
      %v5481 = vmax.f32 %v4731, %v5190
      %v5482 = vmax.f32 %v4739, %v5192
      %v5483 = vmax.f32 %v4738, %v5194
      %v5484 = vmax.f32 %v4740, %v5196
      %v5485 = vmax.f32 %v4748, %v5198
      %v5486 = vmax.f32 %v4756, %v5200
      %v5487 = vmax.f32 %v4755, %v5202
      %v5488 = vmax.f32 %v4757, %v5204
      %v5489 = vmax.f32 %v4765, %v5206
      %v5490 = vmax.f32 %v4773, %v5208
      %v5491 = vmax.f32 %v4772, %v5210
      %v5492 = vmax.f32 %v4774, %v5212
      %v5493 = vmax.f32 %v4782, %v5214
      %v5494 = vmax.f32 %v4790, %v5216
      %v5495 = vmax.f32 %v4789, %v5218
      %v5496 = vmax.f32 %v4791, %v5220
      %v5497 = vmax.f32 %v4799, %v5222
      %v5498 = vmax.f32 %v4807, %v5224
      %v5499 = vmax.f32 %v4806, %v5226
      %v5500 = vmax.f32 %v4808, %v5228
      %v5501 = vmax.f32 %v4816, %v5230
      %v5502 = vmax.f32 %v4824, %v5232
      %v5503 = vmax.f32 %v4823, %v5234
      %v5504 = vmax.f32 %v4825, %v5236
      %v5505 = vmax.f32 %v4833, %v5238
      %v5506 = vmax.f32 %v4841, %v5240
      %v5507 = vmax.f32 %v4840, %v5242
      %v5508 = vmax.f32 %v4842, %v5244
      %v5509 = vmax.f32 %v4850, %v5246
      %v5510 = vmax.f32 %v4858, %v5248
      %v5511 = vmax.f32 %v4857, %v5250
      %v5512 = vmax.f32 %v4859, %v5252
      %v5513 = vmax.f32 %v4867, %v5254
      %v5514 = vmax.f32 %v4875, %v5256
      %v5515 = vmax.f32 %v4874, %v5258
      %v5516 = vmax.f32 %v4876, %v5260
      %v5517 = vmax.f32 %v5389, %v5397
      %v5518 = vmax.f32 %v5390, %v5398
      %v5519 = vmax.f32 %v5391, %v5399
      %v5520 = vmax.f32 %v5392, %v5400
      %v5521 = vmax.f32 %v5393, %v5401
      %v5522 = vmax.f32 %v5394, %v5402
      %v5523 = vmax.f32 %v5395, %v5403
      %v5524 = vmax.f32 %v5396, %v5404
      %v5525 = vmax.f32 %v5405, %v5413
      %v5526 = vmax.f32 %v5406, %v5414
      %v5527 = vmax.f32 %v5407, %v5415
      %v5528 = vmax.f32 %v5408, %v5416
      %v5529 = vmax.f32 %v5409, %v5417
      %v5530 = vmax.f32 %v5410, %v5418
      %v5531 = vmax.f32 %v5411, %v5419
      %v5532 = vmax.f32 %v5412, %v5420
      %v5533 = vmax.f32 %v5421, %v5429
      %v5534 = vmax.f32 %v5422, %v5430
      %v5535 = vmax.f32 %v5423, %v5431
      %v5536 = vmax.f32 %v5424, %v5432
      %v5537 = vmax.f32 %v5425, %v5433
      %v5538 = vmax.f32 %v5426, %v5434
      %v5539 = vmax.f32 %v5427, %v5435
      %v5540 = vmax.f32 %v5428, %v5436
      %v5541 = vmax.f32 %v5437, %v5445
      %v5542 = vmax.f32 %v5438, %v5446
      %v5543 = vmax.f32 %v5439, %v5447
      %v5544 = vmax.f32 %v5440, %v5448
      %v5545 = vmax.f32 %v5441, %v5449
      %v5546 = vmax.f32 %v5442, %v5450
      %v5547 = vmax.f32 %v5443, %v5451
      %v5548 = vmax.f32 %v5444, %v5452
      %v5549 = vmax.f32 %v5453, %v5461
      %v5550 = vmax.f32 %v5454, %v5462
      %v5551 = vmax.f32 %v5455, %v5463
      %v5552 = vmax.f32 %v5456, %v5464
      %v5553 = vmax.f32 %v5457, %v5465
      %v5554 = vmax.f32 %v5458, %v5466
      %v5555 = vmax.f32 %v5459, %v5467
      %v5556 = vmax.f32 %v5460, %v5468
      %v5557 = vmax.f32 %v5469, %v5477
      %v5558 = vmax.f32 %v5470, %v5478
      %v5559 = vmax.f32 %v5471, %v5479
      %v5560 = vmax.f32 %v5472, %v5480
      %v5561 = vmax.f32 %v5473, %v5481
      %v5562 = vmax.f32 %v5474, %v5482
      %v5563 = vmax.f32 %v5475, %v5483
      %v5564 = vmax.f32 %v5476, %v5484
      %v5565 = vmax.f32 %v5485, %v5493
      %v5566 = vmax.f32 %v5486, %v5494
      %v5567 = vmax.f32 %v5487, %v5495
      %v5568 = vmax.f32 %v5488, %v5496
      %v5569 = vmax.f32 %v5489, %v5497
      %v5570 = vmax.f32 %v5490, %v5498
      %v5571 = vmax.f32 %v5491, %v5499
      %v5572 = vmax.f32 %v5492, %v5500
      %v5573 = vmax.f32 %v5501, %v5509
      %v5574 = vmax.f32 %v5502, %v5510
      %v5575 = vmax.f32 %v5503, %v5511
      %v5576 = vmax.f32 %v5504, %v5512
      %v5577 = vmax.f32 %v5505, %v5513
      %v5578 = vmax.f32 %v5506, %v5514
      %v5579 = vmax.f32 %v5507, %v5515
      %v5580 = vmax.f32 %v5508, %v5516
      %v5645 = vlaneseq
      %v5646 = vshrl.u32 %v5645, 7
      %v5647 = vsub.s32 0, %v5646
      %v5648 = vrot.slane %v5517, %v5647
      %v5649 = vlaneseq
      %v5650 = vshrl.u32 %v5649, 7
      %v5651 = vsub.s32 0, %v5650
      %v5652 = vrot.slane %v5518, %v5651
      %v5653 = vlaneseq
      %v5654 = vshrl.u32 %v5653, 7
      %v5655 = vsub.s32 0, %v5654
      %v5656 = vrot.slane %v5519, %v5655
      %v5657 = vlaneseq
      %v5658 = vshrl.u32 %v5657, 7
      %v5659 = vsub.s32 0, %v5658
      %v5660 = vrot.slane %v5520, %v5659
      %v5661 = vlaneseq
      %v5662 = vshrl.u32 %v5661, 7
      %v5663 = vsub.s32 0, %v5662
      %v5664 = vrot.slane %v5521, %v5663
      %v5665 = vlaneseq
      %v5666 = vshrl.u32 %v5665, 7
      %v5667 = vsub.s32 0, %v5666
      %v5668 = vrot.slane %v5522, %v5667
      %v5669 = vlaneseq
      %v5670 = vshrl.u32 %v5669, 7
      %v5671 = vsub.s32 0, %v5670
      %v5672 = vrot.slane %v5523, %v5671
      %v5673 = vlaneseq
      %v5674 = vshrl.u32 %v5673, 7
      %v5675 = vsub.s32 0, %v5674
      %v5676 = vrot.slane %v5524, %v5675
      %v5677 = vlaneseq
      %v5678 = vshrl.u32 %v5677, 7
      %v5679 = vsub.s32 0, %v5678
      %v5680 = vrot.slane %v5525, %v5679
      %v5681 = vlaneseq
      %v5682 = vshrl.u32 %v5681, 7
      %v5683 = vsub.s32 0, %v5682
      %v5684 = vrot.slane %v5526, %v5683
      %v5685 = vlaneseq
      %v5686 = vshrl.u32 %v5685, 7
      %v5687 = vsub.s32 0, %v5686
      %v5688 = vrot.slane %v5527, %v5687
      %v5689 = vlaneseq
      %v5690 = vshrl.u32 %v5689, 7
      %v5691 = vsub.s32 0, %v5690
      %v5692 = vrot.slane %v5528, %v5691
      %v5693 = vlaneseq
      %v5694 = vshrl.u32 %v5693, 7
      %v5695 = vsub.s32 0, %v5694
      %v5696 = vrot.slane %v5529, %v5695
      %v5697 = vlaneseq
      %v5698 = vshrl.u32 %v5697, 7
      %v5699 = vsub.s32 0, %v5698
      %v5700 = vrot.slane %v5530, %v5699
      %v5701 = vlaneseq
      %v5702 = vshrl.u32 %v5701, 7
      %v5703 = vsub.s32 0, %v5702
      %v5704 = vrot.slane %v5531, %v5703
      %v5705 = vlaneseq
      %v5706 = vshrl.u32 %v5705, 7
      %v5707 = vsub.s32 0, %v5706
      %v5708 = vrot.slane %v5532, %v5707
      %v5709 = vlaneseq
      %v5710 = vshrl.u32 %v5709, 7
      %v5711 = vsub.s32 0, %v5710
      %v5712 = vrot.slane %v5533, %v5711
      %v5713 = vlaneseq
      %v5714 = vshrl.u32 %v5713, 7
      %v5715 = vsub.s32 0, %v5714
      %v5716 = vrot.slane %v5534, %v5715
      %v5717 = vlaneseq
      %v5718 = vshrl.u32 %v5717, 7
      %v5719 = vsub.s32 0, %v5718
      %v5720 = vrot.slane %v5535, %v5719
      %v5721 = vlaneseq
      %v5722 = vshrl.u32 %v5721, 7
      %v5723 = vsub.s32 0, %v5722
      %v5724 = vrot.slane %v5536, %v5723
      %v5725 = vlaneseq
      %v5726 = vshrl.u32 %v5725, 7
      %v5727 = vsub.s32 0, %v5726
      %v5728 = vrot.slane %v5537, %v5727
      %v5729 = vlaneseq
      %v5730 = vshrl.u32 %v5729, 7
      %v5731 = vsub.s32 0, %v5730
      %v5732 = vrot.slane %v5538, %v5731
      %v5733 = vlaneseq
      %v5734 = vshrl.u32 %v5733, 7
      %v5735 = vsub.s32 0, %v5734
      %v5736 = vrot.slane %v5539, %v5735
      %v5737 = vlaneseq
      %v5738 = vshrl.u32 %v5737, 7
      %v5739 = vsub.s32 0, %v5738
      %v5740 = vrot.slane %v5540, %v5739
      %v5741 = vlaneseq
      %v5742 = vshrl.u32 %v5741, 7
      %v5743 = vsub.s32 0, %v5742
      %v5744 = vrot.slane %v5541, %v5743
      %v5745 = vlaneseq
      %v5746 = vshrl.u32 %v5745, 7
      %v5747 = vsub.s32 0, %v5746
      %v5748 = vrot.slane %v5542, %v5747
      %v5749 = vlaneseq
      %v5750 = vshrl.u32 %v5749, 7
      %v5751 = vsub.s32 0, %v5750
      %v5752 = vrot.slane %v5543, %v5751
      %v5753 = vlaneseq
      %v5754 = vshrl.u32 %v5753, 7
      %v5755 = vsub.s32 0, %v5754
      %v5756 = vrot.slane %v5544, %v5755
      %v5757 = vlaneseq
      %v5758 = vshrl.u32 %v5757, 7
      %v5759 = vsub.s32 0, %v5758
      %v5760 = vrot.slane %v5545, %v5759
      %v5761 = vlaneseq
      %v5762 = vshrl.u32 %v5761, 7
      %v5763 = vsub.s32 0, %v5762
      %v5764 = vrot.slane %v5546, %v5763
      %v5765 = vlaneseq
      %v5766 = vshrl.u32 %v5765, 7
      %v5767 = vsub.s32 0, %v5766
      %v5768 = vrot.slane %v5547, %v5767
      %v5769 = vlaneseq
      %v5770 = vshrl.u32 %v5769, 7
      %v5771 = vsub.s32 0, %v5770
      %v5772 = vrot.slane %v5548, %v5771
      %v5773 = vlaneseq
      %v5774 = vshrl.u32 %v5773, 7
      %v5775 = vsub.s32 0, %v5774
      %v5776 = vrot.slane %v5549, %v5775
      %v5777 = vlaneseq
      %v5778 = vshrl.u32 %v5777, 7
      %v5779 = vsub.s32 0, %v5778
      %v5780 = vrot.slane %v5550, %v5779
      %v5781 = vlaneseq
      %v5782 = vshrl.u32 %v5781, 7
      %v5783 = vsub.s32 0, %v5782
      %v5784 = vrot.slane %v5551, %v5783
      %v5785 = vlaneseq
      %v5786 = vshrl.u32 %v5785, 7
      %v5787 = vsub.s32 0, %v5786
      %v5788 = vrot.slane %v5552, %v5787
      %v5789 = vlaneseq
      %v5790 = vshrl.u32 %v5789, 7
      %v5791 = vsub.s32 0, %v5790
      %v5792 = vrot.slane %v5553, %v5791
      %v5793 = vlaneseq
      %v5794 = vshrl.u32 %v5793, 7
      %v5795 = vsub.s32 0, %v5794
      %v5796 = vrot.slane %v5554, %v5795
      %v5797 = vlaneseq
      %v5798 = vshrl.u32 %v5797, 7
      %v5799 = vsub.s32 0, %v5798
      %v5800 = vrot.slane %v5555, %v5799
      %v5801 = vlaneseq
      %v5802 = vshrl.u32 %v5801, 7
      %v5803 = vsub.s32 0, %v5802
      %v5804 = vrot.slane %v5556, %v5803
      %v5805 = vlaneseq
      %v5806 = vshrl.u32 %v5805, 7
      %v5807 = vsub.s32 0, %v5806
      %v5808 = vrot.slane %v5557, %v5807
      %v5809 = vlaneseq
      %v5810 = vshrl.u32 %v5809, 7
      %v5811 = vsub.s32 0, %v5810
      %v5812 = vrot.slane %v5558, %v5811
      %v5813 = vlaneseq
      %v5814 = vshrl.u32 %v5813, 7
      %v5815 = vsub.s32 0, %v5814
      %v5816 = vrot.slane %v5559, %v5815
      %v5817 = vlaneseq
      %v5818 = vshrl.u32 %v5817, 7
      %v5819 = vsub.s32 0, %v5818
      %v5820 = vrot.slane %v5560, %v5819
      %v5821 = vlaneseq
      %v5822 = vshrl.u32 %v5821, 7
      %v5823 = vsub.s32 0, %v5822
      %v5824 = vrot.slane %v5561, %v5823
      %v5825 = vlaneseq
      %v5826 = vshrl.u32 %v5825, 7
      %v5827 = vsub.s32 0, %v5826
      %v5828 = vrot.slane %v5562, %v5827
      %v5829 = vlaneseq
      %v5830 = vshrl.u32 %v5829, 7
      %v5831 = vsub.s32 0, %v5830
      %v5832 = vrot.slane %v5563, %v5831
      %v5833 = vlaneseq
      %v5834 = vshrl.u32 %v5833, 7
      %v5835 = vsub.s32 0, %v5834
      %v5836 = vrot.slane %v5564, %v5835
      %v5837 = vlaneseq
      %v5838 = vshrl.u32 %v5837, 7
      %v5839 = vsub.s32 0, %v5838
      %v5840 = vrot.slane %v5565, %v5839
      %v5841 = vlaneseq
      %v5842 = vshrl.u32 %v5841, 7
      %v5843 = vsub.s32 0, %v5842
      %v5844 = vrot.slane %v5566, %v5843
      %v5845 = vlaneseq
      %v5846 = vshrl.u32 %v5845, 7
      %v5847 = vsub.s32 0, %v5846
      %v5848 = vrot.slane %v5567, %v5847
      %v5849 = vlaneseq
      %v5850 = vshrl.u32 %v5849, 7
      %v5851 = vsub.s32 0, %v5850
      %v5852 = vrot.slane %v5568, %v5851
      %v5853 = vlaneseq
      %v5854 = vshrl.u32 %v5853, 7
      %v5855 = vsub.s32 0, %v5854
      %v5856 = vrot.slane %v5569, %v5855
      %v5857 = vlaneseq
      %v5858 = vshrl.u32 %v5857, 7
      %v5859 = vsub.s32 0, %v5858
      %v5860 = vrot.slane %v5570, %v5859
      %v5861 = vlaneseq
      %v5862 = vshrl.u32 %v5861, 7
      %v5863 = vsub.s32 0, %v5862
      %v5864 = vrot.slane %v5571, %v5863
      %v5865 = vlaneseq
      %v5866 = vshrl.u32 %v5865, 7
      %v5867 = vsub.s32 0, %v5866
      %v5868 = vrot.slane %v5572, %v5867
      %v5869 = vlaneseq
      %v5870 = vshrl.u32 %v5869, 7
      %v5871 = vsub.s32 0, %v5870
      %v5872 = vrot.slane %v5573, %v5871
      %v5873 = vlaneseq
      %v5874 = vshrl.u32 %v5873, 7
      %v5875 = vsub.s32 0, %v5874
      %v5876 = vrot.slane %v5574, %v5875
      %v5877 = vlaneseq
      %v5878 = vshrl.u32 %v5877, 7
      %v5879 = vsub.s32 0, %v5878
      %v5880 = vrot.slane %v5575, %v5879
      %v5881 = vlaneseq
      %v5882 = vshrl.u32 %v5881, 7
      %v5883 = vsub.s32 0, %v5882
      %v5884 = vrot.slane %v5576, %v5883
      %v5885 = vlaneseq
      %v5886 = vshrl.u32 %v5885, 7
      %v5887 = vsub.s32 0, %v5886
      %v5888 = vrot.slane %v5577, %v5887
      %v5889 = vlaneseq
      %v5890 = vshrl.u32 %v5889, 7
      %v5891 = vsub.s32 0, %v5890
      %v5892 = vrot.slane %v5578, %v5891
      %v5893 = vlaneseq
      %v5894 = vshrl.u32 %v5893, 7
      %v5895 = vsub.s32 0, %v5894
      %v5896 = vrot.slane %v5579, %v5895
      %v5897 = vlaneseq
      %v5898 = vshrl.u32 %v5897, 7
      %v5899 = vsub.s32 0, %v5898
      %v5900 = vrot.slane %v5580, %v5899
      %vm5901 = vcmask 1041409
      %v5902 = vsel %vm5901, %v5652, %v5648
      %vm5903 = vcmask 1042434
      %v5904 = vsel %vm5903, %v5656, %v5902
      %vm5905 = vcmask 1043459
      %v5906 = vsel %vm5905, %v5660, %v5904
      %vm5907 = vcmask 1044484
      %v5908 = vsel %vm5907, %v5664, %v5906
      %vm5909 = vcmask 1045509
      %v5910 = vsel %vm5909, %v5668, %v5908
      %vm5911 = vcmask 1046534
      %v5912 = vsel %vm5911, %v5672, %v5910
      %vm5913 = vcmask 1047559
      %v5914 = vsel %vm5913, %v5676, %v5912
      %v5915 = vsel %vm5901, %v5684, %v5680
      %v5916 = vsel %vm5903, %v5688, %v5915
      %v5917 = vsel %vm5905, %v5692, %v5916
      %v5918 = vsel %vm5907, %v5696, %v5917
      %v5919 = vsel %vm5909, %v5700, %v5918
      %v5920 = vsel %vm5911, %v5704, %v5919
      %v5921 = vsel %vm5913, %v5708, %v5920
      %v5922 = vsel %vm5901, %v5716, %v5712
      %v5923 = vsel %vm5903, %v5720, %v5922
      %v5924 = vsel %vm5905, %v5724, %v5923
      %v5925 = vsel %vm5907, %v5728, %v5924
      %v5926 = vsel %vm5909, %v5732, %v5925
      %v5927 = vsel %vm5911, %v5736, %v5926
      %v5928 = vsel %vm5913, %v5740, %v5927
      %v5929 = vsel %vm5901, %v5748, %v5744
      %v5930 = vsel %vm5903, %v5752, %v5929
      %v5931 = vsel %vm5905, %v5756, %v5930
      %v5932 = vsel %vm5907, %v5760, %v5931
      %v5933 = vsel %vm5909, %v5764, %v5932
      %v5934 = vsel %vm5911, %v5768, %v5933
      %v5935 = vsel %vm5913, %v5772, %v5934
      %v5936 = vsel %vm5901, %v5780, %v5776
      %v5937 = vsel %vm5903, %v5784, %v5936
      %v5938 = vsel %vm5905, %v5788, %v5937
      %v5939 = vsel %vm5907, %v5792, %v5938
      %v5940 = vsel %vm5909, %v5796, %v5939
      %v5941 = vsel %vm5911, %v5800, %v5940
      %v5942 = vsel %vm5913, %v5804, %v5941
      %v5943 = vsel %vm5901, %v5812, %v5808
      %v5944 = vsel %vm5903, %v5816, %v5943
      %v5945 = vsel %vm5905, %v5820, %v5944
      %v5946 = vsel %vm5907, %v5824, %v5945
      %v5947 = vsel %vm5909, %v5828, %v5946
      %v5948 = vsel %vm5911, %v5832, %v5947
      %v5949 = vsel %vm5913, %v5836, %v5948
      %v5950 = vsel %vm5901, %v5844, %v5840
      %v5951 = vsel %vm5903, %v5848, %v5950
      %v5952 = vsel %vm5905, %v5852, %v5951
      %v5953 = vsel %vm5907, %v5856, %v5952
      %v5954 = vsel %vm5909, %v5860, %v5953
      %v5955 = vsel %vm5911, %v5864, %v5954
      %v5956 = vsel %vm5913, %v5868, %v5955
      %v5957 = vsel %vm5901, %v5876, %v5872
      %v5958 = vsel %vm5903, %v5880, %v5957
      %v5959 = vsel %vm5905, %v5884, %v5958
      %v5960 = vsel %vm5907, %v5888, %v5959
      %v5961 = vsel %vm5909, %v5892, %v5960
      %v5962 = vsel %vm5911, %v5896, %v5961
      %v5963 = vsel %vm5913, %v5900, %v5962
      %s5972 = scalar_lea.vmem [#allocation4], 16
      %5973 = vst.msk [vmem:[%s5972 + $0x1] sm:$0xff] %vm390, %v5914
      %5974 = vst.msk [vmem:[%s5972 + $0x11] sm:$0xff] %vm390, %v5921
      %5975 = vst.msk [vmem:[%s5972 + $0x21] sm:$0xff] %vm390, %v5928
      %5976 = vst.msk [vmem:[%s5972 + $0x31] sm:$0xff] %vm390, %v5935
      %5977 = vst.msk [vmem:[%s5972 + $0x41] sm:$0xff] %vm390, %v5942
      %5978 = vst.msk [vmem:[%s5972 + $0x51] sm:$0xff] %vm390, %v5949
      %5979 = vst.msk [vmem:[%s5972 + $0x61] sm:$0xff] %vm390, %v5956
      %5980 = vst.msk [vmem:[%s5972 + $0x71] sm:$0xff] %vm390, %v5963
      %v5981 = vld [vmem:[#allocation4] sm:$0xff]
      %v5982 = vld [vmem:[#allocation4 + $0x10] sm:$0xff]
      %v5983 = vld [vmem:[#allocation4 + $0x20] sm:$0xff]
      %v5984 = vld [vmem:[#allocation4 + $0x30] sm:$0xff]
      %v5985 = vld [vmem:[#allocation4 + $0x40] sm:$0xff]
      %v5986 = vld [vmem:[#allocation4 + $0x50] sm:$0xff]
      %v5987 = vld [vmem:[#allocation4 + $0x60] sm:$0xff]
      %v5988 = vld [vmem:[#allocation4 + $0x70] sm:$0xff]
      %v5989 = vld [vmem:[#allocation4 + $0x1] sm:$0xff]
      %v5990 = vld [vmem:[#allocation4 + $0x11] sm:$0xff]
      %v5991 = vld [vmem:[#allocation4 + $0x21] sm:$0xff]
      %v5992 = vld [vmem:[#allocation4 + $0x31] sm:$0xff]
      %v5993 = vld [vmem:[#allocation4 + $0x41] sm:$0xff]
      %v5994 = vld [vmem:[#allocation4 + $0x51] sm:$0xff]
      %v5995 = vld [vmem:[#allocation4 + $0x61] sm:$0xff]
      %v5996 = vld [vmem:[#allocation4 + $0x71] sm:$0xff]
      %v5997 = vld [vmem:[#allocation4 + $0x2] sm:$0xff]
      %v5998 = vld [vmem:[#allocation4 + $0x12] sm:$0xff]
      %v5999 = vld [vmem:[#allocation4 + $0x22] sm:$0xff]
      %v6000 = vld [vmem:[#allocation4 + $0x32] sm:$0xff]
      %v6001 = vld [vmem:[#allocation4 + $0x42] sm:$0xff]
      %v6002 = vld [vmem:[#allocation4 + $0x52] sm:$0xff]
      %v6003 = vld [vmem:[#allocation4 + $0x62] sm:$0xff]
      %v6004 = vld [vmem:[#allocation4 + $0x72] sm:$0xff]
      %v6005 = vld [vmem:[%s5972] sm:$0xff]
      %v6006 = vld [vmem:[%s5972 + $0x10] sm:$0xff]
      %v6007 = vld [vmem:[%s5972 + $0x20] sm:$0xff]
      %v6008 = vld [vmem:[%s5972 + $0x30] sm:$0xff]
      %v6009 = vld [vmem:[%s5972 + $0x40] sm:$0xff]
      %v6010 = vld [vmem:[%s5972 + $0x50] sm:$0xff]
      %v6011 = vld [vmem:[%s5972 + $0x60] sm:$0xff]
      %v6012 = vld [vmem:[%s5972 + $0x70] sm:$0xff]
      %v6013 = vld [vmem:[%s5972 + $0x1] sm:$0xff]
      %v6014 = vld [vmem:[%s5972 + $0x11] sm:$0xff]
      %v6015 = vld [vmem:[%s5972 + $0x21] sm:$0xff]
      %v6016 = vld [vmem:[%s5972 + $0x31] sm:$0xff]
      %v6017 = vld [vmem:[%s5972 + $0x41] sm:$0xff]
      %v6018 = vld [vmem:[%s5972 + $0x51] sm:$0xff]
      %v6019 = vld [vmem:[%s5972 + $0x61] sm:$0xff]
      %v6020 = vld [vmem:[%s5972 + $0x71] sm:$0xff]
      %v6021 = vld [vmem:[%s5972 + $0x2] sm:$0xff]
      %v6022 = vld [vmem:[%s5972 + $0x12] sm:$0xff]
      %v6023 = vld [vmem:[%s5972 + $0x22] sm:$0xff]
      %v6024 = vld [vmem:[%s5972 + $0x32] sm:$0xff]
      %v6025 = vld [vmem:[%s5972 + $0x42] sm:$0xff]
      %v6026 = vld [vmem:[%s5972 + $0x52] sm:$0xff]
      %v6027 = vld [vmem:[%s5972 + $0x62] sm:$0xff]
      %v6028 = vld [vmem:[%s5972 + $0x72] sm:$0xff]
      %s6029 = scalar_lea.vmem [#allocation4], 32
      %v6030 = vld [vmem:[%s6029] sm:$0xff]
      %v6031 = vld [vmem:[%s6029 + $0x10] sm:$0xff]
      %v6032 = vld [vmem:[%s6029 + $0x20] sm:$0xff]
      %v6033 = vld [vmem:[%s6029 + $0x30] sm:$0xff]
      %v6034 = vld [vmem:[%s6029 + $0x40] sm:$0xff]
      %v6035 = vld [vmem:[%s6029 + $0x50] sm:$0xff]
      %v6036 = vld [vmem:[%s6029 + $0x60] sm:$0xff]
      %v6037 = vld [vmem:[%s6029 + $0x70] sm:$0xff]
      %v6038 = vld [vmem:[%s6029 + $0x1] sm:$0xff]
      %v6039 = vld [vmem:[%s6029 + $0x11] sm:$0xff]
      %v6040 = vld [vmem:[%s6029 + $0x21] sm:$0xff]
      %v6041 = vld [vmem:[%s6029 + $0x31] sm:$0xff]
      %v6042 = vld [vmem:[%s6029 + $0x41] sm:$0xff]
      %v6043 = vld [vmem:[%s6029 + $0x51] sm:$0xff]
      %v6044 = vld [vmem:[%s6029 + $0x61] sm:$0xff]
      %v6045 = vld [vmem:[%s6029 + $0x71] sm:$0xff]
      %v6046 = vld [vmem:[%s6029 + $0x2] sm:$0xff]
      %v6047 = vld [vmem:[%s6029 + $0x12] sm:$0xff]
      %v6048 = vld [vmem:[%s6029 + $0x22] sm:$0xff]
      %v6049 = vld [vmem:[%s6029 + $0x32] sm:$0xff]
      %v6050 = vld [vmem:[%s6029 + $0x42] sm:$0xff]
      %v6051 = vld [vmem:[%s6029 + $0x52] sm:$0xff]
      %v6052 = vld [vmem:[%s6029 + $0x62] sm:$0xff]
      %v6053 = vld [vmem:[%s6029 + $0x72] sm:$0xff]
      %6062 = vrot.lane.b32.xlu0 %v5989, 32
      %v6063 = vpop.permute.xlu0 %6062
      %6064 = vrot.lane.b32.xlu0 %v5990, 32
      %v6065 = vpop.permute.xlu0 %6064
      %6066 = vrot.lane.b32.xlu0 %v5991, 32
      %v6067 = vpop.permute.xlu0 %6066
      %6068 = vrot.lane.b32.xlu0 %v5992, 32
      %v6069 = vpop.permute.xlu0 %6068
      %6070 = vrot.lane.b32.xlu0 %v5993, 32
      %v6071 = vpop.permute.xlu0 %6070
      %6072 = vrot.lane.b32.xlu0 %v5994, 32
      %v6073 = vpop.permute.xlu0 %6072
      %6074 = vrot.lane.b32.xlu0 %v5995, 32
      %v6075 = vpop.permute.xlu0 %6074
      %6076 = vrot.lane.b32.xlu0 %v5996, 32
      %v6077 = vpop.permute.xlu0 %6076
      %6094 = vrot.lane.b32.xlu0 %v5997, 64
      %v6095 = vpop.permute.xlu0 %6094
      %6096 = vrot.lane.b32.xlu0 %v5998, 64
      %v6097 = vpop.permute.xlu0 %6096
      %6098 = vrot.lane.b32.xlu0 %v5999, 64
      %v6099 = vpop.permute.xlu0 %6098
      %6100 = vrot.lane.b32.xlu0 %v6000, 64
      %v6101 = vpop.permute.xlu0 %6100
      %6102 = vrot.lane.b32.xlu0 %v6001, 64
      %v6103 = vpop.permute.xlu0 %6102
      %6104 = vrot.lane.b32.xlu0 %v6002, 64
      %v6105 = vpop.permute.xlu0 %6104
      %6106 = vrot.lane.b32.xlu0 %v6003, 64
      %v6107 = vpop.permute.xlu0 %6106
      %6108 = vrot.lane.b32.xlu0 %v6004, 64
      %v6109 = vpop.permute.xlu0 %6108
      %6126 = vrot.lane.b32.xlu0 %v6005, 96
      %v6127 = vpop.permute.xlu0 %6126
      %6128 = vrot.lane.b32.xlu0 %v6006, 96
      %v6129 = vpop.permute.xlu0 %6128
      %6130 = vrot.lane.b32.xlu0 %v6007, 96
      %v6131 = vpop.permute.xlu0 %6130
      %6132 = vrot.lane.b32.xlu0 %v6008, 96
      %v6133 = vpop.permute.xlu0 %6132
      %6134 = vrot.lane.b32.xlu0 %v6009, 96
      %v6135 = vpop.permute.xlu0 %6134
      %6136 = vrot.lane.b32.xlu0 %v6010, 96
      %v6137 = vpop.permute.xlu0 %6136
      %6138 = vrot.lane.b32.xlu0 %v6011, 96
      %v6139 = vpop.permute.xlu0 %6138
      %6140 = vrot.lane.b32.xlu0 %v6012, 96
      %v6141 = vpop.permute.xlu0 %6140
      %6158 = vrot.lane.b32.xlu0 %v6021, 32
      %v6159 = vpop.permute.xlu0 %6158
      %6160 = vrot.lane.b32.xlu0 %v6022, 32
      %v6161 = vpop.permute.xlu0 %6160
      %6162 = vrot.lane.b32.xlu0 %v6023, 32
      %v6163 = vpop.permute.xlu0 %6162
      %6164 = vrot.lane.b32.xlu0 %v6024, 32
      %v6165 = vpop.permute.xlu0 %6164
      %6166 = vrot.lane.b32.xlu0 %v6025, 32
      %v6167 = vpop.permute.xlu0 %6166
      %6168 = vrot.lane.b32.xlu0 %v6026, 32
      %v6169 = vpop.permute.xlu0 %6168
      %6170 = vrot.lane.b32.xlu0 %v6027, 32
      %v6171 = vpop.permute.xlu0 %6170
      %6172 = vrot.lane.b32.xlu0 %v6028, 32
      %v6173 = vpop.permute.xlu0 %6172
      %6190 = vrot.lane.b32.xlu0 %v6030, 64
      %v6191 = vpop.permute.xlu0 %6190
      %6192 = vrot.lane.b32.xlu0 %v6031, 64
      %v6193 = vpop.permute.xlu0 %6192
      %6194 = vrot.lane.b32.xlu0 %v6032, 64
      %v6195 = vpop.permute.xlu0 %6194
      %6196 = vrot.lane.b32.xlu0 %v6033, 64
      %v6197 = vpop.permute.xlu0 %6196
      %6198 = vrot.lane.b32.xlu0 %v6034, 64
      %v6199 = vpop.permute.xlu0 %6198
      %6200 = vrot.lane.b32.xlu0 %v6035, 64
      %v6201 = vpop.permute.xlu0 %6200
      %6202 = vrot.lane.b32.xlu0 %v6036, 64
      %v6203 = vpop.permute.xlu0 %6202
      %6204 = vrot.lane.b32.xlu0 %v6037, 64
      %v6205 = vpop.permute.xlu0 %6204
      %6222 = vrot.lane.b32.xlu0 %v6038, 96
      %v6223 = vpop.permute.xlu0 %6222
      %6224 = vrot.lane.b32.xlu0 %v6039, 96
      %v6225 = vpop.permute.xlu0 %6224
      %6226 = vrot.lane.b32.xlu0 %v6040, 96
      %v6227 = vpop.permute.xlu0 %6226
      %6228 = vrot.lane.b32.xlu0 %v6041, 96
      %v6229 = vpop.permute.xlu0 %6228
      %6230 = vrot.lane.b32.xlu0 %v6042, 96
      %v6231 = vpop.permute.xlu0 %6230
      %6232 = vrot.lane.b32.xlu0 %v6043, 96
      %v6233 = vpop.permute.xlu0 %6232
      %6234 = vrot.lane.b32.xlu0 %v6044, 96
      %v6235 = vpop.permute.xlu0 %6234
      %6236 = vrot.lane.b32.xlu0 %v6045, 96
      %v6237 = vpop.permute.xlu0 %6236
      %v6246 = vsel %vm390, %v5981, %v6063
      %v6247 = vsel %vm390, %v5982, %v6065
      %v6248 = vsel %vm390, %v5983, %v6067
      %v6249 = vsel %vm390, %v5984, %v6069
      %v6250 = vsel %vm390, %v5985, %v6071
      %v6251 = vsel %vm390, %v5986, %v6073
      %v6252 = vsel %vm390, %v5987, %v6075
      %v6253 = vsel %vm390, %v5988, %v6077
      %v6254 = vsel %vm466, %v6246, %v6095
      %v6255 = vsel %vm466, %v6247, %v6097
      %v6256 = vsel %vm466, %v6248, %v6099
      %v6257 = vsel %vm466, %v6249, %v6101
      %v6258 = vsel %vm466, %v6250, %v6103
      %v6259 = vsel %vm466, %v6251, %v6105
      %v6260 = vsel %vm466, %v6252, %v6107
      %v6261 = vsel %vm466, %v6253, %v6109
      %v6262 = vsel %vm3571, %v6254, %v6127
      %v6263 = vsel %vm3571, %v6255, %v6129
      %v6264 = vsel %vm3571, %v6256, %v6131
      %v6265 = vsel %vm3571, %v6257, %v6133
      %v6266 = vsel %vm3571, %v6258, %v6135
      %v6267 = vsel %vm3571, %v6259, %v6137
      %v6268 = vsel %vm3571, %v6260, %v6139
      %v6269 = vsel %vm3571, %v6261, %v6141
      %v6270 = vsel %vm390, %v6013, %v6159
      %v6271 = vsel %vm390, %v6014, %v6161
      %v6272 = vsel %vm390, %v6015, %v6163
      %v6273 = vsel %vm390, %v6016, %v6165
      %v6274 = vsel %vm390, %v6017, %v6167
      %v6275 = vsel %vm390, %v6018, %v6169
      %v6276 = vsel %vm390, %v6019, %v6171
      %v6277 = vsel %vm390, %v6020, %v6173
      %v6278 = vsel %vm466, %v6270, %v6191
      %v6279 = vsel %vm466, %v6271, %v6193
      %v6280 = vsel %vm466, %v6272, %v6195
      %v6281 = vsel %vm466, %v6273, %v6197
      %v6282 = vsel %vm466, %v6274, %v6199
      %v6283 = vsel %vm466, %v6275, %v6201
      %v6284 = vsel %vm466, %v6276, %v6203
      %v6285 = vsel %vm466, %v6277, %v6205
      %v6286 = vsel %vm3571, %v6278, %v6223
      %v6287 = vsel %vm3571, %v6279, %v6225
      %v6288 = vsel %vm3571, %v6280, %v6227
      %v6289 = vsel %vm3571, %v6281, %v6229
      %v6290 = vsel %vm3571, %v6282, %v6231
      %v6291 = vsel %vm3571, %v6283, %v6233
      %v6292 = vsel %vm3571, %v6284, %v6235
      %v6293 = vsel %vm3571, %v6285, %v6237
      %v6294 = vpack.c.bf16 %v6263, %v6262
      %v6295 = vpack.c.bf16 %v6287, %v6286
      %v6296 = vpack.c.bf16 %v6047, %v6046
      %v6297 = vpack.c.bf16 %v6265, %v6264
      %v6298 = vpack.c.bf16 %v6289, %v6288
      %v6299 = vpack.c.bf16 %v6049, %v6048
      %v6300 = vpack.c.bf16 %v6267, %v6266
      %v6301 = vpack.c.bf16 %v6291, %v6290
      %v6302 = vpack.c.bf16 %v6051, %v6050
      %v6303 = vpack.c.bf16 %v6269, %v6268
      %v6304 = vpack.c.bf16 %v6293, %v6292
      %v6305 = vpack.c.bf16 %v6053, %v6052
      %v6306 = vld [vmem:[%s5] sm:$0xf]
      %v6307 = vld [vmem:[%s5 + $0x4] sm:$0xf]
      %v6308 = vld [vmem:[%s5 + $0x8] sm:$0xf]
      %v6309 = vld [vmem:[%s5 + $0xc] sm:$0xf]
      %v6310 = vld [vmem:[%s5 + $0x10] sm:$0xf]
      %v6311 = vld [vmem:[%s5 + $0x14] sm:$0xf]
      %v6312 = vld [vmem:[%s5 + $0x18] sm:$0xf]
      %v6313 = vld [vmem:[%s5 + $0x1c] sm:$0xf]
      %v6314 = vld [vmem:[%s5 + $0x20] sm:$0xf]
      %v6315 = vld [vmem:[%s5 + $0x24] sm:$0xf]
      %v6316 = vld [vmem:[%s5 + $0x28] sm:$0xf]
      %v6317 = vld [vmem:[%s5 + $0x2c] sm:$0xf]
      %v6318 = vld [vmem:[%s5 + $0x30] sm:$0xf]
      %v6319 = vld [vmem:[%s5 + $0x34] sm:$0xf]
      %v6320 = vld [vmem:[%s5 + $0x38] sm:$0xf]
      %v6321 = vld [vmem:[%s5 + $0x3c] sm:$0xf]
      %v6322 = vld [vmem:[%s5 + $0x40] sm:$0xf]
      %v6323 = vld [vmem:[%s5 + $0x44] sm:$0xf]
      %v6324 = vld [vmem:[%s5 + $0x48] sm:$0xf]
      %v6325 = vld [vmem:[%s5 + $0x4c] sm:$0xf]
      %v6326 = vld [vmem:[%s5 + $0x50] sm:$0xf]
      %v6327 = vld [vmem:[%s5 + $0x54] sm:$0xf]
      %v6328 = vld [vmem:[%s5 + $0x58] sm:$0xf]
      %v6329 = vld [vmem:[%s5 + $0x5c] sm:$0xf]
      %v6330 = vld [vmem:[%s5 + $0x60] sm:$0xf]
      %v6331 = vld [vmem:[%s5 + $0x64] sm:$0xf]
      %v6332 = vld [vmem:[%s5 + $0x68] sm:$0xf]
      %v6333 = vld [vmem:[%s5 + $0x6c] sm:$0xf]
      %v6334 = vld [vmem:[%s5 + $0x70] sm:$0xf]
      %v6335 = vld [vmem:[%s5 + $0x74] sm:$0xf]
      %v6336 = vld [vmem:[%s5 + $0x78] sm:$0xf]
      %v6337 = vld [vmem:[%s5 + $0x7c] sm:$0xf]
      %v6338 = vld [vmem:[%s5 + $0x80] sm:$0xf]
      %v6339 = vld [vmem:[%s5 + $0x84] sm:$0xf]
      %v6340 = vld [vmem:[%s5 + $0x88] sm:$0xf]
      %v6341 = vld [vmem:[%s5 + $0x8c] sm:$0xf]
      %v6342 = vld [vmem:[%s6] sm:$0x1]
      %v6344 = vlaneseq
      %v6345 = vshrl.u32 %v6344, 7
      %v6346 = vsub.s32 0, %v6345
      %v6347 = vrot.slane %v6342, %v6346
      %v6385 = vunpack.c.l.b16 %v6306
      %v6386 = vunpack.c.l.b16 %v6307
      %v6387 = vunpack.c.l.b16 %v6308
      %v6388 = vunpack.c.l.b16 %v6309
      %v6389 = vunpack.c.l.b16 %v6310
      %v6390 = vunpack.c.l.b16 %v6311
      %v6391 = vunpack.c.l.b16 %v6312
      %v6392 = vunpack.c.l.b16 %v6313
      %v6393 = vunpack.c.l.b16 %v6314
      %v6394 = vunpack.c.l.b16 %v6315
      %v6395 = vunpack.c.l.b16 %v6316
      %v6396 = vunpack.c.l.b16 %v6317
      %v6397 = vunpack.c.l.b16 %v6318
      %v6398 = vunpack.c.l.b16 %v6319
      %v6399 = vunpack.c.l.b16 %v6320
      %v6400 = vunpack.c.l.b16 %v6321
      %v6401 = vunpack.c.l.b16 %v6322
      %v6402 = vunpack.c.l.b16 %v6323
      %v6403 = vunpack.c.l.b16 %v6324
      %v6404 = vunpack.c.l.b16 %v6325
      %v6405 = vunpack.c.l.b16 %v6326
      %v6406 = vunpack.c.l.b16 %v6327
      %v6407 = vunpack.c.l.b16 %v6328
      %v6408 = vunpack.c.l.b16 %v6329
      %v6409 = vunpack.c.l.b16 %v6330
      %v6410 = vunpack.c.l.b16 %v6331
      %v6411 = vunpack.c.l.b16 %v6332
      %v6412 = vunpack.c.l.b16 %v6333
      %v6413 = vunpack.c.l.b16 %v6334
      %v6414 = vunpack.c.l.b16 %v6335
      %v6415 = vunpack.c.l.b16 %v6336
      %v6416 = vunpack.c.l.b16 %v6337
      %v6417 = vunpack.c.l.b16 %v6338
      %v6418 = vunpack.c.l.b16 %v6339
      %v6419 = vunpack.c.l.b16 %v6340
      %v6420 = vunpack.c.l.b16 %v6341
      %v6421 = vpack.c.b16 %v6386, %v6385
      %v6422 = vpack.c.b16 %v6388, %v6387
      %v6423 = vpack.c.b16 %v6390, %v6389
      %v6424 = vpack.c.b16 %v6392, %v6391
      %v6425 = vpack.c.b16 %v6394, %v6393
      %v6426 = vpack.c.b16 %v6396, %v6395
      %v6427 = vpack.c.b16 %v6398, %v6397
      %v6428 = vpack.c.b16 %v6400, %v6399
      %v6429 = vpack.c.b16 %v6402, %v6401
      %v6430 = vpack.c.b16 %v6404, %v6403
      %v6431 = vpack.c.b16 %v6406, %v6405
      %v6432 = vpack.c.b16 %v6408, %v6407
      %v6433 = vpack.c.b16 %v6410, %v6409
      %v6434 = vpack.c.b16 %v6412, %v6411
      %v6435 = vpack.c.b16 %v6414, %v6413
      %v6436 = vpack.c.b16 %v6416, %v6415
      %v6437 = vpack.c.b16 %v6418, %v6417
      %v6438 = vpack.c.b16 %v6420, %v6419
      %v6458 = vsel %vm390, %v6296, 0
      %v6461 = vsel %vm390, %v6299, 0
      %v6464 = vsel %vm390, %v6302, 0
      %v6467 = vsel %vm390, %v6305, 0
      %6469 = vmatprep.subr.bf16.mxu0 0
      %6470 = vmatpush1.bf16.msra.mxu0 %v6421
      %6471 = vmatprep.subr.bf16.mxu0 0
      %6472 = vmatpush1.bf16.msra.mxu0 %v6422
      %6473 = vmatprep.subr.bf16.mxu0 0
      %6474 = vmatpush1.bf16.msra.mxu0 %v6423
      %6475 = vmatprep.subr.bf16.mxu0 0
      %6476 = vmatpush1.bf16.msra.mxu0 %v6424
      %6477 = vmatprep.subr.bf16.mxu0 0
      %6478 = vmatpush1.bf16.msra.mxu0 %v6425
      %6479 = vmatprep.subr.bf16.mxu0 0
      %6480 = vmatpush1.bf16.msra.mxu0 %v6426
      %6481 = vmatprep.subr.bf16.mxu0 0
      %6482 = vmatpush1.bf16.msra.mxu0 %v6427
      %6483 = vmatprep.subr.bf16.mxu0 0
      %6484 = vmatpush1.bf16.msra.mxu0 %v6428
      %6485 = vmatprep.subr.bf16.mxu0 0
      %6486 = vmatpush1.bf16.msra.mxu0 %v6429
      %6487 = vmatprep.subr.bf16.mxu0 0
      %6488 = vmatpush1.bf16.msra.mxu0 %v6430
      %6489 = vmatprep.subr.bf16.mxu0 0
      %6490 = vmatpush1.bf16.msra.mxu0 %v6431
      %6491 = vmatprep.subr.bf16.mxu0 0
      %6492 = vmatpush1.bf16.msra.mxu0 %v6432
      %6493 = vmatprep.subr.bf16.mxu0 0
      %6494 = vmatpush1.bf16.msra.mxu0 %v6433
      %6495 = vmatprep.subr.bf16.mxu0 0
      %6496 = vmatpush1.bf16.msra.mxu0 %v6434
      %6497 = vmatprep.subr.bf16.mxu0 0
      %6498 = vmatpush1.bf16.msra.mxu0 %v6435
      %6499 = vmatprep.subr.bf16.mxu0 0
      %6500 = vmatpush1.bf16.msra.mxu0 %v6436
      %6501 = vmatprep.mubr.bf16.mxu0 %v6295
      %6502 = vmatmul.mubr.bf16.gmra.mrb[0].mxu0 %v6294
      %v6503 = vpop.f32.mrb[0].mxu0
      %v6504 = vadd.f32 %v6347, %v6503
      %v6505 = vpop.f32.mrb[0].mxu0
      %v6506 = vpop.f32.mrb[0].mxu0
      %v6507 = vadd.f32 %v6347, %v6506
      %v6508 = vpop.f32.mrb[0].mxu0
      %6509 = vmatprep.mubr.bf16.mxu0 %v6298
      %6510 = vmatmul.mubr.bf16.gmra.mrb[0].mxu0 %v6297
      %v6511 = vpop.f32.mrb[0].mxu0
      %v6512 = vadd.f32 %v6347, %v6511
      %v6513 = vpop.f32.mrb[0].mxu0
      %v6514 = vpop.f32.mrb[0].mxu0
      %v6515 = vadd.f32 %v6347, %v6514
      %v6516 = vpop.f32.mrb[0].mxu0
      %6517 = vmatprep.mubr.bf16.mxu0 %v6301
      %6518 = vmatmul.mubr.bf16.gmra.mrb[0].mxu0 %v6300
      %v6519 = vpop.f32.mrb[0].mxu0
      %v6520 = vadd.f32 %v6347, %v6519
      %v6521 = vpop.f32.mrb[0].mxu0
      %v6522 = vpop.f32.mrb[0].mxu0
      %v6523 = vadd.f32 %v6347, %v6522
      %v6524 = vpop.f32.mrb[0].mxu0
      %6525 = vmatprep.mubr.bf16.mxu0 %v6304
      %6526 = vmatmul.mubr.bf16.gmra.mrb[0].mxu0 %v6303
      %v6527 = vpop.f32.mrb[0].mxu0
      %v6528 = vadd.f32 %v6347, %v6527
      %v6529 = vpop.f32.mrb[0].mxu0
      %v6530 = vpop.f32.mrb[0].mxu0
      %v6531 = vadd.f32 %v6347, %v6530
      %v6532 = vpop.f32.mrb[0].mxu0
      %6533 = vdwg.mxu0
      %6534 = vmatprep.subr.bf16.mxu0 0
      %6535 = vmatpush1.bf16.msra.mxu0 %v6437
      %6536 = vmatprep.subr.bf16.mxu0 0
      %6537 = vmatpush1.bf16.msra.mxu0 %v6438
      %6538 = vmatprep.subr.bf16.mxu0 0
      %6539 = vmatpush1.bf16.msra.mxu0 0
      %6540 = vmatprep.subr.bf16.mxu0 0
      %6541 = vmatpush1.bf16.msra.mxu0 0
      %6542 = vmatprep.subr.bf16.mxu0 0
      %6543 = vmatpush1.bf16.msra.mxu0 0
      %6544 = vmatprep.subr.bf16.mxu0 0
      %6545 = vmatpush1.bf16.msra.mxu0 0
      %6546 = vmatprep.subr.bf16.mxu0 0
      %6547 = vmatpush1.bf16.msra.mxu0 0
      %6548 = vmatprep.subr.bf16.mxu0 0
      %6549 = vmatpush1.bf16.msra.mxu0 0
      %6550 = vmatprep.subr.bf16.mxu0 0
      %6551 = vmatpush1.bf16.msra.mxu0 0
      %6552 = vmatprep.subr.bf16.mxu0 0
      %6553 = vmatpush1.bf16.msra.mxu0 0
      %6554 = vmatprep.subr.bf16.mxu0 0
      %6555 = vmatpush1.bf16.msra.mxu0 0
      %6556 = vmatprep.subr.bf16.mxu0 0
      %6557 = vmatpush1.bf16.msra.mxu0 0
      %6558 = vmatprep.subr.bf16.mxu0 0
      %6559 = vmatpush1.bf16.msra.mxu0 0
      %6560 = vmatprep.subr.bf16.mxu0 0
      %6561 = vmatpush1.bf16.msra.mxu0 0
      %6562 = vmatprep.subr.bf16.mxu0 0
      %6563 = vmatpush1.bf16.msra.mxu0 0
      %6564 = vmatprep.subr.bf16.mxu0 0
      %6565 = vmatpush1.bf16.msra.mxu0 0
      %6566 = vmatprep.mubr.bf16.mxu0 0
      %6567 = vmatmul.mubr.bf16.gmra.mrb[0].mxu0 %v6458
      %v6568 = vpop.f32.mrb[0].mxu0
      %v6569 = vadd.f32 %v6504, %v6568
      %v6570 = vpop.f32.mrb[0].mxu0
      %v6571 = vpop.f32.mrb[0].mxu0
      %v6572 = vadd.f32 %v6507, %v6571
      %v6573 = vpop.f32.mrb[0].mxu0
      %6574 = vmatprep.mubr.bf16.mxu0 0
      %6575 = vmatmul.mubr.bf16.gmra.mrb[0].mxu0 %v6461
      %v6576 = vpop.f32.mrb[0].mxu0
      %v6577 = vadd.f32 %v6512, %v6576
      %v6578 = vpop.f32.mrb[0].mxu0
      %v6579 = vpop.f32.mrb[0].mxu0
      %v6580 = vadd.f32 %v6515, %v6579
      %v6581 = vpop.f32.mrb[0].mxu0
      %6582 = vmatprep.mubr.bf16.mxu0 0
      %6583 = vmatmul.mubr.bf16.gmra.mrb[0].mxu0 %v6464
      %v6584 = vpop.f32.mrb[0].mxu0
      %v6585 = vadd.f32 %v6520, %v6584
      %v6586 = vpop.f32.mrb[0].mxu0
      %v6587 = vpop.f32.mrb[0].mxu0
      %v6588 = vadd.f32 %v6523, %v6587
      %v6589 = vpop.f32.mrb[0].mxu0
      %6590 = vmatprep.mubr.bf16.mxu0 0
      %6591 = vmatmul.mubr.bf16.gmra.mrb[0].mxu0 %v6467
      %v6592 = vpop.f32.mrb[0].mxu0
      %v6593 = vadd.f32 %v6528, %v6592
      %v6594 = vpop.f32.mrb[0].mxu0
      %v6595 = vpop.f32.mrb[0].mxu0
      %v6596 = vadd.f32 %v6531, %v6595
      %v6597 = vpop.f32.mrb[0].mxu0
      %6598 = vdwg.mxu0
      %v6599 = vmax.f32 %v6569, 0.0
      %v6600 = vmax.f32 %v6572, 0.0
      %v6601 = vmax.f32 %v6577, 0.0
      %v6602 = vmax.f32 %v6580, 0.0
      %v6603 = vmax.f32 %v6585, 0.0
      %v6604 = vmax.f32 %v6588, 0.0
      %v6605 = vmax.f32 %v6593, 0.0
      %v6606 = vmax.f32 %v6596, 0.0
      %s6607 = scalar_lea.vmem [#allocation5], 16
      %6608 = vst.msk [vmem:[%s6607 + $0x1] sm:$0xff] %vm466, %v6599
      %6609 = vst.msk [vmem:[%s6607 + $0x11] sm:$0xff] %vm466, %v6600
      %6610 = vst.msk [vmem:[%s6607 + $0x21] sm:$0xff] %vm466, %v6601
      %6611 = vst.msk [vmem:[%s6607 + $0x31] sm:$0xff] %vm466, %v6602
      %6612 = vst.msk [vmem:[%s6607 + $0x41] sm:$0xff] %vm466, %v6603
      %6613 = vst.msk [vmem:[%s6607 + $0x51] sm:$0xff] %vm466, %v6604
      %6614 = vst.msk [vmem:[%s6607 + $0x61] sm:$0xff] %vm466, %v6605
      %6615 = vst.msk [vmem:[%s6607 + $0x71] sm:$0xff] %vm466, %v6606
      %v6616 = vld [vmem:[#allocation5] sm:$0xff]
      %v6617 = vld [vmem:[#allocation5 + $0x10] sm:$0xff]
      %v6618 = vld [vmem:[#allocation5 + $0x20] sm:$0xff]
      %v6619 = vld [vmem:[#allocation5 + $0x30] sm:$0xff]
      %v6620 = vld [vmem:[#allocation5 + $0x40] sm:$0xff]
      %v6621 = vld [vmem:[#allocation5 + $0x50] sm:$0xff]
      %v6622 = vld [vmem:[#allocation5 + $0x60] sm:$0xff]
      %v6623 = vld [vmem:[#allocation5 + $0x70] sm:$0xff]
      %v6624 = vld [vmem:[#allocation5 + $0x1] sm:$0xff]
      %v6625 = vld [vmem:[#allocation5 + $0x11] sm:$0xff]
      %v6626 = vld [vmem:[#allocation5 + $0x21] sm:$0xff]
      %v6627 = vld [vmem:[#allocation5 + $0x31] sm:$0xff]
      %v6628 = vld [vmem:[#allocation5 + $0x41] sm:$0xff]
      %v6629 = vld [vmem:[#allocation5 + $0x51] sm:$0xff]
      %v6630 = vld [vmem:[#allocation5 + $0x61] sm:$0xff]
      %v6631 = vld [vmem:[#allocation5 + $0x71] sm:$0xff]
      %v6632 = vld [vmem:[#allocation5 + $0x2] sm:$0xff]
      %v6633 = vld [vmem:[#allocation5 + $0x12] sm:$0xff]
      %v6634 = vld [vmem:[#allocation5 + $0x22] sm:$0xff]
      %v6635 = vld [vmem:[#allocation5 + $0x32] sm:$0xff]
      %v6636 = vld [vmem:[#allocation5 + $0x42] sm:$0xff]
      %v6637 = vld [vmem:[#allocation5 + $0x52] sm:$0xff]
      %v6638 = vld [vmem:[#allocation5 + $0x62] sm:$0xff]
      %v6639 = vld [vmem:[#allocation5 + $0x72] sm:$0xff]
      %v6640 = vld [vmem:[%s6607] sm:$0xff]
      %v6641 = vld [vmem:[%s6607 + $0x10] sm:$0xff]
      %v6642 = vld [vmem:[%s6607 + $0x20] sm:$0xff]
      %v6643 = vld [vmem:[%s6607 + $0x30] sm:$0xff]
      %v6644 = vld [vmem:[%s6607 + $0x40] sm:$0xff]
      %v6645 = vld [vmem:[%s6607 + $0x50] sm:$0xff]
      %v6646 = vld [vmem:[%s6607 + $0x60] sm:$0xff]
      %v6647 = vld [vmem:[%s6607 + $0x70] sm:$0xff]
      %v6648 = vld [vmem:[%s6607 + $0x1] sm:$0xff]
      %v6649 = vld [vmem:[%s6607 + $0x11] sm:$0xff]
      %v6650 = vld [vmem:[%s6607 + $0x21] sm:$0xff]
      %v6651 = vld [vmem:[%s6607 + $0x31] sm:$0xff]
      %v6652 = vld [vmem:[%s6607 + $0x41] sm:$0xff]
      %v6653 = vld [vmem:[%s6607 + $0x51] sm:$0xff]
      %v6654 = vld [vmem:[%s6607 + $0x61] sm:$0xff]
      %v6655 = vld [vmem:[%s6607 + $0x71] sm:$0xff]
      %v6656 = vld [vmem:[%s6607 + $0x2] sm:$0xff]
      %v6657 = vld [vmem:[%s6607 + $0x12] sm:$0xff]
      %v6658 = vld [vmem:[%s6607 + $0x22] sm:$0xff]
      %v6659 = vld [vmem:[%s6607 + $0x32] sm:$0xff]
      %v6660 = vld [vmem:[%s6607 + $0x42] sm:$0xff]
      %v6661 = vld [vmem:[%s6607 + $0x52] sm:$0xff]
      %v6662 = vld [vmem:[%s6607 + $0x62] sm:$0xff]
      %v6663 = vld [vmem:[%s6607 + $0x72] sm:$0xff]
      %s6664 = scalar_lea.vmem [#allocation5], 32
      %v6665 = vld [vmem:[%s6664] sm:$0xff]
      %v6666 = vld [vmem:[%s6664 + $0x10] sm:$0xff]
      %v6667 = vld [vmem:[%s6664 + $0x20] sm:$0xff]
      %v6668 = vld [vmem:[%s6664 + $0x30] sm:$0xff]
      %v6669 = vld [vmem:[%s6664 + $0x40] sm:$0xff]
      %v6670 = vld [vmem:[%s6664 + $0x50] sm:$0xff]
      %v6671 = vld [vmem:[%s6664 + $0x60] sm:$0xff]
      %v6672 = vld [vmem:[%s6664 + $0x70] sm:$0xff]
      %v6673 = vld [vmem:[%s6664 + $0x1] sm:$0xff]
      %v6674 = vld [vmem:[%s6664 + $0x11] sm:$0xff]
      %v6675 = vld [vmem:[%s6664 + $0x21] sm:$0xff]
      %v6676 = vld [vmem:[%s6664 + $0x31] sm:$0xff]
      %v6677 = vld [vmem:[%s6664 + $0x41] sm:$0xff]
      %v6678 = vld [vmem:[%s6664 + $0x51] sm:$0xff]
      %v6679 = vld [vmem:[%s6664 + $0x61] sm:$0xff]
      %v6680 = vld [vmem:[%s6664 + $0x71] sm:$0xff]
      %v6681 = vld [vmem:[%s6664 + $0x2] sm:$0xff]
      %v6682 = vld [vmem:[%s6664 + $0x12] sm:$0xff]
      %v6683 = vld [vmem:[%s6664 + $0x22] sm:$0xff]
      %v6684 = vld [vmem:[%s6664 + $0x32] sm:$0xff]
      %v6685 = vld [vmem:[%s6664 + $0x42] sm:$0xff]
      %v6686 = vld [vmem:[%s6664 + $0x52] sm:$0xff]
      %v6687 = vld [vmem:[%s6664 + $0x62] sm:$0xff]
      %v6688 = vld [vmem:[%s6664 + $0x72] sm:$0xff]
      %6697 = vrot.lane.b32.xlu0 %v6624, 64
      %v6698 = vpop.permute.xlu0 %6697
      %6699 = vrot.lane.b32.xlu0 %v6625, 64
      %v6700 = vpop.permute.xlu0 %6699
      %6701 = vrot.lane.b32.xlu0 %v6626, 64
      %v6702 = vpop.permute.xlu0 %6701
      %6703 = vrot.lane.b32.xlu0 %v6627, 64
      %v6704 = vpop.permute.xlu0 %6703
      %6705 = vrot.lane.b32.xlu0 %v6628, 64
      %v6706 = vpop.permute.xlu0 %6705
      %6707 = vrot.lane.b32.xlu0 %v6629, 64
      %v6708 = vpop.permute.xlu0 %6707
      %6709 = vrot.lane.b32.xlu0 %v6630, 64
      %v6710 = vpop.permute.xlu0 %6709
      %6711 = vrot.lane.b32.xlu0 %v6631, 64
      %v6712 = vpop.permute.xlu0 %6711
      %6729 = vrot.lane.b32.xlu0 %v6640, 64
      %v6730 = vpop.permute.xlu0 %6729
      %6731 = vrot.lane.b32.xlu0 %v6641, 64
      %v6732 = vpop.permute.xlu0 %6731
      %6733 = vrot.lane.b32.xlu0 %v6642, 64
      %v6734 = vpop.permute.xlu0 %6733
      %6735 = vrot.lane.b32.xlu0 %v6643, 64
      %v6736 = vpop.permute.xlu0 %6735
      %6737 = vrot.lane.b32.xlu0 %v6644, 64
      %v6738 = vpop.permute.xlu0 %6737
      %6739 = vrot.lane.b32.xlu0 %v6645, 64
      %v6740 = vpop.permute.xlu0 %6739
      %6741 = vrot.lane.b32.xlu0 %v6646, 64
      %v6742 = vpop.permute.xlu0 %6741
      %6743 = vrot.lane.b32.xlu0 %v6647, 64
      %v6744 = vpop.permute.xlu0 %6743
      %6761 = vrot.lane.b32.xlu0 %v6656, 64
      %v6762 = vpop.permute.xlu0 %6761
      %6763 = vrot.lane.b32.xlu0 %v6657, 64
      %v6764 = vpop.permute.xlu0 %6763
      %6765 = vrot.lane.b32.xlu0 %v6658, 64
      %v6766 = vpop.permute.xlu0 %6765
      %6767 = vrot.lane.b32.xlu0 %v6659, 64
      %v6768 = vpop.permute.xlu0 %6767
      %6769 = vrot.lane.b32.xlu0 %v6660, 64
      %v6770 = vpop.permute.xlu0 %6769
      %6771 = vrot.lane.b32.xlu0 %v6661, 64
      %v6772 = vpop.permute.xlu0 %6771
      %6773 = vrot.lane.b32.xlu0 %v6662, 64
      %v6774 = vpop.permute.xlu0 %6773
      %6775 = vrot.lane.b32.xlu0 %v6663, 64
      %v6776 = vpop.permute.xlu0 %6775
      %6793 = vrot.lane.b32.xlu0 %v6673, 64
      %v6794 = vpop.permute.xlu0 %6793
      %6795 = vrot.lane.b32.xlu0 %v6674, 64
      %v6796 = vpop.permute.xlu0 %6795
      %6797 = vrot.lane.b32.xlu0 %v6675, 64
      %v6798 = vpop.permute.xlu0 %6797
      %6799 = vrot.lane.b32.xlu0 %v6676, 64
      %v6800 = vpop.permute.xlu0 %6799
      %6801 = vrot.lane.b32.xlu0 %v6677, 64
      %v6802 = vpop.permute.xlu0 %6801
      %6803 = vrot.lane.b32.xlu0 %v6678, 64
      %v6804 = vpop.permute.xlu0 %6803
      %6805 = vrot.lane.b32.xlu0 %v6679, 64
      %v6806 = vpop.permute.xlu0 %6805
      %6807 = vrot.lane.b32.xlu0 %v6680, 64
      %v6808 = vpop.permute.xlu0 %6807
      %v6817 = vsel %vm466, %v6616, %v6698
      %v6818 = vsel %vm466, %v6617, %v6700
      %v6819 = vsel %vm466, %v6618, %v6702
      %v6820 = vsel %vm466, %v6619, %v6704
      %v6821 = vsel %vm466, %v6620, %v6706
      %v6822 = vsel %vm466, %v6621, %v6708
      %v6823 = vsel %vm466, %v6622, %v6710
      %v6824 = vsel %vm466, %v6623, %v6712
      %v6825 = vsel %vm466, %v6632, %v6730
      %v6826 = vsel %vm466, %v6633, %v6732
      %v6827 = vsel %vm466, %v6634, %v6734
      %v6828 = vsel %vm466, %v6635, %v6736
      %v6829 = vsel %vm466, %v6636, %v6738
      %v6830 = vsel %vm466, %v6637, %v6740
      %v6831 = vsel %vm466, %v6638, %v6742
      %v6832 = vsel %vm466, %v6639, %v6744
      %v6833 = vsel %vm466, %v6648, %v6762
      %v6834 = vsel %vm466, %v6649, %v6764
      %v6835 = vsel %vm466, %v6650, %v6766
      %v6836 = vsel %vm466, %v6651, %v6768
      %v6837 = vsel %vm466, %v6652, %v6770
      %v6838 = vsel %vm466, %v6653, %v6772
      %v6839 = vsel %vm466, %v6654, %v6774
      %v6840 = vsel %vm466, %v6655, %v6776
      %v6841 = vsel %vm466, %v6665, %v6794
      %v6842 = vsel %vm466, %v6666, %v6796
      %v6843 = vsel %vm466, %v6667, %v6798
      %v6844 = vsel %vm466, %v6668, %v6800
      %v6845 = vsel %vm466, %v6669, %v6802
      %v6846 = vsel %vm466, %v6670, %v6804
      %v6847 = vsel %vm466, %v6671, %v6806
      %v6848 = vsel %vm466, %v6672, %v6808
      %v6849 = vpack.c.bf16 %v6818, %v6817
      %v6850 = vpack.c.bf16 %v6826, %v6825
      %v6851 = vpack.c.bf16 %v6834, %v6833
      %v6852 = vpack.c.bf16 %v6842, %v6841
      %v6853 = vpack.c.bf16 %v6682, %v6681
      %v6854 = vpack.c.bf16 %v6820, %v6819
      %v6855 = vpack.c.bf16 %v6828, %v6827
      %v6856 = vpack.c.bf16 %v6836, %v6835
      %v6857 = vpack.c.bf16 %v6844, %v6843
      %v6858 = vpack.c.bf16 %v6684, %v6683
      %v6859 = vpack.c.bf16 %v6822, %v6821
      %v6860 = vpack.c.bf16 %v6830, %v6829
      %v6861 = vpack.c.bf16 %v6838, %v6837
      %v6862 = vpack.c.bf16 %v6846, %v6845
      %v6863 = vpack.c.bf16 %v6686, %v6685
      %v6864 = vpack.c.bf16 %v6824, %v6823
      %v6865 = vpack.c.bf16 %v6832, %v6831
      %v6866 = vpack.c.bf16 %v6840, %v6839
      %v6867 = vpack.c.bf16 %v6848, %v6847
      %v6868 = vpack.c.bf16 %v6688, %v6687
      %v6869 = vld [vmem:[%s7] sm:$0xf]
      %v6870 = vld [vmem:[%s7 + $0x4] sm:$0xf]
      %v6871 = vld [vmem:[%s7 + $0x8] sm:$0xf]
      %v6872 = vld [vmem:[%s7 + $0xc] sm:$0xf]
      %v6873 = vld [vmem:[%s7 + $0x10] sm:$0xf]
      %v6874 = vld [vmem:[%s7 + $0x14] sm:$0xf]
      %v6875 = vld [vmem:[%s7 + $0x18] sm:$0xf]
      %v6876 = vld [vmem:[%s7 + $0x1c] sm:$0xf]
      %v6877 = vld [vmem:[%s7 + $0x20] sm:$0xf]
      %v6878 = vld [vmem:[%s7 + $0x24] sm:$0xf]
      %v6879 = vld [vmem:[%s7 + $0x28] sm:$0xf]
      %v6880 = vld [vmem:[%s7 + $0x2c] sm:$0xf]
      %v6881 = vld [vmem:[%s7 + $0x30] sm:$0xf]
      %v6882 = vld [vmem:[%s7 + $0x34] sm:$0xf]
      %v6883 = vld [vmem:[%s7 + $0x38] sm:$0xf]
      %v6884 = vld [vmem:[%s7 + $0x3c] sm:$0xf]
      %v6885 = vld [vmem:[%s7 + $0x40] sm:$0xf]
      %v6886 = vld [vmem:[%s7 + $0x44] sm:$0xf]
      %v6887 = vld [vmem:[%s7 + $0x48] sm:$0xf]
      %v6888 = vld [vmem:[%s7 + $0x4c] sm:$0xf]
      %v6889 = vld [vmem:[%s7 + $0x50] sm:$0xf]
      %v6890 = vld [vmem:[%s7 + $0x54] sm:$0xf]
      %v6891 = vld [vmem:[%s7 + $0x58] sm:$0xf]
      %v6892 = vld [vmem:[%s7 + $0x5c] sm:$0xf]
      %v6893 = vld [vmem:[%s7 + $0x60] sm:$0xf]
      %v6894 = vld [vmem:[%s7 + $0x64] sm:$0xf]
      %v6895 = vld [vmem:[%s7 + $0x68] sm:$0xf]
      %v6896 = vld [vmem:[%s7 + $0x6c] sm:$0xf]
      %v6897 = vld [vmem:[%s7 + $0x70] sm:$0xf]
      %v6898 = vld [vmem:[%s7 + $0x74] sm:$0xf]
      %v6899 = vld [vmem:[%s7 + $0x78] sm:$0xf]
      %v6900 = vld [vmem:[%s7 + $0x7c] sm:$0xf]
      %v6901 = vld [vmem:[%s7 + $0x80] sm:$0xf]
      %v6902 = vld [vmem:[%s7 + $0x84] sm:$0xf]
      %v6903 = vld [vmem:[%s7 + $0x88] sm:$0xf]
      %v6904 = vld [vmem:[%s7 + $0x8c] sm:$0xf]
      %v6905 = vld [vmem:[%s7 + $0x90] sm:$0xf]
      %v6906 = vld [vmem:[%s7 + $0x94] sm:$0xf]
      %v6907 = vld [vmem:[%s7 + $0x98] sm:$0xf]
      %v6908 = vld [vmem:[%s7 + $0x9c] sm:$0xf]
      %v6909 = vld [vmem:[%s7 + $0xa0] sm:$0xf]
      %v6910 = vld [vmem:[%s7 + $0xa4] sm:$0xf]
      %v6911 = vld [vmem:[%s7 + $0xa8] sm:$0xf]
      %v6912 = vld [vmem:[%s7 + $0xac] sm:$0xf]
      %v6913 = vld [vmem:[%s7 + $0xb0] sm:$0xf]
      %v6914 = vld [vmem:[%s7 + $0xb4] sm:$0xf]
      %v6915 = vld [vmem:[%s7 + $0xb8] sm:$0xf]
      %v6916 = vld [vmem:[%s7 + $0xbc] sm:$0xf]
      %v6917 = vld [vmem:[%s7 + $0xc0] sm:$0xf]
      %v6918 = vld [vmem:[%s7 + $0xc4] sm:$0xf]
      %v6919 = vld [vmem:[%s7 + $0xc8] sm:$0xf]
      %v6920 = vld [vmem:[%s7 + $0xcc] sm:$0xf]
      %v6921 = vld [vmem:[%s7 + $0xd0] sm:$0xf]
      %v6922 = vld [vmem:[%s7 + $0xd4] sm:$0xf]
      %v6923 = vld [vmem:[%s7 + $0xd8] sm:$0xf]
      %v6924 = vld [vmem:[%s7 + $0xdc] sm:$0xf]
      %v6925 = vld [vmem:[%s7 + $0xe0] sm:$0xf]
      %v6926 = vld [vmem:[%s7 + $0xe4] sm:$0xf]
      %v6927 = vld [vmem:[%s7 + $0xe8] sm:$0xf]
      %v6928 = vld [vmem:[%s7 + $0xec] sm:$0xf]
      %v6929 = vld [vmem:[%s7 + $0xf0] sm:$0xf]
      %v6930 = vld [vmem:[%s7 + $0xf4] sm:$0xf]
      %v6931 = vld [vmem:[%s7 + $0xf8] sm:$0xf]
      %v6932 = vld [vmem:[%s7 + $0xfc] sm:$0xf]
      %v6933 = vld [vmem:[%s7 + $0x100] sm:$0xf]
      %v6934 = vld [vmem:[%s7 + $0x104] sm:$0xf]
      %v6935 = vld [vmem:[%s7 + $0x108] sm:$0xf]
      %v6936 = vld [vmem:[%s7 + $0x10c] sm:$0xf]
      %v6937 = vld [vmem:[%s7 + $0x110] sm:$0xf]
      %v6938 = vld [vmem:[%s7 + $0x114] sm:$0xf]
      %v6939 = vld [vmem:[%s7 + $0x118] sm:$0xf]
      %v6940 = vld [vmem:[%s7 + $0x11c] sm:$0xf]
      %v6941 = vld [vmem:[%s8] sm:$0x1]
      %v6943 = vlaneseq
      %v6944 = vshrl.u32 %v6943, 7
      %v6945 = vsub.s32 0, %v6944
      %v6946 = vrot.slane %v6941, %v6945
      %v7020 = vunpack.c.l.b16 %v6869
      %v7021 = vunpack.c.l.b16 %v6870
      %v7022 = vunpack.c.l.b16 %v6871
      %v7023 = vunpack.c.l.b16 %v6872
      %v7024 = vunpack.c.l.b16 %v6873
      %v7025 = vunpack.c.l.b16 %v6874
      %v7026 = vunpack.c.l.b16 %v6875
      %v7027 = vunpack.c.l.b16 %v6876
      %v7028 = vunpack.c.l.b16 %v6877
      %v7029 = vunpack.c.l.b16 %v6878
      %v7030 = vunpack.c.l.b16 %v6879
      %v7031 = vunpack.c.l.b16 %v6880
      %v7032 = vunpack.c.l.b16 %v6881
      %v7033 = vunpack.c.l.b16 %v6882
      %v7034 = vunpack.c.l.b16 %v6883
      %v7035 = vunpack.c.l.b16 %v6884
      %v7036 = vunpack.c.l.b16 %v6885
      %v7037 = vunpack.c.l.b16 %v6886
      %v7038 = vunpack.c.l.b16 %v6887
      %v7039 = vunpack.c.l.b16 %v6888
      %v7040 = vunpack.c.l.b16 %v6889
      %v7041 = vunpack.c.l.b16 %v6890
      %v7042 = vunpack.c.l.b16 %v6891
      %v7043 = vunpack.c.l.b16 %v6892
      %v7044 = vunpack.c.l.b16 %v6893
      %v7045 = vunpack.c.l.b16 %v6894
      %v7046 = vunpack.c.l.b16 %v6895
      %v7047 = vunpack.c.l.b16 %v6896
      %v7048 = vunpack.c.l.b16 %v6897
      %v7049 = vunpack.c.l.b16 %v6898
      %v7050 = vunpack.c.l.b16 %v6899
      %v7051 = vunpack.c.l.b16 %v6900
      %v7052 = vunpack.c.l.b16 %v6901
      %v7053 = vunpack.c.l.b16 %v6902
      %v7054 = vunpack.c.l.b16 %v6903
      %v7055 = vunpack.c.l.b16 %v6904
      %v7056 = vunpack.c.l.b16 %v6905
      %v7057 = vunpack.c.l.b16 %v6906
      %v7058 = vunpack.c.l.b16 %v6907
      %v7059 = vunpack.c.l.b16 %v6908
      %v7060 = vunpack.c.l.b16 %v6909
      %v7061 = vunpack.c.l.b16 %v6910
      %v7062 = vunpack.c.l.b16 %v6911
      %v7063 = vunpack.c.l.b16 %v6912
      %v7064 = vunpack.c.l.b16 %v6913
      %v7065 = vunpack.c.l.b16 %v6914
      %v7066 = vunpack.c.l.b16 %v6915
      %v7067 = vunpack.c.l.b16 %v6916
      %v7068 = vunpack.c.l.b16 %v6917
      %v7069 = vunpack.c.l.b16 %v6918
      %v7070 = vunpack.c.l.b16 %v6919
      %v7071 = vunpack.c.l.b16 %v6920
      %v7072 = vunpack.c.l.b16 %v6921
      %v7073 = vunpack.c.l.b16 %v6922
      %v7074 = vunpack.c.l.b16 %v6923
      %v7075 = vunpack.c.l.b16 %v6924
      %v7076 = vunpack.c.l.b16 %v6925
      %v7077 = vunpack.c.l.b16 %v6926
      %v7078 = vunpack.c.l.b16 %v6927
      %v7079 = vunpack.c.l.b16 %v6928
      %v7080 = vunpack.c.l.b16 %v6929
      %v7081 = vunpack.c.l.b16 %v6930
      %v7082 = vunpack.c.l.b16 %v6931
      %v7083 = vunpack.c.l.b16 %v6932
      %v7084 = vunpack.c.l.b16 %v6933
      %v7085 = vunpack.c.l.b16 %v6934
      %v7086 = vunpack.c.l.b16 %v6935
      %v7087 = vunpack.c.l.b16 %v6936
      %v7088 = vunpack.c.l.b16 %v6937
      %v7089 = vunpack.c.l.b16 %v6938
      %v7090 = vunpack.c.l.b16 %v6939
      %v7091 = vunpack.c.l.b16 %v6940
      %v7092 = vpack.c.b16 %v7021, %v7020
      %v7093 = vpack.c.b16 %v7023, %v7022
      %v7094 = vpack.c.b16 %v7025, %v7024
      %v7095 = vpack.c.b16 %v7027, %v7026
      %v7096 = vpack.c.b16 %v7029, %v7028
      %v7097 = vpack.c.b16 %v7031, %v7030
      %v7098 = vpack.c.b16 %v7033, %v7032
      %v7099 = vpack.c.b16 %v7035, %v7034
      %v7100 = vpack.c.b16 %v7037, %v7036
      %v7101 = vpack.c.b16 %v7039, %v7038
      %v7102 = vpack.c.b16 %v7041, %v7040
      %v7103 = vpack.c.b16 %v7043, %v7042
      %v7104 = vpack.c.b16 %v7045, %v7044
      %v7105 = vpack.c.b16 %v7047, %v7046
      %v7106 = vpack.c.b16 %v7049, %v7048
      %v7107 = vpack.c.b16 %v7051, %v7050
      %v7108 = vpack.c.b16 %v7053, %v7052
      %v7109 = vpack.c.b16 %v7055, %v7054
      %v7110 = vpack.c.b16 %v7057, %v7056
      %v7111 = vpack.c.b16 %v7059, %v7058
      %v7112 = vpack.c.b16 %v7061, %v7060
      %v7113 = vpack.c.b16 %v7063, %v7062
      %v7114 = vpack.c.b16 %v7065, %v7064
      %v7115 = vpack.c.b16 %v7067, %v7066
      %v7116 = vpack.c.b16 %v7069, %v7068
      %v7117 = vpack.c.b16 %v7071, %v7070
      %v7118 = vpack.c.b16 %v7073, %v7072
      %v7119 = vpack.c.b16 %v7075, %v7074
      %v7120 = vpack.c.b16 %v7077, %v7076
      %v7121 = vpack.c.b16 %v7079, %v7078
      %v7122 = vpack.c.b16 %v7081, %v7080
      %v7123 = vpack.c.b16 %v7083, %v7082
      %v7124 = vpack.c.b16 %v7085, %v7084
      %v7125 = vpack.c.b16 %v7087, %v7086
      %v7126 = vpack.c.b16 %v7089, %v7088
      %v7127 = vpack.c.b16 %v7091, %v7090
      %v7165 = vsel %vm466, %v6853, 0
      %v7168 = vsel %vm466, %v6858, 0
      %v7171 = vsel %vm466, %v6863, 0
      %v7174 = vsel %vm466, %v6868, 0
      %7176 = vmatprep.subr.bf16.mxu0 0
      %7177 = vmatpush1.bf16.msra.mxu0 %v7092
      %7178 = vmatprep.subr.bf16.mxu0 0
      %7179 = vmatpush1.bf16.msra.mxu0 %v7093
      %7180 = vmatprep.subr.bf16.mxu0 0
      %7181 = vmatpush1.bf16.msra.mxu0 %v7094
      %7182 = vmatprep.subr.bf16.mxu0 0
      %7183 = vmatpush1.bf16.msra.mxu0 %v7095
      %7184 = vmatprep.subr.bf16.mxu0 0
      %7185 = vmatpush1.bf16.msra.mxu0 %v7096
      %7186 = vmatprep.subr.bf16.mxu0 0
      %7187 = vmatpush1.bf16.msra.mxu0 %v7097
      %7188 = vmatprep.subr.bf16.mxu0 0
      %7189 = vmatpush1.bf16.msra.mxu0 %v7098
      %7190 = vmatprep.subr.bf16.mxu0 0
      %7191 = vmatpush1.bf16.msra.mxu0 %v7099
      %7192 = vmatprep.subr.bf16.mxu0 0
      %7193 = vmatpush1.bf16.msra.mxu0 %v7100
      %7194 = vmatprep.subr.bf16.mxu0 0
      %7195 = vmatpush1.bf16.msra.mxu0 %v7101
      %7196 = vmatprep.subr.bf16.mxu0 0
      %7197 = vmatpush1.bf16.msra.mxu0 %v7102
      %7198 = vmatprep.subr.bf16.mxu0 0
      %7199 = vmatpush1.bf16.msra.mxu0 %v7103
      %7200 = vmatprep.subr.bf16.mxu0 0
      %7201 = vmatpush1.bf16.msra.mxu0 %v7104
      %7202 = vmatprep.subr.bf16.mxu0 0
      %7203 = vmatpush1.bf16.msra.mxu0 %v7105
      %7204 = vmatprep.subr.bf16.mxu0 0
      %7205 = vmatpush1.bf16.msra.mxu0 %v7106
      %7206 = vmatprep.subr.bf16.mxu0 0
      %7207 = vmatpush1.bf16.msra.mxu0 %v7107
      %7208 = vmatprep.mubr.bf16.mxu0 %v6850
      %7209 = vmatmul.mubr.bf16.gmra.mrb[0].mxu0 %v6849
      %v7210 = vpop.f32.mrb[0].mxu0
      %v7211 = vadd.f32 %v6946, %v7210
      %v7212 = vpop.f32.mrb[0].mxu0
      %v7213 = vpop.f32.mrb[0].mxu0
      %v7214 = vadd.f32 %v6946, %v7213
      %v7215 = vpop.f32.mrb[0].mxu0
      %7216 = vmatprep.mubr.bf16.mxu0 %v6855
      %7217 = vmatmul.mubr.bf16.gmra.mrb[0].mxu0 %v6854
      %v7218 = vpop.f32.mrb[0].mxu0
      %v7219 = vadd.f32 %v6946, %v7218
      %v7220 = vpop.f32.mrb[0].mxu0
      %v7221 = vpop.f32.mrb[0].mxu0
      %v7222 = vadd.f32 %v6946, %v7221
      %v7223 = vpop.f32.mrb[0].mxu0
      %7224 = vmatprep.mubr.bf16.mxu0 %v6860
      %7225 = vmatmul.mubr.bf16.gmra.mrb[0].mxu0 %v6859
      %v7226 = vpop.f32.mrb[0].mxu0
      %v7227 = vadd.f32 %v6946, %v7226
      %v7228 = vpop.f32.mrb[0].mxu0
      %v7229 = vpop.f32.mrb[0].mxu0
      %v7230 = vadd.f32 %v6946, %v7229
      %v7231 = vpop.f32.mrb[0].mxu0
      %7232 = vmatprep.mubr.bf16.mxu0 %v6865
      %7233 = vmatmul.mubr.bf16.gmra.mrb[0].mxu0 %v6864
      %v7234 = vpop.f32.mrb[0].mxu0
      %v7235 = vadd.f32 %v6946, %v7234
      %v7236 = vpop.f32.mrb[0].mxu0
      %v7237 = vpop.f32.mrb[0].mxu0
      %v7238 = vadd.f32 %v6946, %v7237
      %v7239 = vpop.f32.mrb[0].mxu0
      %7240 = vdwg.mxu0
      %7241 = vmatprep.subr.bf16.mxu0 0
      %7242 = vmatpush1.bf16.msra.mxu0 %v7108
      %7243 = vmatprep.subr.bf16.mxu0 0
      %7244 = vmatpush1.bf16.msra.mxu0 %v7109
      %7245 = vmatprep.subr.bf16.mxu0 0
      %7246 = vmatpush1.bf16.msra.mxu0 %v7110
      %7247 = vmatprep.subr.bf16.mxu0 0
      %7248 = vmatpush1.bf16.msra.mxu0 %v7111
      %7249 = vmatprep.subr.bf16.mxu0 0
      %7250 = vmatpush1.bf16.msra.mxu0 %v7112
      %7251 = vmatprep.subr.bf16.mxu0 0
      %7252 = vmatpush1.bf16.msra.mxu0 %v7113
      %7253 = vmatprep.subr.bf16.mxu0 0
      %7254 = vmatpush1.bf16.msra.mxu0 %v7114
      %7255 = vmatprep.subr.bf16.mxu0 0
      %7256 = vmatpush1.bf16.msra.mxu0 %v7115
      %7257 = vmatprep.subr.bf16.mxu0 0
      %7258 = vmatpush1.bf16.msra.mxu0 %v7116
      %7259 = vmatprep.subr.bf16.mxu0 0
      %7260 = vmatpush1.bf16.msra.mxu0 %v7117
      %7261 = vmatprep.subr.bf16.mxu0 0
      %7262 = vmatpush1.bf16.msra.mxu0 %v7118
      %7263 = vmatprep.subr.bf16.mxu0 0
      %7264 = vmatpush1.bf16.msra.mxu0 %v7119
      %7265 = vmatprep.subr.bf16.mxu0 0
      %7266 = vmatpush1.bf16.msra.mxu0 %v7120
      %7267 = vmatprep.subr.bf16.mxu0 0
      %7268 = vmatpush1.bf16.msra.mxu0 %v7121
      %7269 = vmatprep.subr.bf16.mxu0 0
      %7270 = vmatpush1.bf16.msra.mxu0 %v7122
      %7271 = vmatprep.subr.bf16.mxu0 0
      %7272 = vmatpush1.bf16.msra.mxu0 %v7123
      %7273 = vmatprep.mubr.bf16.mxu0 %v6852
      %7274 = vmatmul.mubr.bf16.gmra.mrb[0].mxu0 %v6851
      %v7275 = vpop.f32.mrb[0].mxu0
      %v7276 = vadd.f32 %v7211, %v7275
      %v7277 = vpop.f32.mrb[0].mxu0
      %v7278 = vpop.f32.mrb[0].mxu0
      %v7279 = vadd.f32 %v7214, %v7278
      %v7280 = vpop.f32.mrb[0].mxu0
      %7281 = vmatprep.mubr.bf16.mxu0 %v6857
      %7282 = vmatmul.mubr.bf16.gmra.mrb[0].mxu0 %v6856
      %v7283 = vpop.f32.mrb[0].mxu0
      %v7284 = vadd.f32 %v7219, %v7283
      %v7285 = vpop.f32.mrb[0].mxu0
      %v7286 = vpop.f32.mrb[0].mxu0
      %v7287 = vadd.f32 %v7222, %v7286
      %v7288 = vpop.f32.mrb[0].mxu0
      %7289 = vmatprep.mubr.bf16.mxu0 %v6862
      %7290 = vmatmul.mubr.bf16.gmra.mrb[0].mxu0 %v6861
      %v7291 = vpop.f32.mrb[0].mxu0
      %v7292 = vadd.f32 %v7227, %v7291
      %v7293 = vpop.f32.mrb[0].mxu0
      %v7294 = vpop.f32.mrb[0].mxu0
      %v7295 = vadd.f32 %v7230, %v7294
      %v7296 = vpop.f32.mrb[0].mxu0
      %7297 = vmatprep.mubr.bf16.mxu0 %v6867
      %7298 = vmatmul.mubr.bf16.gmra.mrb[0].mxu0 %v6866
      %v7299 = vpop.f32.mrb[0].mxu0
      %v7300 = vadd.f32 %v7235, %v7299
      %v7301 = vpop.f32.mrb[0].mxu0
      %v7302 = vpop.f32.mrb[0].mxu0
      %v7303 = vadd.f32 %v7238, %v7302
      %v7304 = vpop.f32.mrb[0].mxu0
      %7305 = vdwg.mxu0
      %7306 = vmatprep.subr.bf16.mxu0 0
      %7307 = vmatpush1.bf16.msra.mxu0 %v7124
      %7308 = vmatprep.subr.bf16.mxu0 0
      %7309 = vmatpush1.bf16.msra.mxu0 %v7125
      %7310 = vmatprep.subr.bf16.mxu0 0
      %7311 = vmatpush1.bf16.msra.mxu0 %v7126
      %7312 = vmatprep.subr.bf16.mxu0 0
      %7313 = vmatpush1.bf16.msra.mxu0 %v7127
      %7314 = vmatprep.subr.bf16.mxu0 0
      %7315 = vmatpush1.bf16.msra.mxu0 0
      %7316 = vmatprep.subr.bf16.mxu0 0
      %7317 = vmatpush1.bf16.msra.mxu0 0
      %7318 = vmatprep.subr.bf16.mxu0 0
      %7319 = vmatpush1.bf16.msra.mxu0 0
      %7320 = vmatprep.subr.bf16.mxu0 0
      %7321 = vmatpush1.bf16.msra.mxu0 0
      %7322 = vmatprep.subr.bf16.mxu0 0
      %7323 = vmatpush1.bf16.msra.mxu0 0
      %7324 = vmatprep.subr.bf16.mxu0 0
      %7325 = vmatpush1.bf16.msra.mxu0 0
      %7326 = vmatprep.subr.bf16.mxu0 0
      %7327 = vmatpush1.bf16.msra.mxu0 0
      %7328 = vmatprep.subr.bf16.mxu0 0
      %7329 = vmatpush1.bf16.msra.mxu0 0
      %7330 = vmatprep.subr.bf16.mxu0 0
      %7331 = vmatpush1.bf16.msra.mxu0 0
      %7332 = vmatprep.subr.bf16.mxu0 0
      %7333 = vmatpush1.bf16.msra.mxu0 0
      %7334 = vmatprep.subr.bf16.mxu0 0
      %7335 = vmatpush1.bf16.msra.mxu0 0
      %7336 = vmatprep.subr.bf16.mxu0 0
      %7337 = vmatpush1.bf16.msra.mxu0 0
      %7338 = vmatprep.mubr.bf16.mxu0 0
      %7339 = vmatmul.mubr.bf16.gmra.mrb[0].mxu0 %v7165
      %v7340 = vpop.f32.mrb[0].mxu0
      %v7341 = vadd.f32 %v7276, %v7340
      %v7342 = vpop.f32.mrb[0].mxu0
      %v7343 = vpop.f32.mrb[0].mxu0
      %v7344 = vadd.f32 %v7279, %v7343
      %v7345 = vpop.f32.mrb[0].mxu0
      %7346 = vmatprep.mubr.bf16.mxu0 0
      %7347 = vmatmul.mubr.bf16.gmra.mrb[0].mxu0 %v7168
      %v7348 = vpop.f32.mrb[0].mxu0
      %v7349 = vadd.f32 %v7284, %v7348
      %v7350 = vpop.f32.mrb[0].mxu0
      %v7351 = vpop.f32.mrb[0].mxu0
      %v7352 = vadd.f32 %v7287, %v7351
      %v7353 = vpop.f32.mrb[0].mxu0
      %7354 = vmatprep.mubr.bf16.mxu0 0
      %7355 = vmatmul.mubr.bf16.gmra.mrb[0].mxu0 %v7171
      %v7356 = vpop.f32.mrb[0].mxu0
      %v7357 = vadd.f32 %v7292, %v7356
      %v7358 = vpop.f32.mrb[0].mxu0
      %v7359 = vpop.f32.mrb[0].mxu0
      %v7360 = vadd.f32 %v7295, %v7359
      %v7361 = vpop.f32.mrb[0].mxu0
      %7362 = vmatprep.mubr.bf16.mxu0 0
      %7363 = vmatmul.mubr.bf16.gmra.mrb[0].mxu0 %v7174
      %v7364 = vpop.f32.mrb[0].mxu0
      %v7365 = vadd.f32 %v7300, %v7364
      %v7366 = vpop.f32.mrb[0].mxu0
      %v7367 = vpop.f32.mrb[0].mxu0
      %v7368 = vadd.f32 %v7303, %v7367
      %v7369 = vpop.f32.mrb[0].mxu0
      %7370 = vdwg.mxu0
      %v7371 = vmax.f32 %v7341, 0.0
      %v7372 = vmax.f32 %v7344, 0.0
      %v7373 = vmax.f32 %v7349, 0.0
      %v7374 = vmax.f32 %v7352, 0.0
      %v7375 = vmax.f32 %v7357, 0.0
      %v7376 = vmax.f32 %v7360, 0.0
      %v7377 = vmax.f32 %v7365, 0.0
      %v7378 = vmax.f32 %v7368, 0.0
      %v7387 = vcombine.high %v7371, %v7371
      %v7389 = vunpack.c.l.s4 1983009808
      %v7390 = vunpack.c.0.s8 %v7389
      %v7391 = vlaneseq
      %v7392 = vshrl.u32 %v7391, 7
      %v7393 = vsub.s32 %v7390, %v7392
      %v7394 = vrot.slane %v7371, %v7393
      %v7396 = vunpack.c.l.s4 1983009808
      %v7397 = vunpack.c.0.s8 %v7396
      %v7398 = vlaneseq
      %v7399 = vshrl.u32 %v7398, 7
      %v7400 = vsub.s32 %v7397, %v7399
      %v7401 = vrot.slane %v7387, %v7400
      %v7402 = vcombine.high %v7394, %v7394
      %v7403 = vcombine.high %v7401, %v7401
      %v7404 = vcombine.high %v7372, %v7372
      %v7406 = vunpack.c.l.s4 1983009808
      %v7407 = vunpack.c.0.s8 %v7406
      %v7408 = vlaneseq
      %v7409 = vshrl.u32 %v7408, 7
      %v7410 = vsub.s32 %v7407, %v7409
      %v7411 = vrot.slane %v7372, %v7410
      %v7413 = vunpack.c.l.s4 1983009808
      %v7414 = vunpack.c.0.s8 %v7413
      %v7415 = vlaneseq
      %v7416 = vshrl.u32 %v7415, 7
      %v7417 = vsub.s32 %v7414, %v7416
      %v7418 = vrot.slane %v7404, %v7417
      %v7419 = vcombine.high %v7411, %v7411
      %v7420 = vcombine.high %v7418, %v7418
      %v7421 = vcombine.high %v7373, %v7373
      %v7423 = vunpack.c.l.s4 1983009808
      %v7424 = vunpack.c.0.s8 %v7423
      %v7425 = vlaneseq
      %v7426 = vshrl.u32 %v7425, 7
      %v7427 = vsub.s32 %v7424, %v7426
      %v7428 = vrot.slane %v7373, %v7427
      %v7430 = vunpack.c.l.s4 1983009808
      %v7431 = vunpack.c.0.s8 %v7430
      %v7432 = vlaneseq
      %v7433 = vshrl.u32 %v7432, 7
      %v7434 = vsub.s32 %v7431, %v7433
      %v7435 = vrot.slane %v7421, %v7434
      %v7436 = vcombine.high %v7428, %v7428
      %v7437 = vcombine.high %v7435, %v7435
      %v7438 = vcombine.high %v7374, %v7374
      %v7440 = vunpack.c.l.s4 1983009808
      %v7441 = vunpack.c.0.s8 %v7440
      %v7442 = vlaneseq
      %v7443 = vshrl.u32 %v7442, 7
      %v7444 = vsub.s32 %v7441, %v7443
      %v7445 = vrot.slane %v7374, %v7444
      %v7447 = vunpack.c.l.s4 1983009808
      %v7448 = vunpack.c.0.s8 %v7447
      %v7449 = vlaneseq
      %v7450 = vshrl.u32 %v7449, 7
      %v7451 = vsub.s32 %v7448, %v7450
      %v7452 = vrot.slane %v7438, %v7451
      %v7453 = vcombine.high %v7445, %v7445
      %v7454 = vcombine.high %v7452, %v7452
      %v7455 = vcombine.high %v7375, %v7375
      %v7457 = vunpack.c.l.s4 1983009808
      %v7458 = vunpack.c.0.s8 %v7457
      %v7459 = vlaneseq
      %v7460 = vshrl.u32 %v7459, 7
      %v7461 = vsub.s32 %v7458, %v7460
      %v7462 = vrot.slane %v7375, %v7461
      %v7464 = vunpack.c.l.s4 1983009808
      %v7465 = vunpack.c.0.s8 %v7464
      %v7466 = vlaneseq
      %v7467 = vshrl.u32 %v7466, 7
      %v7468 = vsub.s32 %v7465, %v7467
      %v7469 = vrot.slane %v7455, %v7468
      %v7470 = vcombine.high %v7462, %v7462
      %v7471 = vcombine.high %v7469, %v7469
      %v7472 = vcombine.high %v7376, %v7376
      %v7474 = vunpack.c.l.s4 1983009808
      %v7475 = vunpack.c.0.s8 %v7474
      %v7476 = vlaneseq
      %v7477 = vshrl.u32 %v7476, 7
      %v7478 = vsub.s32 %v7475, %v7477
      %v7479 = vrot.slane %v7376, %v7478
      %v7481 = vunpack.c.l.s4 1983009808
      %v7482 = vunpack.c.0.s8 %v7481
      %v7483 = vlaneseq
      %v7484 = vshrl.u32 %v7483, 7
      %v7485 = vsub.s32 %v7482, %v7484
      %v7486 = vrot.slane %v7472, %v7485
      %v7487 = vcombine.high %v7479, %v7479
      %v7488 = vcombine.high %v7486, %v7486
      %v7489 = vcombine.high %v7377, %v7377
      %v7491 = vunpack.c.l.s4 1983009808
      %v7492 = vunpack.c.0.s8 %v7491
      %v7493 = vlaneseq
      %v7494 = vshrl.u32 %v7493, 7
      %v7495 = vsub.s32 %v7492, %v7494
      %v7496 = vrot.slane %v7377, %v7495
      %v7498 = vunpack.c.l.s4 1983009808
      %v7499 = vunpack.c.0.s8 %v7498
      %v7500 = vlaneseq
      %v7501 = vshrl.u32 %v7500, 7
      %v7502 = vsub.s32 %v7499, %v7501
      %v7503 = vrot.slane %v7489, %v7502
      %v7504 = vcombine.high %v7496, %v7496
      %v7505 = vcombine.high %v7503, %v7503
      %v7506 = vcombine.high %v7378, %v7378
      %v7508 = vunpack.c.l.s4 1983009808
      %v7509 = vunpack.c.0.s8 %v7508
      %v7510 = vlaneseq
      %v7511 = vshrl.u32 %v7510, 7
      %v7512 = vsub.s32 %v7509, %v7511
      %v7513 = vrot.slane %v7378, %v7512
      %v7515 = vunpack.c.l.s4 1983009808
      %v7516 = vunpack.c.0.s8 %v7515
      %v7517 = vlaneseq
      %v7518 = vshrl.u32 %v7517, 7
      %v7519 = vsub.s32 %v7516, %v7518
      %v7520 = vrot.slane %v7506, %v7519
      %v7521 = vcombine.high %v7513, %v7513
      %v7522 = vcombine.high %v7520, %v7520
      %v7555 = vrot.slane %v7394, 7
      %v7556 = vrot.slane %v7555, 2
      %v7557 = vrot.slane %v7402, 7
      %v7558 = vrot.slane %v7557, 2
      %v7559 = vrot.slane %v7401, 7
      %v7560 = vrot.slane %v7559, 2
      %v7561 = vrot.slane %v7403, 7
      %v7562 = vrot.slane %v7561, 2
      %v7563 = vrot.slane %v7411, 7
      %v7564 = vrot.slane %v7563, 2
      %v7565 = vrot.slane %v7419, 7
      %v7566 = vrot.slane %v7565, 2
      %v7567 = vrot.slane %v7418, 7
      %v7568 = vrot.slane %v7567, 2
      %v7569 = vrot.slane %v7420, 7
      %v7570 = vrot.slane %v7569, 2
      %v7571 = vrot.slane %v7428, 7
      %v7572 = vrot.slane %v7571, 2
      %v7573 = vrot.slane %v7436, 7
      %v7574 = vrot.slane %v7573, 2
      %v7575 = vrot.slane %v7435, 7
      %v7576 = vrot.slane %v7575, 2
      %v7577 = vrot.slane %v7437, 7
      %v7578 = vrot.slane %v7577, 2
      %v7579 = vrot.slane %v7445, 7
      %v7580 = vrot.slane %v7579, 2
      %v7581 = vrot.slane %v7453, 7
      %v7582 = vrot.slane %v7581, 2
      %v7583 = vrot.slane %v7452, 7
      %v7584 = vrot.slane %v7583, 2
      %v7585 = vrot.slane %v7454, 7
      %v7586 = vrot.slane %v7585, 2
      %v7587 = vrot.slane %v7462, 7
      %v7588 = vrot.slane %v7587, 2
      %v7589 = vrot.slane %v7470, 7
      %v7590 = vrot.slane %v7589, 2
      %v7591 = vrot.slane %v7469, 7
      %v7592 = vrot.slane %v7591, 2
      %v7593 = vrot.slane %v7471, 7
      %v7594 = vrot.slane %v7593, 2
      %v7595 = vrot.slane %v7479, 7
      %v7596 = vrot.slane %v7595, 2
      %v7597 = vrot.slane %v7487, 7
      %v7598 = vrot.slane %v7597, 2
      %v7599 = vrot.slane %v7486, 7
      %v7600 = vrot.slane %v7599, 2
      %v7601 = vrot.slane %v7488, 7
      %v7602 = vrot.slane %v7601, 2
      %v7603 = vrot.slane %v7496, 7
      %v7604 = vrot.slane %v7603, 2
      %v7605 = vrot.slane %v7504, 7
      %v7606 = vrot.slane %v7605, 2
      %v7607 = vrot.slane %v7503, 7
      %v7608 = vrot.slane %v7607, 2
      %v7609 = vrot.slane %v7505, 7
      %v7610 = vrot.slane %v7609, 2
      %v7611 = vrot.slane %v7513, 7
      %v7612 = vrot.slane %v7611, 2
      %v7613 = vrot.slane %v7521, 7
      %v7614 = vrot.slane %v7613, 2
      %v7615 = vrot.slane %v7520, 7
      %v7616 = vrot.slane %v7615, 2
      %v7617 = vrot.slane %v7522, 7
      %v7618 = vrot.slane %v7617, 2
      %v7651 = vmax.f32 %v7394, %v7556
      %v7652 = vmax.f32 %v7402, %v7558
      %v7653 = vmax.f32 %v7401, %v7560
      %v7654 = vmax.f32 %v7403, %v7562
      %v7655 = vmax.f32 %v7411, %v7564
      %v7656 = vmax.f32 %v7419, %v7566
      %v7657 = vmax.f32 %v7418, %v7568
      %v7658 = vmax.f32 %v7420, %v7570
      %v7659 = vmax.f32 %v7428, %v7572
      %v7660 = vmax.f32 %v7436, %v7574
      %v7661 = vmax.f32 %v7435, %v7576
      %v7662 = vmax.f32 %v7437, %v7578
      %v7663 = vmax.f32 %v7445, %v7580
      %v7664 = vmax.f32 %v7453, %v7582
      %v7665 = vmax.f32 %v7452, %v7584
      %v7666 = vmax.f32 %v7454, %v7586
      %v7667 = vmax.f32 %v7462, %v7588
      %v7668 = vmax.f32 %v7470, %v7590
      %v7669 = vmax.f32 %v7469, %v7592
      %v7670 = vmax.f32 %v7471, %v7594
      %v7671 = vmax.f32 %v7479, %v7596
      %v7672 = vmax.f32 %v7487, %v7598
      %v7673 = vmax.f32 %v7486, %v7600
      %v7674 = vmax.f32 %v7488, %v7602
      %v7675 = vmax.f32 %v7496, %v7604
      %v7676 = vmax.f32 %v7504, %v7606
      %v7677 = vmax.f32 %v7503, %v7608
      %v7678 = vmax.f32 %v7505, %v7610
      %v7679 = vmax.f32 %v7513, %v7612
      %v7680 = vmax.f32 %v7521, %v7614
      %v7681 = vmax.f32 %v7520, %v7616
      %v7682 = vmax.f32 %v7522, %v7618
      %v7683 = vmax.f32 %v7651, %v7655
      %v7684 = vmax.f32 %v7652, %v7656
      %v7685 = vmax.f32 %v7653, %v7657
      %v7686 = vmax.f32 %v7654, %v7658
      %v7687 = vmax.f32 %v7659, %v7663
      %v7688 = vmax.f32 %v7660, %v7664
      %v7689 = vmax.f32 %v7661, %v7665
      %v7690 = vmax.f32 %v7662, %v7666
      %v7691 = vmax.f32 %v7667, %v7671
      %v7692 = vmax.f32 %v7668, %v7672
      %v7693 = vmax.f32 %v7669, %v7673
      %v7694 = vmax.f32 %v7670, %v7674
      %v7695 = vmax.f32 %v7675, %v7679
      %v7696 = vmax.f32 %v7676, %v7680
      %v7697 = vmax.f32 %v7677, %v7681
      %v7698 = vmax.f32 %v7678, %v7682
      %v7715 = vsel %vm5907, %v7683, %v7683
      %v7716 = vsel %vm5911, %v7683, %v7715
      %v7717 = vrot.slane %v7684, 7
      %v7718 = vsel %vm5901, %v7717, %v7716
      %v7719 = vsel %vm5905, %v7717, %v7718
      %v7720 = vsel %vm5909, %v7717, %v7719
      %v7721 = vsel %vm5913, %v7717, %v7720
      %v7722 = vsel %vm5907, %v7685, %v7685
      %v7723 = vsel %vm5911, %v7685, %v7722
      %v7724 = vrot.slane %v7686, 7
      %v7725 = vsel %vm5901, %v7724, %v7723
      %v7726 = vsel %vm5905, %v7724, %v7725
      %v7727 = vsel %vm5909, %v7724, %v7726
      %v7728 = vsel %vm5913, %v7724, %v7727
      %v7729 = vsel %vm5907, %v7687, %v7687
      %v7730 = vsel %vm5911, %v7687, %v7729
      %v7731 = vrot.slane %v7688, 7
      %v7732 = vsel %vm5901, %v7731, %v7730
      %v7733 = vsel %vm5905, %v7731, %v7732
      %v7734 = vsel %vm5909, %v7731, %v7733
      %v7735 = vsel %vm5913, %v7731, %v7734
      %v7736 = vsel %vm5907, %v7689, %v7689
      %v7737 = vsel %vm5911, %v7689, %v7736
      %v7738 = vrot.slane %v7690, 7
      %v7739 = vsel %vm5901, %v7738, %v7737
      %v7740 = vsel %vm5905, %v7738, %v7739
      %v7741 = vsel %vm5909, %v7738, %v7740
      %v7742 = vsel %vm5913, %v7738, %v7741
      %v7743 = vsel %vm5907, %v7691, %v7691
      %v7744 = vsel %vm5911, %v7691, %v7743
      %v7745 = vrot.slane %v7692, 7
      %v7746 = vsel %vm5901, %v7745, %v7744
      %v7747 = vsel %vm5905, %v7745, %v7746
      %v7748 = vsel %vm5909, %v7745, %v7747
      %v7749 = vsel %vm5913, %v7745, %v7748
      %v7750 = vsel %vm5907, %v7693, %v7693
      %v7751 = vsel %vm5911, %v7693, %v7750
      %v7752 = vrot.slane %v7694, 7
      %v7753 = vsel %vm5901, %v7752, %v7751
      %v7754 = vsel %vm5905, %v7752, %v7753
      %v7755 = vsel %vm5909, %v7752, %v7754
      %v7756 = vsel %vm5913, %v7752, %v7755
      %v7757 = vsel %vm5907, %v7695, %v7695
      %v7758 = vsel %vm5911, %v7695, %v7757
      %v7759 = vrot.slane %v7696, 7
      %v7760 = vsel %vm5901, %v7759, %v7758
      %v7761 = vsel %vm5905, %v7759, %v7760
      %v7762 = vsel %vm5909, %v7759, %v7761
      %v7763 = vsel %vm5913, %v7759, %v7762
      %v7764 = vsel %vm5907, %v7697, %v7697
      %v7765 = vsel %vm5911, %v7697, %v7764
      %v7766 = vrot.slane %v7698, 7
      %v7767 = vsel %vm5901, %v7766, %v7765
      %v7768 = vsel %vm5905, %v7766, %v7767
      %v7769 = vsel %vm5909, %v7766, %v7768
      %v7770 = vsel %vm5913, %v7766, %v7769
      %v7779 = vcombine.low %v7721, %v7735
      %v7781 = vunpack.c.l.s4 1934713408
      %v7782 = vunpack.c.0.s8 %v7781
      %v7783 = vlaneseq
      %v7784 = vshrl.u32 %v7783, 7
      %v7785 = vsub.s32 %v7782, %v7784
      %v7786 = vrot.slane %v7779, %v7785
      %v7787 = vcombine.high %v7786, 0.0
      %v7788 = vcombine.low %v7749, %v7763
      %v7790 = vunpack.c.l.s4 1934713408
      %v7791 = vunpack.c.0.s8 %v7790
      %v7792 = vlaneseq
      %v7793 = vshrl.u32 %v7792, 7
      %v7794 = vsub.s32 %v7791, %v7793
      %v7795 = vrot.slane %v7788, %v7794
      %v7796 = vcombine.high %v7795, 0.0
      %v7797 = vcombine.low %v7728, %v7742
      %v7799 = vunpack.c.l.s4 1934713408
      %v7800 = vunpack.c.0.s8 %v7799
      %v7801 = vlaneseq
      %v7802 = vshrl.u32 %v7801, 7
      %v7803 = vsub.s32 %v7800, %v7802
      %v7804 = vrot.slane %v7797, %v7803
      %v7805 = vcombine.high %v7804, 0.0
      %v7806 = vcombine.low %v7756, %v7770
      %v7808 = vunpack.c.l.s4 1934713408
      %v7809 = vunpack.c.0.s8 %v7808
      %v7810 = vlaneseq
      %v7811 = vshrl.u32 %v7810, 7
      %v7812 = vsub.s32 %v7809, %v7811
      %v7813 = vrot.slane %v7806, %v7812
      %v7814 = vcombine.high %v7813, 0.0
      %v7817 = vcombine.low %v7786, %v7795
      %v7819 = vunpack.c.l.s4 1983009808
      %v7820 = vunpack.c.0.s8 %v7819
      %v7821 = vlaneseq
      %v7822 = vshrl.u32 %v7821, 7
      %v7823 = vsub.s32 %v7820, %v7822
      %v7824 = vrot.slane %v7817, %v7823
      %v7828 = vcombine.low %v7787, %v7796
      %v7830 = vunpack.c.l.s4 1983009808
      %v7831 = vunpack.c.0.s8 %v7830
      %v7832 = vlaneseq
      %v7833 = vshrl.u32 %v7832, 7
      %v7834 = vsub.s32 %v7831, %v7833
      %v7835 = vrot.slane %v7828, %v7834
      %7836 = vrot.lane.b32.xlu0 %v7835, 64
      %v7837 = vpop.permute.xlu0 %7836
      %v7841 = vcombine.low %v7804, %v7813
      %v7843 = vunpack.c.l.s4 1983009808
      %v7844 = vunpack.c.0.s8 %v7843
      %v7845 = vlaneseq
      %v7846 = vshrl.u32 %v7845, 7
      %v7847 = vsub.s32 %v7844, %v7846
      %v7848 = vrot.slane %v7841, %v7847
      %v7852 = vcombine.low %v7805, %v7814
      %v7854 = vunpack.c.l.s4 1983009808
      %v7855 = vunpack.c.0.s8 %v7854
      %v7856 = vlaneseq
      %v7857 = vshrl.u32 %v7856, 7
      %v7858 = vsub.s32 %v7855, %v7857
      %v7859 = vrot.slane %v7852, %v7858
      %7860 = vrot.lane.b32.xlu0 %v7859, 64
      %v7861 = vpop.permute.xlu0 %7860
      %v7863 = vsel %vm466, %v7824, %v7837
      %v7864 = vsel %vm466, %v7848, %v7861
      %v7867 = vcombine.low %v7863, %v7864
      %7869 = vst [vmem:[%s332] sm:$0xff] %v7867
      %p7870 = scmp.lt.s32.totalorder %s20, 1
      %s7871 = scalar_select %p7870, %s20, 1
      %s7872 = smul.addr %s7871, 2
      %s7873 = smul.addr %s7872, 4
      %s7874 = scalar_lea.vmem %s9, %s7873
      // Predicated region
      $region57: #{base_conv_forward.1} parent=55 // pred_check
        %p7875 = pneg %p232
      $region58: #{base_conv_forward.1} parent=55 // pred_check_branch
        %7877 = sbr.rel (%p7875) target = $region60
      $region59: #{base_conv_forward.1} parent=55 // pred_region
        _
      $region60: #{base_conv_forward.1} parent=55 // pred_fallthru
        _
    $region56: #{base_conv_forward.1} parent=5 // pred_fallthru
      _
    %p7878 = scmp.le.s32.totalorder 2, %s15
    // Predicated region
    $region61: #{base_conv_forward.1} parent=5 // pred_check
      %p7879 = pneg %p7878
    $region62: #{base_conv_forward.1} parent=5 // pred_check_branch
      %7881 = sbr.rel (%p7879) target = $region64
    $region63: #{base_conv_forward.1} parent=5 // pred_region
      %s7882 = ssub.s32 %s15, 2
      // Predicated region
      $region65: #{base_conv_forward.1} parent=63 // pred_check
        %p7883 = pneg %p238
      $region66: #{base_conv_forward.1} parent=63 // pred_check_branch
        %7885 = sbr.rel (%p7883) target = $region68
      $region67: #{base_conv_forward.1} parent=63 // pred_region
        %p7886 = scmp.lt.s32.totalorder %s21, 1
        %s7887 = scalar_select %p7886, %s21, 1
        %s7888 = smul.addr %s7887, 2
        %s7889 = smul.addr %s7888, 4
        %s7890 = scalar_lea.vmem %s9, %s7889
      $region68: #{base_conv_forward.1} parent=63 // pred_fallthru
        _
    $region64: #{base_conv_forward.1} parent=5 // pred_fallthru
      _
  $region6: #{base_conv_forward.1} parent=0 // loop_footer
    %s19 = sadd.s32 1, %s15
  $region7: #{base_conv_forward.1} parent=0 // loop_footer_branch
    %14 = sbr.rel target = $region3
  $region8: #{base_conv_forward.1} parent=0 // loop_exit
    _

</llo_original>
